<compile_context>
chip_gen: v5e
topology: v5e:2x2
jax: 0.10.0
libtpu: 0.0.40
codegen_flags: <defaults>
</compile_context>

<pallas_src>
import functools

import jax
import jax.numpy as jnp
from jax.experimental import pallas as pl
from jax.experimental.pallas import tpu as pltpu

_VMEM_LIMIT = 48 * 1024 * 1024  # safe on v5e/v6e (128 MiB) and v7x (64 MiB physical)


# --------------------------- fused conv block kernel ----------------------------
def _conv_block_kernel(xf_ref, w_ref, b_ref, o_ref, *, H, W, Cin, Cout, Ho, Wo):
    # Conv3x3 (stride 1, pad 1, no bias, eval-BN folded into w/b) + ReLU +
    # MaxPool2d(3, stride=2, pad=1) for one image, fully resident in VMEM.
    #   xf_ref: (1, (H+2)*(W+2)+2, Cin) bf16  flattened zero-padded NHWC image
    #   w_ref : (9, Cin, Cout) bf16           tap k = 3*dy + dx, BN scale folded in
    #   b_ref : (1, Cout) f32                 BN-folded bias
    #   o_ref : (1, Ho, Wo, Cout) bf16        pooled output
    Wp = W + 2            # padded width
    L = H * Wp            # rows of the "wide" conv result (cols W..W+1 are garbage)

    # Conv as 9 accumulating MXU matmuls over shifted slices of the flattened image.
    xf = xf_ref[0]                                               # (L + 2*Wp + 2, Cin)
    acc = None
    for dy in range(3):
        for dx in range(3):
            off = dy * Wp + dx
            part = jnp.dot(xf[off:off + L, :], w_ref[3 * dy + dx],
                           preferred_element_type=jnp.float32)   # (L, Cout) f32
            acc = part if acc is None else acc + part

    # Bias + ReLU (f32 epilogue); drop the 2 wrap-around garbage columns per row.
    act = jnp.maximum(acc + b_ref[...], 0.0)                     # (L, Cout)
    v = act.reshape(H, Wp, Cout)[:, 0:W, :]                      # (H, W, Cout) valid

    # MaxPool2d(3, stride=2, pad=1). Zero padding is equivalent to -inf padding here
    # because the input is post-ReLU (>= 0) and every window has >= 1 real pixel.
    zr = jnp.zeros((1, W, Cout), jnp.float32)
    zc = jnp.zeros((H + 2, 1, Cout), jnp.float32)
    ap = jnp.concatenate([zc, jnp.concatenate([zr, v, zr], axis=0), zc], axis=1)

    # Separable pool: vertical 3-tap max at the Ho even row starts (leading-axis
    # indexing, dense vregs), dense horizontal 3-tap max, single stride-2 column pick.
    band = jnp.stack(
        [jnp.maximum(jnp.maximum(ap[2 * i], ap[2 * i + 1]), ap[2 * i + 2])
         for i in range(Ho)], axis=0)                            # (Ho, W+2, Cout)
    hm = jnp.maximum(jnp.maximum(band[:, 0:W], band[:, 1:W + 1]), band[:, 2:W + 2])
    out = jnp.concatenate([hm[:, 2 * j:2 * j + 1] for j in range(Wo)], axis=1)

    # One dense store of the whole pooled tile (lane dim = Cout), cast to bf16.
    o_ref[0] = out.astype(o_ref.dtype)


def conv_block_forward(x, w_torch, bn):
    # Conv2d(3x3, s=1, p=1, bias=False) + BatchNorm2d(eval) + ReLU + MaxPool2d(3, 2, 1)
    # x: (N, H, W, Cin) NHWC; w_torch: (Cout, Cin, 3, 3) PyTorch layout.
    N, H, W, Cin = x.shape
    Cout = w_torch.shape[0]
    gamma, beta, mean, var, eps = bn

    # Fold eval-mode BatchNorm into the conv weights / bias.
    scale = gamma / jnp.sqrt(var + eps)
    bias = (beta - mean * scale).reshape(1, Cout).astype(jnp.float32)
    wk = (jnp.transpose(w_torch, (2, 3, 1, 0)) * scale[None, None, None, :])
    wk = wk.reshape(9, Cin, Cout).astype(jnp.bfloat16)           # (tap, Cin, Cout)

    # Zero-pad (conv padding=1), flatten spatially, add 2 elements of slack so the
    # (dy,dx)=(2,2) shifted slice stays in bounds.
    Wp = W + 2
    xp = jnp.pad(x, ((0, 0), (1, 1), (1, 1), (0, 0)))
    xf = jnp.pad(xp.reshape(N, (H + 2) * Wp, Cin), ((0, 0), (0, 2), (0, 0)))
    xf = xf.astype(jnp.bfloat16)
    Lp = xf.shape[1]

    Ho, Wo = (H - 1) // 2 + 1, (W - 1) // 2 + 1
    kernel = functools.partial(_conv_block_kernel,
                               H=H, W=W, Cin=Cin, Cout=Cout, Ho=Ho, Wo=Wo)
    return pl.pallas_call(
        kernel,
        out_shape=jax.ShapeDtypeStruct((N, Ho, Wo, Cout), jnp.bfloat16),
        grid=(N,),
        in_specs=[
            pl.BlockSpec((1, Lp, Cin), lambda n: (n, 0, 0)),
            pl.BlockSpec((9, Cin, Cout), lambda n: (0, 0, 0)),
            pl.BlockSpec((1, Cout), lambda n: (0, 0)),
        ],
        out_specs=pl.BlockSpec((1, Ho, Wo, Cout), lambda n: (n, 0, 0, 0)),
        compiler_params=pltpu.CompilerParams(
            dimension_semantics=("parallel",),
            vmem_limit_bytes=_VMEM_LIMIT,
        ),
    )(xf, wk, bias)


# ---------------------------- fused classifier kernel ---------------------------
def _classifier_kernel(x_ref, w1_ref, b1_ref, w2_ref, b2_ref, o_ref):
    # Linear(F -> 128-padded hidden) + bias + ReLU, then Linear(hidden -> padded classes)
    # + bias.  bf16 matmul operands, f32 accumulation and epilogue.
    h = jnp.dot(x_ref[...], w1_ref[...], preferred_element_type=jnp.float32)
    h = jnp.maximum(h + b1_ref[...], 0.0)
    # TODO(synk): nn.Dropout(0.2) is identity in eval/inference mode; no RNG mask applied.
    y = jnp.dot(h.astype(w2_ref.dtype), w2_ref[...], preferred_element_type=jnp.float32)
    o_ref[...] = y + b2_ref[...]


def classifier_forward(feats, fc1_w, fc1_b, fc2_w, fc2_b, spatial, *, block_rows=256):
    # feats: (N, F) flattened in NHWC order.  The torch flatten is (C, H, W)-ordered,
    # so the permutation is folded into fc1_w's columns here (one-time weight shuffle).
    M, F = feats.shape
    Ho, Wo, C = spatial
    Hid = fc1_w.shape[0]
    HP = 128                                    # pad hidden dim to a full lane tile
    ncls = fc2_w.shape[0]
    NP = pl.cdiv(ncls, 128) * 128               # pad class dim to full 128-lane tiles

    w1_nhwc = jnp.transpose(fc1_w.reshape(Hid, C, Ho, Wo), (0, 2, 3, 1)).reshape(Hid, F)
    w1 = jnp.zeros((F, HP), jnp.float32).at[:, :Hid].set(w1_nhwc.T).astype(jnp.bfloat16)
    b1 = jnp.zeros((1, HP), jnp.float32).at[:, :Hid].set(fc1_b.astype(jnp.float32))
    w2 = jnp.zeros((HP, NP), jnp.float32).at[:Hid, :ncls].set(fc2_w.T).astype(jnp.bfloat16)
    b2 = jnp.zeros((1, NP), jnp.float32).at[:, :ncls].set(fc2_b.astype(jnp.float32))

    tm = min(block_rows, M)                     # tile the row (batch) axis; parallel grid
    out = pl.pallas_call(
        _classifier_kernel,
        out_shape=jax.ShapeDtypeStruct((M, NP), jnp.float32),
        grid=(pl.cdiv(M, tm),),
        in_specs=[
            pl.BlockSpec((tm, F), lambda i: (i, 0)),
            pl.BlockSpec((F, HP), lambda i: (0, 0)),
            pl.BlockSpec((1, HP), lambda i: (0, 0)),
            pl.BlockSpec((HP, NP), lambda i: (0, 0)),
            pl.BlockSpec((1, NP), lambda i: (0, 0)),
        ],
        out_specs=pl.BlockSpec((tm, NP), lambda i: (i, 0)),
        compiler_params=pltpu.CompilerParams(
            dimension_semantics=("parallel",),
            vmem_limit_bytes=_VMEM_LIMIT,
        ),
    )(feats.astype(jnp.bfloat16), w1, b1, w2, b2)
    return out[:, :ncls]                        # drop the lane padding


# --------------------------------- full forward ---------------------------------
def corelnet_forward(params, x_nchw):
    # x_nchw: (N, C, H, W), same convention as the PyTorch module.
    x = jnp.transpose(x_nchw, (0, 2, 3, 1)).astype(jnp.float32)   # -> NHWC
    x = conv_block_forward(x, params["conv1_w"], params["bn1"])
    x = conv_block_forward(x, params["conv2_w"], params["bn2"])
    N, Ho, Wo, C = x.shape
    # torch.flatten(features, 1) on NCHW orders features as (C, H, W); that permutation
    # is folded into fc1's weight, so the activation path only needs a plain reshape.
    feats = x.reshape(N, Ho * Wo * C)
    return classifier_forward(feats, params["fc1_w"], params["fc1_b"],
                              params["fc2_w"], params["fc2_b"], (Ho, Wo, C))


def init_params(key, in_channels, num_classes, flat_features):
    k1, k2, k3, k4 = jax.random.split(key, 4)

    def conv_w(k, cout, cin):
        n = 3 * 3 * cin
        return jax.random.normal(k, (cout, cin, 3, 3), jnp.float32) * jnp.sqrt(2.0 / n)

    def bn_params(c):
        # PyTorch eval defaults: gamma=1, beta=0, running_mean=0, running_var=1, eps=1e-5.
        return (jnp.ones((c,), jnp.float32), jnp.zeros((c,), jnp.float32),
                jnp.zeros((c,), jnp.float32), jnp.ones((c,), jnp.float32), 1e-5)

    return {
        "conv1_w": conv_w(k1, 32, in_channels),
        "bn1": bn_params(32),
        "conv2_w": conv_w(k2, 256, 32),
        "bn2": bn_params(256),
        "fc1_w": jax.random.normal(k3, (64, flat_features), jnp.float32) * 0.01,
        "fc1_b": jnp.zeros((64,), jnp.float32),
        "fc2_w": jax.random.normal(k4, (num_classes, 64), jnp.float32) * 0.01,
        "fc2_b": jnp.zeros((num_classes,), jnp.float32),
    }


if __name__ == "__main__":
    key = jax.random.PRNGKey(0)
    kx, kp = jax.random.split(key)

    # Small shapes consistent with the module: 3 input channels, 9 classes.
    # H = W = 13 (== 1 mod 4) so the module's in_features formula
    # (H//4 + 1) * (W//4 + 1) * 256 agrees with the true flattened size after two
    # MaxPool(3, stride=2, pad=1) stages: 13 -> 7 -> 4.
    N, C, H, W = 2, 3, 13, 13
    nclasses = 9

    def pool_out(d):
        return (d - 1) // 2 + 1

    flat_features = pool_out(pool_out(H)) * pool_out(pool_out(W)) * 256
    assert flat_features == (H // 4 + 1) * (W // 4 + 1) * 256, "in_features mismatch"

    params = init_params(kp, C, nclasses, flat_features)
    x = jax.random.normal(kx, (N, C, H, W), jnp.float32)

    fwd = jax.jit(corelnet_forward)
    y = jax.block_until_ready(fwd(params, x))
    assert y.shape == (N, nclasses), y.shape
    assert bool(jnp.all(jnp.isfinite(y)))
    print("KERNEL_OK")
</pallas_src>

<mosaic_0001>
module attributes {stable_mosaic.version = 11 : i64} {
  func.func @_conv_block_kernel(%arg0: i32, %arg1: memref<1x227x3xbf16, #tpu.memory_space<vmem>>, %arg2: memref<9x3x32xbf16, #tpu.memory_space<vmem>>, %arg3: memref<1x32xf32, #tpu.memory_space<vmem>>, %arg4: memref<1x7x7x32xbf16, #tpu.memory_space<vmem>>) attributes {dimension_semantics = [#tpu.dimension_semantics<parallel>], iteration_bounds = array<i64: 2>, scalar_prefetch = 0 : i64, scratch_operands = 0 : i64, tpu.core_type = #tpu.core_type<tc>, window_params = [{transform_indices = @transform_0, window_bounds = array<i64: 1, 227, 3>}, {pipeline_mode = #tpu.pipeline_mode<synchronous>, transform_indices = @transform_1, window_bounds = array<i64: 9, 3, 32>}, {pipeline_mode = #tpu.pipeline_mode<synchronous>, transform_indices = @transform_2, window_bounds = array<i64: 1, 32>}, {transform_indices = @transform_3, window_bounds = array<i64: 1, 7, 7, 32>}]} {
    %c0 = arith.constant 0 : index
    %c0_0 = arith.constant 0 : index
    %c0_1 = arith.constant 0 : index
    %0 = vector.load %arg1[%c0, %c0_0, %c0_1] : memref<1x227x3xbf16, #tpu.memory_space<vmem>>, vector<1x227x3xbf16>
    %1 = vector.shape_cast %0 : vector<1x227x3xbf16> to vector<227x3xbf16>
    %2 = vector.extract_strided_slice %1 {offsets = [0, 0], sizes = [195, 3], strides = [1, 1]} : vector<227x3xbf16> to vector<195x3xbf16>
    %c0_2 = arith.constant 0 : index
    %c0_3 = arith.constant 0 : index
    %c0_4 = arith.constant 0 : index
    %3 = vector.load %arg2[%c0_2, %c0_3, %c0_4] : memref<9x3x32xbf16, #tpu.memory_space<vmem>>, vector<1x3x32xbf16>
    %4 = vector.shape_cast %3 : vector<1x3x32xbf16> to vector<3x32xbf16>
    %cst = arith.constant dense<0.000000e+00> : vector<195x32xf32>
    %5 = tpu.matmul %2, %4, %cst {dimension_numbers = #tpu.dot_dimension_numbers<[1], [0], [0], [1], [0, 0, 1, 1], [], []>} : vector<195x3xbf16>, vector<3x32xbf16>, vector<195x32xf32> -> vector<195x32xf32>
    %6 = vector.extract_strided_slice %1 {offsets = [1, 0], sizes = [195, 3], strides = [1, 1]} : vector<227x3xbf16> to vector<195x3xbf16>
    %c1 = arith.constant 1 : index
    %c0_5 = arith.constant 0 : index
    %c0_6 = arith.constant 0 : index
    %7 = vector.load %arg2[%c1, %c0_5, %c0_6] : memref<9x3x32xbf16, #tpu.memory_space<vmem>>, vector<1x3x32xbf16>
    %8 = vector.shape_cast %7 : vector<1x3x32xbf16> to vector<3x32xbf16>
    %cst_7 = arith.constant dense<0.000000e+00> : vector<195x32xf32>
    %9 = tpu.matmul %6, %8, %cst_7 {dimension_numbers = #tpu.dot_dimension_numbers<[1], [0], [0], [1], [0, 0, 1, 1], [], []>} : vector<195x3xbf16>, vector<3x32xbf16>, vector<195x32xf32> -> vector<195x32xf32>
    %10 = arith.addf %5, %9 : vector<195x32xf32>
    %11 = vector.extract_strided_slice %1 {offsets = [2, 0], sizes = [195, 3], strides = [1, 1]} : vector<227x3xbf16> to vector<195x3xbf16>
    %c2 = arith.constant 2 : index
    %c0_8 = arith.constant 0 : index
    %c0_9 = arith.constant 0 : index
    %12 = vector.load %arg2[%c2, %c0_8, %c0_9] : memref<9x3x32xbf16, #tpu.memory_space<vmem>>, vector<1x3x32xbf16>
    %13 = vector.shape_cast %12 : vector<1x3x32xbf16> to vector<3x32xbf16>
    %cst_10 = arith.constant dense<0.000000e+00> : vector<195x32xf32>
    %14 = tpu.matmul %11, %13, %cst_10 {dimension_numbers = #tpu.dot_dimension_numbers<[1], [0], [0], [1], [0, 0, 1, 1], [], []>} : vector<195x3xbf16>, vector<3x32xbf16>, vector<195x32xf32> -> vector<195x32xf32>
    %15 = arith.addf %10, %14 : vector<195x32xf32>
    %16 = vector.extract_strided_slice %1 {offsets = [15, 0], sizes = [195, 3], strides = [1, 1]} : vector<227x3xbf16> to vector<195x3xbf16>
    %c3 = arith.constant 3 : index
    %c0_11 = arith.constant 0 : index
    %c0_12 = arith.constant 0 : index
    %17 = vector.load %arg2[%c3, %c0_11, %c0_12] : memref<9x3x32xbf16, #tpu.memory_space<vmem>>, vector<1x3x32xbf16>
    %18 = vector.shape_cast %17 : vector<1x3x32xbf16> to vector<3x32xbf16>
    %cst_13 = arith.constant dense<0.000000e+00> : vector<195x32xf32>
    %19 = tpu.matmul %16, %18, %cst_13 {dimension_numbers = #tpu.dot_dimension_numbers<[1], [0], [0], [1], [0, 0, 1, 1], [], []>} : vector<195x3xbf16>, vector<3x32xbf16>, vector<195x32xf32> -> vector<195x32xf32>
    %20 = arith.addf %15, %19 : vector<195x32xf32>
    %21 = vector.extract_strided_slice %1 {offsets = [16, 0], sizes = [195, 3], strides = [1, 1]} : vector<227x3xbf16> to vector<195x3xbf16>
    %c4 = arith.constant 4 : index
    %c0_14 = arith.constant 0 : index
    %c0_15 = arith.constant 0 : index
    %22 = vector.load %arg2[%c4, %c0_14, %c0_15] : memref<9x3x32xbf16, #tpu.memory_space<vmem>>, vector<1x3x32xbf16>
    %23 = vector.shape_cast %22 : vector<1x3x32xbf16> to vector<3x32xbf16>
    %cst_16 = arith.constant dense<0.000000e+00> : vector<195x32xf32>
    %24 = tpu.matmul %21, %23, %cst_16 {dimension_numbers = #tpu.dot_dimension_numbers<[1], [0], [0], [1], [0, 0, 1, 1], [], []>} : vector<195x3xbf16>, vector<3x32xbf16>, vector<195x32xf32> -> vector<195x32xf32>
    %25 = arith.addf %20, %24 : vector<195x32xf32>
    %26 = vector.extract_strided_slice %1 {offsets = [17, 0], sizes = [195, 3], strides = [1, 1]} : vector<227x3xbf16> to vector<195x3xbf16>
    %c5 = arith.constant 5 : index
    %c0_17 = arith.constant 0 : index
    %c0_18 = arith.constant 0 : index
    %27 = vector.load %arg2[%c5, %c0_17, %c0_18] : memref<9x3x32xbf16, #tpu.memory_space<vmem>>, vector<1x3x32xbf16>
    %28 = vector.shape_cast %27 : vector<1x3x32xbf16> to vector<3x32xbf16>
    %cst_19 = arith.constant dense<0.000000e+00> : vector<195x32xf32>
    %29 = tpu.matmul %26, %28, %cst_19 {dimension_numbers = #tpu.dot_dimension_numbers<[1], [0], [0], [1], [0, 0, 1, 1], [], []>} : vector<195x3xbf16>, vector<3x32xbf16>, vector<195x32xf32> -> vector<195x32xf32>
    %30 = arith.addf %25, %29 : vector<195x32xf32>
    %31 = vector.extract_strided_slice %1 {offsets = [30, 0], sizes = [195, 3], strides = [1, 1]} : vector<227x3xbf16> to vector<195x3xbf16>
    %c6 = arith.constant 6 : index
    %c0_20 = arith.constant 0 : index
    %c0_21 = arith.constant 0 : index
    %32 = vector.load %arg2[%c6, %c0_20, %c0_21] : memref<9x3x32xbf16, #tpu.memory_space<vmem>>, vector<1x3x32xbf16>
    %33 = vector.shape_cast %32 : vector<1x3x32xbf16> to vector<3x32xbf16>
    %cst_22 = arith.constant dense<0.000000e+00> : vector<195x32xf32>
    %34 = tpu.matmul %31, %33, %cst_22 {dimension_numbers = #tpu.dot_dimension_numbers<[1], [0], [0], [1], [0, 0, 1, 1], [], []>} : vector<195x3xbf16>, vector<3x32xbf16>, vector<195x32xf32> -> vector<195x32xf32>
    %35 = arith.addf %30, %34 : vector<195x32xf32>
    %36 = vector.extract_strided_slice %1 {offsets = [31, 0], sizes = [195, 3], strides = [1, 1]} : vector<227x3xbf16> to vector<195x3xbf16>
    %c7 = arith.constant 7 : index
    %c0_23 = arith.constant 0 : index
    %c0_24 = arith.constant 0 : index
    %37 = vector.load %arg2[%c7, %c0_23, %c0_24] : memref<9x3x32xbf16, #tpu.memory_space<vmem>>, vector<1x3x32xbf16>
    %38 = vector.shape_cast %37 : vector<1x3x32xbf16> to vector<3x32xbf16>
    %cst_25 = arith.constant dense<0.000000e+00> : vector<195x32xf32>
    %39 = tpu.matmul %36, %38, %cst_25 {dimension_numbers = #tpu.dot_dimension_numbers<[1], [0], [0], [1], [0, 0, 1, 1], [], []>} : vector<195x3xbf16>, vector<3x32xbf16>, vector<195x32xf32> -> vector<195x32xf32>
    %40 = arith.addf %35, %39 : vector<195x32xf32>
    %41 = vector.extract_strided_slice %1 {offsets = [32, 0], sizes = [195, 3], strides = [1, 1]} : vector<227x3xbf16> to vector<195x3xbf16>
    %c8 = arith.constant 8 : index
    %c0_26 = arith.constant 0 : index
    %c0_27 = arith.constant 0 : index
    %42 = vector.load %arg2[%c8, %c0_26, %c0_27] : memref<9x3x32xbf16, #tpu.memory_space<vmem>>, vector<1x3x32xbf16>
    %43 = vector.shape_cast %42 : vector<1x3x32xbf16> to vector<3x32xbf16>
    %cst_28 = arith.constant dense<0.000000e+00> : vector<195x32xf32>
    %44 = tpu.matmul %41, %43, %cst_28 {dimension_numbers = #tpu.dot_dimension_numbers<[1], [0], [0], [1], [0, 0, 1, 1], [], []>} : vector<195x3xbf16>, vector<3x32xbf16>, vector<195x32xf32> -> vector<195x32xf32>
    %45 = arith.addf %40, %44 : vector<195x32xf32>
    %c0_29 = arith.constant 0 : index
    %c0_30 = arith.constant 0 : index
    %46 = vector.load %arg3[%c0_29, %c0_30] : memref<1x32xf32, #tpu.memory_space<vmem>>, vector<1x32xf32>
    %47 = vector.broadcast %46 : vector<1x32xf32> to vector<195x32xf32>
    %48 = arith.addf %45, %47 : vector<195x32xf32>
    %cst_31 = arith.constant 0.000000e+00 : f32
    %49 = vector.broadcast %cst_31 : f32 to vector<195x32xf32>
    %50 = arith.maximumf %48, %49 : vector<195x32xf32>
    %51 = vector.shape_cast %50 : vector<195x32xf32> to vector<13x15x32xf32>
    %52 = vector.extract_strided_slice %51 {offsets = [0, 0, 0], sizes = [13, 13, 32], strides = [1, 1, 1]} : vector<13x15x32xf32> to vector<13x13x32xf32>
    %cst_32 = arith.constant 0.000000e+00 : f32
    %53 = vector.broadcast %cst_32 : f32 to vector<1x13x32xf32>
    %cst_33 = arith.constant 0.000000e+00 : f32
    %54 = vector.broadcast %cst_33 : f32 to vector<15x1x32xf32>
    %55 = tpu.concatenate %53, %52, %53 in 0 : vector<1x13x32xf32>, vector<13x13x32xf32>, vector<1x13x32xf32> -> vector<15x13x32xf32>
    %56 = tpu.concatenate %54, %55, %54 in 1 : vector<15x1x32xf32>, vector<15x13x32xf32>, vector<15x1x32xf32> -> vector<15x15x32xf32>
    %57 = vector.extract_strided_slice %56 {offsets = [0, 0, 0], sizes = [1, 15, 32], strides = [1, 1, 1]} : vector<15x15x32xf32> to vector<1x15x32xf32>
    %58 = vector.shape_cast %57 : vector<1x15x32xf32> to vector<15x32xf32>
    %59 = vector.extract_strided_slice %56 {offsets = [1, 0, 0], sizes = [1, 15, 32], strides = [1, 1, 1]} : vector<15x15x32xf32> to vector<1x15x32xf32>
    %60 = vector.shape_cast %59 : vector<1x15x32xf32> to vector<15x32xf32>
    %61 = arith.maximumf %58, %60 : vector<15x32xf32>
    %62 = vector.extract_strided_slice %56 {offsets = [2, 0, 0], sizes = [1, 15, 32], strides = [1, 1, 1]} : vector<15x15x32xf32> to vector<1x15x32xf32>
    %63 = vector.shape_cast %62 : vector<1x15x32xf32> to vector<15x32xf32>
    %64 = arith.maximumf %61, %63 : vector<15x32xf32>
    %65 = vector.extract_strided_slice %56 {offsets = [2, 0, 0], sizes = [1, 15, 32], strides = [1, 1, 1]} : vector<15x15x32xf32> to vector<1x15x32xf32>
    %66 = vector.shape_cast %65 : vector<1x15x32xf32> to vector<15x32xf32>
    %67 = vector.extract_strided_slice %56 {offsets = [3, 0, 0], sizes = [1, 15, 32], strides = [1, 1, 1]} : vector<15x15x32xf32> to vector<1x15x32xf32>
    %68 = vector.shape_cast %67 : vector<1x15x32xf32> to vector<15x32xf32>
    %69 = arith.maximumf %66, %68 : vector<15x32xf32>
    %70 = vector.extract_strided_slice %56 {offsets = [4, 0, 0], sizes = [1, 15, 32], strides = [1, 1, 1]} : vector<15x15x32xf32> to vector<1x15x32xf32>
    %71 = vector.shape_cast %70 : vector<1x15x32xf32> to vector<15x32xf32>
    %72 = arith.maximumf %69, %71 : vector<15x32xf32>
    %73 = vector.extract_strided_slice %56 {offsets = [4, 0, 0], sizes = [1, 15, 32], strides = [1, 1, 1]} : vector<15x15x32xf32> to vector<1x15x32xf32>
    %74 = vector.shape_cast %73 : vector<1x15x32xf32> to vector<15x32xf32>
    %75 = vector.extract_strided_slice %56 {offsets = [5, 0, 0], sizes = [1, 15, 32], strides = [1, 1, 1]} : vector<15x15x32xf32> to vector<1x15x32xf32>
    %76 = vector.shape_cast %75 : vector<1x15x32xf32> to vector<15x32xf32>
    %77 = arith.maximumf %74, %76 : vector<15x32xf32>
    %78 = vector.extract_strided_slice %56 {offsets = [6, 0, 0], sizes = [1, 15, 32], strides = [1, 1, 1]} : vector<15x15x32xf32> to vector<1x15x32xf32>
    %79 = vector.shape_cast %78 : vector<1x15x32xf32> to vector<15x32xf32>
    %80 = arith.maximumf %77, %79 : vector<15x32xf32>
    %81 = vector.extract_strided_slice %56 {offsets = [6, 0, 0], sizes = [1, 15, 32], strides = [1, 1, 1]} : vector<15x15x32xf32> to vector<1x15x32xf32>
    %82 = vector.shape_cast %81 : vector<1x15x32xf32> to vector<15x32xf32>
    %83 = vector.extract_strided_slice %56 {offsets = [7, 0, 0], sizes = [1, 15, 32], strides = [1, 1, 1]} : vector<15x15x32xf32> to vector<1x15x32xf32>
    %84 = vector.shape_cast %83 : vector<1x15x32xf32> to vector<15x32xf32>
    %85 = arith.maximumf %82, %84 : vector<15x32xf32>
    %86 = vector.extract_strided_slice %56 {offsets = [8, 0, 0], sizes = [1, 15, 32], strides = [1, 1, 1]} : vector<15x15x32xf32> to vector<1x15x32xf32>
    %87 = vector.shape_cast %86 : vector<1x15x32xf32> to vector<15x32xf32>
    %88 = arith.maximumf %85, %87 : vector<15x32xf32>
    %89 = vector.extract_strided_slice %56 {offsets = [8, 0, 0], sizes = [1, 15, 32], strides = [1, 1, 1]} : vector<15x15x32xf32> to vector<1x15x32xf32>
    %90 = vector.shape_cast %89 : vector<1x15x32xf32> to vector<15x32xf32>
    %91 = vector.extract_strided_slice %56 {offsets = [9, 0, 0], sizes = [1, 15, 32], strides = [1, 1, 1]} : vector<15x15x32xf32> to vector<1x15x32xf32>
    %92 = vector.shape_cast %91 : vector<1x15x32xf32> to vector<15x32xf32>
    %93 = arith.maximumf %90, %92 : vector<15x32xf32>
    %94 = vector.extract_strided_slice %56 {offsets = [10, 0, 0], sizes = [1, 15, 32], strides = [1, 1, 1]} : vector<15x15x32xf32> to vector<1x15x32xf32>
    %95 = vector.shape_cast %94 : vector<1x15x32xf32> to vector<15x32xf32>
    %96 = arith.maximumf %93, %95 : vector<15x32xf32>
    %97 = vector.extract_strided_slice %56 {offsets = [10, 0, 0], sizes = [1, 15, 32], strides = [1, 1, 1]} : vector<15x15x32xf32> to vector<1x15x32xf32>
    %98 = vector.shape_cast %97 : vector<1x15x32xf32> to vector<15x32xf32>
    %99 = vector.extract_strided_slice %56 {offsets = [11, 0, 0], sizes = [1, 15, 32], strides = [1, 1, 1]} : vector<15x15x32xf32> to vector<1x15x32xf32>
    %100 = vector.shape_cast %99 : vector<1x15x32xf32> to vector<15x32xf32>
    %101 = arith.maximumf %98, %100 : vector<15x32xf32>
    %102 = vector.extract_strided_slice %56 {offsets = [12, 0, 0], sizes = [1, 15, 32], strides = [1, 1, 1]} : vector<15x15x32xf32> to vector<1x15x32xf32>
    %103 = vector.shape_cast %102 : vector<1x15x32xf32> to vector<15x32xf32>
    %104 = arith.maximumf %101, %103 : vector<15x32xf32>
    %105 = vector.extract_strided_slice %56 {offsets = [12, 0, 0], sizes = [1, 15, 32], strides = [1, 1, 1]} : vector<15x15x32xf32> to vector<1x15x32xf32>
    %106 = vector.shape_cast %105 : vector<1x15x32xf32> to vector<15x32xf32>
    %107 = vector.extract_strided_slice %56 {offsets = [13, 0, 0], sizes = [1, 15, 32], strides = [1, 1, 1]} : vector<15x15x32xf32> to vector<1x15x32xf32>
    %108 = vector.shape_cast %107 : vector<1x15x32xf32> to vector<15x32xf32>
    %109 = arith.maximumf %106, %108 : vector<15x32xf32>
    %110 = vector.extract_strided_slice %56 {offsets = [14, 0, 0], sizes = [1, 15, 32], strides = [1, 1, 1]} : vector<15x15x32xf32> to vector<1x15x32xf32>
    %111 = vector.shape_cast %110 : vector<1x15x32xf32> to vector<15x32xf32>
    %112 = arith.maximumf %109, %111 : vector<15x32xf32>
    %113 = vector.shape_cast %64 : vector<15x32xf32> to vector<1x15x32xf32>
    %114 = vector.shape_cast %72 : vector<15x32xf32> to vector<1x15x32xf32>
    %115 = vector.shape_cast %80 : vector<15x32xf32> to vector<1x15x32xf32>
    %116 = vector.shape_cast %88 : vector<15x32xf32> to vector<1x15x32xf32>
    %117 = vector.shape_cast %96 : vector<15x32xf32> to vector<1x15x32xf32>
    %118 = vector.shape_cast %104 : vector<15x32xf32> to vector<1x15x32xf32>
    %119 = vector.shape_cast %112 : vector<15x32xf32> to vector<1x15x32xf32>
    %120 = tpu.concatenate %113, %114, %115, %116, %117, %118, %119 in 0 : vector<1x15x32xf32>, vector<1x15x32xf32>, vector<1x15x32xf32>, vector<1x15x32xf32>, vector<1x15x32xf32>, vector<1x15x32xf32>, vector<1x15x32xf32> -> vector<7x15x32xf32>
    %121 = vector.extract_strided_slice %120 {offsets = [0, 0, 0], sizes = [7, 13, 32], strides = [1, 1, 1]} : vector<7x15x32xf32> to vector<7x13x32xf32>
    %122 = vector.extract_strided_slice %120 {offsets = [0, 1, 0], sizes = [7, 13, 32], strides = [1, 1, 1]} : vector<7x15x32xf32> to vector<7x13x32xf32>
    %123 = arith.maximumf %121, %122 : vector<7x13x32xf32>
    %124 = vector.extract_strided_slice %120 {offsets = [0, 2, 0], sizes = [7, 13, 32], strides = [1, 1, 1]} : vector<7x15x32xf32> to vector<7x13x32xf32>
    %125 = arith.maximumf %123, %124 : vector<7x13x32xf32>
    %126 = vector.extract_strided_slice %125 {offsets = [0, 0, 0], sizes = [7, 1, 32], strides = [1, 1, 1]} : vector<7x13x32xf32> to vector<7x1x32xf32>
    %127 = vector.extract_strided_slice %125 {offsets = [0, 2, 0], sizes = [7, 1, 32], strides = [1, 1, 1]} : vector<7x13x32xf32> to vector<7x1x32xf32>
    %128 = vector.extract_strided_slice %125 {offsets = [0, 4, 0], sizes = [7, 1, 32], strides = [1, 1, 1]} : vector<7x13x32xf32> to vector<7x1x32xf32>
    %129 = vector.extract_strided_slice %125 {offsets = [0, 6, 0], sizes = [7, 1, 32], strides = [1, 1, 1]} : vector<7x13x32xf32> to vector<7x1x32xf32>
    %130 = vector.extract_strided_slice %125 {offsets = [0, 8, 0], sizes = [7, 1, 32], strides = [1, 1, 1]} : vector<7x13x32xf32> to vector<7x1x32xf32>
    %131 = vector.extract_strided_slice %125 {offsets = [0, 10, 0], sizes = [7, 1, 32], strides = [1, 1, 1]} : vector<7x13x32xf32> to vector<7x1x32xf32>
    %132 = vector.extract_strided_slice %125 {offsets = [0, 12, 0], sizes = [7, 1, 32], strides = [1, 1, 1]} : vector<7x13x32xf32> to vector<7x1x32xf32>
    %133 = tpu.concatenate %126, %127, %128, %129, %130, %131, %132 in 1 : vector<7x1x32xf32>, vector<7x1x32xf32>, vector<7x1x32xf32>, vector<7x1x32xf32>, vector<7x1x32xf32>, vector<7x1x32xf32>, vector<7x1x32xf32> -> vector<7x7x32xf32>
    %134 = arith.truncf %133 : vector<7x7x32xf32> to vector<7x7x32xbf16>
    %c0_34 = arith.constant 0 : index
    %c0_35 = arith.constant 0 : index
    %c0_36 = arith.constant 0 : index
    %c0_37 = arith.constant 0 : index
    %135 = vector.load %arg4[%c0_34, %c0_35, %c0_36, %c0_37] : memref<1x7x7x32xbf16, #tpu.memory_space<vmem>>, vector<1x7x7x32xbf16>
    %136 = vector.shape_cast %135 : vector<1x7x7x32xbf16> to vector<7x7x32xbf16>
    %137 = vector.shape_cast %134 : vector<7x7x32xbf16> to vector<1x7x7x32xbf16>
    tpu.vector_store %arg4[%c0_34, %c0_35, %c0_36, %c0_37], %137 {strides = array<i32>} : memref<1x7x7x32xbf16, #tpu.memory_space<vmem>>, vector<1x7x7x32xbf16>,
    return
  }
  func.func @transform_0(%arg0: i32) -> (i32, i32, i32) {
    %c0_i32 = arith.constant 0 : i32
    %c0_i32_0 = arith.constant 0 : i32
    %c0_i32_1 = arith.constant 0 : i32
    return %arg0, %c0_i32, %c0_i32_0 : i32, i32, i32
  }
  func.func @transform_1(%arg0: i32) -> (i32, i32, i32) {
    %c0_i32 = arith.constant 0 : i32
    %c0_i32_0 = arith.constant 0 : i32
    %c0_i32_1 = arith.constant 0 : i32
    %c0_i32_2 = arith.constant 0 : i32
    return %c0_i32, %c0_i32_0, %c0_i32_1 : i32, i32, i32
  }
  func.func @transform_2(%arg0: i32) -> (i32, i32) {
    %c0_i32 = arith.constant 0 : i32
    %c0_i32_0 = arith.constant 0 : i32
    %c0_i32_1 = arith.constant 0 : i32
    return %c0_i32, %c0_i32_0 : i32, i32
  }
  func.func @transform_3(%arg0: i32) -> (i32, i32, i32, i32) {
    %c0_i32 = arith.constant 0 : i32
    %c0_i32_0 = arith.constant 0 : i32
    %c0_i32_1 = arith.constant 0 : i32
    %c0_i32_2 = arith.constant 0 : i32
    return %arg0, %c0_i32, %c0_i32_0, %c0_i32_1 : i32, i32, i32, i32
  }
}

module attributes {stable_mosaic.version = 11 : i64} {
  func.func @_conv_block_kernel(%arg0: i32, %arg1: memref<1x83x32xbf16, #tpu.memory_space<vmem>>, %arg2: memref<9x32x256xbf16, #tpu.memory_space<vmem>>, %arg3: memref<1x256xf32, #tpu.memory_space<vmem>>, %arg4: memref<1x4x4x256xbf16, #tpu.memory_space<vmem>>) attributes {dimension_semantics = [#tpu.dimension_semantics<parallel>], iteration_bounds = array<i64: 2>, scalar_prefetch = 0 : i64, scratch_operands = 0 : i64, tpu.core_type = #tpu.core_type<tc>, window_params = [{transform_indices = @transform_0, window_bounds = array<i64: 1, 83, 32>}, {pipeline_mode = #tpu.pipeline_mode<synchronous>, transform_indices = @transform_1, window_bounds = array<i64: 9, 32, 256>}, {pipeline_mode = #tpu.pipeline_mode<synchronous>, transform_indices = @transform_2, window_bounds = array<i64: 1, 256>}, {transform_indices = @transform_3, window_bounds = array<i64: 1, 4, 4, 256>}]} {
    %c0 = arith.constant 0 : index
    %c0_0 = arith.constant 0 : index
    %c0_1 = arith.constant 0 : index
    %0 = vector.load %arg1[%c0, %c0_0, %c0_1] : memref<1x83x32xbf16, #tpu.memory_space<vmem>>, vector<1x83x32xbf16>
    %1 = vector.shape_cast %0 : vector<1x83x32xbf16> to vector<83x32xbf16>
    %2 = vector.extract_strided_slice %1 {offsets = [0, 0], sizes = [63, 32], strides = [1, 1]} : vector<83x32xbf16> to vector<63x32xbf16>
    %c0_2 = arith.constant 0 : index
    %c0_3 = arith.constant 0 : index
    %c0_4 = arith.constant 0 : index
    %3 = vector.load %arg2[%c0_2, %c0_3, %c0_4] : memref<9x32x256xbf16, #tpu.memory_space<vmem>>, vector<1x32x256xbf16>
    %4 = vector.shape_cast %3 : vector<1x32x256xbf16> to vector<32x256xbf16>
    %cst = arith.constant dense<0.000000e+00> : vector<63x256xf32>
    %5 = tpu.matmul %2, %4, %cst {dimension_numbers = #tpu.dot_dimension_numbers<[1], [0], [0], [1], [0, 0, 1, 1], [], []>} : vector<63x32xbf16>, vector<32x256xbf16>, vector<63x256xf32> -> vector<63x256xf32>
    %6 = vector.extract_strided_slice %1 {offsets = [1, 0], sizes = [63, 32], strides = [1, 1]} : vector<83x32xbf16> to vector<63x32xbf16>
    %c1 = arith.constant 1 : index
    %c0_5 = arith.constant 0 : index
    %c0_6 = arith.constant 0 : index
    %7 = vector.load %arg2[%c1, %c0_5, %c0_6] : memref<9x32x256xbf16, #tpu.memory_space<vmem>>, vector<1x32x256xbf16>
    %8 = vector.shape_cast %7 : vector<1x32x256xbf16> to vector<32x256xbf16>
    %cst_7 = arith.constant dense<0.000000e+00> : vector<63x256xf32>
    %9 = tpu.matmul %6, %8, %cst_7 {dimension_numbers = #tpu.dot_dimension_numbers<[1], [0], [0], [1], [0, 0, 1, 1], [], []>} : vector<63x32xbf16>, vector<32x256xbf16>, vector<63x256xf32> -> vector<63x256xf32>
    %10 = arith.addf %5, %9 : vector<63x256xf32>
    %11 = vector.extract_strided_slice %1 {offsets = [2, 0], sizes = [63, 32], strides = [1, 1]} : vector<83x32xbf16> to vector<63x32xbf16>
    %c2 = arith.constant 2 : index
    %c0_8 = arith.constant 0 : index
    %c0_9 = arith.constant 0 : index
    %12 = vector.load %arg2[%c2, %c0_8, %c0_9] : memref<9x32x256xbf16, #tpu.memory_space<vmem>>, vector<1x32x256xbf16>
    %13 = vector.shape_cast %12 : vector<1x32x256xbf16> to vector<32x256xbf16>
    %cst_10 = arith.constant dense<0.000000e+00> : vector<63x256xf32>
    %14 = tpu.matmul %11, %13, %cst_10 {dimension_numbers = #tpu.dot_dimension_numbers<[1], [0], [0], [1], [0, 0, 1, 1], [], []>} : vector<63x32xbf16>, vector<32x256xbf16>, vector<63x256xf32> -> vector<63x256xf32>
    %15 = arith.addf %10, %14 : vector<63x256xf32>
    %16 = vector.extract_strided_slice %1 {offsets = [9, 0], sizes = [63, 32], strides = [1, 1]} : vector<83x32xbf16> to vector<63x32xbf16>
    %c3 = arith.constant 3 : index
    %c0_11 = arith.constant 0 : index
    %c0_12 = arith.constant 0 : index
    %17 = vector.load %arg2[%c3, %c0_11, %c0_12] : memref<9x32x256xbf16, #tpu.memory_space<vmem>>, vector<1x32x256xbf16>
    %18 = vector.shape_cast %17 : vector<1x32x256xbf16> to vector<32x256xbf16>
    %cst_13 = arith.constant dense<0.000000e+00> : vector<63x256xf32>
    %19 = tpu.matmul %16, %18, %cst_13 {dimension_numbers = #tpu.dot_dimension_numbers<[1], [0], [0], [1], [0, 0, 1, 1], [], []>} : vector<63x32xbf16>, vector<32x256xbf16>, vector<63x256xf32> -> vector<63x256xf32>
    %20 = arith.addf %15, %19 : vector<63x256xf32>
    %21 = vector.extract_strided_slice %1 {offsets = [10, 0], sizes = [63, 32], strides = [1, 1]} : vector<83x32xbf16> to vector<63x32xbf16>
    %c4 = arith.constant 4 : index
    %c0_14 = arith.constant 0 : index
    %c0_15 = arith.constant 0 : index
    %22 = vector.load %arg2[%c4, %c0_14, %c0_15] : memref<9x32x256xbf16, #tpu.memory_space<vmem>>, vector<1x32x256xbf16>
    %23 = vector.shape_cast %22 : vector<1x32x256xbf16> to vector<32x256xbf16>
    %cst_16 = arith.constant dense<0.000000e+00> : vector<63x256xf32>
    %24 = tpu.matmul %21, %23, %cst_16 {dimension_numbers = #tpu.dot_dimension_numbers<[1], [0], [0], [1], [0, 0, 1, 1], [], []>} : vector<63x32xbf16>, vector<32x256xbf16>, vector<63x256xf32> -> vector<63x256xf32>
    %25 = arith.addf %20, %24 : vector<63x256xf32>
    %26 = vector.extract_strided_slice %1 {offsets = [11, 0], sizes = [63, 32], strides = [1, 1]} : vector<83x32xbf16> to vector<63x32xbf16>
    %c5 = arith.constant 5 : index
    %c0_17 = arith.constant 0 : index
    %c0_18 = arith.constant 0 : index
    %27 = vector.load %arg2[%c5, %c0_17, %c0_18] : memref<9x32x256xbf16, #tpu.memory_space<vmem>>, vector<1x32x256xbf16>
    %28 = vector.shape_cast %27 : vector<1x32x256xbf16> to vector<32x256xbf16>
    %cst_19 = arith.constant dense<0.000000e+00> : vector<63x256xf32>
    %29 = tpu.matmul %26, %28, %cst_19 {dimension_numbers = #tpu.dot_dimension_numbers<[1], [0], [0], [1], [0, 0, 1, 1], [], []>} : vector<63x32xbf16>, vector<32x256xbf16>, vector<63x256xf32> -> vector<63x256xf32>
    %30 = arith.addf %25, %29 : vector<63x256xf32>
    %31 = vector.extract_strided_slice %1 {offsets = [18, 0], sizes = [63, 32], strides = [1, 1]} : vector<83x32xbf16> to vector<63x32xbf16>
    %c6 = arith.constant 6 : index
    %c0_20 = arith.constant 0 : index
    %c0_21 = arith.constant 0 : index
    %32 = vector.load %arg2[%c6, %c0_20, %c0_21] : memref<9x32x256xbf16, #tpu.memory_space<vmem>>, vector<1x32x256xbf16>
    %33 = vector.shape_cast %32 : vector<1x32x256xbf16> to vector<32x256xbf16>
    %cst_22 = arith.constant dense<0.000000e+00> : vector<63x256xf32>
    %34 = tpu.matmul %31, %33, %cst_22 {dimension_numbers = #tpu.dot_dimension_numbers<[1], [0], [0], [1], [0, 0, 1, 1], [], []>} : vector<63x32xbf16>, vector<32x256xbf16>, vector<63x256xf32> -> vector<63x256xf32>
    %35 = arith.addf %30, %34 : vector<63x256xf32>
    %36 = vector.extract_strided_slice %1 {offsets = [19, 0], sizes = [63, 32], strides = [1, 1]} : vector<83x32xbf16> to vector<63x32xbf16>
    %c7 = arith.constant 7 : index
    %c0_23 = arith.constant 0 : index
    %c0_24 = arith.constant 0 : index
    %37 = vector.load %arg2[%c7, %c0_23, %c0_24] : memref<9x32x256xbf16, #tpu.memory_space<vmem>>, vector<1x32x256xbf16>
    %38 = vector.shape_cast %37 : vector<1x32x256xbf16> to vector<32x256xbf16>
    %cst_25 = arith.constant dense<0.000000e+00> : vector<63x256xf32>
    %39 = tpu.matmul %36, %38, %cst_25 {dimension_numbers = #tpu.dot_dimension_numbers<[1], [0], [0], [1], [0, 0, 1, 1], [], []>} : vector<63x32xbf16>, vector<32x256xbf16>, vector<63x256xf32> -> vector<63x256xf32>
    %40 = arith.addf %35, %39 : vector<63x256xf32>
    %41 = vector.extract_strided_slice %1 {offsets = [20, 0], sizes = [63, 32], strides = [1, 1]} : vector<83x32xbf16> to vector<63x32xbf16>
    %c8 = arith.constant 8 : index
    %c0_26 = arith.constant 0 : index
    %c0_27 = arith.constant 0 : index
    %42 = vector.load %arg2[%c8, %c0_26, %c0_27] : memref<9x32x256xbf16, #tpu.memory_space<vmem>>, vector<1x32x256xbf16>
    %43 = vector.shape_cast %42 : vector<1x32x256xbf16> to vector<32x256xbf16>
    %cst_28 = arith.constant dense<0.000000e+00> : vector<63x256xf32>
    %44 = tpu.matmul %41, %43, %cst_28 {dimension_numbers = #tpu.dot_dimension_numbers<[1], [0], [0], [1], [0, 0, 1, 1], [], []>} : vector<63x32xbf16>, vector<32x256xbf16>, vector<63x256xf32> -> vector<63x256xf32>
    %45 = arith.addf %40, %44 : vector<63x256xf32>
    %c0_29 = arith.constant 0 : index
    %c0_30 = arith.constant 0 : index
    %46 = vector.load %arg3[%c0_29, %c0_30] : memref<1x256xf32, #tpu.memory_space<vmem>>, vector<1x256xf32>
    %47 = vector.broadcast %46 : vector<1x256xf32> to vector<63x256xf32>
    %48 = arith.addf %45, %47 : vector<63x256xf32>
    %cst_31 = arith.constant 0.000000e+00 : f32
    %49 = vector.broadcast %cst_31 : f32 to vector<63x256xf32>
    %50 = arith.maximumf %48, %49 : vector<63x256xf32>
    %51 = vector.shape_cast %50 : vector<63x256xf32> to vector<7x9x256xf32>
    %52 = vector.extract_strided_slice %51 {offsets = [0, 0, 0], sizes = [7, 7, 256], strides = [1, 1, 1]} : vector<7x9x256xf32> to vector<7x7x256xf32>
    %cst_32 = arith.constant 0.000000e+00 : f32
    %53 = vector.broadcast %cst_32 : f32 to vector<1x7x256xf32>
    %cst_33 = arith.constant 0.000000e+00 : f32
    %54 = vector.broadcast %cst_33 : f32 to vector<9x1x256xf32>
    %55 = tpu.concatenate %53, %52, %53 in 0 : vector<1x7x256xf32>, vector<7x7x256xf32>, vector<1x7x256xf32> -> vector<9x7x256xf32>
    %56 = tpu.concatenate %54, %55, %54 in 1 : vector<9x1x256xf32>, vector<9x7x256xf32>, vector<9x1x256xf32> -> vector<9x9x256xf32>
    %57 = vector.extract_strided_slice %56 {offsets = [0, 0, 0], sizes = [1, 9, 256], strides = [1, 1, 1]} : vector<9x9x256xf32> to vector<1x9x256xf32>
    %58 = vector.shape_cast %57 : vector<1x9x256xf32> to vector<9x256xf32>
    %59 = vector.extract_strided_slice %56 {offsets = [1, 0, 0], sizes = [1, 9, 256], strides = [1, 1, 1]} : vector<9x9x256xf32> to vector<1x9x256xf32>
    %60 = vector.shape_cast %59 : vector<1x9x256xf32> to vector<9x256xf32>
    %61 = arith.maximumf %58, %60 : vector<9x256xf32>
    %62 = vector.extract_strided_slice %56 {offsets = [2, 0, 0], sizes = [1, 9, 256], strides = [1, 1, 1]} : vector<9x9x256xf32> to vector<1x9x256xf32>
    %63 = vector.shape_cast %62 : vector<1x9x256xf32> to vector<9x256xf32>
    %64 = arith.maximumf %61, %63 : vector<9x256xf32>
    %65 = vector.extract_strided_slice %56 {offsets = [2, 0, 0], sizes = [1, 9, 256], strides = [1, 1, 1]} : vector<9x9x256xf32> to vector<1x9x256xf32>
    %66 = vector.shape_cast %65 : vector<1x9x256xf32> to vector<9x256xf32>
    %67 = vector.extract_strided_slice %56 {offsets = [3, 0, 0], sizes = [1, 9, 256], strides = [1, 1, 1]} : vector<9x9x256xf32> to vector<1x9x256xf32>
    %68 = vector.shape_cast %67 : vector<1x9x256xf32> to vector<9x256xf32>
    %69 = arith.maximumf %66, %68 : vector<9x256xf32>
    %70 = vector.extract_strided_slice %56 {offsets = [4, 0, 0], sizes = [1, 9, 256], strides = [1, 1, 1]} : vector<9x9x256xf32> to vector<1x9x256xf32>
    %71 = vector.shape_cast %70 : vector<1x9x256xf32> to vector<9x256xf32>
    %72 = arith.maximumf %69, %71 : vector<9x256xf32>
    %73 = vector.extract_strided_slice %56 {offsets = [4, 0, 0], sizes = [1, 9, 256], strides = [1, 1, 1]} : vector<9x9x256xf32> to vector<1x9x256xf32>
    %74 = vector.shape_cast %73 : vector<1x9x256xf32> to vector<9x256xf32>
    %75 = vector.extract_strided_slice %56 {offsets = [5, 0, 0], sizes = [1, 9, 256], strides = [1, 1, 1]} : vector<9x9x256xf32> to vector<1x9x256xf32>
    %76 = vector.shape_cast %75 : vector<1x9x256xf32> to vector<9x256xf32>
    %77 = arith.maximumf %74, %76 : vector<9x256xf32>
    %78 = vector.extract_strided_slice %56 {offsets = [6, 0, 0], sizes = [1, 9, 256], strides = [1, 1, 1]} : vector<9x9x256xf32> to vector<1x9x256xf32>
    %79 = vector.shape_cast %78 : vector<1x9x256xf32> to vector<9x256xf32>
    %80 = arith.maximumf %77, %79 : vector<9x256xf32>
    %81 = vector.extract_strided_slice %56 {offsets = [6, 0, 0], sizes = [1, 9, 256], strides = [1, 1, 1]} : vector<9x9x256xf32> to vector<1x9x256xf32>
    %82 = vector.shape_cast %81 : vector<1x9x256xf32> to vector<9x256xf32>
    %83 = vector.extract_strided_slice %56 {offsets = [7, 0, 0], sizes = [1, 9, 256], strides = [1, 1, 1]} : vector<9x9x256xf32> to vector<1x9x256xf32>
    %84 = vector.shape_cast %83 : vector<1x9x256xf32> to vector<9x256xf32>
    %85 = arith.maximumf %82, %84 : vector<9x256xf32>
    %86 = vector.extract_strided_slice %56 {offsets = [8, 0, 0], sizes = [1, 9, 256], strides = [1, 1, 1]} : vector<9x9x256xf32> to vector<1x9x256xf32>
    %87 = vector.shape_cast %86 : vector<1x9x256xf32> to vector<9x256xf32>
    %88 = arith.maximumf %85, %87 : vector<9x256xf32>
    %89 = vector.shape_cast %64 : vector<9x256xf32> to vector<1x9x256xf32>
    %90 = vector.shape_cast %72 : vector<9x256xf32> to vector<1x9x256xf32>
    %91 = vector.shape_cast %80 : vector<9x256xf32> to vector<1x9x256xf32>
    %92 = vector.shape_cast %88 : vector<9x256xf32> to vector<1x9x256xf32>
    %93 = tpu.concatenate %89, %90, %91, %92 in 0 : vector<1x9x256xf32>, vector<1x9x256xf32>, vector<1x9x256xf32>, vector<1x9x256xf32> -> vector<4x9x256xf32>
    %94 = vector.extract_strided_slice %93 {offsets = [0, 0, 0], sizes = [4, 7, 256], strides = [1, 1, 1]} : vector<4x9x256xf32> to vector<4x7x256xf32>
    %95 = vector.extract_strided_slice %93 {offsets = [0, 1, 0], sizes = [4, 7, 256], strides = [1, 1, 1]} : vector<4x9x256xf32> to vector<4x7x256xf32>
    %96 = arith.maximumf %94, %95 : vector<4x7x256xf32>
    %97 = vector.extract_strided_slice %93 {offsets = [0, 2, 0], sizes = [4, 7, 256], strides = [1, 1, 1]} : vector<4x9x256xf32> to vector<4x7x256xf32>
    %98 = arith.maximumf %96, %97 : vector<4x7x256xf32>
    %99 = vector.extract_strided_slice %98 {offsets = [0, 0, 0], sizes = [4, 1, 256], strides = [1, 1, 1]} : vector<4x7x256xf32> to vector<4x1x256xf32>
    %100 = vector.extract_strided_slice %98 {offsets = [0, 2, 0], sizes = [4, 1, 256], strides = [1, 1, 1]} : vector<4x7x256xf32> to vector<4x1x256xf32>
    %101 = vector.extract_strided_slice %98 {offsets = [0, 4, 0], sizes = [4, 1, 256], strides = [1, 1, 1]} : vector<4x7x256xf32> to vector<4x1x256xf32>
    %102 = vector.extract_strided_slice %98 {offsets = [0, 6, 0], sizes = [4, 1, 256], strides = [1, 1, 1]} : vector<4x7x256xf32> to vector<4x1x256xf32>
    %103 = tpu.concatenate %99, %100, %101, %102 in 1 : vector<4x1x256xf32>, vector<4x1x256xf32>, vector<4x1x256xf32>, vector<4x1x256xf32> -> vector<4x4x256xf32>
    %104 = arith.truncf %103 : vector<4x4x256xf32> to vector<4x4x256xbf16>
    %c0_34 = arith.constant 0 : index
    %c0_35 = arith.constant 0 : index
    %c0_36 = arith.constant 0 : index
    %c0_37 = arith.constant 0 : index
    %105 = vector.load %arg4[%c0_34, %c0_35, %c0_36, %c0_37] : memref<1x4x4x256xbf16, #tpu.memory_space<vmem>>, vector<1x4x4x256xbf16>
    %106 = vector.shape_cast %105 : vector<1x4x4x256xbf16> to vector<4x4x256xbf16>
    %107 = vector.shape_cast %104 : vector<4x4x256xbf16> to vector<1x4x4x256xbf16>
    tpu.vector_store %arg4[%c0_34, %c0_35, %c0_36, %c0_37], %107 {strides = array<i32>} : memref<1x4x4x256xbf16, #tpu.memory_space<vmem>>, vector<1x4x4x256xbf16>,
    return
  }
  func.func @transform_0(%arg0: i32) -> (i32, i32, i32) {
    %c0_i32 = arith.constant 0 : i32
    %c0_i32_0 = arith.constant 0 : i32
    %c0_i32_1 = arith.constant 0 : i32
    return %arg0, %c0_i32, %c0_i32_0 : i32, i32, i32
  }
  func.func @transform_1(%arg0: i32) -> (i32, i32, i32) {
    %c0_i32 = arith.constant 0 : i32
    %c0_i32_0 = arith.constant 0 : i32
    %c0_i32_1 = arith.constant 0 : i32
    %c0_i32_2 = arith.constant 0 : i32
    return %c0_i32, %c0_i32_0, %c0_i32_1 : i32, i32, i32
  }
  func.func @transform_2(%arg0: i32) -> (i32, i32) {
    %c0_i32 = arith.constant 0 : i32
    %c0_i32_0 = arith.constant 0 : i32
    %c0_i32_1 = arith.constant 0 : i32
    return %c0_i32, %c0_i32_0 : i32, i32
  }
  func.func @transform_3(%arg0: i32) -> (i32, i32, i32, i32) {
    %c0_i32 = arith.constant 0 : i32
    %c0_i32_0 = arith.constant 0 : i32
    %c0_i32_1 = arith.constant 0 : i32
    %c0_i32_2 = arith.constant 0 : i32
    return %arg0, %c0_i32, %c0_i32_0, %c0_i32_1 : i32, i32, i32, i32
  }
}

module attributes {stable_mosaic.version = 11 : i64} {
  func.func @_classifier_kernel(%arg0: i32, %arg1: memref<2x4096xbf16, #tpu.memory_space<vmem>>, %arg2: memref<4096x128xbf16, #tpu.memory_space<vmem>>, %arg3: memref<1x128xf32, #tpu.memory_space<vmem>>, %arg4: memref<128x128xbf16, #tpu.memory_space<vmem>>, %arg5: memref<1x128xf32, #tpu.memory_space<vmem>>, %arg6: memref<2x128xf32, #tpu.memory_space<vmem>>) attributes {dimension_semantics = [#tpu.dimension_semantics<parallel>], iteration_bounds = array<i64: 1>, scalar_prefetch = 0 : i64, scratch_operands = 0 : i64, tpu.core_type = #tpu.core_type<tc>, window_params = [{transform_indices = @transform_0, window_bounds = array<i64: 2, 4096>}, {pipeline_mode = #tpu.pipeline_mode<synchronous>, transform_indices = @transform_1, window_bounds = array<i64: 4096, 128>}, {pipeline_mode = #tpu.pipeline_mode<synchronous>, transform_indices = @transform_2, window_bounds = array<i64: 1, 128>}, {pipeline_mode = #tpu.pipeline_mode<synchronous>, transform_indices = @transform_3, window_bounds = array<i64: 128, 128>}, {pipeline_mode = #tpu.pipeline_mode<synchronous>, transform_indices = @transform_4, window_bounds = array<i64: 1, 128>}, {transform_indices = @transform_5, window_bounds = array<i64: 2, 128>}]} {
    %c0 = arith.constant 0 : index
    %c0_0 = arith.constant 0 : index
    %0 = vector.load %arg1[%c0, %c0_0] : memref<2x4096xbf16, #tpu.memory_space<vmem>>, vector<2x4096xbf16>
    %c0_1 = arith.constant 0 : index
    %c0_2 = arith.constant 0 : index
    %1 = vector.load %arg2[%c0_1, %c0_2] : memref<4096x128xbf16, #tpu.memory_space<vmem>>, vector<4096x128xbf16>
    %cst = arith.constant dense<0.000000e+00> : vector<2x128xf32>
    %2 = tpu.matmul %0, %1, %cst {dimension_numbers = #tpu.dot_dimension_numbers<[1], [0], [0], [1], [0, 0, 1, 1], [], []>} : vector<2x4096xbf16>, vector<4096x128xbf16>, vector<2x128xf32> -> vector<2x128xf32>
    %c0_3 = arith.constant 0 : index
    %c0_4 = arith.constant 0 : index
    %3 = vector.load %arg3[%c0_3, %c0_4] : memref<1x128xf32, #tpu.memory_space<vmem>>, vector<1x128xf32>
    %4 = vector.broadcast %3 : vector<1x128xf32> to vector<2x128xf32>
    %5 = arith.addf %2, %4 : vector<2x128xf32>
    %cst_5 = arith.constant 0.000000e+00 : f32
    %6 = vector.broadcast %cst_5 : f32 to vector<2x128xf32>
    %7 = arith.maximumf %5, %6 : vector<2x128xf32>
    %8 = arith.truncf %7 : vector<2x128xf32> to vector<2x128xbf16>
    %c0_6 = arith.constant 0 : index
    %c0_7 = arith.constant 0 : index
    %9 = vector.load %arg4[%c0_6, %c0_7] : memref<128x128xbf16, #tpu.memory_space<vmem>>, vector<128x128xbf16>
    %cst_8 = arith.constant dense<0.000000e+00> : vector<2x128xf32>
    %10 = tpu.matmul %8, %9, %cst_8 {dimension_numbers = #tpu.dot_dimension_numbers<[1], [0], [0], [1], [0, 0, 1, 1], [], []>} : vector<2x128xbf16>, vector<128x128xbf16>, vector<2x128xf32> -> vector<2x128xf32>
    %c0_9 = arith.constant 0 : index
    %c0_10 = arith.constant 0 : index
    %11 = vector.load %arg5[%c0_9, %c0_10] : memref<1x128xf32, #tpu.memory_space<vmem>>, vector<1x128xf32>
    %12 = vector.broadcast %11 : vector<1x128xf32> to vector<2x128xf32>
    %13 = arith.addf %10, %12 : vector<2x128xf32>
    %c0_11 = arith.constant 0 : index
    %c0_12 = arith.constant 0 : index
    %14 = vector.load %arg6[%c0_11, %c0_12] : memref<2x128xf32, #tpu.memory_space<vmem>>, vector<2x128xf32>
    tpu.vector_store %arg6[%c0_11, %c0_12], %13 {strides = array<i32>} : memref<2x128xf32, #tpu.memory_space<vmem>>, vector<2x128xf32>,
    return
  }
  func.func @transform_0(%arg0: i32) -> (i32, i32) {
    %c0_i32 = arith.constant 0 : i32
    %c0_i32_0 = arith.constant 0 : i32
    return %arg0, %c0_i32 : i32, i32
  }
  func.func @transform_1(%arg0: i32) -> (i32, i32) {
    %c0_i32 = arith.constant 0 : i32
    %c0_i32_0 = arith.constant 0 : i32
    %c0_i32_1 = arith.constant 0 : i32
    return %c0_i32, %c0_i32_0 : i32, i32
  }
  func.func @transform_2(%arg0: i32) -> (i32, i32) {
    %c0_i32 = arith.constant 0 : i32
    %c0_i32_0 = arith.constant 0 : i32
    %c0_i32_1 = arith.constant 0 : i32
    return %c0_i32, %c0_i32_0 : i32, i32
  }
  func.func @transform_3(%arg0: i32) -> (i32, i32) {
    %c0_i32 = arith.constant 0 : i32
    %c0_i32_0 = arith.constant 0 : i32
    %c0_i32_1 = arith.constant 0 : i32
    return %c0_i32, %c0_i32_0 : i32, i32
  }
  func.func @transform_4(%arg0: i32) -> (i32, i32) {
    %c0_i32 = arith.constant 0 : i32
    %c0_i32_0 = arith.constant 0 : i32
    %c0_i32_1 = arith.constant 0 : i32
    return %c0_i32, %c0_i32_0 : i32, i32
  }
  func.func @transform_5(%arg0: i32) -> (i32, i32) {
    %c0_i32 = arith.constant 0 : i32
    %c0_i32_0 = arith.constant 0 : i32
    return %arg0, %c0_i32 : i32, i32
  }
}

</mosaic_0001>

<llo_original>
// kernel: corelnet_forward.4
$region0: #{corelnet_forward.4}
  #allocation0 [shape = 'u32[]', space=smem, size = 0x4, offset = 0x4, fixed_abs, tag = 'smem constant byte address 0x4 - core index']
  #allocation1 [shape = 'u32[72,128]{1,0:T(1,128)}', space=vmem, size = 0x9000, scoped, tag = 'internal scratch']
  %s0 = inlined_call_operand.vmem [shape: bf16[2,83,32], index: 0, kind: input, shape index: {}]
  %s1 = inlined_call_operand.vmem [shape: bf16[9,32,256], index: 1, kind: input, shape index: {}]
  %s2 = inlined_call_operand.vmem [shape: f32[1,256], index: 2, kind: input, shape index: {}]
  %s3 = inlined_call_operand.vmem [shape: bf16[2,4,4,256], index: 3, kind: output, shape index: {}]
  %s4 = sld [smem:[#allocation0]]
  $region45: #{corelnet_forward.4} parent=0
    _
  %s6 = ssub.s32 1, %s4
  %s7 = scalar_select 0, %s6, %s4
  loop: start=0, step=1, limit=4
  $region2: #{corelnet_forward.4} parent=0 // loop_pre_header
    _
  $region3: #{corelnet_forward.4} parent=0 // loop_header
    %s9 = sphi 0, %s13
    %p10 = scmp.ge.s32.totalorder %s9, 4
    %s19 = sphi 0, %s21
    %s22 = sphi 0, %s19
    %s23 = sphi 0, %s22
    %s39 = sphi 0, %s23
    %s43 = sphi 0, %s43
    %s45 = sphi 0, %s43
    %s46 = sphi 0, %s45
    %s60 = sphi 0, %s46
    %s64 = sphi 0, %s64
    %s66 = sphi 0, %s64
    %s67 = sphi 0, %s66
    %s81 = sphi 0, %s67
    %s87 = sphi 0, %s89
    %s90 = sphi 0, %s87
    %s91 = sphi 0, %s90
    %s107 = sphi 0, %s91
  $region4: #{corelnet_forward.4} parent=0 // loop_header_branch
    %12 = sbr.rel (%p10) target = $region8
  $region5: #{corelnet_forward.4} parent=0 // loop_body
    %s14 = ssub.s32 %s9, 1
    %s15 = ssub.s32 %s9, 2
    %s16 = sadd.s32 %s9, 1
    %s17 = ssub.s32 %s9, %s16
    %p18 = scmp.eq.s32.totalorder %s17, 0
    %s20 = sadd.s32 %s19, 1
    %s21 = scalar_select %p18, %s19, %s20
    %p24 = pneg %p18
    %p25 = scmp.eq.s32.totalorder %s9, 1
    %p26 = por %p24, %p25
    %p27 = scmp.ne.s32.totalorder %s19, %s22
    %p28 = scmp.eq.s32.totalorder %s9, 0
    %p29 = por %p27, %p28
    %p30 = scmp.ne.s32.totalorder %s19, %s22
    %p31 = scmp.eq.s32.totalorder %s14, 1
    %p32 = por %p30, %p31
    %p33 = scmp.ne.s32.totalorder %s22, %s23
    %p34 = scmp.eq.s32.totalorder %s14, 0
    %p35 = por %p33, %p34
    %p36 = scmp.ne.s32.totalorder %s22, %s23
    %p37 = scmp.eq.s32.totalorder %s15, 1
    %p38 = por %p36, %p37
    %p40 = scmp.ne.s32.totalorder %s23, %s39
    %p41 = scmp.eq.s32.totalorder %s15, 0
    %p42 = por %p40, %p41
    %s44 = sadd.s32 %s43, 1
    %p47 = scmp.eq.s32.totalorder %s9, 1
    %p48 = scmp.ne.s32.totalorder %s43, %s45
    %p49 = scmp.eq.s32.totalorder %s9, 0
    %p50 = por %p48, %p49
    %p51 = scmp.ne.s32.totalorder %s43, %s45
    %p52 = scmp.eq.s32.totalorder %s14, 1
    %p53 = por %p51, %p52
    %p54 = scmp.ne.s32.totalorder %s45, %s46
    %p55 = scmp.eq.s32.totalorder %s14, 0
    %p56 = por %p54, %p55
    %p57 = scmp.ne.s32.totalorder %s45, %s46
    %p58 = scmp.eq.s32.totalorder %s15, 1
    %p59 = por %p57, %p58
    %p61 = scmp.ne.s32.totalorder %s46, %s60
    %p62 = scmp.eq.s32.totalorder %s15, 0
    %p63 = por %p61, %p62
    %s65 = sadd.s32 %s64, 1
    %p68 = scmp.eq.s32.totalorder %s9, 1
    %p69 = scmp.ne.s32.totalorder %s64, %s66
    %p70 = scmp.eq.s32.totalorder %s9, 0
    %p71 = por %p69, %p70
    %p72 = scmp.ne.s32.totalorder %s64, %s66
    %p73 = scmp.eq.s32.totalorder %s14, 1
    %p74 = por %p72, %p73
    %p75 = scmp.ne.s32.totalorder %s66, %s67
    %p76 = scmp.eq.s32.totalorder %s14, 0
    %p77 = por %p75, %p76
    %p78 = scmp.ne.s32.totalorder %s66, %s67
    %p79 = scmp.eq.s32.totalorder %s15, 1
    %p80 = por %p78, %p79
    %p82 = scmp.ne.s32.totalorder %s67, %s81
    %p83 = scmp.eq.s32.totalorder %s15, 0
    %p84 = por %p82, %p83
    %s85 = ssub.s32 %s9, %s16
    %p86 = scmp.eq.s32.totalorder %s85, 0
    %s88 = sadd.s32 %s87, 1
    %s89 = scalar_select %p86, %s87, %s88
    %p92 = pneg %p86
    %p93 = scmp.eq.s32.totalorder %s9, 1
    %p94 = por %p92, %p93
    %p95 = scmp.ne.s32.totalorder %s87, %s90
    %p96 = scmp.eq.s32.totalorder %s9, 0
    %p97 = por %p95, %p96
    %p98 = scmp.ne.s32.totalorder %s87, %s90
    %p99 = scmp.eq.s32.totalorder %s14, 1
    %p100 = por %p98, %p99
    %p101 = scmp.ne.s32.totalorder %s90, %s91
    %p102 = scmp.eq.s32.totalorder %s14, 0
    %p103 = por %p101, %p102
    %p104 = scmp.ne.s32.totalorder %s90, %s91
    %p105 = scmp.eq.s32.totalorder %s15, 1
    %p106 = por %p104, %p105
    %p108 = scmp.ne.s32.totalorder %s91, %s107
    %p109 = scmp.eq.s32.totalorder %s15, 0
    %p110 = por %p108, %p109
    %p111 = scmp.le.s32.totalorder 1, %s9
    %p112 = scmp.lt.s32.totalorder %s9, 3
    %p113 = pnand %p111, %p112
    %p114 = pneg %p113
    // Predicated region
    $region9: #{corelnet_forward.4} parent=5 // pred_check
      _
    $region10: #{corelnet_forward.4} parent=5 // pred_check_branch
      %116 = sbr.rel (%p113) target = $region12
    $region11: #{corelnet_forward.4} parent=5 // pred_region
      %s117 = ssub.s32 %s9, 1
      // Predicated region
      $region13: #{corelnet_forward.4} parent=11 // pred_check
        %p118 = pneg %p56
      $region14: #{corelnet_forward.4} parent=11 // pred_check_branch
        %120 = sbr.rel (%p118) target = $region16
      $region15: #{corelnet_forward.4} parent=11 // pred_region
        _
      $region16: #{corelnet_forward.4} parent=11 // pred_fallthru
        _
      // Predicated region
      $region17: #{corelnet_forward.4} parent=11 // pred_check
        %p121 = pneg %p77
      $region18: #{corelnet_forward.4} parent=11 // pred_check_branch
        %123 = sbr.rel (%p121) target = $region20
      $region19: #{corelnet_forward.4} parent=11 // pred_region
        _
      $region20: #{corelnet_forward.4} parent=11 // pred_fallthru
        _
    $region12: #{corelnet_forward.4} parent=5 // pred_fallthru
      _
    %p124 = scmp.lt.s32.totalorder %s9, 2
    // Predicated region
    $region21: #{corelnet_forward.4} parent=5 // pred_check
      %p125 = pneg %p124
    $region22: #{corelnet_forward.4} parent=5 // pred_check_branch
      %127 = sbr.rel (%p125) target = $region24
    $region23: #{corelnet_forward.4} parent=5 // pred_region
      // Predicated region
      $region25: #{corelnet_forward.4} parent=23 // pred_check
        %p128 = pneg %p29
      $region26: #{corelnet_forward.4} parent=23 // pred_check_branch
        %130 = sbr.rel (%p128) target = $region28
      $region27: #{corelnet_forward.4} parent=23 // pred_region
        %p131 = scmp.lt.s32.totalorder %s9, 1
        %s132 = scalar_select %p131, %s9, 1
        %s133 = smul.addr %s132, 11
        %s134 = smul.addr %s133, 4
        %s135 = scalar_lea.vmem %s0, %s134
      $region28: #{corelnet_forward.4} parent=23 // pred_fallthru
        _
    $region24: #{corelnet_forward.4} parent=5 // pred_fallthru
      _
    %p136 = scmp.le.s32.totalorder 1, %s9
    %p137 = scmp.lt.s32.totalorder %s9, 3
    %p138 = pnand %p136, %p137
    %p139 = pneg %p138
    // Predicated region
    $region29: #{corelnet_forward.4} parent=5 // pred_check
      _
    $region30: #{corelnet_forward.4} parent=5 // pred_check_branch
      %141 = sbr.rel (%p138) target = $region32
    $region31: #{corelnet_forward.4} parent=5 // pred_region
      %s142 = ssub.s32 %s9, 1
      %p143 = scmp.lt.s32.totalorder %s14, 1
      %s144 = scalar_select %p143, %s14, 1
      %s145 = smul.addr %s144, 11
      %s146 = smul.addr %s145, 4
      %s147 = scalar_lea.vmem %s0, %s146
      %p148 = pneg %p35
      %p149 = pneg %p32
      %p150 = pneg %p56
      %p151 = pneg %p53
      %p152 = pneg %p77
      %p153 = pneg %p74
      %p154 = pneg %p103
      %p155 = pneg %p100
      %p156 = scmp.lt.s32.totalorder %s14, 1
      %s157 = scalar_select %p156, %s14, 1
      %s158 = smul.addr %s157, 8
      %s159 = smul.addr %s158, 2
      %s160 = scalar_lea.vmem %s3, %s159
      %p161 = scmp.lt.s32.totalorder %s14, 1
      %s162 = scalar_select %p161, %s14, 1
      %s163 = smul.addr %s162, 11
      %s164 = smul.addr %s163, 4
      %s165 = scalar_lea.vmem %s0, %s164
      %p166 = scmp.lt.s32.totalorder %s14, 1
      %s167 = scalar_select %p166, %s14, 1
      %s168 = smul.addr %s167, 8
      %s169 = smul.addr %s168, 2
      %s170 = scalar_lea.vmem %s3, %s169
      %v172 = vld [vmem:[%s165] sm:$0xf]
      %v173 = vld [vmem:[%s165 + $0x4] sm:$0xf]
      %v174 = vld [vmem:[%s165 + $0x8] sm:$0xf]
      %v175 = vld [vmem:[%s165 + $0xc] sm:$0xf]
      %v176 = vld [vmem:[%s165 + $0x10] sm:$0xf]
      %v177 = vld [vmem:[%s165 + $0x14] sm:$0xf]
      %v178 = vld [vmem:[%s165 + $0x18] sm:$0xf]
      %v179 = vld [vmem:[%s165 + $0x1c] sm:$0xf]
      %v180 = vld [vmem:[%s165 + $0x20] sm:$0xf]
      %v181 = vld [vmem:[%s165 + $0x24] sm:$0xf]
      %v182 = vld [vmem:[%s165 + $0x28] sm:$0x3]
      %v183 = vld [vmem:[%s1] sm:$0xff]
      %v184 = vld [vmem:[%s1 + $0x8] sm:$0xff]
      %v185 = vld [vmem:[%s1 + $0x10] sm:$0xff]
      %v186 = vld [vmem:[%s1 + $0x18] sm:$0xff]
      %s187 = scalar_lea.vmem %s1, 32
      %v188 = vld [vmem:[%s187] sm:$0xff]
      %v189 = vld [vmem:[%s187 + $0x8] sm:$0xff]
      %v190 = vld [vmem:[%s187 + $0x10] sm:$0xff]
      %v191 = vld [vmem:[%s187 + $0x18] sm:$0xff]
      %v200 = vunpack.c.l.b16 %v172
      %v201 = vunpack.c.l.b16 %v173
      %v202 = vunpack.c.l.b16 %v174
      %v203 = vunpack.c.l.b16 %v175
      %v204 = vunpack.c.l.b16 %v176
      %v205 = vunpack.c.l.b16 %v177
      %v206 = vunpack.c.l.b16 %v178
      %v207 = vunpack.c.l.b16 %v179
      %v208 = vpack.c.b16 %v201, %v200
      %v209 = vpack.c.b16 %v203, %v202
      %v210 = vpack.c.b16 %v205, %v204
      %v211 = vpack.c.b16 %v207, %v206
      %vm212 = vsmask.f32 7424
      %v214 = vshrl.u32 %v208, 16
      %v216 = vshll.u32 %v208, 16
      %v218 = vrot.slane %v216, 1
      %v219 = vor.u32 %v214, %v218
      %v221 = vshll.u32 %v209, 16
      %v223 = vrot.slane %v221, 1
      %v224 = vsel %vm212, %v219, %v223
      %v225 = vshrl.u32 %v209, 16
      %v227 = vor.u32 %v225, %v223
      %v229 = vshll.u32 %v210, 16
      %v231 = vrot.slane %v229, 1
      %v232 = vsel %vm212, %v227, %v231
      %v233 = vshrl.u32 %v210, 16
      %v235 = vor.u32 %v233, %v231
      %v237 = vshll.u32 %v211, 16
      %v239 = vrot.slane %v237, 1
      %v240 = vsel %vm212, %v235, %v239
      %v241 = vshrl.u32 %v211, 16
      %v243 = vor.u32 %v241, %v239
      %v248 = vunpack.c.l.b16 %v188
      %v249 = vunpack.c.h.b16 %v188
      %v250 = vunpack.c.l.b16 %v189
      %v251 = vunpack.c.h.b16 %v189
      %v252 = vunpack.c.l.b16 %v190
      %v253 = vunpack.c.h.b16 %v190
      %v254 = vunpack.c.l.b16 %v191
      %v255 = vunpack.c.h.b16 %v191
      %v256 = vpack.c.b16 %v250, %v248
      %v257 = vpack.c.b16 %v251, %v249
      %v258 = vpack.c.b16 %v254, %v252
      %v259 = vpack.c.b16 %v255, %v253
      %vm264 = vcmask 261120
      %v266 = vsel %vm264, %v224, 0
      %v269 = vsel %vm264, %v232, 0
      %v272 = vsel %vm264, %v240, 0
      %v275 = vsel %vm264, %v243, 0
      %277 = vmatpush.bf16.msra.mxu0 0
      %278 = vmatpush.bf16.msra.mxu0 0
      %279 = vmatpush.bf16.msra.mxu0 0
      %280 = vmatpush.bf16.msra.mxu0 0
      %281 = vmatpush.bf16.msra.mxu0 0
      %282 = vmatpush.bf16.msra.mxu0 0
      %283 = vmatpush.bf16.msra.mxu0 %v258
      %284 = vmatpush.bf16.msra.mxu0 %v256
      %285 = vmatmul.bf16.gmra.mxu0 %v266
      %v286 = vpop.f32.mrf.mxu0
      %v287 = vadd.f32 0.0, %v286
      %v288 = vpop.f32.mrf.mxu0
      %v289 = vadd.f32 0.0, %v288
      %290 = vmatmul.bf16.gmra.mxu0 %v269
      %v291 = vpop.f32.mrf.mxu0
      %v292 = vadd.f32 0.0, %v291
      %v293 = vpop.f32.mrf.mxu0
      %v294 = vadd.f32 0.0, %v293
      %295 = vmatmul.bf16.gmra.mxu0 %v272
      %v296 = vpop.f32.mrf.mxu0
      %v297 = vadd.f32 0.0, %v296
      %v298 = vpop.f32.mrf.mxu0
      %v299 = vadd.f32 0.0, %v298
      %300 = vmatmul.bf16.gmra.mxu0 %v275
      %v301 = vpop.f32.mrf.mxu0
      %v302 = vadd.f32 0.0, %v301
      %v303 = vpop.f32.mrf.mxu0
      %v304 = vadd.f32 0.0, %v303
      %305 = vdwg.mxu0
      %306 = vmatpush.bf16.msra.mxu0 0
      %307 = vmatpush.bf16.msra.mxu0 0
      %308 = vmatpush.bf16.msra.mxu0 0
      %309 = vmatpush.bf16.msra.mxu0 0
      %310 = vmatpush.bf16.msra.mxu0 0
      %311 = vmatpush.bf16.msra.mxu0 0
      %312 = vmatpush.bf16.msra.mxu0 %v259
      %313 = vmatpush.bf16.msra.mxu0 %v257
      %314 = vmatmul.bf16.gmra.mxu0 %v266
      %v315 = vpop.f32.mrf.mxu0
      %v316 = vadd.f32 0.0, %v315
      %v317 = vpop.f32.mrf.mxu0
      %v318 = vadd.f32 0.0, %v317
      %319 = vmatmul.bf16.gmra.mxu0 %v269
      %v320 = vpop.f32.mrf.mxu0
      %v321 = vadd.f32 0.0, %v320
      %v322 = vpop.f32.mrf.mxu0
      %v323 = vadd.f32 0.0, %v322
      %324 = vmatmul.bf16.gmra.mxu0 %v272
      %v325 = vpop.f32.mrf.mxu0
      %v326 = vadd.f32 0.0, %v325
      %v327 = vpop.f32.mrf.mxu0
      %v328 = vadd.f32 0.0, %v327
      %329 = vmatmul.bf16.gmra.mxu0 %v275
      %v330 = vpop.f32.mrf.mxu0
      %v331 = vadd.f32 0.0, %v330
      %v332 = vpop.f32.mrf.mxu0
      %v333 = vadd.f32 0.0, %v332
      %334 = vdwg.mxu0
      %v339 = vunpack.c.l.b16 %v183
      %v340 = vunpack.c.h.b16 %v183
      %v341 = vunpack.c.l.b16 %v184
      %v342 = vunpack.c.h.b16 %v184
      %v343 = vunpack.c.l.b16 %v185
      %v344 = vunpack.c.h.b16 %v185
      %v345 = vunpack.c.l.b16 %v186
      %v346 = vunpack.c.h.b16 %v186
      %v347 = vpack.c.b16 %v341, %v339
      %v348 = vpack.c.b16 %v342, %v340
      %v349 = vpack.c.b16 %v345, %v343
      %v350 = vpack.c.b16 %v346, %v344
      %v355 = vsel %vm264, %v208, 0
      %v357 = vsel %vm264, %v209, 0
      %v359 = vsel %vm264, %v210, 0
      %v361 = vsel %vm264, %v211, 0
      %363 = vmatpush.bf16.msra.mxu0 0
      %364 = vmatpush.bf16.msra.mxu0 0
      %365 = vmatpush.bf16.msra.mxu0 0
      %366 = vmatpush.bf16.msra.mxu0 0
      %367 = vmatpush.bf16.msra.mxu0 0
      %368 = vmatpush.bf16.msra.mxu0 0
      %369 = vmatpush.bf16.msra.mxu0 %v349
      %370 = vmatpush.bf16.msra.mxu0 %v347
      %371 = vmatmul.bf16.gmra.mxu0 %v355
      %v372 = vpop.f32.mrf.mxu0
      %v373 = vadd.f32 %v287, %v372
      %v374 = vpop.f32.mrf.mxu0
      %v375 = vadd.f32 %v289, %v374
      %376 = vmatmul.bf16.gmra.mxu0 %v357
      %v377 = vpop.f32.mrf.mxu0
      %v378 = vadd.f32 %v292, %v377
      %v379 = vpop.f32.mrf.mxu0
      %v380 = vadd.f32 %v294, %v379
      %381 = vmatmul.bf16.gmra.mxu0 %v359
      %v382 = vpop.f32.mrf.mxu0
      %v383 = vadd.f32 %v297, %v382
      %v384 = vpop.f32.mrf.mxu0
      %v385 = vadd.f32 %v299, %v384
      %386 = vmatmul.bf16.gmra.mxu0 %v361
      %v387 = vpop.f32.mrf.mxu0
      %v388 = vadd.f32 %v302, %v387
      %v389 = vpop.f32.mrf.mxu0
      %v390 = vadd.f32 %v304, %v389
      %391 = vdwg.mxu0
      %392 = vmatpush.bf16.msra.mxu0 0
      %393 = vmatpush.bf16.msra.mxu0 0
      %394 = vmatpush.bf16.msra.mxu0 0
      %395 = vmatpush.bf16.msra.mxu0 0
      %396 = vmatpush.bf16.msra.mxu0 0
      %397 = vmatpush.bf16.msra.mxu0 0
      %398 = vmatpush.bf16.msra.mxu0 %v350
      %399 = vmatpush.bf16.msra.mxu0 %v348
      %400 = vmatmul.bf16.gmra.mxu0 %v355
      %v401 = vpop.f32.mrf.mxu0
      %v402 = vadd.f32 %v316, %v401
      %v403 = vpop.f32.mrf.mxu0
      %v404 = vadd.f32 %v318, %v403
      %405 = vmatmul.bf16.gmra.mxu0 %v357
      %v406 = vpop.f32.mrf.mxu0
      %v407 = vadd.f32 %v321, %v406
      %v408 = vpop.f32.mrf.mxu0
      %v409 = vadd.f32 %v323, %v408
      %410 = vmatmul.bf16.gmra.mxu0 %v359
      %v411 = vpop.f32.mrf.mxu0
      %v412 = vadd.f32 %v326, %v411
      %v413 = vpop.f32.mrf.mxu0
      %v414 = vadd.f32 %v328, %v413
      %415 = vmatmul.bf16.gmra.mxu0 %v361
      %v416 = vpop.f32.mrf.mxu0
      %v417 = vadd.f32 %v331, %v416
      %v418 = vpop.f32.mrf.mxu0
      %v419 = vadd.f32 %v333, %v418
      %420 = vdwg.mxu0
      %s421 = scalar_lea.vmem %s1, 64
      %v422 = vld [vmem:[%s421] sm:$0xff]
      %v423 = vld [vmem:[%s421 + $0x8] sm:$0xff]
      %v424 = vld [vmem:[%s421 + $0x10] sm:$0xff]
      %v425 = vld [vmem:[%s421 + $0x18] sm:$0xff]
      %v427 = vunpack.c.l.b16 %v180
      %v428 = vpack.c.b16 %v427, %v427
      %vm429 = vcmask 1046528
      %v430 = vrot.slane %v208, 1
      %v431 = vrot.slane %v209, 1
      %v432 = vsel %vm429, %v430, %v431
      %v433 = vrot.slane %v210, 1
      %v434 = vsel %vm429, %v431, %v433
      %v435 = vrot.slane %v211, 1
      %v436 = vsel %vm429, %v433, %v435
      %v437 = vrot.slane %v428, 1
      %v438 = vsel %vm429, %v435, %v437
      %v443 = vunpack.c.l.b16 %v422
      %v444 = vunpack.c.h.b16 %v422
      %v445 = vunpack.c.l.b16 %v423
      %v446 = vunpack.c.h.b16 %v423
      %v447 = vunpack.c.l.b16 %v424
      %v448 = vunpack.c.h.b16 %v424
      %v449 = vunpack.c.l.b16 %v425
      %v450 = vunpack.c.h.b16 %v425
      %v451 = vpack.c.b16 %v445, %v443
      %v452 = vpack.c.b16 %v446, %v444
      %v453 = vpack.c.b16 %v449, %v447
      %v454 = vpack.c.b16 %v450, %v448
      %v460 = vsel %vm264, %v432, 0
      %v463 = vsel %vm264, %v434, 0
      %v466 = vsel %vm264, %v436, 0
      %v469 = vsel %vm264, %v438, 0
      %471 = vmatpush.bf16.msra.mxu0 0
      %472 = vmatpush.bf16.msra.mxu0 0
      %473 = vmatpush.bf16.msra.mxu0 0
      %474 = vmatpush.bf16.msra.mxu0 0
      %475 = vmatpush.bf16.msra.mxu0 0
      %476 = vmatpush.bf16.msra.mxu0 0
      %477 = vmatpush.bf16.msra.mxu0 %v453
      %478 = vmatpush.bf16.msra.mxu0 %v451
      %479 = vmatmul.bf16.gmra.mxu0 %v460
      %v480 = vpop.f32.mrf.mxu0
      %v481 = vadd.f32 0.0, %v480
      %v482 = vpop.f32.mrf.mxu0
      %v483 = vadd.f32 0.0, %v482
      %484 = vmatmul.bf16.gmra.mxu0 %v463
      %v485 = vpop.f32.mrf.mxu0
      %v486 = vadd.f32 0.0, %v485
      %v487 = vpop.f32.mrf.mxu0
      %v488 = vadd.f32 0.0, %v487
      %489 = vmatmul.bf16.gmra.mxu0 %v466
      %v490 = vpop.f32.mrf.mxu0
      %v491 = vadd.f32 0.0, %v490
      %v492 = vpop.f32.mrf.mxu0
      %v493 = vadd.f32 0.0, %v492
      %494 = vmatmul.bf16.gmra.mxu0 %v469
      %v495 = vpop.f32.mrf.mxu0
      %v496 = vadd.f32 0.0, %v495
      %v497 = vpop.f32.mrf.mxu0
      %v498 = vadd.f32 0.0, %v497
      %499 = vdwg.mxu0
      %500 = vmatpush.bf16.msra.mxu0 0
      %501 = vmatpush.bf16.msra.mxu0 0
      %502 = vmatpush.bf16.msra.mxu0 0
      %503 = vmatpush.bf16.msra.mxu0 0
      %504 = vmatpush.bf16.msra.mxu0 0
      %505 = vmatpush.bf16.msra.mxu0 0
      %506 = vmatpush.bf16.msra.mxu0 %v454
      %507 = vmatpush.bf16.msra.mxu0 %v452
      %508 = vmatmul.bf16.gmra.mxu0 %v460
      %v509 = vpop.f32.mrf.mxu0
      %v510 = vadd.f32 0.0, %v509
      %v511 = vpop.f32.mrf.mxu0
      %v512 = vadd.f32 0.0, %v511
      %513 = vmatmul.bf16.gmra.mxu0 %v463
      %v514 = vpop.f32.mrf.mxu0
      %v515 = vadd.f32 0.0, %v514
      %v516 = vpop.f32.mrf.mxu0
      %v517 = vadd.f32 0.0, %v516
      %518 = vmatmul.bf16.gmra.mxu0 %v466
      %v519 = vpop.f32.mrf.mxu0
      %v520 = vadd.f32 0.0, %v519
      %v521 = vpop.f32.mrf.mxu0
      %v522 = vadd.f32 0.0, %v521
      %523 = vmatmul.bf16.gmra.mxu0 %v469
      %v524 = vpop.f32.mrf.mxu0
      %v525 = vadd.f32 0.0, %v524
      %v526 = vpop.f32.mrf.mxu0
      %v527 = vadd.f32 0.0, %v526
      %528 = vdwg.mxu0
      %v529 = vadd.f32 %v373, %v481
      %v530 = vadd.f32 %v402, %v510
      %v531 = vadd.f32 %v375, %v483
      %v532 = vadd.f32 %v404, %v512
      %v533 = vadd.f32 %v378, %v486
      %v534 = vadd.f32 %v407, %v515
      %v535 = vadd.f32 %v380, %v488
      %v536 = vadd.f32 %v409, %v517
      %v537 = vadd.f32 %v383, %v491
      %v538 = vadd.f32 %v412, %v520
      %v539 = vadd.f32 %v385, %v493
      %v540 = vadd.f32 %v414, %v522
      %v541 = vadd.f32 %v388, %v496
      %v542 = vadd.f32 %v417, %v525
      %v543 = vadd.f32 %v390, %v498
      %v544 = vadd.f32 %v419, %v527
      %s545 = scalar_lea.vmem %s1, 96
      %v546 = vld [vmem:[%s545] sm:$0xff]
      %v547 = vld [vmem:[%s545 + $0x8] sm:$0xff]
      %v548 = vld [vmem:[%s545 + $0x10] sm:$0xff]
      %v549 = vld [vmem:[%s545 + $0x18] sm:$0xff]
      %v550 = vpack.c.b16 %v202, %v201
      %v551 = vpack.c.b16 %v204, %v203
      %v552 = vpack.c.b16 %v206, %v205
      %v553 = vpack.c.b16 %v427, %v207
      %v555 = vshrl.u32 %v550, 16
      %v557 = vshll.u32 %v550, 16
      %v559 = vrot.slane %v557, 1
      %v560 = vor.u32 %v555, %v559
      %v562 = vshll.u32 %v551, 16
      %v564 = vrot.slane %v562, 1
      %v565 = vsel %vm212, %v560, %v564
      %v566 = vshrl.u32 %v551, 16
      %v568 = vor.u32 %v566, %v564
      %v570 = vshll.u32 %v552, 16
      %v572 = vrot.slane %v570, 1
      %v573 = vsel %vm212, %v568, %v572
      %v574 = vshrl.u32 %v552, 16
      %v576 = vor.u32 %v574, %v572
      %v578 = vshll.u32 %v553, 16
      %v580 = vrot.slane %v578, 1
      %v581 = vsel %vm212, %v576, %v580
      %v582 = vshrl.u32 %v553, 16
      %v584 = vor.u32 %v582, %v580
      %v589 = vunpack.c.l.b16 %v546
      %v590 = vunpack.c.h.b16 %v546
      %v591 = vunpack.c.l.b16 %v547
      %v592 = vunpack.c.h.b16 %v547
      %v593 = vunpack.c.l.b16 %v548
      %v594 = vunpack.c.h.b16 %v548
      %v595 = vunpack.c.l.b16 %v549
      %v596 = vunpack.c.h.b16 %v549
      %v597 = vpack.c.b16 %v591, %v589
      %v598 = vpack.c.b16 %v592, %v590
      %v599 = vpack.c.b16 %v595, %v593
      %v600 = vpack.c.b16 %v596, %v594
      %v606 = vsel %vm264, %v565, 0
      %v609 = vsel %vm264, %v573, 0
      %v612 = vsel %vm264, %v581, 0
      %v615 = vsel %vm264, %v584, 0
      %617 = vmatpush.bf16.msra.mxu0 0
      %618 = vmatpush.bf16.msra.mxu0 0
      %619 = vmatpush.bf16.msra.mxu0 0
      %620 = vmatpush.bf16.msra.mxu0 0
      %621 = vmatpush.bf16.msra.mxu0 0
      %622 = vmatpush.bf16.msra.mxu0 0
      %623 = vmatpush.bf16.msra.mxu0 %v599
      %624 = vmatpush.bf16.msra.mxu0 %v597
      %625 = vmatmul.bf16.gmra.mxu0 %v606
      %v626 = vpop.f32.mrf.mxu0
      %v627 = vadd.f32 0.0, %v626
      %v628 = vpop.f32.mrf.mxu0
      %v629 = vadd.f32 0.0, %v628
      %630 = vmatmul.bf16.gmra.mxu0 %v609
      %v631 = vpop.f32.mrf.mxu0
      %v632 = vadd.f32 0.0, %v631
      %v633 = vpop.f32.mrf.mxu0
      %v634 = vadd.f32 0.0, %v633
      %635 = vmatmul.bf16.gmra.mxu0 %v612
      %v636 = vpop.f32.mrf.mxu0
      %v637 = vadd.f32 0.0, %v636
      %v638 = vpop.f32.mrf.mxu0
      %v639 = vadd.f32 0.0, %v638
      %640 = vmatmul.bf16.gmra.mxu0 %v615
      %v641 = vpop.f32.mrf.mxu0
      %v642 = vadd.f32 0.0, %v641
      %v643 = vpop.f32.mrf.mxu0
      %v644 = vadd.f32 0.0, %v643
      %645 = vdwg.mxu0
      %646 = vmatpush.bf16.msra.mxu0 0
      %647 = vmatpush.bf16.msra.mxu0 0
      %648 = vmatpush.bf16.msra.mxu0 0
      %649 = vmatpush.bf16.msra.mxu0 0
      %650 = vmatpush.bf16.msra.mxu0 0
      %651 = vmatpush.bf16.msra.mxu0 0
      %652 = vmatpush.bf16.msra.mxu0 %v600
      %653 = vmatpush.bf16.msra.mxu0 %v598
      %654 = vmatmul.bf16.gmra.mxu0 %v606
      %v655 = vpop.f32.mrf.mxu0
      %v656 = vadd.f32 0.0, %v655
      %v657 = vpop.f32.mrf.mxu0
      %v658 = vadd.f32 0.0, %v657
      %659 = vmatmul.bf16.gmra.mxu0 %v609
      %v660 = vpop.f32.mrf.mxu0
      %v661 = vadd.f32 0.0, %v660
      %v662 = vpop.f32.mrf.mxu0
      %v663 = vadd.f32 0.0, %v662
      %664 = vmatmul.bf16.gmra.mxu0 %v612
      %v665 = vpop.f32.mrf.mxu0
      %v666 = vadd.f32 0.0, %v665
      %v667 = vpop.f32.mrf.mxu0
      %v668 = vadd.f32 0.0, %v667
      %669 = vmatmul.bf16.gmra.mxu0 %v615
      %v670 = vpop.f32.mrf.mxu0
      %v671 = vadd.f32 0.0, %v670
      %v672 = vpop.f32.mrf.mxu0
      %v673 = vadd.f32 0.0, %v672
      %674 = vdwg.mxu0
      %v675 = vadd.f32 %v529, %v627
      %v676 = vadd.f32 %v530, %v656
      %v677 = vadd.f32 %v531, %v629
      %v678 = vadd.f32 %v532, %v658
      %v679 = vadd.f32 %v533, %v632
      %v680 = vadd.f32 %v534, %v661
      %v681 = vadd.f32 %v535, %v634
      %v682 = vadd.f32 %v536, %v663
      %v683 = vadd.f32 %v537, %v637
      %v684 = vadd.f32 %v538, %v666
      %v685 = vadd.f32 %v539, %v639
      %v686 = vadd.f32 %v540, %v668
      %v687 = vadd.f32 %v541, %v642
      %v688 = vadd.f32 %v542, %v671
      %v689 = vadd.f32 %v543, %v644
      %v690 = vadd.f32 %v544, %v673
      %s691 = scalar_lea.vmem %s1, 128
      %v692 = vld [vmem:[%s691] sm:$0xff]
      %v693 = vld [vmem:[%s691 + $0x8] sm:$0xff]
      %v694 = vld [vmem:[%s691 + $0x10] sm:$0xff]
      %v695 = vld [vmem:[%s691 + $0x18] sm:$0xff]
      %v697 = vunpack.c.l.b16 %v181
      %v698 = vpack.c.b16 %v697, %v697
      %v699 = vrot.slane %v550, 1
      %v700 = vrot.slane %v551, 1
      %v701 = vsel %vm429, %v699, %v700
      %v702 = vrot.slane %v552, 1
      %v703 = vsel %vm429, %v700, %v702
      %v704 = vrot.slane %v553, 1
      %v705 = vsel %vm429, %v702, %v704
      %v706 = vrot.slane %v698, 1
      %v707 = vsel %vm429, %v704, %v706
      %v712 = vunpack.c.l.b16 %v692
      %v713 = vunpack.c.h.b16 %v692
      %v714 = vunpack.c.l.b16 %v693
      %v715 = vunpack.c.h.b16 %v693
      %v716 = vunpack.c.l.b16 %v694
      %v717 = vunpack.c.h.b16 %v694
      %v718 = vunpack.c.l.b16 %v695
      %v719 = vunpack.c.h.b16 %v695
      %v720 = vpack.c.b16 %v714, %v712
      %v721 = vpack.c.b16 %v715, %v713
      %v722 = vpack.c.b16 %v718, %v716
      %v723 = vpack.c.b16 %v719, %v717
      %v729 = vsel %vm264, %v701, 0
      %v732 = vsel %vm264, %v703, 0
      %v735 = vsel %vm264, %v705, 0
      %v738 = vsel %vm264, %v707, 0
      %740 = vmatpush.bf16.msra.mxu0 0
      %741 = vmatpush.bf16.msra.mxu0 0
      %742 = vmatpush.bf16.msra.mxu0 0
      %743 = vmatpush.bf16.msra.mxu0 0
      %744 = vmatpush.bf16.msra.mxu0 0
      %745 = vmatpush.bf16.msra.mxu0 0
      %746 = vmatpush.bf16.msra.mxu0 %v722
      %747 = vmatpush.bf16.msra.mxu0 %v720
      %748 = vmatmul.bf16.gmra.mxu0 %v729
      %v749 = vpop.f32.mrf.mxu0
      %v750 = vadd.f32 0.0, %v749
      %v751 = vpop.f32.mrf.mxu0
      %v752 = vadd.f32 0.0, %v751
      %753 = vmatmul.bf16.gmra.mxu0 %v732
      %v754 = vpop.f32.mrf.mxu0
      %v755 = vadd.f32 0.0, %v754
      %v756 = vpop.f32.mrf.mxu0
      %v757 = vadd.f32 0.0, %v756
      %758 = vmatmul.bf16.gmra.mxu0 %v735
      %v759 = vpop.f32.mrf.mxu0
      %v760 = vadd.f32 0.0, %v759
      %v761 = vpop.f32.mrf.mxu0
      %v762 = vadd.f32 0.0, %v761
      %763 = vmatmul.bf16.gmra.mxu0 %v738
      %v764 = vpop.f32.mrf.mxu0
      %v765 = vadd.f32 0.0, %v764
      %v766 = vpop.f32.mrf.mxu0
      %v767 = vadd.f32 0.0, %v766
      %768 = vdwg.mxu0
      %769 = vmatpush.bf16.msra.mxu0 0
      %770 = vmatpush.bf16.msra.mxu0 0
      %771 = vmatpush.bf16.msra.mxu0 0
      %772 = vmatpush.bf16.msra.mxu0 0
      %773 = vmatpush.bf16.msra.mxu0 0
      %774 = vmatpush.bf16.msra.mxu0 0
      %775 = vmatpush.bf16.msra.mxu0 %v723
      %776 = vmatpush.bf16.msra.mxu0 %v721
      %777 = vmatmul.bf16.gmra.mxu0 %v729
      %v778 = vpop.f32.mrf.mxu0
      %v779 = vadd.f32 0.0, %v778
      %v780 = vpop.f32.mrf.mxu0
      %v781 = vadd.f32 0.0, %v780
      %782 = vmatmul.bf16.gmra.mxu0 %v732
      %v783 = vpop.f32.mrf.mxu0
      %v784 = vadd.f32 0.0, %v783
      %v785 = vpop.f32.mrf.mxu0
      %v786 = vadd.f32 0.0, %v785
      %787 = vmatmul.bf16.gmra.mxu0 %v735
      %v788 = vpop.f32.mrf.mxu0
      %v789 = vadd.f32 0.0, %v788
      %v790 = vpop.f32.mrf.mxu0
      %v791 = vadd.f32 0.0, %v790
      %792 = vmatmul.bf16.gmra.mxu0 %v738
      %v793 = vpop.f32.mrf.mxu0
      %v794 = vadd.f32 0.0, %v793
      %v795 = vpop.f32.mrf.mxu0
      %v796 = vadd.f32 0.0, %v795
      %797 = vdwg.mxu0
      %v798 = vadd.f32 %v675, %v750
      %v799 = vadd.f32 %v676, %v779
      %v800 = vadd.f32 %v677, %v752
      %v801 = vadd.f32 %v678, %v781
      %v802 = vadd.f32 %v679, %v755
      %v803 = vadd.f32 %v680, %v784
      %v804 = vadd.f32 %v681, %v757
      %v805 = vadd.f32 %v682, %v786
      %v806 = vadd.f32 %v683, %v760
      %v807 = vadd.f32 %v684, %v789
      %v808 = vadd.f32 %v685, %v762
      %v809 = vadd.f32 %v686, %v791
      %v810 = vadd.f32 %v687, %v765
      %v811 = vadd.f32 %v688, %v794
      %v812 = vadd.f32 %v689, %v767
      %v813 = vadd.f32 %v690, %v796
      %s814 = scalar_lea.vmem %s1, 160
      %v815 = vld [vmem:[%s814] sm:$0xff]
      %v816 = vld [vmem:[%s814 + $0x8] sm:$0xff]
      %v817 = vld [vmem:[%s814 + $0x10] sm:$0xff]
      %v818 = vld [vmem:[%s814 + $0x18] sm:$0xff]
      %vm819 = vsmask.f32 6400
      %v820 = vrot.slane %v555, 1
      %v821 = vrot.slane %v557, 2
      %v822 = vor.u32 %v820, %v821
      %v823 = vrot.slane %v566, 1
      %v824 = vrot.slane %v562, 2
      %v825 = vor.u32 %v823, %v824
      %v826 = vsel %vm819, %v822, %v825
      %v827 = vrot.slane %v574, 1
      %v828 = vrot.slane %v570, 2
      %v829 = vor.u32 %v827, %v828
      %v830 = vsel %vm819, %v825, %v829
      %v831 = vrot.slane %v582, 1
      %v832 = vrot.slane %v578, 2
      %v833 = vor.u32 %v831, %v832
      %v834 = vsel %vm819, %v829, %v833
      %v836 = vshrl.u32 %v698, 16
      %v838 = vrot.slane %v836, 1
      %v839 = vshll.u32 %v698, 16
      %v841 = vrot.slane %v839, 2
      %v842 = vor.u32 %v838, %v841
      %v843 = vsel %vm819, %v833, %v842
      %v848 = vunpack.c.l.b16 %v815
      %v849 = vunpack.c.h.b16 %v815
      %v850 = vunpack.c.l.b16 %v816
      %v851 = vunpack.c.h.b16 %v816
      %v852 = vunpack.c.l.b16 %v817
      %v853 = vunpack.c.h.b16 %v817
      %v854 = vunpack.c.l.b16 %v818
      %v855 = vunpack.c.h.b16 %v818
      %v856 = vpack.c.b16 %v850, %v848
      %v857 = vpack.c.b16 %v851, %v849
      %v858 = vpack.c.b16 %v854, %v852
      %v859 = vpack.c.b16 %v855, %v853
      %v865 = vsel %vm264, %v826, 0
      %v868 = vsel %vm264, %v830, 0
      %v871 = vsel %vm264, %v834, 0
      %v874 = vsel %vm264, %v843, 0
      %876 = vmatpush.bf16.msra.mxu0 0
      %877 = vmatpush.bf16.msra.mxu0 0
      %878 = vmatpush.bf16.msra.mxu0 0
      %879 = vmatpush.bf16.msra.mxu0 0
      %880 = vmatpush.bf16.msra.mxu0 0
      %881 = vmatpush.bf16.msra.mxu0 0
      %882 = vmatpush.bf16.msra.mxu0 %v858
      %883 = vmatpush.bf16.msra.mxu0 %v856
      %884 = vmatmul.bf16.gmra.mxu0 %v865
      %v885 = vpop.f32.mrf.mxu0
      %v886 = vadd.f32 0.0, %v885
      %v887 = vpop.f32.mrf.mxu0
      %v888 = vadd.f32 0.0, %v887
      %889 = vmatmul.bf16.gmra.mxu0 %v868
      %v890 = vpop.f32.mrf.mxu0
      %v891 = vadd.f32 0.0, %v890
      %v892 = vpop.f32.mrf.mxu0
      %v893 = vadd.f32 0.0, %v892
      %894 = vmatmul.bf16.gmra.mxu0 %v871
      %v895 = vpop.f32.mrf.mxu0
      %v896 = vadd.f32 0.0, %v895
      %v897 = vpop.f32.mrf.mxu0
      %v898 = vadd.f32 0.0, %v897
      %899 = vmatmul.bf16.gmra.mxu0 %v874
      %v900 = vpop.f32.mrf.mxu0
      %v901 = vadd.f32 0.0, %v900
      %v902 = vpop.f32.mrf.mxu0
      %v903 = vadd.f32 0.0, %v902
      %904 = vdwg.mxu0
      %905 = vmatpush.bf16.msra.mxu0 0
      %906 = vmatpush.bf16.msra.mxu0 0
      %907 = vmatpush.bf16.msra.mxu0 0
      %908 = vmatpush.bf16.msra.mxu0 0
      %909 = vmatpush.bf16.msra.mxu0 0
      %910 = vmatpush.bf16.msra.mxu0 0
      %911 = vmatpush.bf16.msra.mxu0 %v859
      %912 = vmatpush.bf16.msra.mxu0 %v857
      %913 = vmatmul.bf16.gmra.mxu0 %v865
      %v914 = vpop.f32.mrf.mxu0
      %v915 = vadd.f32 0.0, %v914
      %v916 = vpop.f32.mrf.mxu0
      %v917 = vadd.f32 0.0, %v916
      %918 = vmatmul.bf16.gmra.mxu0 %v868
      %v919 = vpop.f32.mrf.mxu0
      %v920 = vadd.f32 0.0, %v919
      %v921 = vpop.f32.mrf.mxu0
      %v922 = vadd.f32 0.0, %v921
      %923 = vmatmul.bf16.gmra.mxu0 %v871
      %v924 = vpop.f32.mrf.mxu0
      %v925 = vadd.f32 0.0, %v924
      %v926 = vpop.f32.mrf.mxu0
      %v927 = vadd.f32 0.0, %v926
      %928 = vmatmul.bf16.gmra.mxu0 %v874
      %v929 = vpop.f32.mrf.mxu0
      %v930 = vadd.f32 0.0, %v929
      %v931 = vpop.f32.mrf.mxu0
      %v932 = vadd.f32 0.0, %v931
      %933 = vdwg.mxu0
      %v934 = vadd.f32 %v798, %v886
      %v935 = vadd.f32 %v799, %v915
      %v936 = vadd.f32 %v800, %v888
      %v937 = vadd.f32 %v801, %v917
      %v938 = vadd.f32 %v802, %v891
      %v939 = vadd.f32 %v803, %v920
      %v940 = vadd.f32 %v804, %v893
      %v941 = vadd.f32 %v805, %v922
      %v942 = vadd.f32 %v806, %v896
      %v943 = vadd.f32 %v807, %v925
      %v944 = vadd.f32 %v808, %v898
      %v945 = vadd.f32 %v809, %v927
      %v946 = vadd.f32 %v810, %v901
      %v947 = vadd.f32 %v811, %v930
      %v948 = vadd.f32 %v812, %v903
      %v949 = vadd.f32 %v813, %v932
      %s950 = scalar_lea.vmem %s1, 192
      %v951 = vld [vmem:[%s950] sm:$0xff]
      %v952 = vld [vmem:[%s950 + $0x8] sm:$0xff]
      %v953 = vld [vmem:[%s950 + $0x10] sm:$0xff]
      %v954 = vld [vmem:[%s950 + $0x18] sm:$0xff]
      %v956 = vunpack.c.l.b16 %v182
      %v957 = vpack.c.b16 %v697, %v427
      %v958 = vpack.c.b16 %v956, %v956
      %v959 = vrot.slane %v957, 1
      %v960 = vsel %vm429, %v435, %v959
      %v961 = vrot.slane %v958, 1
      %v962 = vsel %vm429, %v959, %v961
      %v967 = vunpack.c.l.b16 %v951
      %v968 = vunpack.c.h.b16 %v951
      %v969 = vunpack.c.l.b16 %v952
      %v970 = vunpack.c.h.b16 %v952
      %v971 = vunpack.c.l.b16 %v953
      %v972 = vunpack.c.h.b16 %v953
      %v973 = vunpack.c.l.b16 %v954
      %v974 = vunpack.c.h.b16 %v954
      %v975 = vpack.c.b16 %v969, %v967
      %v976 = vpack.c.b16 %v970, %v968
      %v977 = vpack.c.b16 %v973, %v971
      %v978 = vpack.c.b16 %v974, %v972
      %v984 = vsel %vm264, %v960, 0
      %v987 = vsel %vm264, %v962, 0
      %989 = vmatpush.bf16.msra.mxu0 0
      %990 = vmatpush.bf16.msra.mxu0 0
      %991 = vmatpush.bf16.msra.mxu0 0
      %992 = vmatpush.bf16.msra.mxu0 0
      %993 = vmatpush.bf16.msra.mxu0 0
      %994 = vmatpush.bf16.msra.mxu0 0
      %995 = vmatpush.bf16.msra.mxu0 %v977
      %996 = vmatpush.bf16.msra.mxu0 %v975
      %997 = vmatmul.bf16.gmra.mxu0 %v463
      %v998 = vpop.f32.mrf.mxu0
      %v999 = vadd.f32 0.0, %v998
      %v1000 = vpop.f32.mrf.mxu0
      %v1001 = vadd.f32 0.0, %v1000
      %1002 = vmatmul.bf16.gmra.mxu0 %v466
      %v1003 = vpop.f32.mrf.mxu0
      %v1004 = vadd.f32 0.0, %v1003
      %v1005 = vpop.f32.mrf.mxu0
      %v1006 = vadd.f32 0.0, %v1005
      %1007 = vmatmul.bf16.gmra.mxu0 %v984
      %v1008 = vpop.f32.mrf.mxu0
      %v1009 = vadd.f32 0.0, %v1008
      %v1010 = vpop.f32.mrf.mxu0
      %v1011 = vadd.f32 0.0, %v1010
      %1012 = vmatmul.bf16.gmra.mxu0 %v987
      %v1013 = vpop.f32.mrf.mxu0
      %v1014 = vadd.f32 0.0, %v1013
      %v1015 = vpop.f32.mrf.mxu0
      %v1016 = vadd.f32 0.0, %v1015
      %1017 = vdwg.mxu0
      %1018 = vmatpush.bf16.msra.mxu0 0
      %1019 = vmatpush.bf16.msra.mxu0 0
      %1020 = vmatpush.bf16.msra.mxu0 0
      %1021 = vmatpush.bf16.msra.mxu0 0
      %1022 = vmatpush.bf16.msra.mxu0 0
      %1023 = vmatpush.bf16.msra.mxu0 0
      %1024 = vmatpush.bf16.msra.mxu0 %v978
      %1025 = vmatpush.bf16.msra.mxu0 %v976
      %1026 = vmatmul.bf16.gmra.mxu0 %v463
      %v1027 = vpop.f32.mrf.mxu0
      %v1028 = vadd.f32 0.0, %v1027
      %v1029 = vpop.f32.mrf.mxu0
      %v1030 = vadd.f32 0.0, %v1029
      %1031 = vmatmul.bf16.gmra.mxu0 %v466
      %v1032 = vpop.f32.mrf.mxu0
      %v1033 = vadd.f32 0.0, %v1032
      %v1034 = vpop.f32.mrf.mxu0
      %v1035 = vadd.f32 0.0, %v1034
      %1036 = vmatmul.bf16.gmra.mxu0 %v984
      %v1037 = vpop.f32.mrf.mxu0
      %v1038 = vadd.f32 0.0, %v1037
      %v1039 = vpop.f32.mrf.mxu0
      %v1040 = vadd.f32 0.0, %v1039
      %1041 = vmatmul.bf16.gmra.mxu0 %v987
      %v1042 = vpop.f32.mrf.mxu0
      %v1043 = vadd.f32 0.0, %v1042
      %v1044 = vpop.f32.mrf.mxu0
      %v1045 = vadd.f32 0.0, %v1044
      %1046 = vdwg.mxu0
      %v1047 = vadd.f32 %v934, %v999
      %v1048 = vadd.f32 %v935, %v1028
      %v1049 = vadd.f32 %v936, %v1001
      %v1050 = vadd.f32 %v937, %v1030
      %v1051 = vadd.f32 %v938, %v1004
      %v1052 = vadd.f32 %v939, %v1033
      %v1053 = vadd.f32 %v940, %v1006
      %v1054 = vadd.f32 %v941, %v1035
      %v1055 = vadd.f32 %v942, %v1009
      %v1056 = vadd.f32 %v943, %v1038
      %v1057 = vadd.f32 %v944, %v1011
      %v1058 = vadd.f32 %v945, %v1040
      %v1059 = vadd.f32 %v946, %v1014
      %v1060 = vadd.f32 %v947, %v1043
      %v1061 = vadd.f32 %v948, %v1016
      %v1062 = vadd.f32 %v949, %v1045
      %s1063 = scalar_lea.vmem %s1, 224
      %v1064 = vld [vmem:[%s1063] sm:$0xff]
      %v1065 = vld [vmem:[%s1063 + $0x8] sm:$0xff]
      %v1066 = vld [vmem:[%s1063 + $0x10] sm:$0xff]
      %v1067 = vld [vmem:[%s1063 + $0x18] sm:$0xff]
      %v1068 = vrot.slane %v225, 1
      %v1069 = vrot.slane %v221, 2
      %v1070 = vor.u32 %v1068, %v1069
      %v1071 = vrot.slane %v233, 1
      %v1072 = vrot.slane %v229, 2
      %v1073 = vor.u32 %v1071, %v1072
      %v1074 = vsel %vm819, %v1070, %v1073
      %v1075 = vrot.slane %v241, 1
      %v1076 = vrot.slane %v237, 2
      %v1077 = vor.u32 %v1075, %v1076
      %v1078 = vsel %vm819, %v1073, %v1077
      %v1080 = vshrl.u32 %v957, 16
      %v1082 = vrot.slane %v1080, 1
      %v1083 = vshll.u32 %v957, 16
      %v1085 = vrot.slane %v1083, 2
      %v1086 = vor.u32 %v1082, %v1085
      %v1087 = vsel %vm819, %v1077, %v1086
      %v1089 = vshrl.u32 %v958, 16
      %v1091 = vrot.slane %v1089, 1
      %v1092 = vshll.u32 %v958, 16
      %v1094 = vrot.slane %v1092, 2
      %v1095 = vor.u32 %v1091, %v1094
      %v1096 = vsel %vm819, %v1086, %v1095
      %v1101 = vunpack.c.l.b16 %v1064
      %v1102 = vunpack.c.h.b16 %v1064
      %v1103 = vunpack.c.l.b16 %v1065
      %v1104 = vunpack.c.h.b16 %v1065
      %v1105 = vunpack.c.l.b16 %v1066
      %v1106 = vunpack.c.h.b16 %v1066
      %v1107 = vunpack.c.l.b16 %v1067
      %v1108 = vunpack.c.h.b16 %v1067
      %v1109 = vpack.c.b16 %v1103, %v1101
      %v1110 = vpack.c.b16 %v1104, %v1102
      %v1111 = vpack.c.b16 %v1107, %v1105
      %v1112 = vpack.c.b16 %v1108, %v1106
      %v1118 = vsel %vm264, %v1074, 0
      %v1121 = vsel %vm264, %v1078, 0
      %v1124 = vsel %vm264, %v1087, 0
      %v1127 = vsel %vm264, %v1096, 0
      %1129 = vmatpush.bf16.msra.mxu0 0
      %1130 = vmatpush.bf16.msra.mxu0 0
      %1131 = vmatpush.bf16.msra.mxu0 0
      %1132 = vmatpush.bf16.msra.mxu0 0
      %1133 = vmatpush.bf16.msra.mxu0 0
      %1134 = vmatpush.bf16.msra.mxu0 0
      %1135 = vmatpush.bf16.msra.mxu0 %v1111
      %1136 = vmatpush.bf16.msra.mxu0 %v1109
      %1137 = vmatmul.bf16.gmra.mxu0 %v1118
      %v1138 = vpop.f32.mrf.mxu0
      %v1139 = vadd.f32 0.0, %v1138
      %v1140 = vpop.f32.mrf.mxu0
      %v1141 = vadd.f32 0.0, %v1140
      %1142 = vmatmul.bf16.gmra.mxu0 %v1121
      %v1143 = vpop.f32.mrf.mxu0
      %v1144 = vadd.f32 0.0, %v1143
      %v1145 = vpop.f32.mrf.mxu0
      %v1146 = vadd.f32 0.0, %v1145
      %1147 = vmatmul.bf16.gmra.mxu0 %v1124
      %v1148 = vpop.f32.mrf.mxu0
      %v1149 = vadd.f32 0.0, %v1148
      %v1150 = vpop.f32.mrf.mxu0
      %v1151 = vadd.f32 0.0, %v1150
      %1152 = vmatmul.bf16.gmra.mxu0 %v1127
      %v1153 = vpop.f32.mrf.mxu0
      %v1154 = vadd.f32 0.0, %v1153
      %v1155 = vpop.f32.mrf.mxu0
      %v1156 = vadd.f32 0.0, %v1155
      %1157 = vdwg.mxu0
      %1158 = vmatpush.bf16.msra.mxu0 0
      %1159 = vmatpush.bf16.msra.mxu0 0
      %1160 = vmatpush.bf16.msra.mxu0 0
      %1161 = vmatpush.bf16.msra.mxu0 0
      %1162 = vmatpush.bf16.msra.mxu0 0
      %1163 = vmatpush.bf16.msra.mxu0 0
      %1164 = vmatpush.bf16.msra.mxu0 %v1112
      %1165 = vmatpush.bf16.msra.mxu0 %v1110
      %1166 = vmatmul.bf16.gmra.mxu0 %v1118
      %v1167 = vpop.f32.mrf.mxu0
      %v1168 = vadd.f32 0.0, %v1167
      %v1169 = vpop.f32.mrf.mxu0
      %v1170 = vadd.f32 0.0, %v1169
      %1171 = vmatmul.bf16.gmra.mxu0 %v1121
      %v1172 = vpop.f32.mrf.mxu0
      %v1173 = vadd.f32 0.0, %v1172
      %v1174 = vpop.f32.mrf.mxu0
      %v1175 = vadd.f32 0.0, %v1174
      %1176 = vmatmul.bf16.gmra.mxu0 %v1124
      %v1177 = vpop.f32.mrf.mxu0
      %v1178 = vadd.f32 0.0, %v1177
      %v1179 = vpop.f32.mrf.mxu0
      %v1180 = vadd.f32 0.0, %v1179
      %1181 = vmatmul.bf16.gmra.mxu0 %v1127
      %v1182 = vpop.f32.mrf.mxu0
      %v1183 = vadd.f32 0.0, %v1182
      %v1184 = vpop.f32.mrf.mxu0
      %v1185 = vadd.f32 0.0, %v1184
      %1186 = vdwg.mxu0
      %v1187 = vadd.f32 %v1047, %v1139
      %v1188 = vadd.f32 %v1048, %v1168
      %v1189 = vadd.f32 %v1049, %v1141
      %v1190 = vadd.f32 %v1050, %v1170
      %v1191 = vadd.f32 %v1051, %v1144
      %v1192 = vadd.f32 %v1052, %v1173
      %v1193 = vadd.f32 %v1053, %v1146
      %v1194 = vadd.f32 %v1054, %v1175
      %v1195 = vadd.f32 %v1055, %v1149
      %v1196 = vadd.f32 %v1056, %v1178
      %v1197 = vadd.f32 %v1057, %v1151
      %v1198 = vadd.f32 %v1058, %v1180
      %v1199 = vadd.f32 %v1059, %v1154
      %v1200 = vadd.f32 %v1060, %v1183
      %v1201 = vadd.f32 %v1061, %v1156
      %v1202 = vadd.f32 %v1062, %v1185
      %s1203 = scalar_lea.vmem %s1, 256
      %v1204 = vld [vmem:[%s1203] sm:$0xff]
      %v1205 = vld [vmem:[%s1203 + $0x8] sm:$0xff]
      %v1206 = vld [vmem:[%s1203 + $0x10] sm:$0xff]
      %v1207 = vld [vmem:[%s1203 + $0x18] sm:$0xff]
      %vm1208 = vcmask 1045504
      %v1209 = vrot.slane %v209, 2
      %v1210 = vrot.slane %v210, 2
      %v1211 = vsel %vm1208, %v1209, %v1210
      %v1212 = vrot.slane %v211, 2
      %v1213 = vsel %vm1208, %v1210, %v1212
      %v1214 = vrot.slane %v957, 2
      %v1215 = vsel %vm1208, %v1212, %v1214
      %v1216 = vrot.slane %v958, 2
      %v1217 = vsel %vm1208, %v1214, %v1216
      %v1222 = vunpack.c.l.b16 %v1204
      %v1223 = vunpack.c.h.b16 %v1204
      %v1224 = vunpack.c.l.b16 %v1205
      %v1225 = vunpack.c.h.b16 %v1205
      %v1226 = vunpack.c.l.b16 %v1206
      %v1227 = vunpack.c.h.b16 %v1206
      %v1228 = vunpack.c.l.b16 %v1207
      %v1229 = vunpack.c.h.b16 %v1207
      %v1230 = vpack.c.b16 %v1224, %v1222
      %v1231 = vpack.c.b16 %v1225, %v1223
      %v1232 = vpack.c.b16 %v1228, %v1226
      %v1233 = vpack.c.b16 %v1229, %v1227
      %v1239 = vsel %vm264, %v1211, 0
      %v1242 = vsel %vm264, %v1213, 0
      %v1245 = vsel %vm264, %v1215, 0
      %v1248 = vsel %vm264, %v1217, 0
      %1250 = vmatpush.bf16.msra.mxu0 0
      %1251 = vmatpush.bf16.msra.mxu0 0
      %1252 = vmatpush.bf16.msra.mxu0 0
      %1253 = vmatpush.bf16.msra.mxu0 0
      %1254 = vmatpush.bf16.msra.mxu0 0
      %1255 = vmatpush.bf16.msra.mxu0 0
      %1256 = vmatpush.bf16.msra.mxu0 %v1232
      %1257 = vmatpush.bf16.msra.mxu0 %v1230
      %1258 = vmatmul.bf16.gmra.mxu0 %v1239
      %v1259 = vpop.f32.mrf.mxu0
      %v1260 = vadd.f32 0.0, %v1259
      %v1261 = vpop.f32.mrf.mxu0
      %v1262 = vadd.f32 0.0, %v1261
      %1263 = vmatmul.bf16.gmra.mxu0 %v1242
      %v1264 = vpop.f32.mrf.mxu0
      %v1265 = vadd.f32 0.0, %v1264
      %v1266 = vpop.f32.mrf.mxu0
      %v1267 = vadd.f32 0.0, %v1266
      %1268 = vmatmul.bf16.gmra.mxu0 %v1245
      %v1269 = vpop.f32.mrf.mxu0
      %v1270 = vadd.f32 0.0, %v1269
      %v1271 = vpop.f32.mrf.mxu0
      %v1272 = vadd.f32 0.0, %v1271
      %1273 = vmatmul.bf16.gmra.mxu0 %v1248
      %v1274 = vpop.f32.mrf.mxu0
      %v1275 = vadd.f32 0.0, %v1274
      %v1276 = vpop.f32.mrf.mxu0
      %v1277 = vadd.f32 0.0, %v1276
      %1278 = vdwg.mxu0
      %1279 = vmatpush.bf16.msra.mxu0 0
      %1280 = vmatpush.bf16.msra.mxu0 0
      %1281 = vmatpush.bf16.msra.mxu0 0
      %1282 = vmatpush.bf16.msra.mxu0 0
      %1283 = vmatpush.bf16.msra.mxu0 0
      %1284 = vmatpush.bf16.msra.mxu0 0
      %1285 = vmatpush.bf16.msra.mxu0 %v1233
      %1286 = vmatpush.bf16.msra.mxu0 %v1231
      %1287 = vmatmul.bf16.gmra.mxu0 %v1239
      %v1288 = vpop.f32.mrf.mxu0
      %v1289 = vadd.f32 0.0, %v1288
      %v1290 = vpop.f32.mrf.mxu0
      %v1291 = vadd.f32 0.0, %v1290
      %1292 = vmatmul.bf16.gmra.mxu0 %v1242
      %v1293 = vpop.f32.mrf.mxu0
      %v1294 = vadd.f32 0.0, %v1293
      %v1295 = vpop.f32.mrf.mxu0
      %v1296 = vadd.f32 0.0, %v1295
      %1297 = vmatmul.bf16.gmra.mxu0 %v1245
      %v1298 = vpop.f32.mrf.mxu0
      %v1299 = vadd.f32 0.0, %v1298
      %v1300 = vpop.f32.mrf.mxu0
      %v1301 = vadd.f32 0.0, %v1300
      %1302 = vmatmul.bf16.gmra.mxu0 %v1248
      %v1303 = vpop.f32.mrf.mxu0
      %v1304 = vadd.f32 0.0, %v1303
      %v1305 = vpop.f32.mrf.mxu0
      %v1306 = vadd.f32 0.0, %v1305
      %1307 = vdwg.mxu0
      %v1308 = vadd.f32 %v1187, %v1260
      %v1309 = vadd.f32 %v1188, %v1289
      %v1310 = vadd.f32 %v1189, %v1262
      %v1311 = vadd.f32 %v1190, %v1291
      %v1312 = vadd.f32 %v1191, %v1265
      %v1313 = vadd.f32 %v1192, %v1294
      %v1314 = vadd.f32 %v1193, %v1267
      %v1315 = vadd.f32 %v1194, %v1296
      %v1316 = vadd.f32 %v1195, %v1270
      %v1317 = vadd.f32 %v1196, %v1299
      %v1318 = vadd.f32 %v1197, %v1272
      %v1319 = vadd.f32 %v1198, %v1301
      %v1320 = vadd.f32 %v1199, %v1275
      %v1321 = vadd.f32 %v1200, %v1304
      %v1322 = vadd.f32 %v1201, %v1277
      %v1323 = vadd.f32 %v1202, %v1306
      %v1324 = vld [vmem:[%s2] sm:$0x3]
      %v1326 = vperm.slane %v1324, 0
      %v1327 = vperm.slane %v1324, 1
      %v1330 = vadd.f32 %v1308, %v1326
      %v1331 = vadd.f32 %v1309, %v1327
      %v1332 = vadd.f32 %v1310, %v1326
      %v1333 = vadd.f32 %v1311, %v1327
      %v1334 = vadd.f32 %v1312, %v1326
      %v1335 = vadd.f32 %v1313, %v1327
      %v1336 = vadd.f32 %v1314, %v1326
      %v1337 = vadd.f32 %v1315, %v1327
      %v1338 = vadd.f32 %v1316, %v1326
      %v1339 = vadd.f32 %v1317, %v1327
      %v1340 = vadd.f32 %v1318, %v1326
      %v1341 = vadd.f32 %v1319, %v1327
      %v1342 = vadd.f32 %v1320, %v1326
      %v1343 = vadd.f32 %v1321, %v1327
      %v1344 = vadd.f32 %v1322, %v1326
      %v1345 = vadd.f32 %v1323, %v1327
      %v1346 = vmax.f32 %v1330, 0.0
      %v1347 = vmax.f32 %v1331, 0.0
      %v1348 = vmax.f32 %v1332, 0.0
      %v1349 = vmax.f32 %v1333, 0.0
      %v1350 = vmax.f32 %v1334, 0.0
      %v1351 = vmax.f32 %v1335, 0.0
      %v1352 = vmax.f32 %v1336, 0.0
      %v1353 = vmax.f32 %v1337, 0.0
      %v1354 = vmax.f32 %v1338, 0.0
      %v1355 = vmax.f32 %v1339, 0.0
      %v1356 = vmax.f32 %v1340, 0.0
      %v1357 = vmax.f32 %v1341, 0.0
      %v1358 = vmax.f32 %v1342, 0.0
      %v1359 = vmax.f32 %v1343, 0.0
      %v1360 = vmax.f32 %v1344, 0.0
      %v1361 = vmax.f32 %v1345, 0.0
      %v1378 = vrot.slane %v1347, 7
      %v1379 = vrot.slane %v1349, 7
      %v1380 = vrot.slane %v1351, 7
      %v1381 = vrot.slane %v1353, 7
      %v1382 = vrot.slane %v1355, 7
      %v1383 = vrot.slane %v1357, 7
      %v1384 = vrot.slane %v1359, 7
      %v1385 = vrot.slane %v1361, 7
      %vm1386 = vcmask 1040384
      %v1387 = vsel %vm1386, %v1346, %v1378
      %vm1388 = vcmask 1041409
      %v1389 = vsel %vm1388, %v1346, %v1378
      %v1390 = vrot.slane %v1389, 1
      %vm1391 = vcmask 1042434
      %v1392 = vsel %vm1391, %v1346, %v1378
      %v1393 = vrot.slane %v1392, 2
      %vm1394 = vcmask 1043459
      %v1395 = vsel %vm1394, %v1346, %v1378
      %v1396 = vrot.slane %v1395, 3
      %vm1397 = vcmask 1044484
      %v1398 = vsel %vm1397, %v1346, %v1378
      %v1399 = vrot.slane %v1398, 4
      %vm1400 = vcmask 1045509
      %v1401 = vsel %vm1400, %v1346, %v1378
      %v1402 = vrot.slane %v1401, 5
      %vm1403 = vcmask 1046534
      %v1404 = vsel %vm1403, %v1346, %v1378
      %v1405 = vrot.slane %v1404, 6
      %v1406 = vsel %vm1388, %v1348, %v1379
      %v1407 = vrot.slane %v1406, 1
      %v1408 = vsel %vm1391, %v1348, %v1379
      %v1409 = vrot.slane %v1408, 2
      %v1410 = vsel %vm1394, %v1348, %v1379
      %v1411 = vrot.slane %v1410, 3
      %v1412 = vsel %vm1397, %v1348, %v1379
      %v1413 = vrot.slane %v1412, 4
      %v1414 = vsel %vm1400, %v1348, %v1379
      %v1415 = vrot.slane %v1414, 5
      %v1416 = vsel %vm1403, %v1348, %v1379
      %v1417 = vrot.slane %v1416, 6
      %vm1418 = vcmask 1046528
      %v1419 = vsel %vm1418, %v1379, %v1348
      %v1420 = vrot.slane %v1419, 7
      %v1421 = vsel %vm1391, %v1350, %v1380
      %v1422 = vrot.slane %v1421, 2
      %v1423 = vsel %vm1394, %v1350, %v1380
      %v1424 = vrot.slane %v1423, 3
      %v1425 = vsel %vm1397, %v1350, %v1380
      %v1426 = vrot.slane %v1425, 4
      %v1427 = vsel %vm1400, %v1350, %v1380
      %v1428 = vrot.slane %v1427, 5
      %v1429 = vsel %vm1403, %v1350, %v1380
      %v1430 = vrot.slane %v1429, 6
      %v1431 = vsel %vm1418, %v1380, %v1350
      %v1432 = vrot.slane %v1431, 7
      %v1433 = vsel %vm1386, %v1352, %v1381
      %v1434 = vsel %vm1394, %v1352, %v1381
      %v1435 = vrot.slane %v1434, 3
      %v1436 = vsel %vm1397, %v1352, %v1381
      %v1437 = vrot.slane %v1436, 4
      %v1438 = vsel %vm1400, %v1352, %v1381
      %v1439 = vrot.slane %v1438, 5
      %v1440 = vsel %vm1403, %v1352, %v1381
      %v1441 = vrot.slane %v1440, 6
      %v1442 = vsel %vm1418, %v1381, %v1352
      %v1443 = vrot.slane %v1442, 7
      %v1444 = vsel %vm1386, %v1354, %v1382
      %v1445 = vsel %vm1388, %v1354, %v1382
      %v1446 = vrot.slane %v1445, 1
      %v1447 = vsel %vm1397, %v1354, %v1382
      %v1448 = vrot.slane %v1447, 4
      %v1449 = vsel %vm1400, %v1354, %v1382
      %v1450 = vrot.slane %v1449, 5
      %v1451 = vsel %vm1403, %v1354, %v1382
      %v1452 = vrot.slane %v1451, 6
      %v1453 = vsel %vm1418, %v1382, %v1354
      %v1454 = vrot.slane %v1453, 7
      %v1455 = vsel %vm1386, %v1356, %v1383
      %v1456 = vsel %vm1388, %v1356, %v1383
      %v1457 = vrot.slane %v1456, 1
      %v1458 = vsel %vm1391, %v1356, %v1383
      %v1459 = vrot.slane %v1458, 2
      %v1460 = vsel %vm1400, %v1356, %v1383
      %v1461 = vrot.slane %v1460, 5
      %v1462 = vsel %vm1403, %v1356, %v1383
      %v1463 = vrot.slane %v1462, 6
      %v1464 = vsel %vm1418, %v1383, %v1356
      %v1465 = vrot.slane %v1464, 7
      %v1466 = vsel %vm1386, %v1358, %v1384
      %v1467 = vsel %vm1388, %v1358, %v1384
      %v1468 = vrot.slane %v1467, 1
      %v1469 = vsel %vm1391, %v1358, %v1384
      %v1470 = vrot.slane %v1469, 2
      %v1471 = vsel %vm1394, %v1358, %v1384
      %v1472 = vrot.slane %v1471, 3
      %v1473 = vsel %vm1403, %v1358, %v1384
      %v1474 = vrot.slane %v1473, 6
      %v1475 = vsel %vm1418, %v1384, %v1358
      %v1476 = vrot.slane %v1475, 7
      %v1477 = vsel %vm1386, %v1360, %v1385
      %v1478 = vsel %vm1388, %v1360, %v1385
      %v1479 = vrot.slane %v1478, 1
      %v1480 = vsel %vm1391, %v1360, %v1385
      %v1481 = vrot.slane %v1480, 2
      %v1482 = vsel %vm1394, %v1360, %v1385
      %v1483 = vrot.slane %v1482, 3
      %v1484 = vsel %vm1397, %v1360, %v1385
      %v1485 = vrot.slane %v1484, 4
      %1486 = vst [vmem:[#allocation1] ss:$9 sm:$0xff] %v1387
      %s1487 = scalar_lea.vmem [#allocation1], 1
      %1488 = vst [vmem:[%s1487] ss:$9 sm:$0xff] %v1390
      %s1489 = scalar_lea.vmem [#allocation1], 2
      %1490 = vst [vmem:[%s1489] ss:$9 sm:$0xff] %v1393
      %s1491 = scalar_lea.vmem [#allocation1], 3
      %1492 = vst [vmem:[%s1491] ss:$9 sm:$0xff] %v1396
      %s1493 = scalar_lea.vmem [#allocation1], 4
      %1494 = vst [vmem:[%s1493] ss:$9 sm:$0xff] %v1399
      %s1495 = scalar_lea.vmem [#allocation1], 5
      %1496 = vst [vmem:[%s1495] ss:$9 sm:$0xff] %v1402
      %s1497 = scalar_lea.vmem [#allocation1], 6
      %1498 = vst [vmem:[%s1497] ss:$9 sm:$0xff] %v1405
      %v1499 = vld [vmem:[#allocation1] sm:$0xff]
      %v1500 = vld [vmem:[#allocation1 + $0x9] sm:$0xff]
      %1501 = vst [vmem:[#allocation1] ss:$9 sm:$0xff] %v1407
      %1502 = vst [vmem:[%s1487] ss:$9 sm:$0xff] %v1409
      %1503 = vst [vmem:[%s1489] ss:$9 sm:$0xff] %v1411
      %1504 = vst [vmem:[%s1491] ss:$9 sm:$0xff] %v1413
      %1505 = vst [vmem:[%s1493] ss:$9 sm:$0xff] %v1415
      %1506 = vst [vmem:[%s1495] ss:$9 sm:$0xff] %v1417
      %1507 = vst [vmem:[%s1497] ss:$9 sm:$0xff] %v1420
      %v1508 = vld [vmem:[#allocation1] sm:$0xff]
      %v1509 = vld [vmem:[#allocation1 + $0x9] sm:$0xff]
      %1510 = vst [vmem:[#allocation1] ss:$9 sm:$0xff] %v1422
      %1511 = vst [vmem:[%s1487] ss:$9 sm:$0xff] %v1424
      %1512 = vst [vmem:[%s1489] ss:$9 sm:$0xff] %v1426
      %1513 = vst [vmem:[%s1491] ss:$9 sm:$0xff] %v1428
      %1514 = vst [vmem:[%s1493] ss:$9 sm:$0xff] %v1430
      %1515 = vst [vmem:[%s1495] ss:$9 sm:$0xff] %v1432
      %1516 = vst [vmem:[%s1497] ss:$9 sm:$0xff] %v1433
      %v1517 = vld [vmem:[#allocation1] sm:$0xff]
      %v1518 = vld [vmem:[#allocation1 + $0x9] sm:$0xff]
      %1519 = vst [vmem:[#allocation1] ss:$9 sm:$0xff] %v1435
      %1520 = vst [vmem:[%s1487] ss:$9 sm:$0xff] %v1437
      %1521 = vst [vmem:[%s1489] ss:$9 sm:$0xff] %v1439
      %1522 = vst [vmem:[%s1491] ss:$9 sm:$0xff] %v1441
      %1523 = vst [vmem:[%s1493] ss:$9 sm:$0xff] %v1443
      %1524 = vst [vmem:[%s1495] ss:$9 sm:$0xff] %v1444
      %1525 = vst [vmem:[%s1497] ss:$9 sm:$0xff] %v1446
      %v1526 = vld [vmem:[#allocation1] sm:$0xff]
      %v1527 = vld [vmem:[#allocation1 + $0x9] sm:$0xff]
      %1528 = vst [vmem:[#allocation1] ss:$9 sm:$0xff] %v1448
      %1529 = vst [vmem:[%s1487] ss:$9 sm:$0xff] %v1450
      %1530 = vst [vmem:[%s1489] ss:$9 sm:$0xff] %v1452
      %1531 = vst [vmem:[%s1491] ss:$9 sm:$0xff] %v1454
      %1532 = vst [vmem:[%s1493] ss:$9 sm:$0xff] %v1455
      %1533 = vst [vmem:[%s1495] ss:$9 sm:$0xff] %v1457
      %1534 = vst [vmem:[%s1497] ss:$9 sm:$0xff] %v1459
      %v1535 = vld [vmem:[#allocation1] sm:$0xff]
      %v1536 = vld [vmem:[#allocation1 + $0x9] sm:$0xff]
      %1537 = vst [vmem:[#allocation1] ss:$9 sm:$0xff] %v1461
      %1538 = vst [vmem:[%s1487] ss:$9 sm:$0xff] %v1463
      %1539 = vst [vmem:[%s1489] ss:$9 sm:$0xff] %v1465
      %1540 = vst [vmem:[%s1491] ss:$9 sm:$0xff] %v1466
      %1541 = vst [vmem:[%s1493] ss:$9 sm:$0xff] %v1468
      %1542 = vst [vmem:[%s1495] ss:$9 sm:$0xff] %v1470
      %1543 = vst [vmem:[%s1497] ss:$9 sm:$0xff] %v1472
      %v1544 = vld [vmem:[#allocation1] sm:$0xff]
      %v1545 = vld [vmem:[#allocation1 + $0x9] sm:$0xff]
      %1546 = vst [vmem:[#allocation1] ss:$9 sm:$0xff] %v1474
      %1547 = vst [vmem:[%s1487] ss:$9 sm:$0xff] %v1476
      %1548 = vst [vmem:[%s1489] ss:$9 sm:$0xff] %v1477
      %1549 = vst [vmem:[%s1491] ss:$9 sm:$0xff] %v1479
      %1550 = vst [vmem:[%s1493] ss:$9 sm:$0xff] %v1481
      %1551 = vst [vmem:[%s1495] ss:$9 sm:$0xff] %v1483
      %1552 = vst [vmem:[%s1497] ss:$9 sm:$0xff] %v1485
      %v1553 = vld [vmem:[#allocation1] sm:$0xff]
      %v1554 = vld [vmem:[#allocation1 + $0x9] sm:$0xff]
      %v1556 = vrot.slane 0.0, 7
      %v1557 = vrot.slane %v1499, 7
      %v1558 = vrot.slane %v1500, 7
      %v1559 = vrot.slane %v1508, 7
      %v1560 = vrot.slane %v1509, 7
      %v1561 = vrot.slane %v1517, 7
      %v1562 = vrot.slane %v1518, 7
      %v1563 = vrot.slane %v1526, 7
      %v1564 = vrot.slane %v1527, 7
      %v1565 = vrot.slane %v1535, 7
      %v1566 = vrot.slane %v1536, 7
      %v1567 = vrot.slane %v1544, 7
      %v1568 = vrot.slane %v1545, 7
      %v1569 = vrot.slane %v1553, 7
      %v1570 = vrot.slane %v1554, 7
      %v1586 = vsel %vm1386, 0.0, %v1556
      %v1587 = vsel %vm1386, 0.0, %v1557
      %v1588 = vsel %vm1386, 0.0, %v1558
      %v1589 = vsel %vm1386, 0.0, %v1559
      %v1590 = vsel %vm1386, 0.0, %v1560
      %v1591 = vsel %vm1386, 0.0, %v1561
      %v1592 = vsel %vm1386, 0.0, %v1562
      %v1593 = vsel %vm1386, 0.0, %v1563
      %v1594 = vsel %vm1386, 0.0, %v1564
      %v1595 = vsel %vm1386, 0.0, %v1565
      %v1596 = vsel %vm1386, 0.0, %v1566
      %v1597 = vsel %vm1386, 0.0, %v1567
      %v1598 = vsel %vm1386, 0.0, %v1568
      %v1599 = vsel %vm1386, 0.0, %v1569
      %v1600 = vsel %vm1386, 0.0, %v1570
      %v1601 = vmax.f32 %v1586, %v1587
      %v1602 = vmax.f32 %v1586, %v1588
      %v1603 = vmax.f32 %v1601, %v1589
      %v1604 = vmax.f32 %v1602, %v1590
      %v1605 = vmax.f32 %v1589, %v1591
      %v1606 = vmax.f32 %v1590, %v1592
      %v1607 = vmax.f32 %v1605, %v1593
      %v1608 = vmax.f32 %v1606, %v1594
      %v1609 = vmax.f32 %v1593, %v1595
      %v1610 = vmax.f32 %v1594, %v1596
      %v1611 = vmax.f32 %v1609, %v1597
      %v1612 = vmax.f32 %v1610, %v1598
      %v1613 = vmax.f32 %v1597, %v1599
      %v1614 = vmax.f32 %v1598, %v1600
      %v1615 = vmax.f32 %v1613, %v1586
      %v1616 = vmax.f32 %v1614, %v1586
      %v1625 = vrot.slane %v1603, 1
      %v1626 = vrot.slane %v1604, 1
      %v1627 = vrot.slane %v1607, 1
      %v1628 = vrot.slane %v1608, 1
      %v1629 = vrot.slane %v1611, 1
      %v1630 = vrot.slane %v1612, 1
      %v1631 = vrot.slane %v1615, 1
      %v1632 = vrot.slane %v1616, 1
      %v1641 = vmax.f32 %v1603, %v1625
      %v1642 = vmax.f32 %v1604, %v1626
      %v1643 = vmax.f32 %v1607, %v1627
      %v1644 = vmax.f32 %v1608, %v1628
      %v1645 = vmax.f32 %v1611, %v1629
      %v1646 = vmax.f32 %v1612, %v1630
      %v1647 = vmax.f32 %v1615, %v1631
      %v1648 = vmax.f32 %v1616, %v1632
      %vm1649 = vcmask 1045504
      %v1650 = vrot.slane %v1603, 2
      %v1651 = vrot.slane 0.0, 2
      %v1652 = vsel %vm1649, %v1650, %v1651
      %v1653 = vrot.slane %v1604, 2
      %v1654 = vsel %vm1649, %v1653, %v1651
      %v1655 = vrot.slane %v1607, 2
      %v1656 = vsel %vm1649, %v1655, %v1651
      %v1657 = vrot.slane %v1608, 2
      %v1658 = vsel %vm1649, %v1657, %v1651
      %v1659 = vrot.slane %v1611, 2
      %v1660 = vsel %vm1649, %v1659, %v1651
      %v1661 = vrot.slane %v1612, 2
      %v1662 = vsel %vm1649, %v1661, %v1651
      %v1663 = vrot.slane %v1615, 2
      %v1664 = vsel %vm1649, %v1663, %v1651
      %v1665 = vrot.slane %v1616, 2
      %v1666 = vsel %vm1649, %v1665, %v1651
      %v1675 = vmax.f32 %v1641, %v1652
      %v1676 = vmax.f32 %v1642, %v1654
      %v1677 = vmax.f32 %v1643, %v1656
      %v1678 = vmax.f32 %v1644, %v1658
      %v1679 = vmax.f32 %v1645, %v1660
      %v1680 = vmax.f32 %v1646, %v1662
      %v1681 = vmax.f32 %v1647, %v1664
      %v1682 = vmax.f32 %v1648, %v1666
      %v1691 = vrot.slane %v1675, 1
      %v1692 = vrot.slane %v1676, 1
      %v1693 = vrot.slane %v1677, 1
      %v1694 = vrot.slane %v1678, 1
      %v1695 = vrot.slane %v1679, 1
      %v1696 = vrot.slane %v1680, 1
      %v1697 = vrot.slane %v1681, 1
      %v1698 = vrot.slane %v1682, 1
      %v1707 = vrot.slane %v1675, 2
      %v1708 = vrot.slane %v1676, 2
      %v1709 = vrot.slane %v1677, 2
      %v1710 = vrot.slane %v1678, 2
      %v1711 = vrot.slane %v1679, 2
      %v1712 = vrot.slane %v1680, 2
      %v1713 = vrot.slane %v1681, 2
      %v1714 = vrot.slane %v1682, 2
      %v1723 = vrot.slane %v1675, 3
      %v1724 = vrot.slane %v1676, 3
      %v1725 = vrot.slane %v1677, 3
      %v1726 = vrot.slane %v1678, 3
      %v1727 = vrot.slane %v1679, 3
      %v1728 = vrot.slane %v1680, 3
      %v1729 = vrot.slane %v1681, 3
      %v1730 = vrot.slane %v1682, 3
      %v1739 = vsel %vm1386, %v1675, %v1691
      %v1740 = vsel %vm1386, %v1676, %v1692
      %v1741 = vsel %vm1386, %v1677, %v1693
      %v1742 = vsel %vm1386, %v1678, %v1694
      %v1743 = vsel %vm1386, %v1679, %v1695
      %v1744 = vsel %vm1386, %v1680, %v1696
      %v1745 = vsel %vm1386, %v1681, %v1697
      %v1746 = vsel %vm1386, %v1682, %v1698
      %vm1747 = vcmask 1041408
      %v1748 = vsel %vm1747, %v1739, %v1707
      %v1749 = vsel %vm1747, %v1740, %v1708
      %v1750 = vsel %vm1747, %v1741, %v1709
      %v1751 = vsel %vm1747, %v1742, %v1710
      %v1752 = vsel %vm1747, %v1743, %v1711
      %v1753 = vsel %vm1747, %v1744, %v1712
      %v1754 = vsel %vm1747, %v1745, %v1713
      %v1755 = vsel %vm1747, %v1746, %v1714
      %vm1756 = vcmask 1042432
      %v1757 = vsel %vm1756, %v1748, %v1723
      %v1758 = vsel %vm1756, %v1749, %v1724
      %v1759 = vsel %vm1756, %v1750, %v1725
      %v1760 = vsel %vm1756, %v1751, %v1726
      %v1761 = vsel %vm1756, %v1752, %v1727
      %v1762 = vsel %vm1756, %v1753, %v1728
      %v1763 = vsel %vm1756, %v1754, %v1729
      %v1764 = vsel %vm1756, %v1755, %v1730
      %v1765 = vpack.c.bf16 %v1758, %v1757
      %v1766 = vpack.c.bf16 %v1760, %v1759
      %v1767 = vpack.c.bf16 %v1762, %v1761
      %v1768 = vpack.c.bf16 %v1764, %v1763
      %v1773 = vrot.slane %v1765, 2
      %v1774 = vrot.slane %v1766, 2
      %v1775 = vrot.slane %v1767, 2
      %v1776 = vrot.slane %v1768, 2
      %v1779 = vsel %vm1747, %v1765, %v1773
      %v1782 = vsel %vm1747, %v1766, %v1774
      %v1785 = vsel %vm1747, %v1767, %v1775
      %v1788 = vsel %vm1747, %v1768, %v1776
      %1793 = vst [vmem:[%s170] sm:$0xf] %v1779
      %1794 = vst [vmem:[%s170 + $0x4] sm:$0xf] %v1782
      %1795 = vst [vmem:[%s170 + $0x8] sm:$0xf] %v1785
      %1796 = vst [vmem:[%s170 + $0xc] sm:$0xf] %v1788
      %p1797 = scmp.lt.s32.totalorder %s14, 1
      %s1798 = scalar_select %p1797, %s14, 1
      %s1799 = smul.addr %s1798, 8
      %s1800 = smul.addr %s1799, 2
      %s1801 = scalar_lea.vmem %s3, %s1800
      // Predicated region
      $region33: #{corelnet_forward.4} parent=31 // pred_check
        %p1802 = pneg %p100
      $region34: #{corelnet_forward.4} parent=31 // pred_check_branch
        %1804 = sbr.rel (%p1802) target = $region36
      $region35: #{corelnet_forward.4} parent=31 // pred_region
        _
      $region36: #{corelnet_forward.4} parent=31 // pred_fallthru
        _
    $region32: #{corelnet_forward.4} parent=5 // pred_fallthru
      _
    %p1805 = scmp.le.s32.totalorder 2, %s9
    // Predicated region
    $region37: #{corelnet_forward.4} parent=5 // pred_check
      %p1806 = pneg %p1805
    $region38: #{corelnet_forward.4} parent=5 // pred_check_branch
      %1808 = sbr.rel (%p1806) target = $region40
    $region39: #{corelnet_forward.4} parent=5 // pred_region
      %s1809 = ssub.s32 %s9, 2
      // Predicated region
      $region41: #{corelnet_forward.4} parent=39 // pred_check
        %p1810 = pneg %p106
      $region42: #{corelnet_forward.4} parent=39 // pred_check_branch
        %1812 = sbr.rel (%p1810) target = $region44
      $region43: #{corelnet_forward.4} parent=39 // pred_region
        %p1813 = scmp.lt.s32.totalorder %s15, 1
        %s1814 = scalar_select %p1813, %s15, 1
        %s1815 = smul.addr %s1814, 8
        %s1816 = smul.addr %s1815, 2
        %s1817 = scalar_lea.vmem %s3, %s1816
      $region44: #{corelnet_forward.4} parent=39 // pred_fallthru
        _
    $region40: #{corelnet_forward.4} parent=5 // pred_fallthru
      _
  $region6: #{corelnet_forward.4} parent=0 // loop_footer
    %s13 = sadd.s32 1, %s9
  $region7: #{corelnet_forward.4} parent=0 // loop_footer_branch
    %8 = sbr.rel target = $region3
  $region8: #{corelnet_forward.4} parent=0 // loop_exit
    _

// kernel: corelnet_forward.3
$region0: #{corelnet_forward.3}
  #allocation0 [shape = 'u32[]', space=smem, size = 0x4, offset = 0x4, fixed_abs, tag = 'smem constant byte address 0x4 - core index']
  #allocation1 [shape = 'u32[72,128]{1,0:T(1,128)}', space=vmem, size = 0x9000, scoped, tag = 'internal scratch']
  %s0 = inlined_call_operand.vmem [shape: bf16[2,227,3], index: 0, kind: input, shape index: {}]
  %s1 = inlined_call_operand.vmem [shape: bf16[9,3,32], index: 1, kind: input, shape index: {}]
  %s2 = inlined_call_operand.vmem [shape: f32[1,32], index: 2, kind: input, shape index: {}]
  %s3 = inlined_call_operand.vmem [shape: bf16[2,7,7,32], index: 3, kind: output, shape index: {}]
  %s4 = sld [smem:[#allocation0]]
  $region45: #{corelnet_forward.3} parent=0
    _
  %s6 = ssub.s32 1, %s4
  %s7 = scalar_select 0, %s6, %s4
  loop: start=0, step=1, limit=4
  $region2: #{corelnet_forward.3} parent=0 // loop_pre_header
    _
  $region3: #{corelnet_forward.3} parent=0 // loop_header
    %s9 = sphi 0, %s13
    %p10 = scmp.ge.s32.totalorder %s9, 4
    %s19 = sphi 0, %s21
    %s22 = sphi 0, %s19
    %s23 = sphi 0, %s22
    %s39 = sphi 0, %s23
    %s43 = sphi 0, %s43
    %s45 = sphi 0, %s43
    %s46 = sphi 0, %s45
    %s60 = sphi 0, %s46
    %s64 = sphi 0, %s64
    %s66 = sphi 0, %s64
    %s67 = sphi 0, %s66
    %s81 = sphi 0, %s67
    %s87 = sphi 0, %s89
    %s90 = sphi 0, %s87
    %s91 = sphi 0, %s90
    %s107 = sphi 0, %s91
  $region4: #{corelnet_forward.3} parent=0 // loop_header_branch
    %12 = sbr.rel (%p10) target = $region8
  $region5: #{corelnet_forward.3} parent=0 // loop_body
    %s14 = ssub.s32 %s9, 1
    %s15 = ssub.s32 %s9, 2
    %s16 = sadd.s32 %s9, 1
    %s17 = ssub.s32 %s9, %s16
    %p18 = scmp.eq.s32.totalorder %s17, 0
    %s20 = sadd.s32 %s19, 1
    %s21 = scalar_select %p18, %s19, %s20
    %p24 = pneg %p18
    %p25 = scmp.eq.s32.totalorder %s9, 1
    %p26 = por %p24, %p25
    %p27 = scmp.ne.s32.totalorder %s19, %s22
    %p28 = scmp.eq.s32.totalorder %s9, 0
    %p29 = por %p27, %p28
    %p30 = scmp.ne.s32.totalorder %s19, %s22
    %p31 = scmp.eq.s32.totalorder %s14, 1
    %p32 = por %p30, %p31
    %p33 = scmp.ne.s32.totalorder %s22, %s23
    %p34 = scmp.eq.s32.totalorder %s14, 0
    %p35 = por %p33, %p34
    %p36 = scmp.ne.s32.totalorder %s22, %s23
    %p37 = scmp.eq.s32.totalorder %s15, 1
    %p38 = por %p36, %p37
    %p40 = scmp.ne.s32.totalorder %s23, %s39
    %p41 = scmp.eq.s32.totalorder %s15, 0
    %p42 = por %p40, %p41
    %s44 = sadd.s32 %s43, 1
    %p47 = scmp.eq.s32.totalorder %s9, 1
    %p48 = scmp.ne.s32.totalorder %s43, %s45
    %p49 = scmp.eq.s32.totalorder %s9, 0
    %p50 = por %p48, %p49
    %p51 = scmp.ne.s32.totalorder %s43, %s45
    %p52 = scmp.eq.s32.totalorder %s14, 1
    %p53 = por %p51, %p52
    %p54 = scmp.ne.s32.totalorder %s45, %s46
    %p55 = scmp.eq.s32.totalorder %s14, 0
    %p56 = por %p54, %p55
    %p57 = scmp.ne.s32.totalorder %s45, %s46
    %p58 = scmp.eq.s32.totalorder %s15, 1
    %p59 = por %p57, %p58
    %p61 = scmp.ne.s32.totalorder %s46, %s60
    %p62 = scmp.eq.s32.totalorder %s15, 0
    %p63 = por %p61, %p62
    %s65 = sadd.s32 %s64, 1
    %p68 = scmp.eq.s32.totalorder %s9, 1
    %p69 = scmp.ne.s32.totalorder %s64, %s66
    %p70 = scmp.eq.s32.totalorder %s9, 0
    %p71 = por %p69, %p70
    %p72 = scmp.ne.s32.totalorder %s64, %s66
    %p73 = scmp.eq.s32.totalorder %s14, 1
    %p74 = por %p72, %p73
    %p75 = scmp.ne.s32.totalorder %s66, %s67
    %p76 = scmp.eq.s32.totalorder %s14, 0
    %p77 = por %p75, %p76
    %p78 = scmp.ne.s32.totalorder %s66, %s67
    %p79 = scmp.eq.s32.totalorder %s15, 1
    %p80 = por %p78, %p79
    %p82 = scmp.ne.s32.totalorder %s67, %s81
    %p83 = scmp.eq.s32.totalorder %s15, 0
    %p84 = por %p82, %p83
    %s85 = ssub.s32 %s9, %s16
    %p86 = scmp.eq.s32.totalorder %s85, 0
    %s88 = sadd.s32 %s87, 1
    %s89 = scalar_select %p86, %s87, %s88
    %p92 = pneg %p86
    %p93 = scmp.eq.s32.totalorder %s9, 1
    %p94 = por %p92, %p93
    %p95 = scmp.ne.s32.totalorder %s87, %s90
    %p96 = scmp.eq.s32.totalorder %s9, 0
    %p97 = por %p95, %p96
    %p98 = scmp.ne.s32.totalorder %s87, %s90
    %p99 = scmp.eq.s32.totalorder %s14, 1
    %p100 = por %p98, %p99
    %p101 = scmp.ne.s32.totalorder %s90, %s91
    %p102 = scmp.eq.s32.totalorder %s14, 0
    %p103 = por %p101, %p102
    %p104 = scmp.ne.s32.totalorder %s90, %s91
    %p105 = scmp.eq.s32.totalorder %s15, 1
    %p106 = por %p104, %p105
    %p108 = scmp.ne.s32.totalorder %s91, %s107
    %p109 = scmp.eq.s32.totalorder %s15, 0
    %p110 = por %p108, %p109
    %p111 = scmp.le.s32.totalorder 1, %s9
    %p112 = scmp.lt.s32.totalorder %s9, 3
    %p113 = pnand %p111, %p112
    %p114 = pneg %p113
    // Predicated region
    $region9: #{corelnet_forward.3} parent=5 // pred_check
      _
    $region10: #{corelnet_forward.3} parent=5 // pred_check_branch
      %116 = sbr.rel (%p113) target = $region12
    $region11: #{corelnet_forward.3} parent=5 // pred_region
      %s117 = ssub.s32 %s9, 1
      // Predicated region
      $region13: #{corelnet_forward.3} parent=11 // pred_check
        %p118 = pneg %p56
      $region14: #{corelnet_forward.3} parent=11 // pred_check_branch
        %120 = sbr.rel (%p118) target = $region16
      $region15: #{corelnet_forward.3} parent=11 // pred_region
        _
      $region16: #{corelnet_forward.3} parent=11 // pred_fallthru
        _
      // Predicated region
      $region17: #{corelnet_forward.3} parent=11 // pred_check
        %p121 = pneg %p77
      $region18: #{corelnet_forward.3} parent=11 // pred_check_branch
        %123 = sbr.rel (%p121) target = $region20
      $region19: #{corelnet_forward.3} parent=11 // pred_region
        _
      $region20: #{corelnet_forward.3} parent=11 // pred_fallthru
        _
    $region12: #{corelnet_forward.3} parent=5 // pred_fallthru
      _
    %p124 = scmp.lt.s32.totalorder %s9, 2
    // Predicated region
    $region21: #{corelnet_forward.3} parent=5 // pred_check
      %p125 = pneg %p124
    $region22: #{corelnet_forward.3} parent=5 // pred_check_branch
      %127 = sbr.rel (%p125) target = $region24
    $region23: #{corelnet_forward.3} parent=5 // pred_region
      // Predicated region
      $region25: #{corelnet_forward.3} parent=23 // pred_check
        %p128 = pneg %p29
      $region26: #{corelnet_forward.3} parent=23 // pred_check_branch
        %130 = sbr.rel (%p128) target = $region28
      $region27: #{corelnet_forward.3} parent=23 // pred_region
        %p131 = scmp.lt.s32.totalorder %s9, 1
        %s132 = scalar_select %p131, %s9, 1
        %s133 = smul.addr %s132, 29
        %s134 = smul.addr %s133, 4
        %s135 = scalar_lea.vmem %s0, %s134
      $region28: #{corelnet_forward.3} parent=23 // pred_fallthru
        _
    $region24: #{corelnet_forward.3} parent=5 // pred_fallthru
      _
    %p136 = scmp.le.s32.totalorder 1, %s9
    %p137 = scmp.lt.s32.totalorder %s9, 3
    %p138 = pnand %p136, %p137
    %p139 = pneg %p138
    // Predicated region
    $region29: #{corelnet_forward.3} parent=5 // pred_check
      _
    $region30: #{corelnet_forward.3} parent=5 // pred_check_branch
      %141 = sbr.rel (%p138) target = $region32
    $region31: #{corelnet_forward.3} parent=5 // pred_region
      %s142 = ssub.s32 %s9, 1
      %p143 = scmp.lt.s32.totalorder %s14, 1
      %s144 = scalar_select %p143, %s14, 1
      %s145 = smul.addr %s144, 29
      %s146 = smul.addr %s145, 4
      %s147 = scalar_lea.vmem %s0, %s146
      %p148 = pneg %p35
      %p149 = pneg %p32
      %p150 = pneg %p56
      %p151 = pneg %p53
      %p152 = pneg %p77
      %p153 = pneg %p74
      %p154 = pneg %p103
      %p155 = pneg %p100
      %p156 = scmp.lt.s32.totalorder %s14, 1
      %s157 = scalar_select %p156, %s14, 1
      %s158 = smul.addr %s157, 7
      %s159 = smul.addr %s158, 4
      %s160 = scalar_lea.vmem %s3, %s159
      %p161 = scmp.lt.s32.totalorder %s14, 1
      %s162 = scalar_select %p161, %s14, 1
      %s163 = smul.addr %s162, 29
      %s164 = smul.addr %s163, 4
      %s165 = scalar_lea.vmem %s0, %s164
      %p166 = scmp.lt.s32.totalorder %s14, 1
      %s167 = scalar_select %p166, %s14, 1
      %s168 = smul.addr %s167, 7
      %s169 = smul.addr %s168, 4
      %s170 = scalar_lea.vmem %s3, %s169
      %v172 = vld [vmem:[%s165] sm:$0xf]
      %v173 = vld [vmem:[%s165 + $0x4] sm:$0xf]
      %v174 = vld [vmem:[%s165 + $0x8] sm:$0xf]
      %v175 = vld [vmem:[%s165 + $0xc] sm:$0xf]
      %v176 = vld [vmem:[%s165 + $0x10] sm:$0xf]
      %v177 = vld [vmem:[%s165 + $0x14] sm:$0xf]
      %v178 = vld [vmem:[%s165 + $0x18] sm:$0xf]
      %v179 = vld [vmem:[%s165 + $0x1c] sm:$0xf]
      %v180 = vld [vmem:[%s165 + $0x20] sm:$0xf]
      %v181 = vld [vmem:[%s165 + $0x24] sm:$0xf]
      %v182 = vld [vmem:[%s165 + $0x28] sm:$0xf]
      %v183 = vld [vmem:[%s165 + $0x2c] sm:$0xf]
      %v184 = vld [vmem:[%s165 + $0x30] sm:$0xf]
      %v185 = vld [vmem:[%s165 + $0x34] sm:$0xf]
      %v186 = vld [vmem:[%s165 + $0x38] sm:$0xf]
      %v187 = vld [vmem:[%s165 + $0x3c] sm:$0xf]
      %v188 = vld [vmem:[%s165 + $0x40] sm:$0xf]
      %v189 = vld [vmem:[%s165 + $0x44] sm:$0xf]
      %v190 = vld [vmem:[%s165 + $0x48] sm:$0xf]
      %v191 = vld [vmem:[%s165 + $0x4c] sm:$0xf]
      %v192 = vld [vmem:[%s165 + $0x50] sm:$0xf]
      %v193 = vld [vmem:[%s165 + $0x54] sm:$0xf]
      %v194 = vld [vmem:[%s165 + $0x58] sm:$0xf]
      %v195 = vld [vmem:[%s165 + $0x5c] sm:$0xf]
      %v196 = vld [vmem:[%s165 + $0x60] sm:$0xf]
      %v197 = vld [vmem:[%s165 + $0x64] sm:$0xf]
      %v198 = vld [vmem:[%s165 + $0x68] sm:$0xf]
      %v199 = vld [vmem:[%s165 + $0x6c] sm:$0xf]
      %v200 = vld [vmem:[%s165 + $0x70] sm:$0x3]
      %v201 = vld [vmem:[%s1] sm:$0x3]
      %s202 = scalar_lea.vmem %s1, 2
      %v203 = vld [vmem:[%s202] sm:$0x3]
      %v229 = vunpack.c.l.b16 %v172
      %v230 = vunpack.c.l.b16 %v173
      %v231 = vunpack.c.l.b16 %v174
      %v232 = vunpack.c.l.b16 %v175
      %v233 = vunpack.c.l.b16 %v176
      %v234 = vunpack.c.l.b16 %v177
      %v235 = vunpack.c.l.b16 %v178
      %v236 = vunpack.c.l.b16 %v179
      %v237 = vunpack.c.l.b16 %v180
      %v238 = vunpack.c.l.b16 %v181
      %v239 = vunpack.c.l.b16 %v182
      %v240 = vunpack.c.l.b16 %v183
      %v241 = vunpack.c.l.b16 %v184
      %v242 = vunpack.c.l.b16 %v185
      %v243 = vunpack.c.l.b16 %v186
      %v244 = vunpack.c.l.b16 %v187
      %v245 = vunpack.c.l.b16 %v188
      %v246 = vunpack.c.l.b16 %v189
      %v247 = vunpack.c.l.b16 %v190
      %v248 = vunpack.c.l.b16 %v191
      %v249 = vunpack.c.l.b16 %v192
      %v250 = vunpack.c.l.b16 %v193
      %v251 = vunpack.c.l.b16 %v194
      %v252 = vunpack.c.l.b16 %v195
      %v253 = vunpack.c.l.b16 %v196
      %v254 = vpack.c.b16 %v230, %v229
      %v255 = vpack.c.b16 %v232, %v231
      %v256 = vpack.c.b16 %v234, %v233
      %v257 = vpack.c.b16 %v236, %v235
      %v258 = vpack.c.b16 %v238, %v237
      %v259 = vpack.c.b16 %v240, %v239
      %v260 = vpack.c.b16 %v242, %v241
      %v261 = vpack.c.b16 %v244, %v243
      %v262 = vpack.c.b16 %v246, %v245
      %v263 = vpack.c.b16 %v248, %v247
      %v264 = vpack.c.b16 %v250, %v249
      %v265 = vpack.c.b16 %v252, %v251
      %v266 = vpack.c.b16 %v253, %v253
      %vm267 = vsmask.f32 7424
      %v269 = vshrl.u32 %v254, 16
      %v271 = vshll.u32 %v254, 16
      %v273 = vrot.slane %v271, 1
      %v274 = vor.u32 %v269, %v273
      %v276 = vshll.u32 %v255, 16
      %v278 = vrot.slane %v276, 1
      %v279 = vsel %vm267, %v274, %v278
      %v280 = vshrl.u32 %v255, 16
      %v282 = vor.u32 %v280, %v278
      %v284 = vshll.u32 %v256, 16
      %v286 = vrot.slane %v284, 1
      %v287 = vsel %vm267, %v282, %v286
      %v288 = vshrl.u32 %v256, 16
      %v290 = vor.u32 %v288, %v286
      %v292 = vshll.u32 %v257, 16
      %v294 = vrot.slane %v292, 1
      %v295 = vsel %vm267, %v290, %v294
      %v296 = vshrl.u32 %v257, 16
      %v298 = vor.u32 %v296, %v294
      %v300 = vshll.u32 %v258, 16
      %v302 = vrot.slane %v300, 1
      %v303 = vsel %vm267, %v298, %v302
      %v304 = vshrl.u32 %v258, 16
      %v306 = vor.u32 %v304, %v302
      %v308 = vshll.u32 %v259, 16
      %v310 = vrot.slane %v308, 1
      %v311 = vsel %vm267, %v306, %v310
      %v312 = vshrl.u32 %v259, 16
      %v314 = vor.u32 %v312, %v310
      %v316 = vshll.u32 %v260, 16
      %v318 = vrot.slane %v316, 1
      %v319 = vsel %vm267, %v314, %v318
      %v320 = vshrl.u32 %v260, 16
      %v322 = vor.u32 %v320, %v318
      %v324 = vshll.u32 %v261, 16
      %v326 = vrot.slane %v324, 1
      %v327 = vsel %vm267, %v322, %v326
      %v328 = vshrl.u32 %v261, 16
      %v330 = vor.u32 %v328, %v326
      %v332 = vshll.u32 %v262, 16
      %v334 = vrot.slane %v332, 1
      %v335 = vsel %vm267, %v330, %v334
      %v336 = vshrl.u32 %v262, 16
      %v338 = vor.u32 %v336, %v334
      %v340 = vshll.u32 %v263, 16
      %v342 = vrot.slane %v340, 1
      %v343 = vsel %vm267, %v338, %v342
      %v344 = vshrl.u32 %v263, 16
      %v346 = vor.u32 %v344, %v342
      %v348 = vshll.u32 %v264, 16
      %v350 = vrot.slane %v348, 1
      %v351 = vsel %vm267, %v346, %v350
      %v352 = vshrl.u32 %v264, 16
      %v354 = vor.u32 %v352, %v350
      %v356 = vshll.u32 %v265, 16
      %v358 = vrot.slane %v356, 1
      %v359 = vsel %vm267, %v354, %v358
      %v360 = vshrl.u32 %v265, 16
      %v362 = vor.u32 %v360, %v358
      %v364 = vshll.u32 %v266, 16
      %v366 = vrot.slane %v364, 1
      %v367 = vsel %vm267, %v362, %v366
      %v368 = vshrl.u32 %v266, 16
      %v370 = vor.u32 %v368, %v366
      %vm371 = vcmask 23552
      %v373 = vsel %vm371, %v279, 0
      %v376 = vsel %vm371, %v287, 0
      %v379 = vsel %vm371, %v295, 0
      %v382 = vsel %vm371, %v303, 0
      %v385 = vsel %vm371, %v311, 0
      %v388 = vsel %vm371, %v319, 0
      %v391 = vsel %vm371, %v327, 0
      %v394 = vsel %vm371, %v335, 0
      %v397 = vsel %vm371, %v343, 0
      %v400 = vsel %vm371, %v351, 0
      %v403 = vsel %vm371, %v359, 0
      %v406 = vsel %vm371, %v367, 0
      %v409 = vsel %vm371, %v370, 0
      %vm411 = vcmask 1040384
      %vm412 = vcmask 1041408
      %v413 = vsel %vm411, 4294967295, 65535
      %v414 = vsel %vm412, %v413, 0
      %v416 = vand.u32 %v203, %v414
      %418 = vmatpush.bf16.msra.mxu0 0
      %419 = vmatpush.bf16.msra.mxu0 0
      %420 = vmatpush.bf16.msra.mxu0 0
      %421 = vmatpush.bf16.msra.mxu0 0
      %422 = vmatpush.bf16.msra.mxu0 0
      %423 = vmatpush.bf16.msra.mxu0 0
      %424 = vmatpush.bf16.msra.mxu0 0
      %425 = vmatpush.bf16.msra.mxu0 %v416
      %426 = vmatmul.bf16.gmra.mxu0 %v373
      %v427 = vpop.f32.mrf.mxu0
      %v428 = vadd.f32 0.0, %v427
      %v429 = vpop.f32.mrf.mxu0
      %v430 = vadd.f32 0.0, %v429
      %431 = vmatmul.bf16.gmra.mxu0 %v376
      %v432 = vpop.f32.mrf.mxu0
      %v433 = vadd.f32 0.0, %v432
      %v434 = vpop.f32.mrf.mxu0
      %v435 = vadd.f32 0.0, %v434
      %436 = vmatmul.bf16.gmra.mxu0 %v379
      %v437 = vpop.f32.mrf.mxu0
      %v438 = vadd.f32 0.0, %v437
      %v439 = vpop.f32.mrf.mxu0
      %v440 = vadd.f32 0.0, %v439
      %441 = vmatmul.bf16.gmra.mxu0 %v382
      %v442 = vpop.f32.mrf.mxu0
      %v443 = vadd.f32 0.0, %v442
      %v444 = vpop.f32.mrf.mxu0
      %v445 = vadd.f32 0.0, %v444
      %446 = vmatmul.bf16.gmra.mxu0 %v385
      %v447 = vpop.f32.mrf.mxu0
      %v448 = vadd.f32 0.0, %v447
      %v449 = vpop.f32.mrf.mxu0
      %v450 = vadd.f32 0.0, %v449
      %451 = vmatmul.bf16.gmra.mxu0 %v388
      %v452 = vpop.f32.mrf.mxu0
      %v453 = vadd.f32 0.0, %v452
      %v454 = vpop.f32.mrf.mxu0
      %v455 = vadd.f32 0.0, %v454
      %456 = vmatmul.bf16.gmra.mxu0 %v391
      %v457 = vpop.f32.mrf.mxu0
      %v458 = vadd.f32 0.0, %v457
      %v459 = vpop.f32.mrf.mxu0
      %v460 = vadd.f32 0.0, %v459
      %461 = vmatmul.bf16.gmra.mxu0 %v394
      %v462 = vpop.f32.mrf.mxu0
      %v463 = vadd.f32 0.0, %v462
      %v464 = vpop.f32.mrf.mxu0
      %v465 = vadd.f32 0.0, %v464
      %466 = vmatmul.bf16.gmra.mxu0 %v397
      %v467 = vpop.f32.mrf.mxu0
      %v468 = vadd.f32 0.0, %v467
      %v469 = vpop.f32.mrf.mxu0
      %v470 = vadd.f32 0.0, %v469
      %471 = vmatmul.bf16.gmra.mxu0 %v400
      %v472 = vpop.f32.mrf.mxu0
      %v473 = vadd.f32 0.0, %v472
      %v474 = vpop.f32.mrf.mxu0
      %v475 = vadd.f32 0.0, %v474
      %476 = vmatmul.bf16.gmra.mxu0 %v403
      %v477 = vpop.f32.mrf.mxu0
      %v478 = vadd.f32 0.0, %v477
      %v479 = vpop.f32.mrf.mxu0
      %v480 = vadd.f32 0.0, %v479
      %481 = vmatmul.bf16.gmra.mxu0 %v406
      %v482 = vpop.f32.mrf.mxu0
      %v483 = vadd.f32 0.0, %v482
      %v484 = vpop.f32.mrf.mxu0
      %v485 = vadd.f32 0.0, %v484
      %486 = vmatmul.bf16.gmra.mxu0 %v409
      %v487 = vpop.f32.mrf.mxu0
      %v488 = vadd.f32 0.0, %v487
      %v489 = vpop.f32.mrf.mxu0
      %490 = vdwg.mxu0
      %v491 = vsel %vm371, %v254, 0
      %v493 = vsel %vm371, %v255, 0
      %v495 = vsel %vm371, %v256, 0
      %v497 = vsel %vm371, %v257, 0
      %v499 = vsel %vm371, %v258, 0
      %v501 = vsel %vm371, %v259, 0
      %v503 = vsel %vm371, %v260, 0
      %v505 = vsel %vm371, %v261, 0
      %v507 = vsel %vm371, %v262, 0
      %v509 = vsel %vm371, %v263, 0
      %v511 = vsel %vm371, %v264, 0
      %v513 = vsel %vm371, %v265, 0
      %v515 = vsel %vm371, %v266, 0
      %v518 = vand.u32 %v201, %v414
      %520 = vmatpush.bf16.msra.mxu0 0
      %521 = vmatpush.bf16.msra.mxu0 0
      %522 = vmatpush.bf16.msra.mxu0 0
      %523 = vmatpush.bf16.msra.mxu0 0
      %524 = vmatpush.bf16.msra.mxu0 0
      %525 = vmatpush.bf16.msra.mxu0 0
      %526 = vmatpush.bf16.msra.mxu0 0
      %527 = vmatpush.bf16.msra.mxu0 %v518
      %528 = vmatmul.bf16.gmra.mxu0 %v491
      %v529 = vpop.f32.mrf.mxu0
      %v530 = vadd.f32 %v428, %v529
      %v531 = vpop.f32.mrf.mxu0
      %v532 = vadd.f32 %v430, %v531
      %533 = vmatmul.bf16.gmra.mxu0 %v493
      %v534 = vpop.f32.mrf.mxu0
      %v535 = vadd.f32 %v433, %v534
      %v536 = vpop.f32.mrf.mxu0
      %v537 = vadd.f32 %v435, %v536
      %538 = vmatmul.bf16.gmra.mxu0 %v495
      %v539 = vpop.f32.mrf.mxu0
      %v540 = vadd.f32 %v438, %v539
      %v541 = vpop.f32.mrf.mxu0
      %v542 = vadd.f32 %v440, %v541
      %543 = vmatmul.bf16.gmra.mxu0 %v497
      %v544 = vpop.f32.mrf.mxu0
      %v545 = vadd.f32 %v443, %v544
      %v546 = vpop.f32.mrf.mxu0
      %v547 = vadd.f32 %v445, %v546
      %548 = vmatmul.bf16.gmra.mxu0 %v499
      %v549 = vpop.f32.mrf.mxu0
      %v550 = vadd.f32 %v448, %v549
      %v551 = vpop.f32.mrf.mxu0
      %v552 = vadd.f32 %v450, %v551
      %553 = vmatmul.bf16.gmra.mxu0 %v501
      %v554 = vpop.f32.mrf.mxu0
      %v555 = vadd.f32 %v453, %v554
      %v556 = vpop.f32.mrf.mxu0
      %v557 = vadd.f32 %v455, %v556
      %558 = vmatmul.bf16.gmra.mxu0 %v503
      %v559 = vpop.f32.mrf.mxu0
      %v560 = vadd.f32 %v458, %v559
      %v561 = vpop.f32.mrf.mxu0
      %v562 = vadd.f32 %v460, %v561
      %563 = vmatmul.bf16.gmra.mxu0 %v505
      %v564 = vpop.f32.mrf.mxu0
      %v565 = vadd.f32 %v463, %v564
      %v566 = vpop.f32.mrf.mxu0
      %v567 = vadd.f32 %v465, %v566
      %568 = vmatmul.bf16.gmra.mxu0 %v507
      %v569 = vpop.f32.mrf.mxu0
      %v570 = vadd.f32 %v468, %v569
      %v571 = vpop.f32.mrf.mxu0
      %v572 = vadd.f32 %v470, %v571
      %573 = vmatmul.bf16.gmra.mxu0 %v509
      %v574 = vpop.f32.mrf.mxu0
      %v575 = vadd.f32 %v473, %v574
      %v576 = vpop.f32.mrf.mxu0
      %v577 = vadd.f32 %v475, %v576
      %578 = vmatmul.bf16.gmra.mxu0 %v511
      %v579 = vpop.f32.mrf.mxu0
      %v580 = vadd.f32 %v478, %v579
      %v581 = vpop.f32.mrf.mxu0
      %v582 = vadd.f32 %v480, %v581
      %583 = vmatmul.bf16.gmra.mxu0 %v513
      %v584 = vpop.f32.mrf.mxu0
      %v585 = vadd.f32 %v483, %v584
      %v586 = vpop.f32.mrf.mxu0
      %v587 = vadd.f32 %v485, %v586
      %588 = vmatmul.bf16.gmra.mxu0 %v515
      %v589 = vpop.f32.mrf.mxu0
      %v590 = vadd.f32 %v488, %v589
      %v591 = vpop.f32.mrf.mxu0
      %592 = vdwg.mxu0
      %s593 = scalar_lea.vmem %s1, 4
      %v594 = vld [vmem:[%s593] sm:$0x3]
      %vm595 = vcmask 1046528
      %v596 = vrot.slane %v254, 1
      %v597 = vrot.slane %v255, 1
      %v598 = vsel %vm595, %v596, %v597
      %v599 = vrot.slane %v256, 1
      %v600 = vsel %vm595, %v597, %v599
      %v601 = vrot.slane %v257, 1
      %v602 = vsel %vm595, %v599, %v601
      %v603 = vrot.slane %v258, 1
      %v604 = vsel %vm595, %v601, %v603
      %v605 = vrot.slane %v259, 1
      %v606 = vsel %vm595, %v603, %v605
      %v607 = vrot.slane %v260, 1
      %v608 = vsel %vm595, %v605, %v607
      %v609 = vrot.slane %v261, 1
      %v610 = vsel %vm595, %v607, %v609
      %v611 = vrot.slane %v262, 1
      %v612 = vsel %vm595, %v609, %v611
      %v613 = vrot.slane %v263, 1
      %v614 = vsel %vm595, %v611, %v613
      %v615 = vrot.slane %v264, 1
      %v616 = vsel %vm595, %v613, %v615
      %v617 = vrot.slane %v265, 1
      %v618 = vsel %vm595, %v615, %v617
      %v619 = vrot.slane %v266, 1
      %v620 = vsel %vm595, %v617, %v619
      %v622 = vsel %vm371, %v598, 0
      %v625 = vsel %vm371, %v600, 0
      %v628 = vsel %vm371, %v602, 0
      %v631 = vsel %vm371, %v604, 0
      %v634 = vsel %vm371, %v606, 0
      %v637 = vsel %vm371, %v608, 0
      %v640 = vsel %vm371, %v610, 0
      %v643 = vsel %vm371, %v612, 0
      %v646 = vsel %vm371, %v614, 0
      %v649 = vsel %vm371, %v616, 0
      %v652 = vsel %vm371, %v618, 0
      %v655 = vsel %vm371, %v620, 0
      %v658 = vsel %vm371, %v619, 0
      %v661 = vand.u32 %v594, %v414
      %663 = vmatpush.bf16.msra.mxu0 0
      %664 = vmatpush.bf16.msra.mxu0 0
      %665 = vmatpush.bf16.msra.mxu0 0
      %666 = vmatpush.bf16.msra.mxu0 0
      %667 = vmatpush.bf16.msra.mxu0 0
      %668 = vmatpush.bf16.msra.mxu0 0
      %669 = vmatpush.bf16.msra.mxu0 0
      %670 = vmatpush.bf16.msra.mxu0 %v661
      %671 = vmatmul.bf16.gmra.mxu0 %v622
      %v672 = vpop.f32.mrf.mxu0
      %v673 = vadd.f32 0.0, %v672
      %v674 = vpop.f32.mrf.mxu0
      %v675 = vadd.f32 0.0, %v674
      %676 = vmatmul.bf16.gmra.mxu0 %v625
      %v677 = vpop.f32.mrf.mxu0
      %v678 = vadd.f32 0.0, %v677
      %v679 = vpop.f32.mrf.mxu0
      %v680 = vadd.f32 0.0, %v679
      %681 = vmatmul.bf16.gmra.mxu0 %v628
      %v682 = vpop.f32.mrf.mxu0
      %v683 = vadd.f32 0.0, %v682
      %v684 = vpop.f32.mrf.mxu0
      %v685 = vadd.f32 0.0, %v684
      %686 = vmatmul.bf16.gmra.mxu0 %v631
      %v687 = vpop.f32.mrf.mxu0
      %v688 = vadd.f32 0.0, %v687
      %v689 = vpop.f32.mrf.mxu0
      %v690 = vadd.f32 0.0, %v689
      %691 = vmatmul.bf16.gmra.mxu0 %v634
      %v692 = vpop.f32.mrf.mxu0
      %v693 = vadd.f32 0.0, %v692
      %v694 = vpop.f32.mrf.mxu0
      %v695 = vadd.f32 0.0, %v694
      %696 = vmatmul.bf16.gmra.mxu0 %v637
      %v697 = vpop.f32.mrf.mxu0
      %v698 = vadd.f32 0.0, %v697
      %v699 = vpop.f32.mrf.mxu0
      %v700 = vadd.f32 0.0, %v699
      %701 = vmatmul.bf16.gmra.mxu0 %v640
      %v702 = vpop.f32.mrf.mxu0
      %v703 = vadd.f32 0.0, %v702
      %v704 = vpop.f32.mrf.mxu0
      %v705 = vadd.f32 0.0, %v704
      %706 = vmatmul.bf16.gmra.mxu0 %v643
      %v707 = vpop.f32.mrf.mxu0
      %v708 = vadd.f32 0.0, %v707
      %v709 = vpop.f32.mrf.mxu0
      %v710 = vadd.f32 0.0, %v709
      %711 = vmatmul.bf16.gmra.mxu0 %v646
      %v712 = vpop.f32.mrf.mxu0
      %v713 = vadd.f32 0.0, %v712
      %v714 = vpop.f32.mrf.mxu0
      %v715 = vadd.f32 0.0, %v714
      %716 = vmatmul.bf16.gmra.mxu0 %v649
      %v717 = vpop.f32.mrf.mxu0
      %v718 = vadd.f32 0.0, %v717
      %v719 = vpop.f32.mrf.mxu0
      %v720 = vadd.f32 0.0, %v719
      %721 = vmatmul.bf16.gmra.mxu0 %v652
      %v722 = vpop.f32.mrf.mxu0
      %v723 = vadd.f32 0.0, %v722
      %v724 = vpop.f32.mrf.mxu0
      %v725 = vadd.f32 0.0, %v724
      %726 = vmatmul.bf16.gmra.mxu0 %v655
      %v727 = vpop.f32.mrf.mxu0
      %v728 = vadd.f32 0.0, %v727
      %v729 = vpop.f32.mrf.mxu0
      %v730 = vadd.f32 0.0, %v729
      %731 = vmatmul.bf16.gmra.mxu0 %v658
      %v732 = vpop.f32.mrf.mxu0
      %v733 = vadd.f32 0.0, %v732
      %v734 = vpop.f32.mrf.mxu0
      %735 = vdwg.mxu0
      %v736 = vadd.f32 %v530, %v673
      %v737 = vadd.f32 %v532, %v675
      %v738 = vadd.f32 %v535, %v678
      %v739 = vadd.f32 %v537, %v680
      %v740 = vadd.f32 %v540, %v683
      %v741 = vadd.f32 %v542, %v685
      %v742 = vadd.f32 %v545, %v688
      %v743 = vadd.f32 %v547, %v690
      %v744 = vadd.f32 %v550, %v693
      %v745 = vadd.f32 %v552, %v695
      %v746 = vadd.f32 %v555, %v698
      %v747 = vadd.f32 %v557, %v700
      %v748 = vadd.f32 %v560, %v703
      %v749 = vadd.f32 %v562, %v705
      %v750 = vadd.f32 %v565, %v708
      %v751 = vadd.f32 %v567, %v710
      %v752 = vadd.f32 %v570, %v713
      %v753 = vadd.f32 %v572, %v715
      %v754 = vadd.f32 %v575, %v718
      %v755 = vadd.f32 %v577, %v720
      %v756 = vadd.f32 %v580, %v723
      %v757 = vadd.f32 %v582, %v725
      %v758 = vadd.f32 %v585, %v728
      %v759 = vadd.f32 %v587, %v730
      %v760 = vadd.f32 %v590, %v733
      %s761 = scalar_lea.vmem %s1, 6
      %v762 = vld [vmem:[%s761] sm:$0x3]
      %v765 = vunpack.c.l.b16 %v197
      %v766 = vunpack.c.l.b16 %v198
      %v767 = vpack.c.b16 %v231, %v230
      %v768 = vpack.c.b16 %v233, %v232
      %v769 = vpack.c.b16 %v235, %v234
      %v770 = vpack.c.b16 %v237, %v236
      %v771 = vpack.c.b16 %v239, %v238
      %v772 = vpack.c.b16 %v241, %v240
      %v773 = vpack.c.b16 %v243, %v242
      %v774 = vpack.c.b16 %v245, %v244
      %v775 = vpack.c.b16 %v247, %v246
      %v776 = vpack.c.b16 %v249, %v248
      %v777 = vpack.c.b16 %v251, %v250
      %v778 = vpack.c.b16 %v253, %v252
      %v779 = vpack.c.b16 %v766, %v765
      %vm780 = vsmask.f32 4352
      %v782 = vshrl.u32 %v767, 16
      %v784 = vrot.slane %v782, 3
      %v785 = vshll.u32 %v767, 16
      %v787 = vrot.slane %v785, 4
      %v788 = vor.u32 %v784, %v787
      %v790 = vshrl.u32 %v768, 16
      %v792 = vrot.slane %v790, 3
      %v793 = vshll.u32 %v768, 16
      %v795 = vrot.slane %v793, 4
      %v796 = vor.u32 %v792, %v795
      %v797 = vsel %vm780, %v788, %v796
      %v799 = vshrl.u32 %v769, 16
      %v801 = vrot.slane %v799, 3
      %v802 = vshll.u32 %v769, 16
      %v804 = vrot.slane %v802, 4
      %v805 = vor.u32 %v801, %v804
      %v806 = vsel %vm780, %v796, %v805
      %v808 = vshrl.u32 %v770, 16
      %v810 = vrot.slane %v808, 3
      %v811 = vshll.u32 %v770, 16
      %v813 = vrot.slane %v811, 4
      %v814 = vor.u32 %v810, %v813
      %v815 = vsel %vm780, %v805, %v814
      %v817 = vshrl.u32 %v771, 16
      %v819 = vrot.slane %v817, 3
      %v820 = vshll.u32 %v771, 16
      %v822 = vrot.slane %v820, 4
      %v823 = vor.u32 %v819, %v822
      %v824 = vsel %vm780, %v814, %v823
      %v826 = vshrl.u32 %v772, 16
      %v828 = vrot.slane %v826, 3
      %v829 = vshll.u32 %v772, 16
      %v831 = vrot.slane %v829, 4
      %v832 = vor.u32 %v828, %v831
      %v833 = vsel %vm780, %v823, %v832
      %v835 = vshrl.u32 %v773, 16
      %v837 = vrot.slane %v835, 3
      %v838 = vshll.u32 %v773, 16
      %v840 = vrot.slane %v838, 4
      %v841 = vor.u32 %v837, %v840
      %v842 = vsel %vm780, %v832, %v841
      %v844 = vshrl.u32 %v774, 16
      %v846 = vrot.slane %v844, 3
      %v847 = vshll.u32 %v774, 16
      %v849 = vrot.slane %v847, 4
      %v850 = vor.u32 %v846, %v849
      %v851 = vsel %vm780, %v841, %v850
      %v853 = vshrl.u32 %v775, 16
      %v855 = vrot.slane %v853, 3
      %v856 = vshll.u32 %v775, 16
      %v858 = vrot.slane %v856, 4
      %v859 = vor.u32 %v855, %v858
      %v860 = vsel %vm780, %v850, %v859
      %v862 = vshrl.u32 %v776, 16
      %v864 = vrot.slane %v862, 3
      %v865 = vshll.u32 %v776, 16
      %v867 = vrot.slane %v865, 4
      %v868 = vor.u32 %v864, %v867
      %v869 = vsel %vm780, %v859, %v868
      %v871 = vshrl.u32 %v777, 16
      %v873 = vrot.slane %v871, 3
      %v874 = vshll.u32 %v777, 16
      %v876 = vrot.slane %v874, 4
      %v877 = vor.u32 %v873, %v876
      %v878 = vsel %vm780, %v868, %v877
      %v880 = vshrl.u32 %v778, 16
      %v882 = vrot.slane %v880, 3
      %v883 = vshll.u32 %v778, 16
      %v885 = vrot.slane %v883, 4
      %v886 = vor.u32 %v882, %v885
      %v887 = vsel %vm780, %v877, %v886
      %v889 = vshrl.u32 %v779, 16
      %v891 = vrot.slane %v889, 3
      %v892 = vshll.u32 %v779, 16
      %v894 = vrot.slane %v892, 4
      %v895 = vor.u32 %v891, %v894
      %v896 = vsel %vm780, %v886, %v895
      %v898 = vsel %vm371, %v797, 0
      %v901 = vsel %vm371, %v806, 0
      %v904 = vsel %vm371, %v815, 0
      %v907 = vsel %vm371, %v824, 0
      %v910 = vsel %vm371, %v833, 0
      %v913 = vsel %vm371, %v842, 0
      %v916 = vsel %vm371, %v851, 0
      %v919 = vsel %vm371, %v860, 0
      %v922 = vsel %vm371, %v869, 0
      %v925 = vsel %vm371, %v878, 0
      %v928 = vsel %vm371, %v887, 0
      %v931 = vsel %vm371, %v896, 0
      %v934 = vsel %vm371, %v895, 0
      %v937 = vand.u32 %v762, %v414
      %939 = vmatpush.bf16.msra.mxu0 0
      %940 = vmatpush.bf16.msra.mxu0 0
      %941 = vmatpush.bf16.msra.mxu0 0
      %942 = vmatpush.bf16.msra.mxu0 0
      %943 = vmatpush.bf16.msra.mxu0 0
      %944 = vmatpush.bf16.msra.mxu0 0
      %945 = vmatpush.bf16.msra.mxu0 0
      %946 = vmatpush.bf16.msra.mxu0 %v937
      %947 = vmatmul.bf16.gmra.mxu0 %v898
      %v948 = vpop.f32.mrf.mxu0
      %v949 = vadd.f32 0.0, %v948
      %v950 = vpop.f32.mrf.mxu0
      %v951 = vadd.f32 0.0, %v950
      %952 = vmatmul.bf16.gmra.mxu0 %v901
      %v953 = vpop.f32.mrf.mxu0
      %v954 = vadd.f32 0.0, %v953
      %v955 = vpop.f32.mrf.mxu0
      %v956 = vadd.f32 0.0, %v955
      %957 = vmatmul.bf16.gmra.mxu0 %v904
      %v958 = vpop.f32.mrf.mxu0
      %v959 = vadd.f32 0.0, %v958
      %v960 = vpop.f32.mrf.mxu0
      %v961 = vadd.f32 0.0, %v960
      %962 = vmatmul.bf16.gmra.mxu0 %v907
      %v963 = vpop.f32.mrf.mxu0
      %v964 = vadd.f32 0.0, %v963
      %v965 = vpop.f32.mrf.mxu0
      %v966 = vadd.f32 0.0, %v965
      %967 = vmatmul.bf16.gmra.mxu0 %v910
      %v968 = vpop.f32.mrf.mxu0
      %v969 = vadd.f32 0.0, %v968
      %v970 = vpop.f32.mrf.mxu0
      %v971 = vadd.f32 0.0, %v970
      %972 = vmatmul.bf16.gmra.mxu0 %v913
      %v973 = vpop.f32.mrf.mxu0
      %v974 = vadd.f32 0.0, %v973
      %v975 = vpop.f32.mrf.mxu0
      %v976 = vadd.f32 0.0, %v975
      %977 = vmatmul.bf16.gmra.mxu0 %v916
      %v978 = vpop.f32.mrf.mxu0
      %v979 = vadd.f32 0.0, %v978
      %v980 = vpop.f32.mrf.mxu0
      %v981 = vadd.f32 0.0, %v980
      %982 = vmatmul.bf16.gmra.mxu0 %v919
      %v983 = vpop.f32.mrf.mxu0
      %v984 = vadd.f32 0.0, %v983
      %v985 = vpop.f32.mrf.mxu0
      %v986 = vadd.f32 0.0, %v985
      %987 = vmatmul.bf16.gmra.mxu0 %v922
      %v988 = vpop.f32.mrf.mxu0
      %v989 = vadd.f32 0.0, %v988
      %v990 = vpop.f32.mrf.mxu0
      %v991 = vadd.f32 0.0, %v990
      %992 = vmatmul.bf16.gmra.mxu0 %v925
      %v993 = vpop.f32.mrf.mxu0
      %v994 = vadd.f32 0.0, %v993
      %v995 = vpop.f32.mrf.mxu0
      %v996 = vadd.f32 0.0, %v995
      %997 = vmatmul.bf16.gmra.mxu0 %v928
      %v998 = vpop.f32.mrf.mxu0
      %v999 = vadd.f32 0.0, %v998
      %v1000 = vpop.f32.mrf.mxu0
      %v1001 = vadd.f32 0.0, %v1000
      %1002 = vmatmul.bf16.gmra.mxu0 %v931
      %v1003 = vpop.f32.mrf.mxu0
      %v1004 = vadd.f32 0.0, %v1003
      %v1005 = vpop.f32.mrf.mxu0
      %v1006 = vadd.f32 0.0, %v1005
      %1007 = vmatmul.bf16.gmra.mxu0 %v934
      %v1008 = vpop.f32.mrf.mxu0
      %v1009 = vadd.f32 0.0, %v1008
      %v1010 = vpop.f32.mrf.mxu0
      %1011 = vdwg.mxu0
      %v1012 = vadd.f32 %v736, %v949
      %v1013 = vadd.f32 %v737, %v951
      %v1014 = vadd.f32 %v738, %v954
      %v1015 = vadd.f32 %v739, %v956
      %v1016 = vadd.f32 %v740, %v959
      %v1017 = vadd.f32 %v741, %v961
      %v1018 = vadd.f32 %v742, %v964
      %v1019 = vadd.f32 %v743, %v966
      %v1020 = vadd.f32 %v744, %v969
      %v1021 = vadd.f32 %v745, %v971
      %v1022 = vadd.f32 %v746, %v974
      %v1023 = vadd.f32 %v747, %v976
      %v1024 = vadd.f32 %v748, %v979
      %v1025 = vadd.f32 %v749, %v981
      %v1026 = vadd.f32 %v750, %v984
      %v1027 = vadd.f32 %v751, %v986
      %v1028 = vadd.f32 %v752, %v989
      %v1029 = vadd.f32 %v753, %v991
      %v1030 = vadd.f32 %v754, %v994
      %v1031 = vadd.f32 %v755, %v996
      %v1032 = vadd.f32 %v756, %v999
      %v1033 = vadd.f32 %v757, %v1001
      %v1034 = vadd.f32 %v758, %v1004
      %v1035 = vadd.f32 %v759, %v1006
      %v1036 = vadd.f32 %v760, %v1009
      %s1037 = scalar_lea.vmem %s1, 8
      %v1038 = vld [vmem:[%s1037] sm:$0x3]
      %v1039 = vpack.c.b16 %v765, %v253
      %v1040 = vpack.c.b16 %v766, %v766
      %v1042 = vsel %vm371, %v1039, 0
      %v1045 = vsel %vm371, %v1040, 0
      %v1048 = vand.u32 %v1038, %v414
      %1050 = vmatpush.bf16.msra.mxu0 0
      %1051 = vmatpush.bf16.msra.mxu0 0
      %1052 = vmatpush.bf16.msra.mxu0 0
      %1053 = vmatpush.bf16.msra.mxu0 0
      %1054 = vmatpush.bf16.msra.mxu0 0
      %1055 = vmatpush.bf16.msra.mxu0 0
      %1056 = vmatpush.bf16.msra.mxu0 0
      %1057 = vmatpush.bf16.msra.mxu0 %v1048
      %1058 = vmatmul.bf16.gmra.mxu0 %v493
      %v1059 = vpop.f32.mrf.mxu0
      %v1060 = vadd.f32 0.0, %v1059
      %v1061 = vpop.f32.mrf.mxu0
      %v1062 = vadd.f32 0.0, %v1061
      %1063 = vmatmul.bf16.gmra.mxu0 %v495
      %v1064 = vpop.f32.mrf.mxu0
      %v1065 = vadd.f32 0.0, %v1064
      %v1066 = vpop.f32.mrf.mxu0
      %v1067 = vadd.f32 0.0, %v1066
      %1068 = vmatmul.bf16.gmra.mxu0 %v497
      %v1069 = vpop.f32.mrf.mxu0
      %v1070 = vadd.f32 0.0, %v1069
      %v1071 = vpop.f32.mrf.mxu0
      %v1072 = vadd.f32 0.0, %v1071
      %1073 = vmatmul.bf16.gmra.mxu0 %v499
      %v1074 = vpop.f32.mrf.mxu0
      %v1075 = vadd.f32 0.0, %v1074
      %v1076 = vpop.f32.mrf.mxu0
      %v1077 = vadd.f32 0.0, %v1076
      %1078 = vmatmul.bf16.gmra.mxu0 %v501
      %v1079 = vpop.f32.mrf.mxu0
      %v1080 = vadd.f32 0.0, %v1079
      %v1081 = vpop.f32.mrf.mxu0
      %v1082 = vadd.f32 0.0, %v1081
      %1083 = vmatmul.bf16.gmra.mxu0 %v503
      %v1084 = vpop.f32.mrf.mxu0
      %v1085 = vadd.f32 0.0, %v1084
      %v1086 = vpop.f32.mrf.mxu0
      %v1087 = vadd.f32 0.0, %v1086
      %1088 = vmatmul.bf16.gmra.mxu0 %v505
      %v1089 = vpop.f32.mrf.mxu0
      %v1090 = vadd.f32 0.0, %v1089
      %v1091 = vpop.f32.mrf.mxu0
      %v1092 = vadd.f32 0.0, %v1091
      %1093 = vmatmul.bf16.gmra.mxu0 %v507
      %v1094 = vpop.f32.mrf.mxu0
      %v1095 = vadd.f32 0.0, %v1094
      %v1096 = vpop.f32.mrf.mxu0
      %v1097 = vadd.f32 0.0, %v1096
      %1098 = vmatmul.bf16.gmra.mxu0 %v509
      %v1099 = vpop.f32.mrf.mxu0
      %v1100 = vadd.f32 0.0, %v1099
      %v1101 = vpop.f32.mrf.mxu0
      %v1102 = vadd.f32 0.0, %v1101
      %1103 = vmatmul.bf16.gmra.mxu0 %v511
      %v1104 = vpop.f32.mrf.mxu0
      %v1105 = vadd.f32 0.0, %v1104
      %v1106 = vpop.f32.mrf.mxu0
      %v1107 = vadd.f32 0.0, %v1106
      %1108 = vmatmul.bf16.gmra.mxu0 %v513
      %v1109 = vpop.f32.mrf.mxu0
      %v1110 = vadd.f32 0.0, %v1109
      %v1111 = vpop.f32.mrf.mxu0
      %v1112 = vadd.f32 0.0, %v1111
      %1113 = vmatmul.bf16.gmra.mxu0 %v1042
      %v1114 = vpop.f32.mrf.mxu0
      %v1115 = vadd.f32 0.0, %v1114
      %v1116 = vpop.f32.mrf.mxu0
      %v1117 = vadd.f32 0.0, %v1116
      %1118 = vmatmul.bf16.gmra.mxu0 %v1045
      %v1119 = vpop.f32.mrf.mxu0
      %v1120 = vadd.f32 0.0, %v1119
      %v1121 = vpop.f32.mrf.mxu0
      %1122 = vdwg.mxu0
      %v1123 = vadd.f32 %v1012, %v1060
      %v1124 = vadd.f32 %v1013, %v1062
      %v1125 = vadd.f32 %v1014, %v1065
      %v1126 = vadd.f32 %v1015, %v1067
      %v1127 = vadd.f32 %v1016, %v1070
      %v1128 = vadd.f32 %v1017, %v1072
      %v1129 = vadd.f32 %v1018, %v1075
      %v1130 = vadd.f32 %v1019, %v1077
      %v1131 = vadd.f32 %v1020, %v1080
      %v1132 = vadd.f32 %v1021, %v1082
      %v1133 = vadd.f32 %v1022, %v1085
      %v1134 = vadd.f32 %v1023, %v1087
      %v1135 = vadd.f32 %v1024, %v1090
      %v1136 = vadd.f32 %v1025, %v1092
      %v1137 = vadd.f32 %v1026, %v1095
      %v1138 = vadd.f32 %v1027, %v1097
      %v1139 = vadd.f32 %v1028, %v1100
      %v1140 = vadd.f32 %v1029, %v1102
      %v1141 = vadd.f32 %v1030, %v1105
      %v1142 = vadd.f32 %v1031, %v1107
      %v1143 = vadd.f32 %v1032, %v1110
      %v1144 = vadd.f32 %v1033, %v1112
      %v1145 = vadd.f32 %v1034, %v1115
      %v1146 = vadd.f32 %v1035, %v1117
      %v1147 = vadd.f32 %v1036, %v1120
      %s1148 = scalar_lea.vmem %s1, 10
      %v1149 = vld [vmem:[%s1148] sm:$0x3]
      %v1150 = vshll.u32 %v1039, 16
      %v1152 = vrot.slane %v1150, 1
      %v1153 = vsel %vm267, %v362, %v1152
      %v1154 = vshrl.u32 %v1039, 16
      %v1156 = vor.u32 %v1154, %v1152
      %v1157 = vshll.u32 %v1040, 16
      %v1159 = vrot.slane %v1157, 1
      %v1160 = vsel %vm267, %v1156, %v1159
      %v1161 = vshrl.u32 %v1040, 16
      %v1163 = vor.u32 %v1161, %v1159
      %v1165 = vsel %vm371, %v1153, 0
      %v1168 = vsel %vm371, %v1160, 0
      %v1171 = vsel %vm371, %v1163, 0
      %v1174 = vand.u32 %v1149, %v414
      %1176 = vmatpush.bf16.msra.mxu0 0
      %1177 = vmatpush.bf16.msra.mxu0 0
      %1178 = vmatpush.bf16.msra.mxu0 0
      %1179 = vmatpush.bf16.msra.mxu0 0
      %1180 = vmatpush.bf16.msra.mxu0 0
      %1181 = vmatpush.bf16.msra.mxu0 0
      %1182 = vmatpush.bf16.msra.mxu0 0
      %1183 = vmatpush.bf16.msra.mxu0 %v1174
      %1184 = vmatmul.bf16.gmra.mxu0 %v376
      %v1185 = vpop.f32.mrf.mxu0
      %v1186 = vadd.f32 0.0, %v1185
      %v1187 = vpop.f32.mrf.mxu0
      %v1188 = vadd.f32 0.0, %v1187
      %1189 = vmatmul.bf16.gmra.mxu0 %v379
      %v1190 = vpop.f32.mrf.mxu0
      %v1191 = vadd.f32 0.0, %v1190
      %v1192 = vpop.f32.mrf.mxu0
      %v1193 = vadd.f32 0.0, %v1192
      %1194 = vmatmul.bf16.gmra.mxu0 %v382
      %v1195 = vpop.f32.mrf.mxu0
      %v1196 = vadd.f32 0.0, %v1195
      %v1197 = vpop.f32.mrf.mxu0
      %v1198 = vadd.f32 0.0, %v1197
      %1199 = vmatmul.bf16.gmra.mxu0 %v385
      %v1200 = vpop.f32.mrf.mxu0
      %v1201 = vadd.f32 0.0, %v1200
      %v1202 = vpop.f32.mrf.mxu0
      %v1203 = vadd.f32 0.0, %v1202
      %1204 = vmatmul.bf16.gmra.mxu0 %v388
      %v1205 = vpop.f32.mrf.mxu0
      %v1206 = vadd.f32 0.0, %v1205
      %v1207 = vpop.f32.mrf.mxu0
      %v1208 = vadd.f32 0.0, %v1207
      %1209 = vmatmul.bf16.gmra.mxu0 %v391
      %v1210 = vpop.f32.mrf.mxu0
      %v1211 = vadd.f32 0.0, %v1210
      %v1212 = vpop.f32.mrf.mxu0
      %v1213 = vadd.f32 0.0, %v1212
      %1214 = vmatmul.bf16.gmra.mxu0 %v394
      %v1215 = vpop.f32.mrf.mxu0
      %v1216 = vadd.f32 0.0, %v1215
      %v1217 = vpop.f32.mrf.mxu0
      %v1218 = vadd.f32 0.0, %v1217
      %1219 = vmatmul.bf16.gmra.mxu0 %v397
      %v1220 = vpop.f32.mrf.mxu0
      %v1221 = vadd.f32 0.0, %v1220
      %v1222 = vpop.f32.mrf.mxu0
      %v1223 = vadd.f32 0.0, %v1222
      %1224 = vmatmul.bf16.gmra.mxu0 %v400
      %v1225 = vpop.f32.mrf.mxu0
      %v1226 = vadd.f32 0.0, %v1225
      %v1227 = vpop.f32.mrf.mxu0
      %v1228 = vadd.f32 0.0, %v1227
      %1229 = vmatmul.bf16.gmra.mxu0 %v403
      %v1230 = vpop.f32.mrf.mxu0
      %v1231 = vadd.f32 0.0, %v1230
      %v1232 = vpop.f32.mrf.mxu0
      %v1233 = vadd.f32 0.0, %v1232
      %1234 = vmatmul.bf16.gmra.mxu0 %v1165
      %v1235 = vpop.f32.mrf.mxu0
      %v1236 = vadd.f32 0.0, %v1235
      %v1237 = vpop.f32.mrf.mxu0
      %v1238 = vadd.f32 0.0, %v1237
      %1239 = vmatmul.bf16.gmra.mxu0 %v1168
      %v1240 = vpop.f32.mrf.mxu0
      %v1241 = vadd.f32 0.0, %v1240
      %v1242 = vpop.f32.mrf.mxu0
      %v1243 = vadd.f32 0.0, %v1242
      %1244 = vmatmul.bf16.gmra.mxu0 %v1171
      %v1245 = vpop.f32.mrf.mxu0
      %v1246 = vadd.f32 0.0, %v1245
      %v1247 = vpop.f32.mrf.mxu0
      %1248 = vdwg.mxu0
      %v1249 = vadd.f32 %v1123, %v1186
      %v1250 = vadd.f32 %v1124, %v1188
      %v1251 = vadd.f32 %v1125, %v1191
      %v1252 = vadd.f32 %v1126, %v1193
      %v1253 = vadd.f32 %v1127, %v1196
      %v1254 = vadd.f32 %v1128, %v1198
      %v1255 = vadd.f32 %v1129, %v1201
      %v1256 = vadd.f32 %v1130, %v1203
      %v1257 = vadd.f32 %v1131, %v1206
      %v1258 = vadd.f32 %v1132, %v1208
      %v1259 = vadd.f32 %v1133, %v1211
      %v1260 = vadd.f32 %v1134, %v1213
      %v1261 = vadd.f32 %v1135, %v1216
      %v1262 = vadd.f32 %v1136, %v1218
      %v1263 = vadd.f32 %v1137, %v1221
      %v1264 = vadd.f32 %v1138, %v1223
      %v1265 = vadd.f32 %v1139, %v1226
      %v1266 = vadd.f32 %v1140, %v1228
      %v1267 = vadd.f32 %v1141, %v1231
      %v1268 = vadd.f32 %v1142, %v1233
      %v1269 = vadd.f32 %v1143, %v1236
      %v1270 = vadd.f32 %v1144, %v1238
      %v1271 = vadd.f32 %v1145, %v1241
      %v1272 = vadd.f32 %v1146, %v1243
      %v1273 = vadd.f32 %v1147, %v1246
      %s1274 = scalar_lea.vmem %s1, 12
      %v1275 = vld [vmem:[%s1274] sm:$0x3]
      %v1278 = vunpack.c.l.b16 %v199
      %v1279 = vunpack.c.l.b16 %v200
      %v1280 = vpack.c.b16 %v1279, %v1278
      %vm1281 = vcmask 1044480
      %v1282 = vrot.slane %v768, 3
      %v1283 = vrot.slane %v769, 3
      %v1284 = vsel %vm1281, %v1282, %v1283
      %v1285 = vrot.slane %v770, 3
      %v1286 = vsel %vm1281, %v1283, %v1285
      %v1287 = vrot.slane %v771, 3
      %v1288 = vsel %vm1281, %v1285, %v1287
      %v1289 = vrot.slane %v772, 3
      %v1290 = vsel %vm1281, %v1287, %v1289
      %v1291 = vrot.slane %v773, 3
      %v1292 = vsel %vm1281, %v1289, %v1291
      %v1293 = vrot.slane %v774, 3
      %v1294 = vsel %vm1281, %v1291, %v1293
      %v1295 = vrot.slane %v775, 3
      %v1296 = vsel %vm1281, %v1293, %v1295
      %v1297 = vrot.slane %v776, 3
      %v1298 = vsel %vm1281, %v1295, %v1297
      %v1299 = vrot.slane %v777, 3
      %v1300 = vsel %vm1281, %v1297, %v1299
      %v1301 = vrot.slane %v778, 3
      %v1302 = vsel %vm1281, %v1299, %v1301
      %v1303 = vrot.slane %v779, 3
      %v1304 = vsel %vm1281, %v1301, %v1303
      %v1305 = vrot.slane %v1280, 3
      %v1306 = vsel %vm1281, %v1303, %v1305
      %v1308 = vsel %vm371, %v1284, 0
      %v1311 = vsel %vm371, %v1286, 0
      %v1314 = vsel %vm371, %v1288, 0
      %v1317 = vsel %vm371, %v1290, 0
      %v1320 = vsel %vm371, %v1292, 0
      %v1323 = vsel %vm371, %v1294, 0
      %v1326 = vsel %vm371, %v1296, 0
      %v1329 = vsel %vm371, %v1298, 0
      %v1332 = vsel %vm371, %v1300, 0
      %v1335 = vsel %vm371, %v1302, 0
      %v1338 = vsel %vm371, %v1304, 0
      %v1341 = vsel %vm371, %v1306, 0
      %v1344 = vsel %vm371, %v1305, 0
      %v1347 = vand.u32 %v1275, %v414
      %1349 = vmatpush.bf16.msra.mxu0 0
      %1350 = vmatpush.bf16.msra.mxu0 0
      %1351 = vmatpush.bf16.msra.mxu0 0
      %1352 = vmatpush.bf16.msra.mxu0 0
      %1353 = vmatpush.bf16.msra.mxu0 0
      %1354 = vmatpush.bf16.msra.mxu0 0
      %1355 = vmatpush.bf16.msra.mxu0 0
      %1356 = vmatpush.bf16.msra.mxu0 %v1347
      %1357 = vmatmul.bf16.gmra.mxu0 %v1308
      %v1358 = vpop.f32.mrf.mxu0
      %v1359 = vadd.f32 0.0, %v1358
      %v1360 = vpop.f32.mrf.mxu0
      %v1361 = vadd.f32 0.0, %v1360
      %1362 = vmatmul.bf16.gmra.mxu0 %v1311
      %v1363 = vpop.f32.mrf.mxu0
      %v1364 = vadd.f32 0.0, %v1363
      %v1365 = vpop.f32.mrf.mxu0
      %v1366 = vadd.f32 0.0, %v1365
      %1367 = vmatmul.bf16.gmra.mxu0 %v1314
      %v1368 = vpop.f32.mrf.mxu0
      %v1369 = vadd.f32 0.0, %v1368
      %v1370 = vpop.f32.mrf.mxu0
      %v1371 = vadd.f32 0.0, %v1370
      %1372 = vmatmul.bf16.gmra.mxu0 %v1317
      %v1373 = vpop.f32.mrf.mxu0
      %v1374 = vadd.f32 0.0, %v1373
      %v1375 = vpop.f32.mrf.mxu0
      %v1376 = vadd.f32 0.0, %v1375
      %1377 = vmatmul.bf16.gmra.mxu0 %v1320
      %v1378 = vpop.f32.mrf.mxu0
      %v1379 = vadd.f32 0.0, %v1378
      %v1380 = vpop.f32.mrf.mxu0
      %v1381 = vadd.f32 0.0, %v1380
      %1382 = vmatmul.bf16.gmra.mxu0 %v1323
      %v1383 = vpop.f32.mrf.mxu0
      %v1384 = vadd.f32 0.0, %v1383
      %v1385 = vpop.f32.mrf.mxu0
      %v1386 = vadd.f32 0.0, %v1385
      %1387 = vmatmul.bf16.gmra.mxu0 %v1326
      %v1388 = vpop.f32.mrf.mxu0
      %v1389 = vadd.f32 0.0, %v1388
      %v1390 = vpop.f32.mrf.mxu0
      %v1391 = vadd.f32 0.0, %v1390
      %1392 = vmatmul.bf16.gmra.mxu0 %v1329
      %v1393 = vpop.f32.mrf.mxu0
      %v1394 = vadd.f32 0.0, %v1393
      %v1395 = vpop.f32.mrf.mxu0
      %v1396 = vadd.f32 0.0, %v1395
      %1397 = vmatmul.bf16.gmra.mxu0 %v1332
      %v1398 = vpop.f32.mrf.mxu0
      %v1399 = vadd.f32 0.0, %v1398
      %v1400 = vpop.f32.mrf.mxu0
      %v1401 = vadd.f32 0.0, %v1400
      %1402 = vmatmul.bf16.gmra.mxu0 %v1335
      %v1403 = vpop.f32.mrf.mxu0
      %v1404 = vadd.f32 0.0, %v1403
      %v1405 = vpop.f32.mrf.mxu0
      %v1406 = vadd.f32 0.0, %v1405
      %1407 = vmatmul.bf16.gmra.mxu0 %v1338
      %v1408 = vpop.f32.mrf.mxu0
      %v1409 = vadd.f32 0.0, %v1408
      %v1410 = vpop.f32.mrf.mxu0
      %v1411 = vadd.f32 0.0, %v1410
      %1412 = vmatmul.bf16.gmra.mxu0 %v1341
      %v1413 = vpop.f32.mrf.mxu0
      %v1414 = vadd.f32 0.0, %v1413
      %v1415 = vpop.f32.mrf.mxu0
      %v1416 = vadd.f32 0.0, %v1415
      %1417 = vmatmul.bf16.gmra.mxu0 %v1344
      %v1418 = vpop.f32.mrf.mxu0
      %v1419 = vadd.f32 0.0, %v1418
      %v1420 = vpop.f32.mrf.mxu0
      %1421 = vdwg.mxu0
      %v1422 = vadd.f32 %v1249, %v1359
      %v1423 = vadd.f32 %v1250, %v1361
      %v1424 = vadd.f32 %v1251, %v1364
      %v1425 = vadd.f32 %v1252, %v1366
      %v1426 = vadd.f32 %v1253, %v1369
      %v1427 = vadd.f32 %v1254, %v1371
      %v1428 = vadd.f32 %v1255, %v1374
      %v1429 = vadd.f32 %v1256, %v1376
      %v1430 = vadd.f32 %v1257, %v1379
      %v1431 = vadd.f32 %v1258, %v1381
      %v1432 = vadd.f32 %v1259, %v1384
      %v1433 = vadd.f32 %v1260, %v1386
      %v1434 = vadd.f32 %v1261, %v1389
      %v1435 = vadd.f32 %v1262, %v1391
      %v1436 = vadd.f32 %v1263, %v1394
      %v1437 = vadd.f32 %v1264, %v1396
      %v1438 = vadd.f32 %v1265, %v1399
      %v1439 = vadd.f32 %v1266, %v1401
      %v1440 = vadd.f32 %v1267, %v1404
      %v1441 = vadd.f32 %v1268, %v1406
      %v1442 = vadd.f32 %v1269, %v1409
      %v1443 = vadd.f32 %v1270, %v1411
      %v1444 = vadd.f32 %v1271, %v1414
      %v1445 = vadd.f32 %v1272, %v1416
      %v1446 = vadd.f32 %v1273, %v1419
      %s1447 = scalar_lea.vmem %s1, 14
      %v1448 = vld [vmem:[%s1447] sm:$0x3]
      %v1450 = vshrl.u32 %v1280, 16
      %v1452 = vrot.slane %v1450, 3
      %v1453 = vshll.u32 %v1280, 16
      %v1455 = vrot.slane %v1453, 4
      %v1456 = vor.u32 %v1452, %v1455
      %v1457 = vsel %vm780, %v895, %v1456
      %v1459 = vsel %vm371, %v1457, 0
      %v1462 = vsel %vm371, %v1456, 0
      %v1465 = vand.u32 %v1448, %v414
      %1467 = vmatpush.bf16.msra.mxu0 0
      %1468 = vmatpush.bf16.msra.mxu0 0
      %1469 = vmatpush.bf16.msra.mxu0 0
      %1470 = vmatpush.bf16.msra.mxu0 0
      %1471 = vmatpush.bf16.msra.mxu0 0
      %1472 = vmatpush.bf16.msra.mxu0 0
      %1473 = vmatpush.bf16.msra.mxu0 0
      %1474 = vmatpush.bf16.msra.mxu0 %v1465
      %1475 = vmatmul.bf16.gmra.mxu0 %v901
      %v1476 = vpop.f32.mrf.mxu0
      %v1477 = vadd.f32 0.0, %v1476
      %v1478 = vpop.f32.mrf.mxu0
      %v1479 = vadd.f32 0.0, %v1478
      %1480 = vmatmul.bf16.gmra.mxu0 %v904
      %v1481 = vpop.f32.mrf.mxu0
      %v1482 = vadd.f32 0.0, %v1481
      %v1483 = vpop.f32.mrf.mxu0
      %v1484 = vadd.f32 0.0, %v1483
      %1485 = vmatmul.bf16.gmra.mxu0 %v907
      %v1486 = vpop.f32.mrf.mxu0
      %v1487 = vadd.f32 0.0, %v1486
      %v1488 = vpop.f32.mrf.mxu0
      %v1489 = vadd.f32 0.0, %v1488
      %1490 = vmatmul.bf16.gmra.mxu0 %v910
      %v1491 = vpop.f32.mrf.mxu0
      %v1492 = vadd.f32 0.0, %v1491
      %v1493 = vpop.f32.mrf.mxu0
      %v1494 = vadd.f32 0.0, %v1493
      %1495 = vmatmul.bf16.gmra.mxu0 %v913
      %v1496 = vpop.f32.mrf.mxu0
      %v1497 = vadd.f32 0.0, %v1496
      %v1498 = vpop.f32.mrf.mxu0
      %v1499 = vadd.f32 0.0, %v1498
      %1500 = vmatmul.bf16.gmra.mxu0 %v916
      %v1501 = vpop.f32.mrf.mxu0
      %v1502 = vadd.f32 0.0, %v1501
      %v1503 = vpop.f32.mrf.mxu0
      %v1504 = vadd.f32 0.0, %v1503
      %1505 = vmatmul.bf16.gmra.mxu0 %v919
      %v1506 = vpop.f32.mrf.mxu0
      %v1507 = vadd.f32 0.0, %v1506
      %v1508 = vpop.f32.mrf.mxu0
      %v1509 = vadd.f32 0.0, %v1508
      %1510 = vmatmul.bf16.gmra.mxu0 %v922
      %v1511 = vpop.f32.mrf.mxu0
      %v1512 = vadd.f32 0.0, %v1511
      %v1513 = vpop.f32.mrf.mxu0
      %v1514 = vadd.f32 0.0, %v1513
      %1515 = vmatmul.bf16.gmra.mxu0 %v925
      %v1516 = vpop.f32.mrf.mxu0
      %v1517 = vadd.f32 0.0, %v1516
      %v1518 = vpop.f32.mrf.mxu0
      %v1519 = vadd.f32 0.0, %v1518
      %1520 = vmatmul.bf16.gmra.mxu0 %v928
      %v1521 = vpop.f32.mrf.mxu0
      %v1522 = vadd.f32 0.0, %v1521
      %v1523 = vpop.f32.mrf.mxu0
      %v1524 = vadd.f32 0.0, %v1523
      %1525 = vmatmul.bf16.gmra.mxu0 %v931
      %v1526 = vpop.f32.mrf.mxu0
      %v1527 = vadd.f32 0.0, %v1526
      %v1528 = vpop.f32.mrf.mxu0
      %v1529 = vadd.f32 0.0, %v1528
      %1530 = vmatmul.bf16.gmra.mxu0 %v1459
      %v1531 = vpop.f32.mrf.mxu0
      %v1532 = vadd.f32 0.0, %v1531
      %v1533 = vpop.f32.mrf.mxu0
      %v1534 = vadd.f32 0.0, %v1533
      %1535 = vmatmul.bf16.gmra.mxu0 %v1462
      %v1536 = vpop.f32.mrf.mxu0
      %v1537 = vadd.f32 0.0, %v1536
      %v1538 = vpop.f32.mrf.mxu0
      %1539 = vdwg.mxu0
      %v1540 = vadd.f32 %v1422, %v1477
      %v1541 = vadd.f32 %v1423, %v1479
      %v1542 = vadd.f32 %v1424, %v1482
      %v1543 = vadd.f32 %v1425, %v1484
      %v1544 = vadd.f32 %v1426, %v1487
      %v1545 = vadd.f32 %v1427, %v1489
      %v1546 = vadd.f32 %v1428, %v1492
      %v1547 = vadd.f32 %v1429, %v1494
      %v1548 = vadd.f32 %v1430, %v1497
      %v1549 = vadd.f32 %v1431, %v1499
      %v1550 = vadd.f32 %v1432, %v1502
      %v1551 = vadd.f32 %v1433, %v1504
      %v1552 = vadd.f32 %v1434, %v1507
      %v1553 = vadd.f32 %v1435, %v1509
      %v1554 = vadd.f32 %v1436, %v1512
      %v1555 = vadd.f32 %v1437, %v1514
      %v1556 = vadd.f32 %v1438, %v1517
      %v1557 = vadd.f32 %v1439, %v1519
      %v1558 = vadd.f32 %v1440, %v1522
      %v1559 = vadd.f32 %v1441, %v1524
      %v1560 = vadd.f32 %v1442, %v1527
      %v1561 = vadd.f32 %v1443, %v1529
      %v1562 = vadd.f32 %v1444, %v1532
      %v1563 = vadd.f32 %v1445, %v1534
      %v1564 = vadd.f32 %v1446, %v1537
      %s1565 = scalar_lea.vmem %s1, 16
      %v1566 = vld [vmem:[%s1565] sm:$0x3]
      %v1567 = vpack.c.b16 %v1278, %v766
      %v1568 = vpack.c.b16 %v1279, %v1279
      %v1570 = vsel %vm371, %v1567, 0
      %v1573 = vsel %vm371, %v1568, 0
      %v1576 = vand.u32 %v1566, %v414
      %1578 = vmatpush.bf16.msra.mxu0 0
      %1579 = vmatpush.bf16.msra.mxu0 0
      %1580 = vmatpush.bf16.msra.mxu0 0
      %1581 = vmatpush.bf16.msra.mxu0 0
      %1582 = vmatpush.bf16.msra.mxu0 0
      %1583 = vmatpush.bf16.msra.mxu0 0
      %1584 = vmatpush.bf16.msra.mxu0 0
      %1585 = vmatpush.bf16.msra.mxu0 %v1576
      %1586 = vmatmul.bf16.gmra.mxu0 %v495
      %v1587 = vpop.f32.mrf.mxu0
      %v1588 = vadd.f32 0.0, %v1587
      %v1589 = vpop.f32.mrf.mxu0
      %v1590 = vadd.f32 0.0, %v1589
      %1591 = vmatmul.bf16.gmra.mxu0 %v497
      %v1592 = vpop.f32.mrf.mxu0
      %v1593 = vadd.f32 0.0, %v1592
      %v1594 = vpop.f32.mrf.mxu0
      %v1595 = vadd.f32 0.0, %v1594
      %1596 = vmatmul.bf16.gmra.mxu0 %v499
      %v1597 = vpop.f32.mrf.mxu0
      %v1598 = vadd.f32 0.0, %v1597
      %v1599 = vpop.f32.mrf.mxu0
      %v1600 = vadd.f32 0.0, %v1599
      %1601 = vmatmul.bf16.gmra.mxu0 %v501
      %v1602 = vpop.f32.mrf.mxu0
      %v1603 = vadd.f32 0.0, %v1602
      %v1604 = vpop.f32.mrf.mxu0
      %v1605 = vadd.f32 0.0, %v1604
      %1606 = vmatmul.bf16.gmra.mxu0 %v503
      %v1607 = vpop.f32.mrf.mxu0
      %v1608 = vadd.f32 0.0, %v1607
      %v1609 = vpop.f32.mrf.mxu0
      %v1610 = vadd.f32 0.0, %v1609
      %1611 = vmatmul.bf16.gmra.mxu0 %v505
      %v1612 = vpop.f32.mrf.mxu0
      %v1613 = vadd.f32 0.0, %v1612
      %v1614 = vpop.f32.mrf.mxu0
      %v1615 = vadd.f32 0.0, %v1614
      %1616 = vmatmul.bf16.gmra.mxu0 %v507
      %v1617 = vpop.f32.mrf.mxu0
      %v1618 = vadd.f32 0.0, %v1617
      %v1619 = vpop.f32.mrf.mxu0
      %v1620 = vadd.f32 0.0, %v1619
      %1621 = vmatmul.bf16.gmra.mxu0 %v509
      %v1622 = vpop.f32.mrf.mxu0
      %v1623 = vadd.f32 0.0, %v1622
      %v1624 = vpop.f32.mrf.mxu0
      %v1625 = vadd.f32 0.0, %v1624
      %1626 = vmatmul.bf16.gmra.mxu0 %v511
      %v1627 = vpop.f32.mrf.mxu0
      %v1628 = vadd.f32 0.0, %v1627
      %v1629 = vpop.f32.mrf.mxu0
      %v1630 = vadd.f32 0.0, %v1629
      %1631 = vmatmul.bf16.gmra.mxu0 %v513
      %v1632 = vpop.f32.mrf.mxu0
      %v1633 = vadd.f32 0.0, %v1632
      %v1634 = vpop.f32.mrf.mxu0
      %v1635 = vadd.f32 0.0, %v1634
      %1636 = vmatmul.bf16.gmra.mxu0 %v1042
      %v1637 = vpop.f32.mrf.mxu0
      %v1638 = vadd.f32 0.0, %v1637
      %v1639 = vpop.f32.mrf.mxu0
      %v1640 = vadd.f32 0.0, %v1639
      %1641 = vmatmul.bf16.gmra.mxu0 %v1570
      %v1642 = vpop.f32.mrf.mxu0
      %v1643 = vadd.f32 0.0, %v1642
      %v1644 = vpop.f32.mrf.mxu0
      %v1645 = vadd.f32 0.0, %v1644
      %1646 = vmatmul.bf16.gmra.mxu0 %v1573
      %v1647 = vpop.f32.mrf.mxu0
      %v1648 = vadd.f32 0.0, %v1647
      %v1649 = vpop.f32.mrf.mxu0
      %1650 = vdwg.mxu0
      %v1651 = vadd.f32 %v1540, %v1588
      %v1652 = vadd.f32 %v1541, %v1590
      %v1653 = vadd.f32 %v1542, %v1593
      %v1654 = vadd.f32 %v1543, %v1595
      %v1655 = vadd.f32 %v1544, %v1598
      %v1656 = vadd.f32 %v1545, %v1600
      %v1657 = vadd.f32 %v1546, %v1603
      %v1658 = vadd.f32 %v1547, %v1605
      %v1659 = vadd.f32 %v1548, %v1608
      %v1660 = vadd.f32 %v1549, %v1610
      %v1661 = vadd.f32 %v1550, %v1613
      %v1662 = vadd.f32 %v1551, %v1615
      %v1663 = vadd.f32 %v1552, %v1618
      %v1664 = vadd.f32 %v1553, %v1620
      %v1665 = vadd.f32 %v1554, %v1623
      %v1666 = vadd.f32 %v1555, %v1625
      %v1667 = vadd.f32 %v1556, %v1628
      %v1668 = vadd.f32 %v1557, %v1630
      %v1669 = vadd.f32 %v1558, %v1633
      %v1670 = vadd.f32 %v1559, %v1635
      %v1671 = vadd.f32 %v1560, %v1638
      %v1672 = vadd.f32 %v1561, %v1640
      %v1673 = vadd.f32 %v1562, %v1643
      %v1674 = vadd.f32 %v1563, %v1645
      %v1675 = vadd.f32 %v1564, %v1648
      %v1676 = vld [vmem:[%s2] sm:$0x1]
      %v1678 = vperm.slane %v1676, 0
      %v1680 = vadd.f32 %v1651, %v1678
      %v1681 = vadd.f32 %v1652, %v1678
      %v1682 = vadd.f32 %v1653, %v1678
      %v1683 = vadd.f32 %v1654, %v1678
      %v1684 = vadd.f32 %v1655, %v1678
      %v1685 = vadd.f32 %v1656, %v1678
      %v1686 = vadd.f32 %v1657, %v1678
      %v1687 = vadd.f32 %v1658, %v1678
      %v1688 = vadd.f32 %v1659, %v1678
      %v1689 = vadd.f32 %v1660, %v1678
      %v1690 = vadd.f32 %v1661, %v1678
      %v1691 = vadd.f32 %v1662, %v1678
      %v1692 = vadd.f32 %v1663, %v1678
      %v1693 = vadd.f32 %v1664, %v1678
      %v1694 = vadd.f32 %v1665, %v1678
      %v1695 = vadd.f32 %v1666, %v1678
      %v1696 = vadd.f32 %v1667, %v1678
      %v1697 = vadd.f32 %v1668, %v1678
      %v1698 = vadd.f32 %v1669, %v1678
      %v1699 = vadd.f32 %v1670, %v1678
      %v1700 = vadd.f32 %v1671, %v1678
      %v1701 = vadd.f32 %v1672, %v1678
      %v1702 = vadd.f32 %v1673, %v1678
      %v1703 = vadd.f32 %v1674, %v1678
      %v1704 = vadd.f32 %v1675, %v1678
      %v1705 = vmax.f32 %v1680, 0.0
      %v1706 = vmax.f32 %v1681, 0.0
      %v1707 = vmax.f32 %v1682, 0.0
      %v1708 = vmax.f32 %v1683, 0.0
      %v1709 = vmax.f32 %v1684, 0.0
      %v1710 = vmax.f32 %v1685, 0.0
      %v1711 = vmax.f32 %v1686, 0.0
      %v1712 = vmax.f32 %v1687, 0.0
      %v1713 = vmax.f32 %v1688, 0.0
      %v1714 = vmax.f32 %v1689, 0.0
      %v1715 = vmax.f32 %v1690, 0.0
      %v1716 = vmax.f32 %v1691, 0.0
      %v1717 = vmax.f32 %v1692, 0.0
      %v1718 = vmax.f32 %v1693, 0.0
      %v1719 = vmax.f32 %v1694, 0.0
      %v1720 = vmax.f32 %v1695, 0.0
      %v1721 = vmax.f32 %v1696, 0.0
      %v1722 = vmax.f32 %v1697, 0.0
      %v1723 = vmax.f32 %v1698, 0.0
      %v1724 = vmax.f32 %v1699, 0.0
      %v1725 = vmax.f32 %v1700, 0.0
      %v1726 = vmax.f32 %v1701, 0.0
      %v1727 = vmax.f32 %v1702, 0.0
      %v1728 = vmax.f32 %v1703, 0.0
      %v1729 = vmax.f32 %v1704, 0.0
      %v1755 = vrot.slane %v1705, 1
      %v1756 = vrot.slane %v1705, 2
      %v1757 = vrot.slane %v1705, 3
      %v1758 = vrot.slane %v1705, 4
      %v1759 = vrot.slane %v1705, 5
      %v1760 = vrot.slane %v1705, 6
      %v1761 = vrot.slane %v1705, 7
      %v1762 = vrot.slane %v1706, 1
      %v1763 = vrot.slane %v1706, 2
      %v1764 = vrot.slane %v1706, 3
      %v1765 = vrot.slane %v1706, 4
      %v1766 = vrot.slane %v1706, 7
      %v1767 = vrot.slane %v1707, 1
      %v1768 = vrot.slane %v1707, 2
      %v1769 = vrot.slane %v1707, 3
      %v1770 = vrot.slane %v1707, 4
      %v1771 = vrot.slane %v1707, 5
      %v1772 = vrot.slane %v1707, 6
      %v1773 = vrot.slane %v1707, 7
      %v1774 = vrot.slane %v1708, 1
      %v1775 = vrot.slane %v1708, 2
      %v1776 = vrot.slane %v1708, 3
      %v1777 = vrot.slane %v1708, 6
      %v1778 = vrot.slane %v1708, 7
      %v1779 = vrot.slane %v1709, 1
      %v1780 = vrot.slane %v1709, 2
      %v1781 = vrot.slane %v1709, 3
      %v1782 = vrot.slane %v1709, 4
      %v1783 = vrot.slane %v1709, 5
      %v1784 = vrot.slane %v1709, 6
      %v1785 = vrot.slane %v1709, 7
      %v1786 = vrot.slane %v1710, 1
      %v1787 = vrot.slane %v1710, 2
      %v1788 = vrot.slane %v1710, 5
      %v1789 = vrot.slane %v1710, 6
      %v1790 = vrot.slane %v1710, 7
      %v1791 = vrot.slane %v1711, 1
      %v1792 = vrot.slane %v1711, 2
      %v1793 = vrot.slane %v1711, 3
      %v1794 = vrot.slane %v1711, 4
      %v1795 = vrot.slane %v1711, 5
      %v1796 = vrot.slane %v1711, 6
      %v1797 = vrot.slane %v1711, 7
      %v1798 = vrot.slane %v1712, 1
      %v1799 = vrot.slane %v1712, 4
      %v1800 = vrot.slane %v1712, 5
      %v1801 = vrot.slane %v1712, 6
      %v1802 = vrot.slane %v1712, 7
      %v1803 = vrot.slane %v1713, 1
      %v1804 = vrot.slane %v1713, 2
      %v1805 = vrot.slane %v1713, 3
      %v1806 = vrot.slane %v1713, 4
      %v1807 = vrot.slane %v1713, 5
      %v1808 = vrot.slane %v1713, 6
      %v1809 = vrot.slane %v1713, 7
      %v1810 = vrot.slane %v1714, 3
      %v1811 = vrot.slane %v1714, 4
      %v1812 = vrot.slane %v1714, 5
      %v1813 = vrot.slane %v1714, 6
      %v1814 = vrot.slane %v1714, 7
      %v1815 = vrot.slane %v1715, 1
      %v1816 = vrot.slane %v1715, 2
      %v1817 = vrot.slane %v1715, 3
      %v1818 = vrot.slane %v1715, 4
      %v1819 = vrot.slane %v1715, 5
      %v1820 = vrot.slane %v1715, 6
      %v1821 = vrot.slane %v1715, 7
      %v1822 = vrot.slane %v1716, 2
      %v1823 = vrot.slane %v1716, 3
      %v1824 = vrot.slane %v1716, 4
      %v1825 = vrot.slane %v1716, 5
      %v1826 = vrot.slane %v1716, 6
      %v1827 = vrot.slane %v1716, 7
      %v1828 = vrot.slane %v1717, 1
      %v1829 = vrot.slane %v1717, 2
      %v1830 = vrot.slane %v1717, 3
      %v1831 = vrot.slane %v1717, 4
      %v1832 = vrot.slane %v1717, 5
      %v1833 = vrot.slane %v1717, 6
      %v1834 = vrot.slane %v1718, 1
      %v1835 = vrot.slane %v1718, 2
      %v1836 = vrot.slane %v1718, 3
      %v1837 = vrot.slane %v1718, 4
      %v1838 = vrot.slane %v1718, 5
      %v1839 = vrot.slane %v1718, 6
      %v1840 = vrot.slane %v1718, 7
      %v1841 = vrot.slane %v1719, 1
      %v1842 = vrot.slane %v1719, 2
      %v1843 = vrot.slane %v1719, 3
      %v1844 = vrot.slane %v1719, 4
      %v1845 = vrot.slane %v1719, 5
      %v1846 = vrot.slane %v1720, 1
      %v1847 = vrot.slane %v1720, 2
      %v1848 = vrot.slane %v1720, 3
      %v1849 = vrot.slane %v1720, 4
      %v1850 = vrot.slane %v1720, 5
      %v1851 = vrot.slane %v1720, 6
      %v1852 = vrot.slane %v1720, 7
      %v1853 = vrot.slane %v1721, 1
      %v1854 = vrot.slane %v1721, 2
      %v1855 = vrot.slane %v1721, 3
      %v1856 = vrot.slane %v1721, 4
      %v1857 = vrot.slane %v1721, 7
      %v1858 = vrot.slane %v1722, 1
      %v1859 = vrot.slane %v1722, 2
      %v1860 = vrot.slane %v1722, 3
      %v1861 = vrot.slane %v1722, 4
      %v1862 = vrot.slane %v1722, 5
      %v1863 = vrot.slane %v1722, 6
      %v1864 = vrot.slane %v1722, 7
      %v1865 = vrot.slane %v1723, 1
      %v1866 = vrot.slane %v1723, 2
      %v1867 = vrot.slane %v1723, 3
      %v1868 = vrot.slane %v1723, 6
      %v1869 = vrot.slane %v1723, 7
      %v1870 = vrot.slane %v1724, 1
      %v1871 = vrot.slane %v1724, 2
      %v1872 = vrot.slane %v1724, 3
      %v1873 = vrot.slane %v1724, 4
      %v1874 = vrot.slane %v1724, 5
      %v1875 = vrot.slane %v1724, 6
      %v1876 = vrot.slane %v1724, 7
      %v1877 = vrot.slane %v1725, 1
      %v1878 = vrot.slane %v1725, 2
      %v1879 = vrot.slane %v1725, 5
      %v1880 = vrot.slane %v1725, 6
      %v1881 = vrot.slane %v1725, 7
      %v1882 = vrot.slane %v1726, 1
      %v1883 = vrot.slane %v1726, 2
      %v1884 = vrot.slane %v1726, 3
      %v1885 = vrot.slane %v1726, 4
      %v1886 = vrot.slane %v1726, 5
      %v1887 = vrot.slane %v1726, 6
      %v1888 = vrot.slane %v1726, 7
      %v1889 = vrot.slane %v1727, 1
      %v1890 = vrot.slane %v1727, 4
      %v1891 = vrot.slane %v1727, 5
      %v1892 = vrot.slane %v1727, 6
      %v1893 = vrot.slane %v1727, 7
      %v1894 = vrot.slane %v1728, 1
      %v1895 = vrot.slane %v1728, 2
      %v1896 = vrot.slane %v1728, 3
      %v1897 = vrot.slane %v1728, 4
      %v1898 = vrot.slane %v1728, 5
      %v1899 = vrot.slane %v1728, 6
      %v1900 = vrot.slane %v1728, 7
      %1901 = vst [vmem:[#allocation1] ss:$9 sm:$0xff] %v1705
      %s1902 = scalar_lea.vmem [#allocation1], 1
      %1903 = vst [vmem:[%s1902] ss:$9 sm:$0xff] %v1755
      %s1904 = scalar_lea.vmem [#allocation1], 2
      %1905 = vst [vmem:[%s1904] ss:$9 sm:$0xff] %v1756
      %s1906 = scalar_lea.vmem [#allocation1], 3
      %1907 = vst [vmem:[%s1906] ss:$9 sm:$0xff] %v1757
      %s1908 = scalar_lea.vmem [#allocation1], 4
      %1909 = vst [vmem:[%s1908] ss:$9 sm:$0xff] %v1758
      %s1910 = scalar_lea.vmem [#allocation1], 5
      %1911 = vst [vmem:[%s1910] ss:$9 sm:$0xff] %v1759
      %s1912 = scalar_lea.vmem [#allocation1], 6
      %1913 = vst [vmem:[%s1912] ss:$9 sm:$0xff] %v1760
      %s1914 = scalar_lea.vmem [#allocation1], 7
      %1915 = vst [vmem:[%s1914] ss:$9 sm:$0xff] %v1761
      %v1916 = vld [vmem:[#allocation1] sm:$0xff]
      %1917 = vst [vmem:[#allocation1] ss:$9 sm:$0xff] %v1706
      %1918 = vst [vmem:[%s1902] ss:$9 sm:$0xff] %v1762
      %1919 = vst [vmem:[%s1904] ss:$9 sm:$0xff] %v1763
      %1920 = vst [vmem:[%s1906] ss:$9 sm:$0xff] %v1764
      %1921 = vst [vmem:[%s1908] ss:$9 sm:$0xff] %v1765
      %v1922 = vld [vmem:[#allocation1] sm:$0xff]
      %1923 = vst [vmem:[#allocation1] ss:$9 sm:$0xff] %v1766
      %1924 = vst [vmem:[%s1902] ss:$9 sm:$0xff] %v1707
      %1925 = vst [vmem:[%s1904] ss:$9 sm:$0xff] %v1767
      %1926 = vst [vmem:[%s1906] ss:$9 sm:$0xff] %v1768
      %1927 = vst [vmem:[%s1908] ss:$9 sm:$0xff] %v1769
      %1928 = vst [vmem:[%s1910] ss:$9 sm:$0xff] %v1770
      %1929 = vst [vmem:[%s1912] ss:$9 sm:$0xff] %v1771
      %1930 = vst [vmem:[%s1914] ss:$9 sm:$0xff] %v1772
      %v1931 = vld [vmem:[#allocation1] sm:$0xff]
      %1932 = vst [vmem:[#allocation1] ss:$9 sm:$0xff] %v1773
      %1933 = vst [vmem:[%s1902] ss:$9 sm:$0xff] %v1708
      %1934 = vst [vmem:[%s1904] ss:$9 sm:$0xff] %v1774
      %1935 = vst [vmem:[%s1906] ss:$9 sm:$0xff] %v1775
      %1936 = vst [vmem:[%s1908] ss:$9 sm:$0xff] %v1776
      %v1937 = vld [vmem:[#allocation1] sm:$0xff]
      %1938 = vst [vmem:[#allocation1] ss:$9 sm:$0xff] %v1777
      %1939 = vst [vmem:[%s1902] ss:$9 sm:$0xff] %v1778
      %1940 = vst [vmem:[%s1904] ss:$9 sm:$0xff] %v1709
      %1941 = vst [vmem:[%s1906] ss:$9 sm:$0xff] %v1779
      %1942 = vst [vmem:[%s1908] ss:$9 sm:$0xff] %v1780
      %1943 = vst [vmem:[%s1910] ss:$9 sm:$0xff] %v1781
      %1944 = vst [vmem:[%s1912] ss:$9 sm:$0xff] %v1782
      %1945 = vst [vmem:[%s1914] ss:$9 sm:$0xff] %v1783
      %v1946 = vld [vmem:[#allocation1] sm:$0xff]
      %1947 = vst [vmem:[#allocation1] ss:$9 sm:$0xff] %v1784
      %1948 = vst [vmem:[%s1902] ss:$9 sm:$0xff] %v1785
      %1949 = vst [vmem:[%s1904] ss:$9 sm:$0xff] %v1710
      %1950 = vst [vmem:[%s1906] ss:$9 sm:$0xff] %v1786
      %1951 = vst [vmem:[%s1908] ss:$9 sm:$0xff] %v1787
      %v1952 = vld [vmem:[#allocation1] sm:$0xff]
      %1953 = vst [vmem:[#allocation1] ss:$9 sm:$0xff] %v1788
      %1954 = vst [vmem:[%s1902] ss:$9 sm:$0xff] %v1789
      %1955 = vst [vmem:[%s1904] ss:$9 sm:$0xff] %v1790
      %1956 = vst [vmem:[%s1906] ss:$9 sm:$0xff] %v1711
      %1957 = vst [vmem:[%s1908] ss:$9 sm:$0xff] %v1791
      %1958 = vst [vmem:[%s1910] ss:$9 sm:$0xff] %v1792
      %1959 = vst [vmem:[%s1912] ss:$9 sm:$0xff] %v1793
      %1960 = vst [vmem:[%s1914] ss:$9 sm:$0xff] %v1794
      %v1961 = vld [vmem:[#allocation1] sm:$0xff]
      %1962 = vst [vmem:[#allocation1] ss:$9 sm:$0xff] %v1795
      %1963 = vst [vmem:[%s1902] ss:$9 sm:$0xff] %v1796
      %1964 = vst [vmem:[%s1904] ss:$9 sm:$0xff] %v1797
      %1965 = vst [vmem:[%s1906] ss:$9 sm:$0xff] %v1712
      %1966 = vst [vmem:[%s1908] ss:$9 sm:$0xff] %v1798
      %v1967 = vld [vmem:[#allocation1] sm:$0xff]
      %1968 = vst [vmem:[#allocation1] ss:$9 sm:$0xff] %v1799
      %1969 = vst [vmem:[%s1902] ss:$9 sm:$0xff] %v1800
      %1970 = vst [vmem:[%s1904] ss:$9 sm:$0xff] %v1801
      %1971 = vst [vmem:[%s1906] ss:$9 sm:$0xff] %v1802
      %1972 = vst [vmem:[%s1908] ss:$9 sm:$0xff] %v1713
      %1973 = vst [vmem:[%s1910] ss:$9 sm:$0xff] %v1803
      %1974 = vst [vmem:[%s1912] ss:$9 sm:$0xff] %v1804
      %1975 = vst [vmem:[%s1914] ss:$9 sm:$0xff] %v1805
      %v1976 = vld [vmem:[#allocation1] sm:$0xff]
      %1977 = vst [vmem:[#allocation1] ss:$9 sm:$0xff] %v1806
      %1978 = vst [vmem:[%s1902] ss:$9 sm:$0xff] %v1807
      %1979 = vst [vmem:[%s1904] ss:$9 sm:$0xff] %v1808
      %1980 = vst [vmem:[%s1906] ss:$9 sm:$0xff] %v1809
      %1981 = vst [vmem:[%s1908] ss:$9 sm:$0xff] %v1714
      %v1982 = vld [vmem:[#allocation1] sm:$0xff]
      %1983 = vst [vmem:[#allocation1] ss:$9 sm:$0xff] %v1810
      %1984 = vst [vmem:[%s1902] ss:$9 sm:$0xff] %v1811
      %1985 = vst [vmem:[%s1904] ss:$9 sm:$0xff] %v1812
      %1986 = vst [vmem:[%s1906] ss:$9 sm:$0xff] %v1813
      %1987 = vst [vmem:[%s1908] ss:$9 sm:$0xff] %v1814
      %1988 = vst [vmem:[%s1910] ss:$9 sm:$0xff] %v1715
      %1989 = vst [vmem:[%s1912] ss:$9 sm:$0xff] %v1815
      %1990 = vst [vmem:[%s1914] ss:$9 sm:$0xff] %v1816
      %v1991 = vld [vmem:[#allocation1] sm:$0xff]
      %1992 = vst [vmem:[#allocation1] ss:$9 sm:$0xff] %v1817
      %1993 = vst [vmem:[%s1902] ss:$9 sm:$0xff] %v1818
      %1994 = vst [vmem:[%s1904] ss:$9 sm:$0xff] %v1819
      %1995 = vst [vmem:[%s1906] ss:$9 sm:$0xff] %v1820
      %1996 = vst [vmem:[%s1908] ss:$9 sm:$0xff] %v1821
      %v1997 = vld [vmem:[#allocation1] sm:$0xff]
      %1998 = vst [vmem:[#allocation1] ss:$9 sm:$0xff] %v1822
      %1999 = vst [vmem:[%s1902] ss:$9 sm:$0xff] %v1823
      %2000 = vst [vmem:[%s1904] ss:$9 sm:$0xff] %v1824
      %2001 = vst [vmem:[%s1906] ss:$9 sm:$0xff] %v1825
      %2002 = vst [vmem:[%s1908] ss:$9 sm:$0xff] %v1826
      %2003 = vst [vmem:[%s1910] ss:$9 sm:$0xff] %v1827
      %2004 = vst [vmem:[%s1912] ss:$9 sm:$0xff] %v1717
      %2005 = vst [vmem:[%s1914] ss:$9 sm:$0xff] %v1828
      %v2006 = vld [vmem:[#allocation1] sm:$0xff]
      %2007 = vst [vmem:[#allocation1] ss:$9 sm:$0xff] %v1829
      %2008 = vst [vmem:[%s1902] ss:$9 sm:$0xff] %v1830
      %2009 = vst [vmem:[%s1904] ss:$9 sm:$0xff] %v1831
      %2010 = vst [vmem:[%s1906] ss:$9 sm:$0xff] %v1832
      %2011 = vst [vmem:[%s1908] ss:$9 sm:$0xff] %v1833
      %v2012 = vld [vmem:[#allocation1] sm:$0xff]
      %2013 = vst [vmem:[#allocation1] ss:$9 sm:$0xff] %v1834
      %2014 = vst [vmem:[%s1902] ss:$9 sm:$0xff] %v1835
      %2015 = vst [vmem:[%s1904] ss:$9 sm:$0xff] %v1836
      %2016 = vst [vmem:[%s1906] ss:$9 sm:$0xff] %v1837
      %2017 = vst [vmem:[%s1908] ss:$9 sm:$0xff] %v1838
      %2018 = vst [vmem:[%s1910] ss:$9 sm:$0xff] %v1839
      %2019 = vst [vmem:[%s1912] ss:$9 sm:$0xff] %v1840
      %2020 = vst [vmem:[%s1914] ss:$9 sm:$0xff] %v1719
      %v2021 = vld [vmem:[#allocation1] sm:$0xff]
      %2022 = vst [vmem:[#allocation1] ss:$9 sm:$0xff] %v1841
      %2023 = vst [vmem:[%s1902] ss:$9 sm:$0xff] %v1842
      %2024 = vst [vmem:[%s1904] ss:$9 sm:$0xff] %v1843
      %2025 = vst [vmem:[%s1906] ss:$9 sm:$0xff] %v1844
      %2026 = vst [vmem:[%s1908] ss:$9 sm:$0xff] %v1845
      %v2027 = vld [vmem:[#allocation1] sm:$0xff]
      %2028 = vst [vmem:[#allocation1] ss:$9 sm:$0xff] %v1720
      %2029 = vst [vmem:[%s1902] ss:$9 sm:$0xff] %v1846
      %2030 = vst [vmem:[%s1904] ss:$9 sm:$0xff] %v1847
      %2031 = vst [vmem:[%s1906] ss:$9 sm:$0xff] %v1848
      %2032 = vst [vmem:[%s1908] ss:$9 sm:$0xff] %v1849
      %2033 = vst [vmem:[%s1910] ss:$9 sm:$0xff] %v1850
      %2034 = vst [vmem:[%s1912] ss:$9 sm:$0xff] %v1851
      %2035 = vst [vmem:[%s1914] ss:$9 sm:$0xff] %v1852
      %v2036 = vld [vmem:[#allocation1] sm:$0xff]
      %2037 = vst [vmem:[#allocation1] ss:$9 sm:$0xff] %v1721
      %2038 = vst [vmem:[%s1902] ss:$9 sm:$0xff] %v1853
      %2039 = vst [vmem:[%s1904] ss:$9 sm:$0xff] %v1854
      %2040 = vst [vmem:[%s1906] ss:$9 sm:$0xff] %v1855
      %2041 = vst [vmem:[%s1908] ss:$9 sm:$0xff] %v1856
      %v2042 = vld [vmem:[#allocation1] sm:$0xff]
      %2043 = vst [vmem:[#allocation1] ss:$9 sm:$0xff] %v1857
      %2044 = vst [vmem:[%s1902] ss:$9 sm:$0xff] %v1722
      %2045 = vst [vmem:[%s1904] ss:$9 sm:$0xff] %v1858
      %2046 = vst [vmem:[%s1906] ss:$9 sm:$0xff] %v1859
      %2047 = vst [vmem:[%s1908] ss:$9 sm:$0xff] %v1860
      %2048 = vst [vmem:[%s1910] ss:$9 sm:$0xff] %v1861
      %2049 = vst [vmem:[%s1912] ss:$9 sm:$0xff] %v1862
      %2050 = vst [vmem:[%s1914] ss:$9 sm:$0xff] %v1863
      %v2051 = vld [vmem:[#allocation1] sm:$0xff]
      %2052 = vst [vmem:[#allocation1] ss:$9 sm:$0xff] %v1864
      %2053 = vst [vmem:[%s1902] ss:$9 sm:$0xff] %v1723
      %2054 = vst [vmem:[%s1904] ss:$9 sm:$0xff] %v1865
      %2055 = vst [vmem:[%s1906] ss:$9 sm:$0xff] %v1866
      %2056 = vst [vmem:[%s1908] ss:$9 sm:$0xff] %v1867
      %v2057 = vld [vmem:[#allocation1] sm:$0xff]
      %2058 = vst [vmem:[#allocation1] ss:$9 sm:$0xff] %v1868
      %2059 = vst [vmem:[%s1902] ss:$9 sm:$0xff] %v1869
      %2060 = vst [vmem:[%s1904] ss:$9 sm:$0xff] %v1724
      %2061 = vst [vmem:[%s1906] ss:$9 sm:$0xff] %v1870
      %2062 = vst [vmem:[%s1908] ss:$9 sm:$0xff] %v1871
      %2063 = vst [vmem:[%s1910] ss:$9 sm:$0xff] %v1872
      %2064 = vst [vmem:[%s1912] ss:$9 sm:$0xff] %v1873
      %2065 = vst [vmem:[%s1914] ss:$9 sm:$0xff] %v1874
      %v2066 = vld [vmem:[#allocation1] sm:$0xff]
      %2067 = vst [vmem:[#allocation1] ss:$9 sm:$0xff] %v1875
      %2068 = vst [vmem:[%s1902] ss:$9 sm:$0xff] %v1876
      %2069 = vst [vmem:[%s1904] ss:$9 sm:$0xff] %v1725
      %2070 = vst [vmem:[%s1906] ss:$9 sm:$0xff] %v1877
      %2071 = vst [vmem:[%s1908] ss:$9 sm:$0xff] %v1878
      %v2072 = vld [vmem:[#allocation1] sm:$0xff]
      %2073 = vst [vmem:[#allocation1] ss:$9 sm:$0xff] %v1879
      %2074 = vst [vmem:[%s1902] ss:$9 sm:$0xff] %v1880
      %2075 = vst [vmem:[%s1904] ss:$9 sm:$0xff] %v1881
      %2076 = vst [vmem:[%s1906] ss:$9 sm:$0xff] %v1726
      %2077 = vst [vmem:[%s1908] ss:$9 sm:$0xff] %v1882
      %2078 = vst [vmem:[%s1910] ss:$9 sm:$0xff] %v1883
      %2079 = vst [vmem:[%s1912] ss:$9 sm:$0xff] %v1884
      %2080 = vst [vmem:[%s1914] ss:$9 sm:$0xff] %v1885
      %v2081 = vld [vmem:[#allocation1] sm:$0xff]
      %2082 = vst [vmem:[#allocation1] ss:$9 sm:$0xff] %v1886
      %2083 = vst [vmem:[%s1902] ss:$9 sm:$0xff] %v1887
      %2084 = vst [vmem:[%s1904] ss:$9 sm:$0xff] %v1888
      %2085 = vst [vmem:[%s1906] ss:$9 sm:$0xff] %v1727
      %2086 = vst [vmem:[%s1908] ss:$9 sm:$0xff] %v1889
      %v2087 = vld [vmem:[#allocation1] sm:$0xff]
      %2088 = vst [vmem:[#allocation1] ss:$9 sm:$0xff] %v1890
      %2089 = vst [vmem:[%s1902] ss:$9 sm:$0xff] %v1891
      %2090 = vst [vmem:[%s1904] ss:$9 sm:$0xff] %v1892
      %2091 = vst [vmem:[%s1906] ss:$9 sm:$0xff] %v1893
      %2092 = vst [vmem:[%s1908] ss:$9 sm:$0xff] %v1728
      %2093 = vst [vmem:[%s1910] ss:$9 sm:$0xff] %v1894
      %2094 = vst [vmem:[%s1912] ss:$9 sm:$0xff] %v1895
      %2095 = vst [vmem:[%s1914] ss:$9 sm:$0xff] %v1896
      %v2096 = vld [vmem:[#allocation1] sm:$0xff]
      %2097 = vst [vmem:[#allocation1] ss:$9 sm:$0xff] %v1897
      %2098 = vst [vmem:[%s1902] ss:$9 sm:$0xff] %v1898
      %2099 = vst [vmem:[%s1904] ss:$9 sm:$0xff] %v1899
      %2100 = vst [vmem:[%s1906] ss:$9 sm:$0xff] %v1900
      %2101 = vst [vmem:[%s1908] ss:$9 sm:$0xff] %v1729
      %v2102 = vld [vmem:[#allocation1] sm:$0xff]
      %v2104 = vrot.slane 0.0, 7
      %v2105 = vsel %vm411, %v2104, %v2104
      %v2106 = vrot.slane %v1916, 7
      %v2107 = vrot.slane %v1922, 7
      %v2108 = vsel %vm411, %v2106, %v2107
      %v2109 = vrot.slane %v1931, 7
      %v2110 = vrot.slane %v1937, 7
      %v2111 = vsel %vm411, %v2109, %v2110
      %v2112 = vrot.slane %v1946, 7
      %v2113 = vrot.slane %v1952, 7
      %v2114 = vsel %vm411, %v2112, %v2113
      %v2115 = vrot.slane %v1961, 7
      %v2116 = vrot.slane %v1967, 7
      %v2117 = vsel %vm411, %v2115, %v2116
      %v2118 = vrot.slane %v1976, 7
      %v2119 = vrot.slane %v1982, 7
      %v2120 = vsel %vm411, %v2118, %v2119
      %v2121 = vrot.slane %v1991, 7
      %v2122 = vrot.slane %v1997, 7
      %v2123 = vsel %vm411, %v2121, %v2122
      %v2124 = vrot.slane %v2006, 7
      %v2125 = vrot.slane %v2012, 7
      %v2126 = vsel %vm411, %v2124, %v2125
      %v2127 = vrot.slane %v2021, 7
      %v2128 = vrot.slane %v2027, 7
      %v2129 = vsel %vm411, %v2127, %v2128
      %v2130 = vrot.slane %v2036, 7
      %v2131 = vrot.slane %v2042, 7
      %v2132 = vsel %vm411, %v2130, %v2131
      %v2133 = vrot.slane %v2051, 7
      %v2134 = vrot.slane %v2057, 7
      %v2135 = vsel %vm411, %v2133, %v2134
      %v2136 = vrot.slane %v2066, 7
      %v2137 = vrot.slane %v2072, 7
      %v2138 = vsel %vm411, %v2136, %v2137
      %v2139 = vrot.slane %v2081, 7
      %v2140 = vrot.slane %v2087, 7
      %v2141 = vsel %vm411, %v2139, %v2140
      %v2142 = vrot.slane %v2096, 7
      %v2143 = vrot.slane %v2102, 7
      %v2144 = vsel %vm411, %v2142, %v2143
      %v2173 = vsel %vm411, 0.0, %v2104
      %v2174 = vsel %vm411, 0.0, %v2106
      %v2175 = vsel %vm411, 0.0, %v2109
      %v2176 = vsel %vm411, 0.0, %v2112
      %v2177 = vsel %vm411, 0.0, %v2115
      %v2178 = vsel %vm411, 0.0, %v2118
      %v2179 = vsel %vm411, 0.0, %v2121
      %v2180 = vsel %vm411, 0.0, %v2124
      %v2181 = vsel %vm411, 0.0, %v2127
      %v2182 = vsel %vm411, 0.0, %v2130
      %v2183 = vsel %vm411, 0.0, %v2133
      %v2184 = vsel %vm411, 0.0, %v2136
      %v2185 = vsel %vm411, 0.0, %v2139
      %v2186 = vsel %vm411, 0.0, %v2142
      %vm2187 = vcmask 1045504
      %v2188 = vsel %vm2187, %v2105, 0.0
      %v2189 = vsel %vm2187, %v2108, 0.0
      %v2190 = vsel %vm2187, %v2111, 0.0
      %v2191 = vsel %vm2187, %v2114, 0.0
      %v2192 = vsel %vm2187, %v2117, 0.0
      %v2193 = vsel %vm2187, %v2120, 0.0
      %v2194 = vsel %vm2187, %v2123, 0.0
      %v2195 = vsel %vm2187, %v2126, 0.0
      %v2196 = vsel %vm2187, %v2129, 0.0
      %v2197 = vsel %vm2187, %v2132, 0.0
      %v2198 = vsel %vm2187, %v2135, 0.0
      %v2199 = vsel %vm2187, %v2138, 0.0
      %v2200 = vsel %vm2187, %v2141, 0.0
      %v2201 = vsel %vm2187, %v2144, 0.0
      %v2202 = vmax.f32 %v2173, %v2174
      %v2203 = vmax.f32 %v2188, %v2189
      %v2204 = vmax.f32 %v2202, %v2175
      %v2205 = vmax.f32 %v2203, %v2190
      %v2206 = vmax.f32 %v2175, %v2176
      %v2207 = vmax.f32 %v2190, %v2191
      %v2208 = vmax.f32 %v2206, %v2177
      %v2209 = vmax.f32 %v2207, %v2192
      %v2210 = vmax.f32 %v2177, %v2178
      %v2211 = vmax.f32 %v2192, %v2193
      %v2212 = vmax.f32 %v2210, %v2179
      %v2213 = vmax.f32 %v2211, %v2194
      %v2214 = vmax.f32 %v2179, %v2180
      %v2215 = vmax.f32 %v2194, %v2195
      %v2216 = vmax.f32 %v2214, %v2181
      %v2217 = vmax.f32 %v2215, %v2196
      %v2218 = vmax.f32 %v2181, %v2182
      %v2219 = vmax.f32 %v2196, %v2197
      %v2220 = vmax.f32 %v2218, %v2183
      %v2221 = vmax.f32 %v2219, %v2198
      %v2222 = vmax.f32 %v2183, %v2184
      %v2223 = vmax.f32 %v2198, %v2199
      %v2224 = vmax.f32 %v2222, %v2185
      %v2225 = vmax.f32 %v2223, %v2200
      %v2226 = vmax.f32 %v2185, %v2186
      %v2227 = vmax.f32 %v2200, %v2201
      %v2228 = vmax.f32 %v2226, %v2173
      %v2229 = vmax.f32 %v2227, %v2188
      %vm2244 = vcmask 1046528
      %v2245 = vrot.slane %v2204, 1
      %v2246 = vrot.slane %v2205, 1
      %v2247 = vsel %vm2244, %v2245, %v2246
      %v2248 = vrot.slane %v2208, 1
      %v2249 = vrot.slane %v2209, 1
      %v2250 = vsel %vm2244, %v2248, %v2249
      %v2251 = vrot.slane %v2212, 1
      %v2252 = vrot.slane %v2213, 1
      %v2253 = vsel %vm2244, %v2251, %v2252
      %v2254 = vrot.slane %v2216, 1
      %v2255 = vrot.slane %v2217, 1
      %v2256 = vsel %vm2244, %v2254, %v2255
      %v2257 = vrot.slane %v2220, 1
      %v2258 = vrot.slane %v2221, 1
      %v2259 = vsel %vm2244, %v2257, %v2258
      %v2260 = vrot.slane %v2224, 1
      %v2261 = vrot.slane %v2225, 1
      %v2262 = vsel %vm2244, %v2260, %v2261
      %v2263 = vrot.slane %v2228, 1
      %v2264 = vrot.slane %v2229, 1
      %v2265 = vsel %vm2244, %v2263, %v2264
      %v2280 = vmax.f32 %v2204, %v2247
      %v2281 = vmax.f32 %v2205, %v2246
      %v2282 = vmax.f32 %v2208, %v2250
      %v2283 = vmax.f32 %v2209, %v2249
      %v2284 = vmax.f32 %v2212, %v2253
      %v2285 = vmax.f32 %v2213, %v2252
      %v2286 = vmax.f32 %v2216, %v2256
      %v2287 = vmax.f32 %v2217, %v2255
      %v2288 = vmax.f32 %v2220, %v2259
      %v2289 = vmax.f32 %v2221, %v2258
      %v2290 = vmax.f32 %v2224, %v2262
      %v2291 = vmax.f32 %v2225, %v2261
      %v2292 = vmax.f32 %v2228, %v2265
      %v2293 = vmax.f32 %v2229, %v2264
      %v2294 = vrot.slane %v2204, 2
      %v2295 = vrot.slane %v2205, 2
      %v2296 = vsel %vm2187, %v2294, %v2295
      %v2297 = vrot.slane %v2208, 2
      %v2298 = vrot.slane %v2209, 2
      %v2299 = vsel %vm2187, %v2297, %v2298
      %v2300 = vrot.slane %v2212, 2
      %v2301 = vrot.slane %v2213, 2
      %v2302 = vsel %vm2187, %v2300, %v2301
      %v2303 = vrot.slane %v2216, 2
      %v2304 = vrot.slane %v2217, 2
      %v2305 = vsel %vm2187, %v2303, %v2304
      %v2306 = vrot.slane %v2220, 2
      %v2307 = vrot.slane %v2221, 2
      %v2308 = vsel %vm2187, %v2306, %v2307
      %v2309 = vrot.slane %v2224, 2
      %v2310 = vrot.slane %v2225, 2
      %v2311 = vsel %vm2187, %v2309, %v2310
      %v2312 = vrot.slane %v2228, 2
      %v2313 = vrot.slane %v2229, 2
      %v2314 = vsel %vm2187, %v2312, %v2313
      %v2329 = vmax.f32 %v2280, %v2296
      %v2330 = vmax.f32 %v2281, %v2295
      %v2331 = vmax.f32 %v2282, %v2299
      %v2332 = vmax.f32 %v2283, %v2298
      %v2333 = vmax.f32 %v2284, %v2302
      %v2334 = vmax.f32 %v2285, %v2301
      %v2335 = vmax.f32 %v2286, %v2305
      %v2336 = vmax.f32 %v2287, %v2304
      %v2337 = vmax.f32 %v2288, %v2308
      %v2338 = vmax.f32 %v2289, %v2307
      %v2339 = vmax.f32 %v2290, %v2311
      %v2340 = vmax.f32 %v2291, %v2310
      %v2341 = vmax.f32 %v2292, %v2314
      %v2342 = vmax.f32 %v2293, %v2313
      %v2350 = vrot.slane %v2329, 1
      %v2351 = vrot.slane %v2331, 1
      %v2352 = vrot.slane %v2333, 1
      %v2353 = vrot.slane %v2335, 1
      %v2354 = vrot.slane %v2337, 1
      %v2355 = vrot.slane %v2339, 1
      %v2356 = vrot.slane %v2341, 1
      %v2364 = vrot.slane %v2329, 2
      %v2365 = vrot.slane %v2331, 2
      %v2366 = vrot.slane %v2333, 2
      %v2367 = vrot.slane %v2335, 2
      %v2368 = vrot.slane %v2337, 2
      %v2369 = vrot.slane %v2339, 2
      %v2370 = vrot.slane %v2341, 2
      %v2378 = vrot.slane %v2329, 3
      %v2379 = vrot.slane %v2331, 3
      %v2380 = vrot.slane %v2333, 3
      %v2381 = vrot.slane %v2335, 3
      %v2382 = vrot.slane %v2337, 3
      %v2383 = vrot.slane %v2339, 3
      %v2384 = vrot.slane %v2341, 3
      %v2399 = vrot.slane %v2330, 4
      %v2400 = vrot.slane %v2332, 4
      %v2401 = vrot.slane %v2334, 4
      %v2402 = vrot.slane %v2336, 4
      %v2403 = vrot.slane %v2338, 4
      %v2404 = vrot.slane %v2340, 4
      %v2405 = vrot.slane %v2342, 4
      %v2413 = vrot.slane %v2330, 5
      %v2414 = vrot.slane %v2332, 5
      %v2415 = vrot.slane %v2334, 5
      %v2416 = vrot.slane %v2336, 5
      %v2417 = vrot.slane %v2338, 5
      %v2418 = vrot.slane %v2340, 5
      %v2419 = vrot.slane %v2342, 5
      %v2427 = vrot.slane %v2330, 6
      %v2428 = vrot.slane %v2332, 6
      %v2429 = vrot.slane %v2334, 6
      %v2430 = vrot.slane %v2336, 6
      %v2431 = vrot.slane %v2338, 6
      %v2432 = vrot.slane %v2340, 6
      %v2433 = vrot.slane %v2342, 6
      %v2441 = vsel %vm411, %v2329, %v2350
      %v2442 = vsel %vm411, %v2331, %v2351
      %v2443 = vsel %vm411, %v2333, %v2352
      %v2444 = vsel %vm411, %v2335, %v2353
      %v2445 = vsel %vm411, %v2337, %v2354
      %v2446 = vsel %vm411, %v2339, %v2355
      %v2447 = vsel %vm411, %v2341, %v2356
      %v2448 = vsel %vm412, %v2441, %v2364
      %v2449 = vsel %vm412, %v2442, %v2365
      %v2450 = vsel %vm412, %v2443, %v2366
      %v2451 = vsel %vm412, %v2444, %v2367
      %v2452 = vsel %vm412, %v2445, %v2368
      %v2453 = vsel %vm412, %v2446, %v2369
      %v2454 = vsel %vm412, %v2447, %v2370
      %vm2455 = vcmask 1042432
      %v2456 = vsel %vm2455, %v2448, %v2378
      %v2457 = vsel %vm2455, %v2449, %v2379
      %v2458 = vsel %vm2455, %v2450, %v2380
      %v2459 = vsel %vm2455, %v2451, %v2381
      %v2460 = vsel %vm2455, %v2452, %v2382
      %v2461 = vsel %vm2455, %v2453, %v2383
      %v2462 = vsel %vm2455, %v2454, %v2384
      %vm2463 = vcmask 1043456
      %v2464 = vsel %vm2463, %v2456, %v2399
      %v2465 = vsel %vm2463, %v2457, %v2400
      %v2466 = vsel %vm2463, %v2458, %v2401
      %v2467 = vsel %vm2463, %v2459, %v2402
      %v2468 = vsel %vm2463, %v2460, %v2403
      %v2469 = vsel %vm2463, %v2461, %v2404
      %v2470 = vsel %vm2463, %v2462, %v2405
      %vm2471 = vcmask 1044480
      %v2472 = vsel %vm2471, %v2464, %v2413
      %v2473 = vsel %vm2471, %v2465, %v2414
      %v2474 = vsel %vm2471, %v2466, %v2415
      %v2475 = vsel %vm2471, %v2467, %v2416
      %v2476 = vsel %vm2471, %v2468, %v2417
      %v2477 = vsel %vm2471, %v2469, %v2418
      %v2478 = vsel %vm2471, %v2470, %v2419
      %v2479 = vsel %vm2187, %v2472, %v2427
      %v2480 = vsel %vm2187, %v2473, %v2428
      %v2481 = vsel %vm2187, %v2474, %v2429
      %v2482 = vsel %vm2187, %v2475, %v2430
      %v2483 = vsel %vm2187, %v2476, %v2431
      %v2484 = vsel %vm2187, %v2477, %v2432
      %v2485 = vsel %vm2187, %v2478, %v2433
      %v2486 = vpack.c.bf16 %v2479, %v2479
      %v2487 = vpack.c.bf16 %v2480, %v2480
      %v2488 = vpack.c.bf16 %v2481, %v2481
      %v2489 = vpack.c.bf16 %v2482, %v2482
      %v2490 = vpack.c.bf16 %v2483, %v2483
      %v2491 = vpack.c.bf16 %v2484, %v2484
      %v2492 = vpack.c.bf16 %v2485, %v2485
      %vm2493 = vcmask 257024
      %vm2494 = vsmask.f32 3328
      %vm2495 = vmand %vm2493, %vm2494
      %v2496 = vld [vmem:[%s170] sm:$0xf]
      %v2497 = vsel %vm2495, %v2486, %v2496
      %2498 = vst [vmem:[%s170] sm:$0xf] %v2497
      %v2499 = vld [vmem:[%s170 + $0x4] sm:$0xf]
      %v2500 = vsel %vm2495, %v2487, %v2499
      %2501 = vst [vmem:[%s170 + $0x4] sm:$0xf] %v2500
      %v2502 = vld [vmem:[%s170 + $0x8] sm:$0xf]
      %v2503 = vsel %vm2495, %v2488, %v2502
      %2504 = vst [vmem:[%s170 + $0x8] sm:$0xf] %v2503
      %v2505 = vld [vmem:[%s170 + $0xc] sm:$0xf]
      %v2506 = vsel %vm2495, %v2489, %v2505
      %2507 = vst [vmem:[%s170 + $0xc] sm:$0xf] %v2506
      %v2508 = vld [vmem:[%s170 + $0x10] sm:$0xf]
      %v2509 = vsel %vm2495, %v2490, %v2508
      %2510 = vst [vmem:[%s170 + $0x10] sm:$0xf] %v2509
      %v2511 = vld [vmem:[%s170 + $0x14] sm:$0xf]
      %v2512 = vsel %vm2495, %v2491, %v2511
      %2513 = vst [vmem:[%s170 + $0x14] sm:$0xf] %v2512
      %v2514 = vld [vmem:[%s170 + $0x18] sm:$0xf]
      %v2515 = vsel %vm2495, %v2492, %v2514
      %2516 = vst [vmem:[%s170 + $0x18] sm:$0xf] %v2515
      %p2517 = scmp.lt.s32.totalorder %s14, 1
      %s2518 = scalar_select %p2517, %s14, 1
      %s2519 = smul.addr %s2518, 7
      %s2520 = smul.addr %s2519, 4
      %s2521 = scalar_lea.vmem %s3, %s2520
      // Predicated region
      $region33: #{corelnet_forward.3} parent=31 // pred_check
        %p2522 = pneg %p100
      $region34: #{corelnet_forward.3} parent=31 // pred_check_branch
        %2524 = sbr.rel (%p2522) target = $region36
      $region35: #{corelnet_forward.3} parent=31 // pred_region
        _
      $region36: #{corelnet_forward.3} parent=31 // pred_fallthru
        _
    $region32: #{corelnet_forward.3} parent=5 // pred_fallthru
      _
    %p2525 = scmp.le.s32.totalorder 2, %s9
    // Predicated region
    $region37: #{corelnet_forward.3} parent=5 // pred_check
      %p2526 = pneg %p2525
    $region38: #{corelnet_forward.3} parent=5 // pred_check_branch
      %2528 = sbr.rel (%p2526) target = $region40
    $region39: #{corelnet_forward.3} parent=5 // pred_region
      %s2529 = ssub.s32 %s9, 2
      // Predicated region
      $region41: #{corelnet_forward.3} parent=39 // pred_check
        %p2530 = pneg %p106
      $region42: #{corelnet_forward.3} parent=39 // pred_check_branch
        %2532 = sbr.rel (%p2530) target = $region44
      $region43: #{corelnet_forward.3} parent=39 // pred_region
        %p2533 = scmp.lt.s32.totalorder %s15, 1
        %s2534 = scalar_select %p2533, %s15, 1
        %s2535 = smul.addr %s2534, 7
        %s2536 = smul.addr %s2535, 4
        %s2537 = scalar_lea.vmem %s3, %s2536
      $region44: #{corelnet_forward.3} parent=39 // pred_fallthru
        _
    $region40: #{corelnet_forward.3} parent=5 // pred_fallthru
      _
  $region6: #{corelnet_forward.3} parent=0 // loop_footer
    %s13 = sadd.s32 1, %s9
  $region7: #{corelnet_forward.3} parent=0 // loop_footer_branch
    %8 = sbr.rel target = $region3
  $region8: #{corelnet_forward.3} parent=0 // loop_exit
    _

// kernel: corelnet_forward.5
$region0: #{corelnet_forward.5}
  #allocation0 [shape = 'u32[]', space=smem, size = 0x4, offset = 0x4, fixed_abs, tag = 'smem constant byte address 0x4 - core index']
  #allocation1 [shape = 'u32[72,128]{1,0:T(1,128)}', space=vmem, size = 0x9000, scoped, tag = 'internal scratch']
  %s0 = inlined_call_operand.vmem [shape: bf16[2,4096], index: 0, kind: input, shape index: {}]
  %s1 = inlined_call_operand.vmem [shape: bf16[4096,128], index: 1, kind: input, shape index: {}]
  %s2 = inlined_call_operand.vmem [shape: f32[1,128], index: 2, kind: input, shape index: {}]
  %s3 = inlined_call_operand.vmem [shape: bf16[128,128], index: 3, kind: input, shape index: {}]
  %s4 = inlined_call_operand.vmem [shape: f32[1,128], index: 4, kind: input, shape index: {}]
  %s5 = inlined_call_operand.hbm [shape: f32[2,128], index: 5, kind: output, shape index: {}]
  %s6 = sld [smem:[#allocation0]]
  $region30: #{corelnet_forward.5} parent=0
    _
  %s8 = ssub.s32 1, %s6
  %s9 = scalar_select 0, %s8, %s6
  $region1: #{corelnet_forward.5} parent=0
    #allocation2 [shape = 'u8[1024]{0}', space=vmem, size = 0x400, scoped, tag = 'output window, operand 0, single buffered']
    #allocation3 [shape = 's32[1]{0}', space=sflag, size = 0x4, scoped, tag = 'scoped memory for corelnet_forward.5']
    %10 = vsyncpa [#allocation3], 0
    // Predicated region
    $region2: #{corelnet_forward.5} parent=1 // pred_check
      _
    $region3: #{corelnet_forward.5} parent=1 // pred_check_branch
      %12 = sbr.rel (0) target = $region5
    $region4: #{corelnet_forward.5} parent=1 // pred_region
      _
    $region5: #{corelnet_forward.5} parent=1 // pred_fallthru
      _
    // Predicated region
    $region6: #{corelnet_forward.5} parent=1 // pred_check
      _
    $region7: #{corelnet_forward.5} parent=1 // pred_check_branch
      %14 = sbr.rel (0) target = $region9
    $region8: #{corelnet_forward.5} parent=1 // pred_region
      _
    $region9: #{corelnet_forward.5} parent=1 // pred_fallthru
      _
    // Predicated region
    $region10: #{corelnet_forward.5} parent=1 // pred_check
      _
    $region11: #{corelnet_forward.5} parent=1 // pred_check_branch
      %16 = sbr.rel (0) target = $region13
    $region12: #{corelnet_forward.5} parent=1 // pred_region
      _
    $region13: #{corelnet_forward.5} parent=1 // pred_fallthru
      _
    // Predicated region
    $region14: #{corelnet_forward.5} parent=1 // pred_check
      _
    $region15: #{corelnet_forward.5} parent=1 // pred_check_branch
      %18 = sbr.rel (0) target = $region17
    $region16: #{corelnet_forward.5} parent=1 // pred_region
      _
    $region17: #{corelnet_forward.5} parent=1 // pred_fallthru
      _
    // Predicated region
    $region18: #{corelnet_forward.5} parent=1 // pred_check
      _
    $region19: #{corelnet_forward.5} parent=1 // pred_check_branch
      %20 = sbr.rel (0) target = $region21
    $region20: #{corelnet_forward.5} parent=1 // pred_region
      _
    $region21: #{corelnet_forward.5} parent=1 // pred_fallthru
      _
    %v21 = vld [vmem:[%s0] sm:$0xff]
    %v22 = vld [vmem:[%s0 + $0x8] sm:$0xff]
    %v23 = vld [vmem:[%s0 + $0x10] sm:$0xff]
    %v24 = vld [vmem:[%s0 + $0x18] sm:$0xff]
    %v25 = vld [vmem:[%s1] sm:$0xf]
    %v26 = vld [vmem:[%s1 + $0x4] sm:$0xf]
    %v27 = vld [vmem:[%s1 + $0x8] sm:$0xf]
    %v28 = vld [vmem:[%s1 + $0xc] sm:$0xf]
    %v29 = vld [vmem:[%s1 + $0x10] sm:$0xf]
    %v30 = vld [vmem:[%s1 + $0x14] sm:$0xf]
    %v31 = vld [vmem:[%s1 + $0x18] sm:$0xf]
    %v32 = vld [vmem:[%s1 + $0x1c] sm:$0xf]
    %v33 = vld [vmem:[%s1 + $0x20] sm:$0xf]
    %v34 = vld [vmem:[%s1 + $0x24] sm:$0xf]
    %v35 = vld [vmem:[%s1 + $0x28] sm:$0xf]
    %v36 = vld [vmem:[%s1 + $0x2c] sm:$0xf]
    %v37 = vld [vmem:[%s1 + $0x30] sm:$0xf]
    %v38 = vld [vmem:[%s1 + $0x34] sm:$0xf]
    %v39 = vld [vmem:[%s1 + $0x38] sm:$0xf]
    %v40 = vld [vmem:[%s1 + $0x3c] sm:$0xf]
    %v41 = vld [vmem:[%s1 + $0x40] sm:$0xf]
    %v42 = vld [vmem:[%s1 + $0x44] sm:$0xf]
    %v43 = vld [vmem:[%s1 + $0x48] sm:$0xf]
    %v44 = vld [vmem:[%s1 + $0x4c] sm:$0xf]
    %v45 = vld [vmem:[%s1 + $0x50] sm:$0xf]
    %v46 = vld [vmem:[%s1 + $0x54] sm:$0xf]
    %v47 = vld [vmem:[%s1 + $0x58] sm:$0xf]
    %v48 = vld [vmem:[%s1 + $0x5c] sm:$0xf]
    %v49 = vld [vmem:[%s1 + $0x60] sm:$0xf]
    %v50 = vld [vmem:[%s1 + $0x64] sm:$0xf]
    %v51 = vld [vmem:[%s1 + $0x68] sm:$0xf]
    %v52 = vld [vmem:[%s1 + $0x6c] sm:$0xf]
    %v53 = vld [vmem:[%s1 + $0x70] sm:$0xf]
    %v54 = vld [vmem:[%s1 + $0x74] sm:$0xf]
    %v55 = vld [vmem:[%s1 + $0x78] sm:$0xf]
    %v56 = vld [vmem:[%s1 + $0x7c] sm:$0xf]
    %v57 = vld [vmem:[%s1 + $0x80] sm:$0xf]
    %v58 = vld [vmem:[%s1 + $0x84] sm:$0xf]
    %v59 = vld [vmem:[%s1 + $0x88] sm:$0xf]
    %v60 = vld [vmem:[%s1 + $0x8c] sm:$0xf]
    %v61 = vld [vmem:[%s1 + $0x90] sm:$0xf]
    %v62 = vld [vmem:[%s1 + $0x94] sm:$0xf]
    %v63 = vld [vmem:[%s1 + $0x98] sm:$0xf]
    %v64 = vld [vmem:[%s1 + $0x9c] sm:$0xf]
    %v65 = vld [vmem:[%s1 + $0xa0] sm:$0xf]
    %v66 = vld [vmem:[%s1 + $0xa4] sm:$0xf]
    %v67 = vld [vmem:[%s1 + $0xa8] sm:$0xf]
    %v68 = vld [vmem:[%s1 + $0xac] sm:$0xf]
    %v69 = vld [vmem:[%s1 + $0xb0] sm:$0xf]
    %v70 = vld [vmem:[%s1 + $0xb4] sm:$0xf]
    %v71 = vld [vmem:[%s1 + $0xb8] sm:$0xf]
    %v72 = vld [vmem:[%s1 + $0xbc] sm:$0xf]
    %v73 = vld [vmem:[%s1 + $0xc0] sm:$0xf]
    %v74 = vld [vmem:[%s1 + $0xc4] sm:$0xf]
    %v75 = vld [vmem:[%s1 + $0xc8] sm:$0xf]
    %v76 = vld [vmem:[%s1 + $0xcc] sm:$0xf]
    %v77 = vld [vmem:[%s1 + $0xd0] sm:$0xf]
    %v78 = vld [vmem:[%s1 + $0xd4] sm:$0xf]
    %v79 = vld [vmem:[%s1 + $0xd8] sm:$0xf]
    %v80 = vld [vmem:[%s1 + $0xdc] sm:$0xf]
    %v81 = vld [vmem:[%s1 + $0xe0] sm:$0xf]
    %v82 = vld [vmem:[%s1 + $0xe4] sm:$0xf]
    %v83 = vld [vmem:[%s1 + $0xe8] sm:$0xf]
    %v84 = vld [vmem:[%s1 + $0xec] sm:$0xf]
    %v85 = vld [vmem:[%s1 + $0xf0] sm:$0xf]
    %v86 = vld [vmem:[%s1 + $0xf4] sm:$0xf]
    %v87 = vld [vmem:[%s1 + $0xf8] sm:$0xf]
    %v88 = vld [vmem:[%s1 + $0xfc] sm:$0xf]
    %v89 = vld [vmem:[%s1 + $0x100] sm:$0xf]
    %v90 = vld [vmem:[%s1 + $0x104] sm:$0xf]
    %v91 = vld [vmem:[%s1 + $0x108] sm:$0xf]
    %v92 = vld [vmem:[%s1 + $0x10c] sm:$0xf]
    %v93 = vld [vmem:[%s1 + $0x110] sm:$0xf]
    %v94 = vld [vmem:[%s1 + $0x114] sm:$0xf]
    %v95 = vld [vmem:[%s1 + $0x118] sm:$0xf]
    %v96 = vld [vmem:[%s1 + $0x11c] sm:$0xf]
    %v97 = vld [vmem:[%s1 + $0x120] sm:$0xf]
    %v98 = vld [vmem:[%s1 + $0x124] sm:$0xf]
    %v99 = vld [vmem:[%s1 + $0x128] sm:$0xf]
    %v100 = vld [vmem:[%s1 + $0x12c] sm:$0xf]
    %v101 = vld [vmem:[%s1 + $0x130] sm:$0xf]
    %v102 = vld [vmem:[%s1 + $0x134] sm:$0xf]
    %v103 = vld [vmem:[%s1 + $0x138] sm:$0xf]
    %v104 = vld [vmem:[%s1 + $0x13c] sm:$0xf]
    %v105 = vld [vmem:[%s1 + $0x140] sm:$0xf]
    %v106 = vld [vmem:[%s1 + $0x144] sm:$0xf]
    %v107 = vld [vmem:[%s1 + $0x148] sm:$0xf]
    %v108 = vld [vmem:[%s1 + $0x14c] sm:$0xf]
    %v109 = vld [vmem:[%s1 + $0x150] sm:$0xf]
    %v110 = vld [vmem:[%s1 + $0x154] sm:$0xf]
    %v111 = vld [vmem:[%s1 + $0x158] sm:$0xf]
    %v112 = vld [vmem:[%s1 + $0x15c] sm:$0xf]
    %v113 = vld [vmem:[%s1 + $0x160] sm:$0xf]
    %v114 = vld [vmem:[%s1 + $0x164] sm:$0xf]
    %v115 = vld [vmem:[%s1 + $0x168] sm:$0xf]
    %v116 = vld [vmem:[%s1 + $0x16c] sm:$0xf]
    %v117 = vld [vmem:[%s1 + $0x170] sm:$0xf]
    %v118 = vld [vmem:[%s1 + $0x174] sm:$0xf]
    %v119 = vld [vmem:[%s1 + $0x178] sm:$0xf]
    %v120 = vld [vmem:[%s1 + $0x17c] sm:$0xf]
    %v121 = vld [vmem:[%s1 + $0x180] sm:$0xf]
    %v122 = vld [vmem:[%s1 + $0x184] sm:$0xf]
    %v123 = vld [vmem:[%s1 + $0x188] sm:$0xf]
    %v124 = vld [vmem:[%s1 + $0x18c] sm:$0xf]
    %v125 = vld [vmem:[%s1 + $0x190] sm:$0xf]
    %v126 = vld [vmem:[%s1 + $0x194] sm:$0xf]
    %v127 = vld [vmem:[%s1 + $0x198] sm:$0xf]
    %v128 = vld [vmem:[%s1 + $0x19c] sm:$0xf]
    %v129 = vld [vmem:[%s1 + $0x1a0] sm:$0xf]
    %v130 = vld [vmem:[%s1 + $0x1a4] sm:$0xf]
    %v131 = vld [vmem:[%s1 + $0x1a8] sm:$0xf]
    %v132 = vld [vmem:[%s1 + $0x1ac] sm:$0xf]
    %v133 = vld [vmem:[%s1 + $0x1b0] sm:$0xf]
    %v134 = vld [vmem:[%s1 + $0x1b4] sm:$0xf]
    %v135 = vld [vmem:[%s1 + $0x1b8] sm:$0xf]
    %v136 = vld [vmem:[%s1 + $0x1bc] sm:$0xf]
    %v137 = vld [vmem:[%s1 + $0x1c0] sm:$0xf]
    %v138 = vld [vmem:[%s1 + $0x1c4] sm:$0xf]
    %v139 = vld [vmem:[%s1 + $0x1c8] sm:$0xf]
    %v140 = vld [vmem:[%s1 + $0x1cc] sm:$0xf]
    %v141 = vld [vmem:[%s1 + $0x1d0] sm:$0xf]
    %v142 = vld [vmem:[%s1 + $0x1d4] sm:$0xf]
    %v143 = vld [vmem:[%s1 + $0x1d8] sm:$0xf]
    %v144 = vld [vmem:[%s1 + $0x1dc] sm:$0xf]
    %v145 = vld [vmem:[%s1 + $0x1e0] sm:$0xf]
    %v146 = vld [vmem:[%s1 + $0x1e4] sm:$0xf]
    %v147 = vld [vmem:[%s1 + $0x1e8] sm:$0xf]
    %v148 = vld [vmem:[%s1 + $0x1ec] sm:$0xf]
    %v149 = vld [vmem:[%s1 + $0x1f0] sm:$0xf]
    %v150 = vld [vmem:[%s1 + $0x1f4] sm:$0xf]
    %v151 = vld [vmem:[%s1 + $0x1f8] sm:$0xf]
    %v152 = vld [vmem:[%s1 + $0x1fc] sm:$0xf]
    %v153 = vld [vmem:[%s1 + $0x200] sm:$0xf]
    %v154 = vld [vmem:[%s1 + $0x204] sm:$0xf]
    %v155 = vld [vmem:[%s1 + $0x208] sm:$0xf]
    %v156 = vld [vmem:[%s1 + $0x20c] sm:$0xf]
    %v157 = vld [vmem:[%s1 + $0x210] sm:$0xf]
    %v158 = vld [vmem:[%s1 + $0x214] sm:$0xf]
    %v159 = vld [vmem:[%s1 + $0x218] sm:$0xf]
    %v160 = vld [vmem:[%s1 + $0x21c] sm:$0xf]
    %v161 = vld [vmem:[%s1 + $0x220] sm:$0xf]
    %v162 = vld [vmem:[%s1 + $0x224] sm:$0xf]
    %v163 = vld [vmem:[%s1 + $0x228] sm:$0xf]
    %v164 = vld [vmem:[%s1 + $0x22c] sm:$0xf]
    %v165 = vld [vmem:[%s1 + $0x230] sm:$0xf]
    %v166 = vld [vmem:[%s1 + $0x234] sm:$0xf]
    %v167 = vld [vmem:[%s1 + $0x238] sm:$0xf]
    %v168 = vld [vmem:[%s1 + $0x23c] sm:$0xf]
    %v169 = vld [vmem:[%s1 + $0x240] sm:$0xf]
    %v170 = vld [vmem:[%s1 + $0x244] sm:$0xf]
    %v171 = vld [vmem:[%s1 + $0x248] sm:$0xf]
    %v172 = vld [vmem:[%s1 + $0x24c] sm:$0xf]
    %v173 = vld [vmem:[%s1 + $0x250] sm:$0xf]
    %v174 = vld [vmem:[%s1 + $0x254] sm:$0xf]
    %v175 = vld [vmem:[%s1 + $0x258] sm:$0xf]
    %v176 = vld [vmem:[%s1 + $0x25c] sm:$0xf]
    %v177 = vld [vmem:[%s1 + $0x260] sm:$0xf]
    %v178 = vld [vmem:[%s1 + $0x264] sm:$0xf]
    %v179 = vld [vmem:[%s1 + $0x268] sm:$0xf]
    %v180 = vld [vmem:[%s1 + $0x26c] sm:$0xf]
    %v181 = vld [vmem:[%s1 + $0x270] sm:$0xf]
    %v182 = vld [vmem:[%s1 + $0x274] sm:$0xf]
    %v183 = vld [vmem:[%s1 + $0x278] sm:$0xf]
    %v184 = vld [vmem:[%s1 + $0x27c] sm:$0xf]
    %v185 = vld [vmem:[%s1 + $0x280] sm:$0xf]
    %v186 = vld [vmem:[%s1 + $0x284] sm:$0xf]
    %v187 = vld [vmem:[%s1 + $0x288] sm:$0xf]
    %v188 = vld [vmem:[%s1 + $0x28c] sm:$0xf]
    %v189 = vld [vmem:[%s1 + $0x290] sm:$0xf]
    %v190 = vld [vmem:[%s1 + $0x294] sm:$0xf]
    %v191 = vld [vmem:[%s1 + $0x298] sm:$0xf]
    %v192 = vld [vmem:[%s1 + $0x29c] sm:$0xf]
    %v193 = vld [vmem:[%s1 + $0x2a0] sm:$0xf]
    %v194 = vld [vmem:[%s1 + $0x2a4] sm:$0xf]
    %v195 = vld [vmem:[%s1 + $0x2a8] sm:$0xf]
    %v196 = vld [vmem:[%s1 + $0x2ac] sm:$0xf]
    %v197 = vld [vmem:[%s1 + $0x2b0] sm:$0xf]
    %v198 = vld [vmem:[%s1 + $0x2b4] sm:$0xf]
    %v199 = vld [vmem:[%s1 + $0x2b8] sm:$0xf]
    %v200 = vld [vmem:[%s1 + $0x2bc] sm:$0xf]
    %v201 = vld [vmem:[%s1 + $0x2c0] sm:$0xf]
    %v202 = vld [vmem:[%s1 + $0x2c4] sm:$0xf]
    %v203 = vld [vmem:[%s1 + $0x2c8] sm:$0xf]
    %v204 = vld [vmem:[%s1 + $0x2cc] sm:$0xf]
    %v205 = vld [vmem:[%s1 + $0x2d0] sm:$0xf]
    %v206 = vld [vmem:[%s1 + $0x2d4] sm:$0xf]
    %v207 = vld [vmem:[%s1 + $0x2d8] sm:$0xf]
    %v208 = vld [vmem:[%s1 + $0x2dc] sm:$0xf]
    %v209 = vld [vmem:[%s1 + $0x2e0] sm:$0xf]
    %v210 = vld [vmem:[%s1 + $0x2e4] sm:$0xf]
    %v211 = vld [vmem:[%s1 + $0x2e8] sm:$0xf]
    %v212 = vld [vmem:[%s1 + $0x2ec] sm:$0xf]
    %v213 = vld [vmem:[%s1 + $0x2f0] sm:$0xf]
    %v214 = vld [vmem:[%s1 + $0x2f4] sm:$0xf]
    %v215 = vld [vmem:[%s1 + $0x2f8] sm:$0xf]
    %v216 = vld [vmem:[%s1 + $0x2fc] sm:$0xf]
    %v217 = vld [vmem:[%s1 + $0x300] sm:$0xf]
    %v218 = vld [vmem:[%s1 + $0x304] sm:$0xf]
    %v219 = vld [vmem:[%s1 + $0x308] sm:$0xf]
    %v220 = vld [vmem:[%s1 + $0x30c] sm:$0xf]
    %v221 = vld [vmem:[%s1 + $0x310] sm:$0xf]
    %v222 = vld [vmem:[%s1 + $0x314] sm:$0xf]
    %v223 = vld [vmem:[%s1 + $0x318] sm:$0xf]
    %v224 = vld [vmem:[%s1 + $0x31c] sm:$0xf]
    %v225 = vld [vmem:[%s1 + $0x320] sm:$0xf]
    %v226 = vld [vmem:[%s1 + $0x324] sm:$0xf]
    %v227 = vld [vmem:[%s1 + $0x328] sm:$0xf]
    %v228 = vld [vmem:[%s1 + $0x32c] sm:$0xf]
    %v229 = vld [vmem:[%s1 + $0x330] sm:$0xf]
    %v230 = vld [vmem:[%s1 + $0x334] sm:$0xf]
    %v231 = vld [vmem:[%s1 + $0x338] sm:$0xf]
    %v232 = vld [vmem:[%s1 + $0x33c] sm:$0xf]
    %v233 = vld [vmem:[%s1 + $0x340] sm:$0xf]
    %v234 = vld [vmem:[%s1 + $0x344] sm:$0xf]
    %v235 = vld [vmem:[%s1 + $0x348] sm:$0xf]
    %v236 = vld [vmem:[%s1 + $0x34c] sm:$0xf]
    %v237 = vld [vmem:[%s1 + $0x350] sm:$0xf]
    %v238 = vld [vmem:[%s1 + $0x354] sm:$0xf]
    %v239 = vld [vmem:[%s1 + $0x358] sm:$0xf]
    %v240 = vld [vmem:[%s1 + $0x35c] sm:$0xf]
    %v241 = vld [vmem:[%s1 + $0x360] sm:$0xf]
    %v242 = vld [vmem:[%s1 + $0x364] sm:$0xf]
    %v243 = vld [vmem:[%s1 + $0x368] sm:$0xf]
    %v244 = vld [vmem:[%s1 + $0x36c] sm:$0xf]
    %v245 = vld [vmem:[%s1 + $0x370] sm:$0xf]
    %v246 = vld [vmem:[%s1 + $0x374] sm:$0xf]
    %v247 = vld [vmem:[%s1 + $0x378] sm:$0xf]
    %v248 = vld [vmem:[%s1 + $0x37c] sm:$0xf]
    %v249 = vld [vmem:[%s1 + $0x380] sm:$0xf]
    %v250 = vld [vmem:[%s1 + $0x384] sm:$0xf]
    %v251 = vld [vmem:[%s1 + $0x388] sm:$0xf]
    %v252 = vld [vmem:[%s1 + $0x38c] sm:$0xf]
    %v253 = vld [vmem:[%s1 + $0x390] sm:$0xf]
    %v254 = vld [vmem:[%s1 + $0x394] sm:$0xf]
    %v255 = vld [vmem:[%s1 + $0x398] sm:$0xf]
    %v256 = vld [vmem:[%s1 + $0x39c] sm:$0xf]
    %v257 = vld [vmem:[%s1 + $0x3a0] sm:$0xf]
    %v258 = vld [vmem:[%s1 + $0x3a4] sm:$0xf]
    %v259 = vld [vmem:[%s1 + $0x3a8] sm:$0xf]
    %v260 = vld [vmem:[%s1 + $0x3ac] sm:$0xf]
    %v261 = vld [vmem:[%s1 + $0x3b0] sm:$0xf]
    %v262 = vld [vmem:[%s1 + $0x3b4] sm:$0xf]
    %v263 = vld [vmem:[%s1 + $0x3b8] sm:$0xf]
    %v264 = vld [vmem:[%s1 + $0x3bc] sm:$0xf]
    %v265 = vld [vmem:[%s1 + $0x3c0] sm:$0xf]
    %v266 = vld [vmem:[%s1 + $0x3c4] sm:$0xf]
    %v267 = vld [vmem:[%s1 + $0x3c8] sm:$0xf]
    %v268 = vld [vmem:[%s1 + $0x3cc] sm:$0xf]
    %v269 = vld [vmem:[%s1 + $0x3d0] sm:$0xf]
    %v270 = vld [vmem:[%s1 + $0x3d4] sm:$0xf]
    %v271 = vld [vmem:[%s1 + $0x3d8] sm:$0xf]
    %v272 = vld [vmem:[%s1 + $0x3dc] sm:$0xf]
    %v273 = vld [vmem:[%s1 + $0x3e0] sm:$0xf]
    %v274 = vld [vmem:[%s1 + $0x3e4] sm:$0xf]
    %v275 = vld [vmem:[%s1 + $0x3e8] sm:$0xf]
    %v276 = vld [vmem:[%s1 + $0x3ec] sm:$0xf]
    %v277 = vld [vmem:[%s1 + $0x3f0] sm:$0xf]
    %v278 = vld [vmem:[%s1 + $0x3f4] sm:$0xf]
    %v279 = vld [vmem:[%s1 + $0x3f8] sm:$0xf]
    %v280 = vld [vmem:[%s1 + $0x3fc] sm:$0xf]
    %v281 = vld [vmem:[%s1 + $0x400] sm:$0xf]
    %v282 = vld [vmem:[%s1 + $0x404] sm:$0xf]
    %v283 = vld [vmem:[%s1 + $0x408] sm:$0xf]
    %v284 = vld [vmem:[%s1 + $0x40c] sm:$0xf]
    %v285 = vld [vmem:[%s1 + $0x410] sm:$0xf]
    %v286 = vld [vmem:[%s1 + $0x414] sm:$0xf]
    %v287 = vld [vmem:[%s1 + $0x418] sm:$0xf]
    %v288 = vld [vmem:[%s1 + $0x41c] sm:$0xf]
    %v289 = vld [vmem:[%s1 + $0x420] sm:$0xf]
    %v290 = vld [vmem:[%s1 + $0x424] sm:$0xf]
    %v291 = vld [vmem:[%s1 + $0x428] sm:$0xf]
    %v292 = vld [vmem:[%s1 + $0x42c] sm:$0xf]
    %v293 = vld [vmem:[%s1 + $0x430] sm:$0xf]
    %v294 = vld [vmem:[%s1 + $0x434] sm:$0xf]
    %v295 = vld [vmem:[%s1 + $0x438] sm:$0xf]
    %v296 = vld [vmem:[%s1 + $0x43c] sm:$0xf]
    %v297 = vld [vmem:[%s1 + $0x440] sm:$0xf]
    %v298 = vld [vmem:[%s1 + $0x444] sm:$0xf]
    %v299 = vld [vmem:[%s1 + $0x448] sm:$0xf]
    %v300 = vld [vmem:[%s1 + $0x44c] sm:$0xf]
    %v301 = vld [vmem:[%s1 + $0x450] sm:$0xf]
    %v302 = vld [vmem:[%s1 + $0x454] sm:$0xf]
    %v303 = vld [vmem:[%s1 + $0x458] sm:$0xf]
    %v304 = vld [vmem:[%s1 + $0x45c] sm:$0xf]
    %v305 = vld [vmem:[%s1 + $0x460] sm:$0xf]
    %v306 = vld [vmem:[%s1 + $0x464] sm:$0xf]
    %v307 = vld [vmem:[%s1 + $0x468] sm:$0xf]
    %v308 = vld [vmem:[%s1 + $0x46c] sm:$0xf]
    %v309 = vld [vmem:[%s1 + $0x470] sm:$0xf]
    %v310 = vld [vmem:[%s1 + $0x474] sm:$0xf]
    %v311 = vld [vmem:[%s1 + $0x478] sm:$0xf]
    %v312 = vld [vmem:[%s1 + $0x47c] sm:$0xf]
    %v313 = vld [vmem:[%s1 + $0x480] sm:$0xf]
    %v314 = vld [vmem:[%s1 + $0x484] sm:$0xf]
    %v315 = vld [vmem:[%s1 + $0x488] sm:$0xf]
    %v316 = vld [vmem:[%s1 + $0x48c] sm:$0xf]
    %v317 = vld [vmem:[%s1 + $0x490] sm:$0xf]
    %v318 = vld [vmem:[%s1 + $0x494] sm:$0xf]
    %v319 = vld [vmem:[%s1 + $0x498] sm:$0xf]
    %v320 = vld [vmem:[%s1 + $0x49c] sm:$0xf]
    %v321 = vld [vmem:[%s1 + $0x4a0] sm:$0xf]
    %v322 = vld [vmem:[%s1 + $0x4a4] sm:$0xf]
    %v323 = vld [vmem:[%s1 + $0x4a8] sm:$0xf]
    %v324 = vld [vmem:[%s1 + $0x4ac] sm:$0xf]
    %v325 = vld [vmem:[%s1 + $0x4b0] sm:$0xf]
    %v326 = vld [vmem:[%s1 + $0x4b4] sm:$0xf]
    %v327 = vld [vmem:[%s1 + $0x4b8] sm:$0xf]
    %v328 = vld [vmem:[%s1 + $0x4bc] sm:$0xf]
    %v329 = vld [vmem:[%s1 + $0x4c0] sm:$0xf]
    %v330 = vld [vmem:[%s1 + $0x4c4] sm:$0xf]
    %v331 = vld [vmem:[%s1 + $0x4c8] sm:$0xf]
    %v332 = vld [vmem:[%s1 + $0x4cc] sm:$0xf]
    %v333 = vld [vmem:[%s1 + $0x4d0] sm:$0xf]
    %v334 = vld [vmem:[%s1 + $0x4d4] sm:$0xf]
    %v335 = vld [vmem:[%s1 + $0x4d8] sm:$0xf]
    %v336 = vld [vmem:[%s1 + $0x4dc] sm:$0xf]
    %v337 = vld [vmem:[%s1 + $0x4e0] sm:$0xf]
    %v338 = vld [vmem:[%s1 + $0x4e4] sm:$0xf]
    %v339 = vld [vmem:[%s1 + $0x4e8] sm:$0xf]
    %v340 = vld [vmem:[%s1 + $0x4ec] sm:$0xf]
    %v341 = vld [vmem:[%s1 + $0x4f0] sm:$0xf]
    %v342 = vld [vmem:[%s1 + $0x4f4] sm:$0xf]
    %v343 = vld [vmem:[%s1 + $0x4f8] sm:$0xf]
    %v344 = vld [vmem:[%s1 + $0x4fc] sm:$0xf]
    %v345 = vld [vmem:[%s1 + $0x500] sm:$0xf]
    %v346 = vld [vmem:[%s1 + $0x504] sm:$0xf]
    %v347 = vld [vmem:[%s1 + $0x508] sm:$0xf]
    %v348 = vld [vmem:[%s1 + $0x50c] sm:$0xf]
    %v349 = vld [vmem:[%s1 + $0x510] sm:$0xf]
    %v350 = vld [vmem:[%s1 + $0x514] sm:$0xf]
    %v351 = vld [vmem:[%s1 + $0x518] sm:$0xf]
    %v352 = vld [vmem:[%s1 + $0x51c] sm:$0xf]
    %v353 = vld [vmem:[%s1 + $0x520] sm:$0xf]
    %v354 = vld [vmem:[%s1 + $0x524] sm:$0xf]
    %v355 = vld [vmem:[%s1 + $0x528] sm:$0xf]
    %v356 = vld [vmem:[%s1 + $0x52c] sm:$0xf]
    %v357 = vld [vmem:[%s1 + $0x530] sm:$0xf]
    %v358 = vld [vmem:[%s1 + $0x534] sm:$0xf]
    %v359 = vld [vmem:[%s1 + $0x538] sm:$0xf]
    %v360 = vld [vmem:[%s1 + $0x53c] sm:$0xf]
    %v361 = vld [vmem:[%s1 + $0x540] sm:$0xf]
    %v362 = vld [vmem:[%s1 + $0x544] sm:$0xf]
    %v363 = vld [vmem:[%s1 + $0x548] sm:$0xf]
    %v364 = vld [vmem:[%s1 + $0x54c] sm:$0xf]
    %v365 = vld [vmem:[%s1 + $0x550] sm:$0xf]
    %v366 = vld [vmem:[%s1 + $0x554] sm:$0xf]
    %v367 = vld [vmem:[%s1 + $0x558] sm:$0xf]
    %v368 = vld [vmem:[%s1 + $0x55c] sm:$0xf]
    %v369 = vld [vmem:[%s1 + $0x560] sm:$0xf]
    %v370 = vld [vmem:[%s1 + $0x564] sm:$0xf]
    %v371 = vld [vmem:[%s1 + $0x568] sm:$0xf]
    %v372 = vld [vmem:[%s1 + $0x56c] sm:$0xf]
    %v373 = vld [vmem:[%s1 + $0x570] sm:$0xf]
    %v374 = vld [vmem:[%s1 + $0x574] sm:$0xf]
    %v375 = vld [vmem:[%s1 + $0x578] sm:$0xf]
    %v376 = vld [vmem:[%s1 + $0x57c] sm:$0xf]
    %v377 = vld [vmem:[%s1 + $0x580] sm:$0xf]
    %v378 = vld [vmem:[%s1 + $0x584] sm:$0xf]
    %v379 = vld [vmem:[%s1 + $0x588] sm:$0xf]
    %v380 = vld [vmem:[%s1 + $0x58c] sm:$0xf]
    %v381 = vld [vmem:[%s1 + $0x590] sm:$0xf]
    %v382 = vld [vmem:[%s1 + $0x594] sm:$0xf]
    %v383 = vld [vmem:[%s1 + $0x598] sm:$0xf]
    %v384 = vld [vmem:[%s1 + $0x59c] sm:$0xf]
    %v385 = vld [vmem:[%s1 + $0x5a0] sm:$0xf]
    %v386 = vld [vmem:[%s1 + $0x5a4] sm:$0xf]
    %v387 = vld [vmem:[%s1 + $0x5a8] sm:$0xf]
    %v388 = vld [vmem:[%s1 + $0x5ac] sm:$0xf]
    %v389 = vld [vmem:[%s1 + $0x5b0] sm:$0xf]
    %v390 = vld [vmem:[%s1 + $0x5b4] sm:$0xf]
    %v391 = vld [vmem:[%s1 + $0x5b8] sm:$0xf]
    %v392 = vld [vmem:[%s1 + $0x5bc] sm:$0xf]
    %v393 = vld [vmem:[%s1 + $0x5c0] sm:$0xf]
    %v394 = vld [vmem:[%s1 + $0x5c4] sm:$0xf]
    %v395 = vld [vmem:[%s1 + $0x5c8] sm:$0xf]
    %v396 = vld [vmem:[%s1 + $0x5cc] sm:$0xf]
    %v397 = vld [vmem:[%s1 + $0x5d0] sm:$0xf]
    %v398 = vld [vmem:[%s1 + $0x5d4] sm:$0xf]
    %v399 = vld [vmem:[%s1 + $0x5d8] sm:$0xf]
    %v400 = vld [vmem:[%s1 + $0x5dc] sm:$0xf]
    %v401 = vld [vmem:[%s1 + $0x5e0] sm:$0xf]
    %v402 = vld [vmem:[%s1 + $0x5e4] sm:$0xf]
    %v403 = vld [vmem:[%s1 + $0x5e8] sm:$0xf]
    %v404 = vld [vmem:[%s1 + $0x5ec] sm:$0xf]
    %v405 = vld [vmem:[%s1 + $0x5f0] sm:$0xf]
    %v406 = vld [vmem:[%s1 + $0x5f4] sm:$0xf]
    %v407 = vld [vmem:[%s1 + $0x5f8] sm:$0xf]
    %v408 = vld [vmem:[%s1 + $0x5fc] sm:$0xf]
    %v409 = vld [vmem:[%s1 + $0x600] sm:$0xf]
    %v410 = vld [vmem:[%s1 + $0x604] sm:$0xf]
    %v411 = vld [vmem:[%s1 + $0x608] sm:$0xf]
    %v412 = vld [vmem:[%s1 + $0x60c] sm:$0xf]
    %v413 = vld [vmem:[%s1 + $0x610] sm:$0xf]
    %v414 = vld [vmem:[%s1 + $0x614] sm:$0xf]
    %v415 = vld [vmem:[%s1 + $0x618] sm:$0xf]
    %v416 = vld [vmem:[%s1 + $0x61c] sm:$0xf]
    %v417 = vld [vmem:[%s1 + $0x620] sm:$0xf]
    %v418 = vld [vmem:[%s1 + $0x624] sm:$0xf]
    %v419 = vld [vmem:[%s1 + $0x628] sm:$0xf]
    %v420 = vld [vmem:[%s1 + $0x62c] sm:$0xf]
    %v421 = vld [vmem:[%s1 + $0x630] sm:$0xf]
    %v422 = vld [vmem:[%s1 + $0x634] sm:$0xf]
    %v423 = vld [vmem:[%s1 + $0x638] sm:$0xf]
    %v424 = vld [vmem:[%s1 + $0x63c] sm:$0xf]
    %v425 = vld [vmem:[%s1 + $0x640] sm:$0xf]
    %v426 = vld [vmem:[%s1 + $0x644] sm:$0xf]
    %v427 = vld [vmem:[%s1 + $0x648] sm:$0xf]
    %v428 = vld [vmem:[%s1 + $0x64c] sm:$0xf]
    %v429 = vld [vmem:[%s1 + $0x650] sm:$0xf]
    %v430 = vld [vmem:[%s1 + $0x654] sm:$0xf]
    %v431 = vld [vmem:[%s1 + $0x658] sm:$0xf]
    %v432 = vld [vmem:[%s1 + $0x65c] sm:$0xf]
    %v433 = vld [vmem:[%s1 + $0x660] sm:$0xf]
    %v434 = vld [vmem:[%s1 + $0x664] sm:$0xf]
    %v435 = vld [vmem:[%s1 + $0x668] sm:$0xf]
    %v436 = vld [vmem:[%s1 + $0x66c] sm:$0xf]
    %v437 = vld [vmem:[%s1 + $0x670] sm:$0xf]
    %v438 = vld [vmem:[%s1 + $0x674] sm:$0xf]
    %v439 = vld [vmem:[%s1 + $0x678] sm:$0xf]
    %v440 = vld [vmem:[%s1 + $0x67c] sm:$0xf]
    %v441 = vld [vmem:[%s1 + $0x680] sm:$0xf]
    %v442 = vld [vmem:[%s1 + $0x684] sm:$0xf]
    %v443 = vld [vmem:[%s1 + $0x688] sm:$0xf]
    %v444 = vld [vmem:[%s1 + $0x68c] sm:$0xf]
    %v445 = vld [vmem:[%s1 + $0x690] sm:$0xf]
    %v446 = vld [vmem:[%s1 + $0x694] sm:$0xf]
    %v447 = vld [vmem:[%s1 + $0x698] sm:$0xf]
    %v448 = vld [vmem:[%s1 + $0x69c] sm:$0xf]
    %v449 = vld [vmem:[%s1 + $0x6a0] sm:$0xf]
    %v450 = vld [vmem:[%s1 + $0x6a4] sm:$0xf]
    %v451 = vld [vmem:[%s1 + $0x6a8] sm:$0xf]
    %v452 = vld [vmem:[%s1 + $0x6ac] sm:$0xf]
    %v453 = vld [vmem:[%s1 + $0x6b0] sm:$0xf]
    %v454 = vld [vmem:[%s1 + $0x6b4] sm:$0xf]
    %v455 = vld [vmem:[%s1 + $0x6b8] sm:$0xf]
    %v456 = vld [vmem:[%s1 + $0x6bc] sm:$0xf]
    %v457 = vld [vmem:[%s1 + $0x6c0] sm:$0xf]
    %v458 = vld [vmem:[%s1 + $0x6c4] sm:$0xf]
    %v459 = vld [vmem:[%s1 + $0x6c8] sm:$0xf]
    %v460 = vld [vmem:[%s1 + $0x6cc] sm:$0xf]
    %v461 = vld [vmem:[%s1 + $0x6d0] sm:$0xf]
    %v462 = vld [vmem:[%s1 + $0x6d4] sm:$0xf]
    %v463 = vld [vmem:[%s1 + $0x6d8] sm:$0xf]
    %v464 = vld [vmem:[%s1 + $0x6dc] sm:$0xf]
    %v465 = vld [vmem:[%s1 + $0x6e0] sm:$0xf]
    %v466 = vld [vmem:[%s1 + $0x6e4] sm:$0xf]
    %v467 = vld [vmem:[%s1 + $0x6e8] sm:$0xf]
    %v468 = vld [vmem:[%s1 + $0x6ec] sm:$0xf]
    %v469 = vld [vmem:[%s1 + $0x6f0] sm:$0xf]
    %v470 = vld [vmem:[%s1 + $0x6f4] sm:$0xf]
    %v471 = vld [vmem:[%s1 + $0x6f8] sm:$0xf]
    %v472 = vld [vmem:[%s1 + $0x6fc] sm:$0xf]
    %v473 = vld [vmem:[%s1 + $0x700] sm:$0xf]
    %v474 = vld [vmem:[%s1 + $0x704] sm:$0xf]
    %v475 = vld [vmem:[%s1 + $0x708] sm:$0xf]
    %v476 = vld [vmem:[%s1 + $0x70c] sm:$0xf]
    %v477 = vld [vmem:[%s1 + $0x710] sm:$0xf]
    %v478 = vld [vmem:[%s1 + $0x714] sm:$0xf]
    %v479 = vld [vmem:[%s1 + $0x718] sm:$0xf]
    %v480 = vld [vmem:[%s1 + $0x71c] sm:$0xf]
    %v481 = vld [vmem:[%s1 + $0x720] sm:$0xf]
    %v482 = vld [vmem:[%s1 + $0x724] sm:$0xf]
    %v483 = vld [vmem:[%s1 + $0x728] sm:$0xf]
    %v484 = vld [vmem:[%s1 + $0x72c] sm:$0xf]
    %v485 = vld [vmem:[%s1 + $0x730] sm:$0xf]
    %v486 = vld [vmem:[%s1 + $0x734] sm:$0xf]
    %v487 = vld [vmem:[%s1 + $0x738] sm:$0xf]
    %v488 = vld [vmem:[%s1 + $0x73c] sm:$0xf]
    %v489 = vld [vmem:[%s1 + $0x740] sm:$0xf]
    %v490 = vld [vmem:[%s1 + $0x744] sm:$0xf]
    %v491 = vld [vmem:[%s1 + $0x748] sm:$0xf]
    %v492 = vld [vmem:[%s1 + $0x74c] sm:$0xf]
    %v493 = vld [vmem:[%s1 + $0x750] sm:$0xf]
    %v494 = vld [vmem:[%s1 + $0x754] sm:$0xf]
    %v495 = vld [vmem:[%s1 + $0x758] sm:$0xf]
    %v496 = vld [vmem:[%s1 + $0x75c] sm:$0xf]
    %v497 = vld [vmem:[%s1 + $0x760] sm:$0xf]
    %v498 = vld [vmem:[%s1 + $0x764] sm:$0xf]
    %v499 = vld [vmem:[%s1 + $0x768] sm:$0xf]
    %v500 = vld [vmem:[%s1 + $0x76c] sm:$0xf]
    %v501 = vld [vmem:[%s1 + $0x770] sm:$0xf]
    %v502 = vld [vmem:[%s1 + $0x774] sm:$0xf]
    %v503 = vld [vmem:[%s1 + $0x778] sm:$0xf]
    %v504 = vld [vmem:[%s1 + $0x77c] sm:$0xf]
    %v505 = vld [vmem:[%s1 + $0x780] sm:$0xf]
    %v506 = vld [vmem:[%s1 + $0x784] sm:$0xf]
    %v507 = vld [vmem:[%s1 + $0x788] sm:$0xf]
    %v508 = vld [vmem:[%s1 + $0x78c] sm:$0xf]
    %v509 = vld [vmem:[%s1 + $0x790] sm:$0xf]
    %v510 = vld [vmem:[%s1 + $0x794] sm:$0xf]
    %v511 = vld [vmem:[%s1 + $0x798] sm:$0xf]
    %v512 = vld [vmem:[%s1 + $0x79c] sm:$0xf]
    %v513 = vld [vmem:[%s1 + $0x7a0] sm:$0xf]
    %v514 = vld [vmem:[%s1 + $0x7a4] sm:$0xf]
    %v515 = vld [vmem:[%s1 + $0x7a8] sm:$0xf]
    %v516 = vld [vmem:[%s1 + $0x7ac] sm:$0xf]
    %v517 = vld [vmem:[%s1 + $0x7b0] sm:$0xf]
    %v518 = vld [vmem:[%s1 + $0x7b4] sm:$0xf]
    %v519 = vld [vmem:[%s1 + $0x7b8] sm:$0xf]
    %v520 = vld [vmem:[%s1 + $0x7bc] sm:$0xf]
    %v521 = vld [vmem:[%s1 + $0x7c0] sm:$0xf]
    %v522 = vld [vmem:[%s1 + $0x7c4] sm:$0xf]
    %v523 = vld [vmem:[%s1 + $0x7c8] sm:$0xf]
    %v524 = vld [vmem:[%s1 + $0x7cc] sm:$0xf]
    %v525 = vld [vmem:[%s1 + $0x7d0] sm:$0xf]
    %v526 = vld [vmem:[%s1 + $0x7d4] sm:$0xf]
    %v527 = vld [vmem:[%s1 + $0x7d8] sm:$0xf]
    %v528 = vld [vmem:[%s1 + $0x7dc] sm:$0xf]
    %v529 = vld [vmem:[%s1 + $0x7e0] sm:$0xf]
    %v530 = vld [vmem:[%s1 + $0x7e4] sm:$0xf]
    %v531 = vld [vmem:[%s1 + $0x7e8] sm:$0xf]
    %v532 = vld [vmem:[%s1 + $0x7ec] sm:$0xf]
    %v533 = vld [vmem:[%s1 + $0x7f0] sm:$0xf]
    %v534 = vld [vmem:[%s1 + $0x7f4] sm:$0xf]
    %v535 = vld [vmem:[%s1 + $0x7f8] sm:$0xf]
    %v536 = vld [vmem:[%s1 + $0x7fc] sm:$0xf]
    %v537 = vld [vmem:[%s2] sm:$0x1]
    %v539 = vperm.slane %v537, 0
    %542 = vst [vmem:[#allocation1] ss:$9 sm:$0xff] %v21
    %v543 = vld [vmem:[#allocation1] sm:$0xff]
    %v544 = vld [vmem:[#allocation1 + $0x9] sm:$0xff]
    %v545 = vld [vmem:[#allocation1 + $0x12] sm:$0xff]
    %v546 = vld [vmem:[#allocation1 + $0x1b] sm:$0xff]
    %v547 = vld [vmem:[#allocation1 + $0x24] sm:$0xff]
    %v548 = vld [vmem:[#allocation1 + $0x2d] sm:$0xff]
    %v549 = vld [vmem:[#allocation1 + $0x36] sm:$0xff]
    %v550 = vld [vmem:[#allocation1 + $0x3f] sm:$0xff]
    %552 = vst [vmem:[#allocation1] ss:$9 sm:$0xff] %v22
    %v553 = vld [vmem:[#allocation1] sm:$0xff]
    %v554 = vld [vmem:[#allocation1 + $0x9] sm:$0xff]
    %v555 = vld [vmem:[#allocation1 + $0x12] sm:$0xff]
    %v556 = vld [vmem:[#allocation1 + $0x1b] sm:$0xff]
    %v557 = vld [vmem:[#allocation1 + $0x24] sm:$0xff]
    %v558 = vld [vmem:[#allocation1 + $0x2d] sm:$0xff]
    %v559 = vld [vmem:[#allocation1 + $0x36] sm:$0xff]
    %v560 = vld [vmem:[#allocation1 + $0x3f] sm:$0xff]
    %562 = vst [vmem:[#allocation1] ss:$9 sm:$0xff] %v23
    %v563 = vld [vmem:[#allocation1] sm:$0xff]
    %v564 = vld [vmem:[#allocation1 + $0x9] sm:$0xff]
    %v565 = vld [vmem:[#allocation1 + $0x12] sm:$0xff]
    %v566 = vld [vmem:[#allocation1 + $0x1b] sm:$0xff]
    %v567 = vld [vmem:[#allocation1 + $0x24] sm:$0xff]
    %v568 = vld [vmem:[#allocation1 + $0x2d] sm:$0xff]
    %v569 = vld [vmem:[#allocation1 + $0x36] sm:$0xff]
    %v570 = vld [vmem:[#allocation1 + $0x3f] sm:$0xff]
    %572 = vst [vmem:[#allocation1] ss:$9 sm:$0xff] %v24
    %v573 = vld [vmem:[#allocation1] sm:$0xff]
    %v574 = vld [vmem:[#allocation1 + $0x9] sm:$0xff]
    %v575 = vld [vmem:[#allocation1 + $0x12] sm:$0xff]
    %v576 = vld [vmem:[#allocation1 + $0x1b] sm:$0xff]
    %v577 = vld [vmem:[#allocation1 + $0x24] sm:$0xff]
    %v578 = vld [vmem:[#allocation1 + $0x2d] sm:$0xff]
    %v579 = vld [vmem:[#allocation1 + $0x36] sm:$0xff]
    %v580 = vld [vmem:[#allocation1 + $0x3f] sm:$0xff]
    %v1125 = vunpack.c.l.b16 %v25
    %v1126 = vunpack.c.l.b16 %v26
    %v1127 = vunpack.c.l.b16 %v27
    %v1128 = vunpack.c.l.b16 %v28
    %v1129 = vunpack.c.l.b16 %v29
    %v1130 = vunpack.c.l.b16 %v30
    %v1131 = vunpack.c.l.b16 %v31
    %v1132 = vunpack.c.l.b16 %v32
    %v1133 = vunpack.c.l.b16 %v33
    %v1134 = vunpack.c.l.b16 %v34
    %v1135 = vunpack.c.l.b16 %v35
    %v1136 = vunpack.c.l.b16 %v36
    %v1137 = vunpack.c.l.b16 %v37
    %v1138 = vunpack.c.l.b16 %v38
    %v1139 = vunpack.c.l.b16 %v39
    %v1140 = vunpack.c.l.b16 %v40
    %v1141 = vunpack.c.l.b16 %v41
    %v1142 = vunpack.c.l.b16 %v42
    %v1143 = vunpack.c.l.b16 %v43
    %v1144 = vunpack.c.l.b16 %v44
    %v1145 = vunpack.c.l.b16 %v45
    %v1146 = vunpack.c.l.b16 %v46
    %v1147 = vunpack.c.l.b16 %v47
    %v1148 = vunpack.c.l.b16 %v48
    %v1149 = vunpack.c.l.b16 %v49
    %v1150 = vunpack.c.l.b16 %v50
    %v1151 = vunpack.c.l.b16 %v51
    %v1152 = vunpack.c.l.b16 %v52
    %v1153 = vunpack.c.l.b16 %v53
    %v1154 = vunpack.c.l.b16 %v54
    %v1155 = vunpack.c.l.b16 %v55
    %v1156 = vunpack.c.l.b16 %v56
    %v1157 = vunpack.c.l.b16 %v57
    %v1158 = vunpack.c.l.b16 %v58
    %v1159 = vunpack.c.l.b16 %v59
    %v1160 = vunpack.c.l.b16 %v60
    %v1161 = vunpack.c.l.b16 %v61
    %v1162 = vunpack.c.l.b16 %v62
    %v1163 = vunpack.c.l.b16 %v63
    %v1164 = vunpack.c.l.b16 %v64
    %v1165 = vunpack.c.l.b16 %v65
    %v1166 = vunpack.c.l.b16 %v66
    %v1167 = vunpack.c.l.b16 %v67
    %v1168 = vunpack.c.l.b16 %v68
    %v1169 = vunpack.c.l.b16 %v69
    %v1170 = vunpack.c.l.b16 %v70
    %v1171 = vunpack.c.l.b16 %v71
    %v1172 = vunpack.c.l.b16 %v72
    %v1173 = vunpack.c.l.b16 %v73
    %v1174 = vunpack.c.l.b16 %v74
    %v1175 = vunpack.c.l.b16 %v75
    %v1176 = vunpack.c.l.b16 %v76
    %v1177 = vunpack.c.l.b16 %v77
    %v1178 = vunpack.c.l.b16 %v78
    %v1179 = vunpack.c.l.b16 %v79
    %v1180 = vunpack.c.l.b16 %v80
    %v1181 = vunpack.c.l.b16 %v81
    %v1182 = vunpack.c.l.b16 %v82
    %v1183 = vunpack.c.l.b16 %v83
    %v1184 = vunpack.c.l.b16 %v84
    %v1185 = vunpack.c.l.b16 %v85
    %v1186 = vunpack.c.l.b16 %v86
    %v1187 = vunpack.c.l.b16 %v87
    %v1188 = vunpack.c.l.b16 %v88
    %v1189 = vunpack.c.l.b16 %v89
    %v1190 = vunpack.c.l.b16 %v90
    %v1191 = vunpack.c.l.b16 %v91
    %v1192 = vunpack.c.l.b16 %v92
    %v1193 = vunpack.c.l.b16 %v93
    %v1194 = vunpack.c.l.b16 %v94
    %v1195 = vunpack.c.l.b16 %v95
    %v1196 = vunpack.c.l.b16 %v96
    %v1197 = vunpack.c.l.b16 %v97
    %v1198 = vunpack.c.l.b16 %v98
    %v1199 = vunpack.c.l.b16 %v99
    %v1200 = vunpack.c.l.b16 %v100
    %v1201 = vunpack.c.l.b16 %v101
    %v1202 = vunpack.c.l.b16 %v102
    %v1203 = vunpack.c.l.b16 %v103
    %v1204 = vunpack.c.l.b16 %v104
    %v1205 = vunpack.c.l.b16 %v105
    %v1206 = vunpack.c.l.b16 %v106
    %v1207 = vunpack.c.l.b16 %v107
    %v1208 = vunpack.c.l.b16 %v108
    %v1209 = vunpack.c.l.b16 %v109
    %v1210 = vunpack.c.l.b16 %v110
    %v1211 = vunpack.c.l.b16 %v111
    %v1212 = vunpack.c.l.b16 %v112
    %v1213 = vunpack.c.l.b16 %v113
    %v1214 = vunpack.c.l.b16 %v114
    %v1215 = vunpack.c.l.b16 %v115
    %v1216 = vunpack.c.l.b16 %v116
    %v1217 = vunpack.c.l.b16 %v117
    %v1218 = vunpack.c.l.b16 %v118
    %v1219 = vunpack.c.l.b16 %v119
    %v1220 = vunpack.c.l.b16 %v120
    %v1221 = vunpack.c.l.b16 %v121
    %v1222 = vunpack.c.l.b16 %v122
    %v1223 = vunpack.c.l.b16 %v123
    %v1224 = vunpack.c.l.b16 %v124
    %v1225 = vunpack.c.l.b16 %v125
    %v1226 = vunpack.c.l.b16 %v126
    %v1227 = vunpack.c.l.b16 %v127
    %v1228 = vunpack.c.l.b16 %v128
    %v1229 = vunpack.c.l.b16 %v129
    %v1230 = vunpack.c.l.b16 %v130
    %v1231 = vunpack.c.l.b16 %v131
    %v1232 = vunpack.c.l.b16 %v132
    %v1233 = vunpack.c.l.b16 %v133
    %v1234 = vunpack.c.l.b16 %v134
    %v1235 = vunpack.c.l.b16 %v135
    %v1236 = vunpack.c.l.b16 %v136
    %v1237 = vunpack.c.l.b16 %v137
    %v1238 = vunpack.c.l.b16 %v138
    %v1239 = vunpack.c.l.b16 %v139
    %v1240 = vunpack.c.l.b16 %v140
    %v1241 = vunpack.c.l.b16 %v141
    %v1242 = vunpack.c.l.b16 %v142
    %v1243 = vunpack.c.l.b16 %v143
    %v1244 = vunpack.c.l.b16 %v144
    %v1245 = vunpack.c.l.b16 %v145
    %v1246 = vunpack.c.l.b16 %v146
    %v1247 = vunpack.c.l.b16 %v147
    %v1248 = vunpack.c.l.b16 %v148
    %v1249 = vunpack.c.l.b16 %v149
    %v1250 = vunpack.c.l.b16 %v150
    %v1251 = vunpack.c.l.b16 %v151
    %v1252 = vunpack.c.l.b16 %v152
    %v1253 = vunpack.c.l.b16 %v153
    %v1254 = vunpack.c.l.b16 %v154
    %v1255 = vunpack.c.l.b16 %v155
    %v1256 = vunpack.c.l.b16 %v156
    %v1257 = vunpack.c.l.b16 %v157
    %v1258 = vunpack.c.l.b16 %v158
    %v1259 = vunpack.c.l.b16 %v159
    %v1260 = vunpack.c.l.b16 %v160
    %v1261 = vunpack.c.l.b16 %v161
    %v1262 = vunpack.c.l.b16 %v162
    %v1263 = vunpack.c.l.b16 %v163
    %v1264 = vunpack.c.l.b16 %v164
    %v1265 = vunpack.c.l.b16 %v165
    %v1266 = vunpack.c.l.b16 %v166
    %v1267 = vunpack.c.l.b16 %v167
    %v1268 = vunpack.c.l.b16 %v168
    %v1269 = vunpack.c.l.b16 %v169
    %v1270 = vunpack.c.l.b16 %v170
    %v1271 = vunpack.c.l.b16 %v171
    %v1272 = vunpack.c.l.b16 %v172
    %v1273 = vunpack.c.l.b16 %v173
    %v1274 = vunpack.c.l.b16 %v174
    %v1275 = vunpack.c.l.b16 %v175
    %v1276 = vunpack.c.l.b16 %v176
    %v1277 = vunpack.c.l.b16 %v177
    %v1278 = vunpack.c.l.b16 %v178
    %v1279 = vunpack.c.l.b16 %v179
    %v1280 = vunpack.c.l.b16 %v180
    %v1281 = vunpack.c.l.b16 %v181
    %v1282 = vunpack.c.l.b16 %v182
    %v1283 = vunpack.c.l.b16 %v183
    %v1284 = vunpack.c.l.b16 %v184
    %v1285 = vunpack.c.l.b16 %v185
    %v1286 = vunpack.c.l.b16 %v186
    %v1287 = vunpack.c.l.b16 %v187
    %v1288 = vunpack.c.l.b16 %v188
    %v1289 = vunpack.c.l.b16 %v189
    %v1290 = vunpack.c.l.b16 %v190
    %v1291 = vunpack.c.l.b16 %v191
    %v1292 = vunpack.c.l.b16 %v192
    %v1293 = vunpack.c.l.b16 %v193
    %v1294 = vunpack.c.l.b16 %v194
    %v1295 = vunpack.c.l.b16 %v195
    %v1296 = vunpack.c.l.b16 %v196
    %v1297 = vunpack.c.l.b16 %v197
    %v1298 = vunpack.c.l.b16 %v198
    %v1299 = vunpack.c.l.b16 %v199
    %v1300 = vunpack.c.l.b16 %v200
    %v1301 = vunpack.c.l.b16 %v201
    %v1302 = vunpack.c.l.b16 %v202
    %v1303 = vunpack.c.l.b16 %v203
    %v1304 = vunpack.c.l.b16 %v204
    %v1305 = vunpack.c.l.b16 %v205
    %v1306 = vunpack.c.l.b16 %v206
    %v1307 = vunpack.c.l.b16 %v207
    %v1308 = vunpack.c.l.b16 %v208
    %v1309 = vunpack.c.l.b16 %v209
    %v1310 = vunpack.c.l.b16 %v210
    %v1311 = vunpack.c.l.b16 %v211
    %v1312 = vunpack.c.l.b16 %v212
    %v1313 = vunpack.c.l.b16 %v213
    %v1314 = vunpack.c.l.b16 %v214
    %v1315 = vunpack.c.l.b16 %v215
    %v1316 = vunpack.c.l.b16 %v216
    %v1317 = vunpack.c.l.b16 %v217
    %v1318 = vunpack.c.l.b16 %v218
    %v1319 = vunpack.c.l.b16 %v219
    %v1320 = vunpack.c.l.b16 %v220
    %v1321 = vunpack.c.l.b16 %v221
    %v1322 = vunpack.c.l.b16 %v222
    %v1323 = vunpack.c.l.b16 %v223
    %v1324 = vunpack.c.l.b16 %v224
    %v1325 = vunpack.c.l.b16 %v225
    %v1326 = vunpack.c.l.b16 %v226
    %v1327 = vunpack.c.l.b16 %v227
    %v1328 = vunpack.c.l.b16 %v228
    %v1329 = vunpack.c.l.b16 %v229
    %v1330 = vunpack.c.l.b16 %v230
    %v1331 = vunpack.c.l.b16 %v231
    %v1332 = vunpack.c.l.b16 %v232
    %v1333 = vunpack.c.l.b16 %v233
    %v1334 = vunpack.c.l.b16 %v234
    %v1335 = vunpack.c.l.b16 %v235
    %v1336 = vunpack.c.l.b16 %v236
    %v1337 = vunpack.c.l.b16 %v237
    %v1338 = vunpack.c.l.b16 %v238
    %v1339 = vunpack.c.l.b16 %v239
    %v1340 = vunpack.c.l.b16 %v240
    %v1341 = vunpack.c.l.b16 %v241
    %v1342 = vunpack.c.l.b16 %v242
    %v1343 = vunpack.c.l.b16 %v243
    %v1344 = vunpack.c.l.b16 %v244
    %v1345 = vunpack.c.l.b16 %v245
    %v1346 = vunpack.c.l.b16 %v246
    %v1347 = vunpack.c.l.b16 %v247
    %v1348 = vunpack.c.l.b16 %v248
    %v1349 = vunpack.c.l.b16 %v249
    %v1350 = vunpack.c.l.b16 %v250
    %v1351 = vunpack.c.l.b16 %v251
    %v1352 = vunpack.c.l.b16 %v252
    %v1353 = vunpack.c.l.b16 %v253
    %v1354 = vunpack.c.l.b16 %v254
    %v1355 = vunpack.c.l.b16 %v255
    %v1356 = vunpack.c.l.b16 %v256
    %v1357 = vunpack.c.l.b16 %v257
    %v1358 = vunpack.c.l.b16 %v258
    %v1359 = vunpack.c.l.b16 %v259
    %v1360 = vunpack.c.l.b16 %v260
    %v1361 = vunpack.c.l.b16 %v261
    %v1362 = vunpack.c.l.b16 %v262
    %v1363 = vunpack.c.l.b16 %v263
    %v1364 = vunpack.c.l.b16 %v264
    %v1365 = vunpack.c.l.b16 %v265
    %v1366 = vunpack.c.l.b16 %v266
    %v1367 = vunpack.c.l.b16 %v267
    %v1368 = vunpack.c.l.b16 %v268
    %v1369 = vunpack.c.l.b16 %v269
    %v1370 = vunpack.c.l.b16 %v270
    %v1371 = vunpack.c.l.b16 %v271
    %v1372 = vunpack.c.l.b16 %v272
    %v1373 = vunpack.c.l.b16 %v273
    %v1374 = vunpack.c.l.b16 %v274
    %v1375 = vunpack.c.l.b16 %v275
    %v1376 = vunpack.c.l.b16 %v276
    %v1377 = vunpack.c.l.b16 %v277
    %v1378 = vunpack.c.l.b16 %v278
    %v1379 = vunpack.c.l.b16 %v279
    %v1380 = vunpack.c.l.b16 %v280
    %v1381 = vunpack.c.l.b16 %v281
    %v1382 = vunpack.c.l.b16 %v282
    %v1383 = vunpack.c.l.b16 %v283
    %v1384 = vunpack.c.l.b16 %v284
    %v1385 = vunpack.c.l.b16 %v285
    %v1386 = vunpack.c.l.b16 %v286
    %v1387 = vunpack.c.l.b16 %v287
    %v1388 = vunpack.c.l.b16 %v288
    %v1389 = vunpack.c.l.b16 %v289
    %v1390 = vunpack.c.l.b16 %v290
    %v1391 = vunpack.c.l.b16 %v291
    %v1392 = vunpack.c.l.b16 %v292
    %v1393 = vunpack.c.l.b16 %v293
    %v1394 = vunpack.c.l.b16 %v294
    %v1395 = vunpack.c.l.b16 %v295
    %v1396 = vunpack.c.l.b16 %v296
    %v1397 = vunpack.c.l.b16 %v297
    %v1398 = vunpack.c.l.b16 %v298
    %v1399 = vunpack.c.l.b16 %v299
    %v1400 = vunpack.c.l.b16 %v300
    %v1401 = vunpack.c.l.b16 %v301
    %v1402 = vunpack.c.l.b16 %v302
    %v1403 = vunpack.c.l.b16 %v303
    %v1404 = vunpack.c.l.b16 %v304
    %v1405 = vunpack.c.l.b16 %v305
    %v1406 = vunpack.c.l.b16 %v306
    %v1407 = vunpack.c.l.b16 %v307
    %v1408 = vunpack.c.l.b16 %v308
    %v1409 = vunpack.c.l.b16 %v309
    %v1410 = vunpack.c.l.b16 %v310
    %v1411 = vunpack.c.l.b16 %v311
    %v1412 = vunpack.c.l.b16 %v312
    %v1413 = vunpack.c.l.b16 %v313
    %v1414 = vunpack.c.l.b16 %v314
    %v1415 = vunpack.c.l.b16 %v315
    %v1416 = vunpack.c.l.b16 %v316
    %v1417 = vunpack.c.l.b16 %v317
    %v1418 = vunpack.c.l.b16 %v318
    %v1419 = vunpack.c.l.b16 %v319
    %v1420 = vunpack.c.l.b16 %v320
    %v1421 = vunpack.c.l.b16 %v321
    %v1422 = vunpack.c.l.b16 %v322
    %v1423 = vunpack.c.l.b16 %v323
    %v1424 = vunpack.c.l.b16 %v324
    %v1425 = vunpack.c.l.b16 %v325
    %v1426 = vunpack.c.l.b16 %v326
    %v1427 = vunpack.c.l.b16 %v327
    %v1428 = vunpack.c.l.b16 %v328
    %v1429 = vunpack.c.l.b16 %v329
    %v1430 = vunpack.c.l.b16 %v330
    %v1431 = vunpack.c.l.b16 %v331
    %v1432 = vunpack.c.l.b16 %v332
    %v1433 = vunpack.c.l.b16 %v333
    %v1434 = vunpack.c.l.b16 %v334
    %v1435 = vunpack.c.l.b16 %v335
    %v1436 = vunpack.c.l.b16 %v336
    %v1437 = vunpack.c.l.b16 %v337
    %v1438 = vunpack.c.l.b16 %v338
    %v1439 = vunpack.c.l.b16 %v339
    %v1440 = vunpack.c.l.b16 %v340
    %v1441 = vunpack.c.l.b16 %v341
    %v1442 = vunpack.c.l.b16 %v342
    %v1443 = vunpack.c.l.b16 %v343
    %v1444 = vunpack.c.l.b16 %v344
    %v1445 = vunpack.c.l.b16 %v345
    %v1446 = vunpack.c.l.b16 %v346
    %v1447 = vunpack.c.l.b16 %v347
    %v1448 = vunpack.c.l.b16 %v348
    %v1449 = vunpack.c.l.b16 %v349
    %v1450 = vunpack.c.l.b16 %v350
    %v1451 = vunpack.c.l.b16 %v351
    %v1452 = vunpack.c.l.b16 %v352
    %v1453 = vunpack.c.l.b16 %v353
    %v1454 = vunpack.c.l.b16 %v354
    %v1455 = vunpack.c.l.b16 %v355
    %v1456 = vunpack.c.l.b16 %v356
    %v1457 = vunpack.c.l.b16 %v357
    %v1458 = vunpack.c.l.b16 %v358
    %v1459 = vunpack.c.l.b16 %v359
    %v1460 = vunpack.c.l.b16 %v360
    %v1461 = vunpack.c.l.b16 %v361
    %v1462 = vunpack.c.l.b16 %v362
    %v1463 = vunpack.c.l.b16 %v363
    %v1464 = vunpack.c.l.b16 %v364
    %v1465 = vunpack.c.l.b16 %v365
    %v1466 = vunpack.c.l.b16 %v366
    %v1467 = vunpack.c.l.b16 %v367
    %v1468 = vunpack.c.l.b16 %v368
    %v1469 = vunpack.c.l.b16 %v369
    %v1470 = vunpack.c.l.b16 %v370
    %v1471 = vunpack.c.l.b16 %v371
    %v1472 = vunpack.c.l.b16 %v372
    %v1473 = vunpack.c.l.b16 %v373
    %v1474 = vunpack.c.l.b16 %v374
    %v1475 = vunpack.c.l.b16 %v375
    %v1476 = vunpack.c.l.b16 %v376
    %v1477 = vunpack.c.l.b16 %v377
    %v1478 = vunpack.c.l.b16 %v378
    %v1479 = vunpack.c.l.b16 %v379
    %v1480 = vunpack.c.l.b16 %v380
    %v1481 = vunpack.c.l.b16 %v381
    %v1482 = vunpack.c.l.b16 %v382
    %v1483 = vunpack.c.l.b16 %v383
    %v1484 = vunpack.c.l.b16 %v384
    %v1485 = vunpack.c.l.b16 %v385
    %v1486 = vunpack.c.l.b16 %v386
    %v1487 = vunpack.c.l.b16 %v387
    %v1488 = vunpack.c.l.b16 %v388
    %v1489 = vunpack.c.l.b16 %v389
    %v1490 = vunpack.c.l.b16 %v390
    %v1491 = vunpack.c.l.b16 %v391
    %v1492 = vunpack.c.l.b16 %v392
    %v1493 = vunpack.c.l.b16 %v393
    %v1494 = vunpack.c.l.b16 %v394
    %v1495 = vunpack.c.l.b16 %v395
    %v1496 = vunpack.c.l.b16 %v396
    %v1497 = vunpack.c.l.b16 %v397
    %v1498 = vunpack.c.l.b16 %v398
    %v1499 = vunpack.c.l.b16 %v399
    %v1500 = vunpack.c.l.b16 %v400
    %v1501 = vunpack.c.l.b16 %v401
    %v1502 = vunpack.c.l.b16 %v402
    %v1503 = vunpack.c.l.b16 %v403
    %v1504 = vunpack.c.l.b16 %v404
    %v1505 = vunpack.c.l.b16 %v405
    %v1506 = vunpack.c.l.b16 %v406
    %v1507 = vunpack.c.l.b16 %v407
    %v1508 = vunpack.c.l.b16 %v408
    %v1509 = vunpack.c.l.b16 %v409
    %v1510 = vunpack.c.l.b16 %v410
    %v1511 = vunpack.c.l.b16 %v411
    %v1512 = vunpack.c.l.b16 %v412
    %v1513 = vunpack.c.l.b16 %v413
    %v1514 = vunpack.c.l.b16 %v414
    %v1515 = vunpack.c.l.b16 %v415
    %v1516 = vunpack.c.l.b16 %v416
    %v1517 = vunpack.c.l.b16 %v417
    %v1518 = vunpack.c.l.b16 %v418
    %v1519 = vunpack.c.l.b16 %v419
    %v1520 = vunpack.c.l.b16 %v420
    %v1521 = vunpack.c.l.b16 %v421
    %v1522 = vunpack.c.l.b16 %v422
    %v1523 = vunpack.c.l.b16 %v423
    %v1524 = vunpack.c.l.b16 %v424
    %v1525 = vunpack.c.l.b16 %v425
    %v1526 = vunpack.c.l.b16 %v426
    %v1527 = vunpack.c.l.b16 %v427
    %v1528 = vunpack.c.l.b16 %v428
    %v1529 = vunpack.c.l.b16 %v429
    %v1530 = vunpack.c.l.b16 %v430
    %v1531 = vunpack.c.l.b16 %v431
    %v1532 = vunpack.c.l.b16 %v432
    %v1533 = vunpack.c.l.b16 %v433
    %v1534 = vunpack.c.l.b16 %v434
    %v1535 = vunpack.c.l.b16 %v435
    %v1536 = vunpack.c.l.b16 %v436
    %v1537 = vunpack.c.l.b16 %v437
    %v1538 = vunpack.c.l.b16 %v438
    %v1539 = vunpack.c.l.b16 %v439
    %v1540 = vunpack.c.l.b16 %v440
    %v1541 = vunpack.c.l.b16 %v441
    %v1542 = vunpack.c.l.b16 %v442
    %v1543 = vunpack.c.l.b16 %v443
    %v1544 = vunpack.c.l.b16 %v444
    %v1545 = vunpack.c.l.b16 %v445
    %v1546 = vunpack.c.l.b16 %v446
    %v1547 = vunpack.c.l.b16 %v447
    %v1548 = vunpack.c.l.b16 %v448
    %v1549 = vunpack.c.l.b16 %v449
    %v1550 = vunpack.c.l.b16 %v450
    %v1551 = vunpack.c.l.b16 %v451
    %v1552 = vunpack.c.l.b16 %v452
    %v1553 = vunpack.c.l.b16 %v453
    %v1554 = vunpack.c.l.b16 %v454
    %v1555 = vunpack.c.l.b16 %v455
    %v1556 = vunpack.c.l.b16 %v456
    %v1557 = vunpack.c.l.b16 %v457
    %v1558 = vunpack.c.l.b16 %v458
    %v1559 = vunpack.c.l.b16 %v459
    %v1560 = vunpack.c.l.b16 %v460
    %v1561 = vunpack.c.l.b16 %v461
    %v1562 = vunpack.c.l.b16 %v462
    %v1563 = vunpack.c.l.b16 %v463
    %v1564 = vunpack.c.l.b16 %v464
    %v1565 = vunpack.c.l.b16 %v465
    %v1566 = vunpack.c.l.b16 %v466
    %v1567 = vunpack.c.l.b16 %v467
    %v1568 = vunpack.c.l.b16 %v468
    %v1569 = vunpack.c.l.b16 %v469
    %v1570 = vunpack.c.l.b16 %v470
    %v1571 = vunpack.c.l.b16 %v471
    %v1572 = vunpack.c.l.b16 %v472
    %v1573 = vunpack.c.l.b16 %v473
    %v1574 = vunpack.c.l.b16 %v474
    %v1575 = vunpack.c.l.b16 %v475
    %v1576 = vunpack.c.l.b16 %v476
    %v1577 = vunpack.c.l.b16 %v477
    %v1578 = vunpack.c.l.b16 %v478
    %v1579 = vunpack.c.l.b16 %v479
    %v1580 = vunpack.c.l.b16 %v480
    %v1581 = vunpack.c.l.b16 %v481
    %v1582 = vunpack.c.l.b16 %v482
    %v1583 = vunpack.c.l.b16 %v483
    %v1584 = vunpack.c.l.b16 %v484
    %v1585 = vunpack.c.l.b16 %v485
    %v1586 = vunpack.c.l.b16 %v486
    %v1587 = vunpack.c.l.b16 %v487
    %v1588 = vunpack.c.l.b16 %v488
    %v1589 = vunpack.c.l.b16 %v489
    %v1590 = vunpack.c.l.b16 %v490
    %v1591 = vunpack.c.l.b16 %v491
    %v1592 = vunpack.c.l.b16 %v492
    %v1593 = vunpack.c.l.b16 %v493
    %v1594 = vunpack.c.l.b16 %v494
    %v1595 = vunpack.c.l.b16 %v495
    %v1596 = vunpack.c.l.b16 %v496
    %v1597 = vunpack.c.l.b16 %v497
    %v1598 = vunpack.c.l.b16 %v498
    %v1599 = vunpack.c.l.b16 %v499
    %v1600 = vunpack.c.l.b16 %v500
    %v1601 = vunpack.c.l.b16 %v501
    %v1602 = vunpack.c.l.b16 %v502
    %v1603 = vunpack.c.l.b16 %v503
    %v1604 = vunpack.c.l.b16 %v504
    %v1605 = vunpack.c.l.b16 %v505
    %v1606 = vunpack.c.l.b16 %v506
    %v1607 = vunpack.c.l.b16 %v507
    %v1608 = vunpack.c.l.b16 %v508
    %v1609 = vunpack.c.l.b16 %v509
    %v1610 = vunpack.c.l.b16 %v510
    %v1611 = vunpack.c.l.b16 %v511
    %v1612 = vunpack.c.l.b16 %v512
    %v1613 = vunpack.c.l.b16 %v513
    %v1614 = vunpack.c.l.b16 %v514
    %v1615 = vunpack.c.l.b16 %v515
    %v1616 = vunpack.c.l.b16 %v516
    %v1617 = vunpack.c.l.b16 %v517
    %v1618 = vunpack.c.l.b16 %v518
    %v1619 = vunpack.c.l.b16 %v519
    %v1620 = vunpack.c.l.b16 %v520
    %v1621 = vunpack.c.l.b16 %v521
    %v1622 = vunpack.c.l.b16 %v522
    %v1623 = vunpack.c.l.b16 %v523
    %v1624 = vunpack.c.l.b16 %v524
    %v1625 = vunpack.c.l.b16 %v525
    %v1626 = vunpack.c.l.b16 %v526
    %v1627 = vunpack.c.l.b16 %v527
    %v1628 = vunpack.c.l.b16 %v528
    %v1629 = vunpack.c.l.b16 %v529
    %v1630 = vunpack.c.l.b16 %v530
    %v1631 = vunpack.c.l.b16 %v531
    %v1632 = vunpack.c.l.b16 %v532
    %v1633 = vunpack.c.l.b16 %v533
    %v1634 = vunpack.c.l.b16 %v534
    %v1635 = vunpack.c.l.b16 %v535
    %v1636 = vunpack.c.l.b16 %v536
    %v1637 = vpack.c.b16 %v1126, %v1125
    %v1638 = vpack.c.b16 %v1128, %v1127
    %v1639 = vpack.c.b16 %v1130, %v1129
    %v1640 = vpack.c.b16 %v1132, %v1131
    %v1641 = vpack.c.b16 %v1134, %v1133
    %v1642 = vpack.c.b16 %v1136, %v1135
    %v1643 = vpack.c.b16 %v1138, %v1137
    %v1644 = vpack.c.b16 %v1140, %v1139
    %v1645 = vpack.c.b16 %v1142, %v1141
    %v1646 = vpack.c.b16 %v1144, %v1143
    %v1647 = vpack.c.b16 %v1146, %v1145
    %v1648 = vpack.c.b16 %v1148, %v1147
    %v1649 = vpack.c.b16 %v1150, %v1149
    %v1650 = vpack.c.b16 %v1152, %v1151
    %v1651 = vpack.c.b16 %v1154, %v1153
    %v1652 = vpack.c.b16 %v1156, %v1155
    %v1653 = vpack.c.b16 %v1158, %v1157
    %v1654 = vpack.c.b16 %v1160, %v1159
    %v1655 = vpack.c.b16 %v1162, %v1161
    %v1656 = vpack.c.b16 %v1164, %v1163
    %v1657 = vpack.c.b16 %v1166, %v1165
    %v1658 = vpack.c.b16 %v1168, %v1167
    %v1659 = vpack.c.b16 %v1170, %v1169
    %v1660 = vpack.c.b16 %v1172, %v1171
    %v1661 = vpack.c.b16 %v1174, %v1173
    %v1662 = vpack.c.b16 %v1176, %v1175
    %v1663 = vpack.c.b16 %v1178, %v1177
    %v1664 = vpack.c.b16 %v1180, %v1179
    %v1665 = vpack.c.b16 %v1182, %v1181
    %v1666 = vpack.c.b16 %v1184, %v1183
    %v1667 = vpack.c.b16 %v1186, %v1185
    %v1668 = vpack.c.b16 %v1188, %v1187
    %v1669 = vpack.c.b16 %v1190, %v1189
    %v1670 = vpack.c.b16 %v1192, %v1191
    %v1671 = vpack.c.b16 %v1194, %v1193
    %v1672 = vpack.c.b16 %v1196, %v1195
    %v1673 = vpack.c.b16 %v1198, %v1197
    %v1674 = vpack.c.b16 %v1200, %v1199
    %v1675 = vpack.c.b16 %v1202, %v1201
    %v1676 = vpack.c.b16 %v1204, %v1203
    %v1677 = vpack.c.b16 %v1206, %v1205
    %v1678 = vpack.c.b16 %v1208, %v1207
    %v1679 = vpack.c.b16 %v1210, %v1209
    %v1680 = vpack.c.b16 %v1212, %v1211
    %v1681 = vpack.c.b16 %v1214, %v1213
    %v1682 = vpack.c.b16 %v1216, %v1215
    %v1683 = vpack.c.b16 %v1218, %v1217
    %v1684 = vpack.c.b16 %v1220, %v1219
    %v1685 = vpack.c.b16 %v1222, %v1221
    %v1686 = vpack.c.b16 %v1224, %v1223
    %v1687 = vpack.c.b16 %v1226, %v1225
    %v1688 = vpack.c.b16 %v1228, %v1227
    %v1689 = vpack.c.b16 %v1230, %v1229
    %v1690 = vpack.c.b16 %v1232, %v1231
    %v1691 = vpack.c.b16 %v1234, %v1233
    %v1692 = vpack.c.b16 %v1236, %v1235
    %v1693 = vpack.c.b16 %v1238, %v1237
    %v1694 = vpack.c.b16 %v1240, %v1239
    %v1695 = vpack.c.b16 %v1242, %v1241
    %v1696 = vpack.c.b16 %v1244, %v1243
    %v1697 = vpack.c.b16 %v1246, %v1245
    %v1698 = vpack.c.b16 %v1248, %v1247
    %v1699 = vpack.c.b16 %v1250, %v1249
    %v1700 = vpack.c.b16 %v1252, %v1251
    %v1701 = vpack.c.b16 %v1254, %v1253
    %v1702 = vpack.c.b16 %v1256, %v1255
    %v1703 = vpack.c.b16 %v1258, %v1257
    %v1704 = vpack.c.b16 %v1260, %v1259
    %v1705 = vpack.c.b16 %v1262, %v1261
    %v1706 = vpack.c.b16 %v1264, %v1263
    %v1707 = vpack.c.b16 %v1266, %v1265
    %v1708 = vpack.c.b16 %v1268, %v1267
    %v1709 = vpack.c.b16 %v1270, %v1269
    %v1710 = vpack.c.b16 %v1272, %v1271
    %v1711 = vpack.c.b16 %v1274, %v1273
    %v1712 = vpack.c.b16 %v1276, %v1275
    %v1713 = vpack.c.b16 %v1278, %v1277
    %v1714 = vpack.c.b16 %v1280, %v1279
    %v1715 = vpack.c.b16 %v1282, %v1281
    %v1716 = vpack.c.b16 %v1284, %v1283
    %v1717 = vpack.c.b16 %v1286, %v1285
    %v1718 = vpack.c.b16 %v1288, %v1287
    %v1719 = vpack.c.b16 %v1290, %v1289
    %v1720 = vpack.c.b16 %v1292, %v1291
    %v1721 = vpack.c.b16 %v1294, %v1293
    %v1722 = vpack.c.b16 %v1296, %v1295
    %v1723 = vpack.c.b16 %v1298, %v1297
    %v1724 = vpack.c.b16 %v1300, %v1299
    %v1725 = vpack.c.b16 %v1302, %v1301
    %v1726 = vpack.c.b16 %v1304, %v1303
    %v1727 = vpack.c.b16 %v1306, %v1305
    %v1728 = vpack.c.b16 %v1308, %v1307
    %v1729 = vpack.c.b16 %v1310, %v1309
    %v1730 = vpack.c.b16 %v1312, %v1311
    %v1731 = vpack.c.b16 %v1314, %v1313
    %v1732 = vpack.c.b16 %v1316, %v1315
    %v1733 = vpack.c.b16 %v1318, %v1317
    %v1734 = vpack.c.b16 %v1320, %v1319
    %v1735 = vpack.c.b16 %v1322, %v1321
    %v1736 = vpack.c.b16 %v1324, %v1323
    %v1737 = vpack.c.b16 %v1326, %v1325
    %v1738 = vpack.c.b16 %v1328, %v1327
    %v1739 = vpack.c.b16 %v1330, %v1329
    %v1740 = vpack.c.b16 %v1332, %v1331
    %v1741 = vpack.c.b16 %v1334, %v1333
    %v1742 = vpack.c.b16 %v1336, %v1335
    %v1743 = vpack.c.b16 %v1338, %v1337
    %v1744 = vpack.c.b16 %v1340, %v1339
    %v1745 = vpack.c.b16 %v1342, %v1341
    %v1746 = vpack.c.b16 %v1344, %v1343
    %v1747 = vpack.c.b16 %v1346, %v1345
    %v1748 = vpack.c.b16 %v1348, %v1347
    %v1749 = vpack.c.b16 %v1350, %v1349
    %v1750 = vpack.c.b16 %v1352, %v1351
    %v1751 = vpack.c.b16 %v1354, %v1353
    %v1752 = vpack.c.b16 %v1356, %v1355
    %v1753 = vpack.c.b16 %v1358, %v1357
    %v1754 = vpack.c.b16 %v1360, %v1359
    %v1755 = vpack.c.b16 %v1362, %v1361
    %v1756 = vpack.c.b16 %v1364, %v1363
    %v1757 = vpack.c.b16 %v1366, %v1365
    %v1758 = vpack.c.b16 %v1368, %v1367
    %v1759 = vpack.c.b16 %v1370, %v1369
    %v1760 = vpack.c.b16 %v1372, %v1371
    %v1761 = vpack.c.b16 %v1374, %v1373
    %v1762 = vpack.c.b16 %v1376, %v1375
    %v1763 = vpack.c.b16 %v1378, %v1377
    %v1764 = vpack.c.b16 %v1380, %v1379
    %v1765 = vpack.c.b16 %v1382, %v1381
    %v1766 = vpack.c.b16 %v1384, %v1383
    %v1767 = vpack.c.b16 %v1386, %v1385
    %v1768 = vpack.c.b16 %v1388, %v1387
    %v1769 = vpack.c.b16 %v1390, %v1389
    %v1770 = vpack.c.b16 %v1392, %v1391
    %v1771 = vpack.c.b16 %v1394, %v1393
    %v1772 = vpack.c.b16 %v1396, %v1395
    %v1773 = vpack.c.b16 %v1398, %v1397
    %v1774 = vpack.c.b16 %v1400, %v1399
    %v1775 = vpack.c.b16 %v1402, %v1401
    %v1776 = vpack.c.b16 %v1404, %v1403
    %v1777 = vpack.c.b16 %v1406, %v1405
    %v1778 = vpack.c.b16 %v1408, %v1407
    %v1779 = vpack.c.b16 %v1410, %v1409
    %v1780 = vpack.c.b16 %v1412, %v1411
    %v1781 = vpack.c.b16 %v1414, %v1413
    %v1782 = vpack.c.b16 %v1416, %v1415
    %v1783 = vpack.c.b16 %v1418, %v1417
    %v1784 = vpack.c.b16 %v1420, %v1419
    %v1785 = vpack.c.b16 %v1422, %v1421
    %v1786 = vpack.c.b16 %v1424, %v1423
    %v1787 = vpack.c.b16 %v1426, %v1425
    %v1788 = vpack.c.b16 %v1428, %v1427
    %v1789 = vpack.c.b16 %v1430, %v1429
    %v1790 = vpack.c.b16 %v1432, %v1431
    %v1791 = vpack.c.b16 %v1434, %v1433
    %v1792 = vpack.c.b16 %v1436, %v1435
    %v1793 = vpack.c.b16 %v1438, %v1437
    %v1794 = vpack.c.b16 %v1440, %v1439
    %v1795 = vpack.c.b16 %v1442, %v1441
    %v1796 = vpack.c.b16 %v1444, %v1443
    %v1797 = vpack.c.b16 %v1446, %v1445
    %v1798 = vpack.c.b16 %v1448, %v1447
    %v1799 = vpack.c.b16 %v1450, %v1449
    %v1800 = vpack.c.b16 %v1452, %v1451
    %v1801 = vpack.c.b16 %v1454, %v1453
    %v1802 = vpack.c.b16 %v1456, %v1455
    %v1803 = vpack.c.b16 %v1458, %v1457
    %v1804 = vpack.c.b16 %v1460, %v1459
    %v1805 = vpack.c.b16 %v1462, %v1461
    %v1806 = vpack.c.b16 %v1464, %v1463
    %v1807 = vpack.c.b16 %v1466, %v1465
    %v1808 = vpack.c.b16 %v1468, %v1467
    %v1809 = vpack.c.b16 %v1470, %v1469
    %v1810 = vpack.c.b16 %v1472, %v1471
    %v1811 = vpack.c.b16 %v1474, %v1473
    %v1812 = vpack.c.b16 %v1476, %v1475
    %v1813 = vpack.c.b16 %v1478, %v1477
    %v1814 = vpack.c.b16 %v1480, %v1479
    %v1815 = vpack.c.b16 %v1482, %v1481
    %v1816 = vpack.c.b16 %v1484, %v1483
    %v1817 = vpack.c.b16 %v1486, %v1485
    %v1818 = vpack.c.b16 %v1488, %v1487
    %v1819 = vpack.c.b16 %v1490, %v1489
    %v1820 = vpack.c.b16 %v1492, %v1491
    %v1821 = vpack.c.b16 %v1494, %v1493
    %v1822 = vpack.c.b16 %v1496, %v1495
    %v1823 = vpack.c.b16 %v1498, %v1497
    %v1824 = vpack.c.b16 %v1500, %v1499
    %v1825 = vpack.c.b16 %v1502, %v1501
    %v1826 = vpack.c.b16 %v1504, %v1503
    %v1827 = vpack.c.b16 %v1506, %v1505
    %v1828 = vpack.c.b16 %v1508, %v1507
    %v1829 = vpack.c.b16 %v1510, %v1509
    %v1830 = vpack.c.b16 %v1512, %v1511
    %v1831 = vpack.c.b16 %v1514, %v1513
    %v1832 = vpack.c.b16 %v1516, %v1515
    %v1833 = vpack.c.b16 %v1518, %v1517
    %v1834 = vpack.c.b16 %v1520, %v1519
    %v1835 = vpack.c.b16 %v1522, %v1521
    %v1836 = vpack.c.b16 %v1524, %v1523
    %v1837 = vpack.c.b16 %v1526, %v1525
    %v1838 = vpack.c.b16 %v1528, %v1527
    %v1839 = vpack.c.b16 %v1530, %v1529
    %v1840 = vpack.c.b16 %v1532, %v1531
    %v1841 = vpack.c.b16 %v1534, %v1533
    %v1842 = vpack.c.b16 %v1536, %v1535
    %v1843 = vpack.c.b16 %v1538, %v1537
    %v1844 = vpack.c.b16 %v1540, %v1539
    %v1845 = vpack.c.b16 %v1542, %v1541
    %v1846 = vpack.c.b16 %v1544, %v1543
    %v1847 = vpack.c.b16 %v1546, %v1545
    %v1848 = vpack.c.b16 %v1548, %v1547
    %v1849 = vpack.c.b16 %v1550, %v1549
    %v1850 = vpack.c.b16 %v1552, %v1551
    %v1851 = vpack.c.b16 %v1554, %v1553
    %v1852 = vpack.c.b16 %v1556, %v1555
    %v1853 = vpack.c.b16 %v1558, %v1557
    %v1854 = vpack.c.b16 %v1560, %v1559
    %v1855 = vpack.c.b16 %v1562, %v1561
    %v1856 = vpack.c.b16 %v1564, %v1563
    %v1857 = vpack.c.b16 %v1566, %v1565
    %v1858 = vpack.c.b16 %v1568, %v1567
    %v1859 = vpack.c.b16 %v1570, %v1569
    %v1860 = vpack.c.b16 %v1572, %v1571
    %v1861 = vpack.c.b16 %v1574, %v1573
    %v1862 = vpack.c.b16 %v1576, %v1575
    %v1863 = vpack.c.b16 %v1578, %v1577
    %v1864 = vpack.c.b16 %v1580, %v1579
    %v1865 = vpack.c.b16 %v1582, %v1581
    %v1866 = vpack.c.b16 %v1584, %v1583
    %v1867 = vpack.c.b16 %v1586, %v1585
    %v1868 = vpack.c.b16 %v1588, %v1587
    %v1869 = vpack.c.b16 %v1590, %v1589
    %v1870 = vpack.c.b16 %v1592, %v1591
    %v1871 = vpack.c.b16 %v1594, %v1593
    %v1872 = vpack.c.b16 %v1596, %v1595
    %v1873 = vpack.c.b16 %v1598, %v1597
    %v1874 = vpack.c.b16 %v1600, %v1599
    %v1875 = vpack.c.b16 %v1602, %v1601
    %v1876 = vpack.c.b16 %v1604, %v1603
    %v1877 = vpack.c.b16 %v1606, %v1605
    %v1878 = vpack.c.b16 %v1608, %v1607
    %v1879 = vpack.c.b16 %v1610, %v1609
    %v1880 = vpack.c.b16 %v1612, %v1611
    %v1881 = vpack.c.b16 %v1614, %v1613
    %v1882 = vpack.c.b16 %v1616, %v1615
    %v1883 = vpack.c.b16 %v1618, %v1617
    %v1884 = vpack.c.b16 %v1620, %v1619
    %v1885 = vpack.c.b16 %v1622, %v1621
    %v1886 = vpack.c.b16 %v1624, %v1623
    %v1887 = vpack.c.b16 %v1626, %v1625
    %v1888 = vpack.c.b16 %v1628, %v1627
    %v1889 = vpack.c.b16 %v1630, %v1629
    %v1890 = vpack.c.b16 %v1632, %v1631
    %v1891 = vpack.c.b16 %v1634, %v1633
    %v1892 = vpack.c.b16 %v1636, %v1635
    %2149 = vmatpush.bf16.msra.mxu0 %v1644
    %2150 = vmatpush.bf16.msra.mxu0 %v1643
    %2151 = vmatpush.bf16.msra.mxu0 %v1642
    %2152 = vmatpush.bf16.msra.mxu0 %v1641
    %2153 = vmatpush.bf16.msra.mxu0 %v1640
    %2154 = vmatpush.bf16.msra.mxu0 %v1639
    %2155 = vmatpush.bf16.msra.mxu0 %v1638
    %2156 = vmatpush.bf16.msra.mxu0 %v1637
    %2157 = vmatmul.bf16.gmra.mxu0 %v543
    %v2158 = vpop.f32.mrf.mxu0
    %v2159 = vadd.f32 %v539, %v2158
    %v2160 = vpop.f32.mrf.mxu0
    %2161 = vdwg.mxu0
    %2162 = vmatpush.bf16.msra.mxu0 %v1652
    %2163 = vmatpush.bf16.msra.mxu0 %v1651
    %2164 = vmatpush.bf16.msra.mxu0 %v1650
    %2165 = vmatpush.bf16.msra.mxu0 %v1649
    %2166 = vmatpush.bf16.msra.mxu0 %v1648
    %2167 = vmatpush.bf16.msra.mxu0 %v1647
    %2168 = vmatpush.bf16.msra.mxu0 %v1646
    %2169 = vmatpush.bf16.msra.mxu0 %v1645
    %2170 = vmatmul.bf16.gmra.mxu0 %v544
    %v2171 = vpop.f32.mrf.mxu0
    %v2172 = vadd.f32 %v2159, %v2171
    %v2173 = vpop.f32.mrf.mxu0
    %2174 = vdwg.mxu0
    %2175 = vmatpush.bf16.msra.mxu0 %v1660
    %2176 = vmatpush.bf16.msra.mxu0 %v1659
    %2177 = vmatpush.bf16.msra.mxu0 %v1658
    %2178 = vmatpush.bf16.msra.mxu0 %v1657
    %2179 = vmatpush.bf16.msra.mxu0 %v1656
    %2180 = vmatpush.bf16.msra.mxu0 %v1655
    %2181 = vmatpush.bf16.msra.mxu0 %v1654
    %2182 = vmatpush.bf16.msra.mxu0 %v1653
    %2183 = vmatmul.bf16.gmra.mxu0 %v545
    %v2184 = vpop.f32.mrf.mxu0
    %v2185 = vadd.f32 %v2172, %v2184
    %v2186 = vpop.f32.mrf.mxu0
    %2187 = vdwg.mxu0
    %2188 = vmatpush.bf16.msra.mxu0 %v1668
    %2189 = vmatpush.bf16.msra.mxu0 %v1667
    %2190 = vmatpush.bf16.msra.mxu0 %v1666
    %2191 = vmatpush.bf16.msra.mxu0 %v1665
    %2192 = vmatpush.bf16.msra.mxu0 %v1664
    %2193 = vmatpush.bf16.msra.mxu0 %v1663
    %2194 = vmatpush.bf16.msra.mxu0 %v1662
    %2195 = vmatpush.bf16.msra.mxu0 %v1661
    %2196 = vmatmul.bf16.gmra.mxu0 %v546
    %v2197 = vpop.f32.mrf.mxu0
    %v2198 = vadd.f32 %v2185, %v2197
    %v2199 = vpop.f32.mrf.mxu0
    %2200 = vdwg.mxu0
    %2201 = vmatpush.bf16.msra.mxu0 %v1676
    %2202 = vmatpush.bf16.msra.mxu0 %v1675
    %2203 = vmatpush.bf16.msra.mxu0 %v1674
    %2204 = vmatpush.bf16.msra.mxu0 %v1673
    %2205 = vmatpush.bf16.msra.mxu0 %v1672
    %2206 = vmatpush.bf16.msra.mxu0 %v1671
    %2207 = vmatpush.bf16.msra.mxu0 %v1670
    %2208 = vmatpush.bf16.msra.mxu0 %v1669
    %2209 = vmatmul.bf16.gmra.mxu0 %v547
    %v2210 = vpop.f32.mrf.mxu0
    %v2211 = vadd.f32 %v2198, %v2210
    %v2212 = vpop.f32.mrf.mxu0
    %2213 = vdwg.mxu0
    %2214 = vmatpush.bf16.msra.mxu0 %v1684
    %2215 = vmatpush.bf16.msra.mxu0 %v1683
    %2216 = vmatpush.bf16.msra.mxu0 %v1682
    %2217 = vmatpush.bf16.msra.mxu0 %v1681
    %2218 = vmatpush.bf16.msra.mxu0 %v1680
    %2219 = vmatpush.bf16.msra.mxu0 %v1679
    %2220 = vmatpush.bf16.msra.mxu0 %v1678
    %2221 = vmatpush.bf16.msra.mxu0 %v1677
    %2222 = vmatmul.bf16.gmra.mxu0 %v548
    %v2223 = vpop.f32.mrf.mxu0
    %v2224 = vadd.f32 %v2211, %v2223
    %v2225 = vpop.f32.mrf.mxu0
    %2226 = vdwg.mxu0
    %2227 = vmatpush.bf16.msra.mxu0 %v1692
    %2228 = vmatpush.bf16.msra.mxu0 %v1691
    %2229 = vmatpush.bf16.msra.mxu0 %v1690
    %2230 = vmatpush.bf16.msra.mxu0 %v1689
    %2231 = vmatpush.bf16.msra.mxu0 %v1688
    %2232 = vmatpush.bf16.msra.mxu0 %v1687
    %2233 = vmatpush.bf16.msra.mxu0 %v1686
    %2234 = vmatpush.bf16.msra.mxu0 %v1685
    %2235 = vmatmul.bf16.gmra.mxu0 %v549
    %v2236 = vpop.f32.mrf.mxu0
    %v2237 = vadd.f32 %v2224, %v2236
    %v2238 = vpop.f32.mrf.mxu0
    %2239 = vdwg.mxu0
    %2240 = vmatpush.bf16.msra.mxu0 %v1700
    %2241 = vmatpush.bf16.msra.mxu0 %v1699
    %2242 = vmatpush.bf16.msra.mxu0 %v1698
    %2243 = vmatpush.bf16.msra.mxu0 %v1697
    %2244 = vmatpush.bf16.msra.mxu0 %v1696
    %2245 = vmatpush.bf16.msra.mxu0 %v1695
    %2246 = vmatpush.bf16.msra.mxu0 %v1694
    %2247 = vmatpush.bf16.msra.mxu0 %v1693
    %2248 = vmatmul.bf16.gmra.mxu0 %v550
    %v2249 = vpop.f32.mrf.mxu0
    %v2250 = vadd.f32 %v2237, %v2249
    %v2251 = vpop.f32.mrf.mxu0
    %2252 = vdwg.mxu0
    %2253 = vmatpush.bf16.msra.mxu0 %v1708
    %2254 = vmatpush.bf16.msra.mxu0 %v1707
    %2255 = vmatpush.bf16.msra.mxu0 %v1706
    %2256 = vmatpush.bf16.msra.mxu0 %v1705
    %2257 = vmatpush.bf16.msra.mxu0 %v1704
    %2258 = vmatpush.bf16.msra.mxu0 %v1703
    %2259 = vmatpush.bf16.msra.mxu0 %v1702
    %2260 = vmatpush.bf16.msra.mxu0 %v1701
    %2261 = vmatmul.bf16.gmra.mxu0 %v553
    %v2262 = vpop.f32.mrf.mxu0
    %v2263 = vadd.f32 %v2250, %v2262
    %v2264 = vpop.f32.mrf.mxu0
    %2265 = vdwg.mxu0
    %2266 = vmatpush.bf16.msra.mxu0 %v1716
    %2267 = vmatpush.bf16.msra.mxu0 %v1715
    %2268 = vmatpush.bf16.msra.mxu0 %v1714
    %2269 = vmatpush.bf16.msra.mxu0 %v1713
    %2270 = vmatpush.bf16.msra.mxu0 %v1712
    %2271 = vmatpush.bf16.msra.mxu0 %v1711
    %2272 = vmatpush.bf16.msra.mxu0 %v1710
    %2273 = vmatpush.bf16.msra.mxu0 %v1709
    %2274 = vmatmul.bf16.gmra.mxu0 %v554
    %v2275 = vpop.f32.mrf.mxu0
    %v2276 = vadd.f32 %v2263, %v2275
    %v2277 = vpop.f32.mrf.mxu0
    %2278 = vdwg.mxu0
    %2279 = vmatpush.bf16.msra.mxu0 %v1724
    %2280 = vmatpush.bf16.msra.mxu0 %v1723
    %2281 = vmatpush.bf16.msra.mxu0 %v1722
    %2282 = vmatpush.bf16.msra.mxu0 %v1721
    %2283 = vmatpush.bf16.msra.mxu0 %v1720
    %2284 = vmatpush.bf16.msra.mxu0 %v1719
    %2285 = vmatpush.bf16.msra.mxu0 %v1718
    %2286 = vmatpush.bf16.msra.mxu0 %v1717
    %2287 = vmatmul.bf16.gmra.mxu0 %v555
    %v2288 = vpop.f32.mrf.mxu0
    %v2289 = vadd.f32 %v2276, %v2288
    %v2290 = vpop.f32.mrf.mxu0
    %2291 = vdwg.mxu0
    %2292 = vmatpush.bf16.msra.mxu0 %v1732
    %2293 = vmatpush.bf16.msra.mxu0 %v1731
    %2294 = vmatpush.bf16.msra.mxu0 %v1730
    %2295 = vmatpush.bf16.msra.mxu0 %v1729
    %2296 = vmatpush.bf16.msra.mxu0 %v1728
    %2297 = vmatpush.bf16.msra.mxu0 %v1727
    %2298 = vmatpush.bf16.msra.mxu0 %v1726
    %2299 = vmatpush.bf16.msra.mxu0 %v1725
    %2300 = vmatmul.bf16.gmra.mxu0 %v556
    %v2301 = vpop.f32.mrf.mxu0
    %v2302 = vadd.f32 %v2289, %v2301
    %v2303 = vpop.f32.mrf.mxu0
    %2304 = vdwg.mxu0
    %2305 = vmatpush.bf16.msra.mxu0 %v1740
    %2306 = vmatpush.bf16.msra.mxu0 %v1739
    %2307 = vmatpush.bf16.msra.mxu0 %v1738
    %2308 = vmatpush.bf16.msra.mxu0 %v1737
    %2309 = vmatpush.bf16.msra.mxu0 %v1736
    %2310 = vmatpush.bf16.msra.mxu0 %v1735
    %2311 = vmatpush.bf16.msra.mxu0 %v1734
    %2312 = vmatpush.bf16.msra.mxu0 %v1733
    %2313 = vmatmul.bf16.gmra.mxu0 %v557
    %v2314 = vpop.f32.mrf.mxu0
    %v2315 = vadd.f32 %v2302, %v2314
    %v2316 = vpop.f32.mrf.mxu0
    %2317 = vdwg.mxu0
    %2318 = vmatpush.bf16.msra.mxu0 %v1748
    %2319 = vmatpush.bf16.msra.mxu0 %v1747
    %2320 = vmatpush.bf16.msra.mxu0 %v1746
    %2321 = vmatpush.bf16.msra.mxu0 %v1745
    %2322 = vmatpush.bf16.msra.mxu0 %v1744
    %2323 = vmatpush.bf16.msra.mxu0 %v1743
    %2324 = vmatpush.bf16.msra.mxu0 %v1742
    %2325 = vmatpush.bf16.msra.mxu0 %v1741
    %2326 = vmatmul.bf16.gmra.mxu0 %v558
    %v2327 = vpop.f32.mrf.mxu0
    %v2328 = vadd.f32 %v2315, %v2327
    %v2329 = vpop.f32.mrf.mxu0
    %2330 = vdwg.mxu0
    %2331 = vmatpush.bf16.msra.mxu0 %v1756
    %2332 = vmatpush.bf16.msra.mxu0 %v1755
    %2333 = vmatpush.bf16.msra.mxu0 %v1754
    %2334 = vmatpush.bf16.msra.mxu0 %v1753
    %2335 = vmatpush.bf16.msra.mxu0 %v1752
    %2336 = vmatpush.bf16.msra.mxu0 %v1751
    %2337 = vmatpush.bf16.msra.mxu0 %v1750
    %2338 = vmatpush.bf16.msra.mxu0 %v1749
    %2339 = vmatmul.bf16.gmra.mxu0 %v559
    %v2340 = vpop.f32.mrf.mxu0
    %v2341 = vadd.f32 %v2328, %v2340
    %v2342 = vpop.f32.mrf.mxu0
    %2343 = vdwg.mxu0
    %2344 = vmatpush.bf16.msra.mxu0 %v1764
    %2345 = vmatpush.bf16.msra.mxu0 %v1763
    %2346 = vmatpush.bf16.msra.mxu0 %v1762
    %2347 = vmatpush.bf16.msra.mxu0 %v1761
    %2348 = vmatpush.bf16.msra.mxu0 %v1760
    %2349 = vmatpush.bf16.msra.mxu0 %v1759
    %2350 = vmatpush.bf16.msra.mxu0 %v1758
    %2351 = vmatpush.bf16.msra.mxu0 %v1757
    %2352 = vmatmul.bf16.gmra.mxu0 %v560
    %v2353 = vpop.f32.mrf.mxu0
    %v2354 = vadd.f32 %v2341, %v2353
    %v2355 = vpop.f32.mrf.mxu0
    %2356 = vdwg.mxu0
    %2357 = vmatpush.bf16.msra.mxu0 %v1772
    %2358 = vmatpush.bf16.msra.mxu0 %v1771
    %2359 = vmatpush.bf16.msra.mxu0 %v1770
    %2360 = vmatpush.bf16.msra.mxu0 %v1769
    %2361 = vmatpush.bf16.msra.mxu0 %v1768
    %2362 = vmatpush.bf16.msra.mxu0 %v1767
    %2363 = vmatpush.bf16.msra.mxu0 %v1766
    %2364 = vmatpush.bf16.msra.mxu0 %v1765
    %2365 = vmatmul.bf16.gmra.mxu0 %v563
    %v2366 = vpop.f32.mrf.mxu0
    %v2367 = vadd.f32 %v2354, %v2366
    %v2368 = vpop.f32.mrf.mxu0
    %2369 = vdwg.mxu0
    %2370 = vmatpush.bf16.msra.mxu0 %v1780
    %2371 = vmatpush.bf16.msra.mxu0 %v1779
    %2372 = vmatpush.bf16.msra.mxu0 %v1778
    %2373 = vmatpush.bf16.msra.mxu0 %v1777
    %2374 = vmatpush.bf16.msra.mxu0 %v1776
    %2375 = vmatpush.bf16.msra.mxu0 %v1775
    %2376 = vmatpush.bf16.msra.mxu0 %v1774
    %2377 = vmatpush.bf16.msra.mxu0 %v1773
    %2378 = vmatmul.bf16.gmra.mxu0 %v564
    %v2379 = vpop.f32.mrf.mxu0
    %v2380 = vadd.f32 %v2367, %v2379
    %v2381 = vpop.f32.mrf.mxu0
    %2382 = vdwg.mxu0
    %2383 = vmatpush.bf16.msra.mxu0 %v1788
    %2384 = vmatpush.bf16.msra.mxu0 %v1787
    %2385 = vmatpush.bf16.msra.mxu0 %v1786
    %2386 = vmatpush.bf16.msra.mxu0 %v1785
    %2387 = vmatpush.bf16.msra.mxu0 %v1784
    %2388 = vmatpush.bf16.msra.mxu0 %v1783
    %2389 = vmatpush.bf16.msra.mxu0 %v1782
    %2390 = vmatpush.bf16.msra.mxu0 %v1781
    %2391 = vmatmul.bf16.gmra.mxu0 %v565
    %v2392 = vpop.f32.mrf.mxu0
    %v2393 = vadd.f32 %v2380, %v2392
    %v2394 = vpop.f32.mrf.mxu0
    %2395 = vdwg.mxu0
    %2396 = vmatpush.bf16.msra.mxu0 %v1796
    %2397 = vmatpush.bf16.msra.mxu0 %v1795
    %2398 = vmatpush.bf16.msra.mxu0 %v1794
    %2399 = vmatpush.bf16.msra.mxu0 %v1793
    %2400 = vmatpush.bf16.msra.mxu0 %v1792
    %2401 = vmatpush.bf16.msra.mxu0 %v1791
    %2402 = vmatpush.bf16.msra.mxu0 %v1790
    %2403 = vmatpush.bf16.msra.mxu0 %v1789
    %2404 = vmatmul.bf16.gmra.mxu0 %v566
    %v2405 = vpop.f32.mrf.mxu0
    %v2406 = vadd.f32 %v2393, %v2405
    %v2407 = vpop.f32.mrf.mxu0
    %2408 = vdwg.mxu0
    %2409 = vmatpush.bf16.msra.mxu0 %v1804
    %2410 = vmatpush.bf16.msra.mxu0 %v1803
    %2411 = vmatpush.bf16.msra.mxu0 %v1802
    %2412 = vmatpush.bf16.msra.mxu0 %v1801
    %2413 = vmatpush.bf16.msra.mxu0 %v1800
    %2414 = vmatpush.bf16.msra.mxu0 %v1799
    %2415 = vmatpush.bf16.msra.mxu0 %v1798
    %2416 = vmatpush.bf16.msra.mxu0 %v1797
    %2417 = vmatmul.bf16.gmra.mxu0 %v567
    %v2418 = vpop.f32.mrf.mxu0
    %v2419 = vadd.f32 %v2406, %v2418
    %v2420 = vpop.f32.mrf.mxu0
    %2421 = vdwg.mxu0
    %2422 = vmatpush.bf16.msra.mxu0 %v1812
    %2423 = vmatpush.bf16.msra.mxu0 %v1811
    %2424 = vmatpush.bf16.msra.mxu0 %v1810
    %2425 = vmatpush.bf16.msra.mxu0 %v1809
    %2426 = vmatpush.bf16.msra.mxu0 %v1808
    %2427 = vmatpush.bf16.msra.mxu0 %v1807
    %2428 = vmatpush.bf16.msra.mxu0 %v1806
    %2429 = vmatpush.bf16.msra.mxu0 %v1805
    %2430 = vmatmul.bf16.gmra.mxu0 %v568
    %v2431 = vpop.f32.mrf.mxu0
    %v2432 = vadd.f32 %v2419, %v2431
    %v2433 = vpop.f32.mrf.mxu0
    %2434 = vdwg.mxu0
    %2435 = vmatpush.bf16.msra.mxu0 %v1820
    %2436 = vmatpush.bf16.msra.mxu0 %v1819
    %2437 = vmatpush.bf16.msra.mxu0 %v1818
    %2438 = vmatpush.bf16.msra.mxu0 %v1817
    %2439 = vmatpush.bf16.msra.mxu0 %v1816
    %2440 = vmatpush.bf16.msra.mxu0 %v1815
    %2441 = vmatpush.bf16.msra.mxu0 %v1814
    %2442 = vmatpush.bf16.msra.mxu0 %v1813
    %2443 = vmatmul.bf16.gmra.mxu0 %v569
    %v2444 = vpop.f32.mrf.mxu0
    %v2445 = vadd.f32 %v2432, %v2444
    %v2446 = vpop.f32.mrf.mxu0
    %2447 = vdwg.mxu0
    %2448 = vmatpush.bf16.msra.mxu0 %v1828
    %2449 = vmatpush.bf16.msra.mxu0 %v1827
    %2450 = vmatpush.bf16.msra.mxu0 %v1826
    %2451 = vmatpush.bf16.msra.mxu0 %v1825
    %2452 = vmatpush.bf16.msra.mxu0 %v1824
    %2453 = vmatpush.bf16.msra.mxu0 %v1823
    %2454 = vmatpush.bf16.msra.mxu0 %v1822
    %2455 = vmatpush.bf16.msra.mxu0 %v1821
    %2456 = vmatmul.bf16.gmra.mxu0 %v570
    %v2457 = vpop.f32.mrf.mxu0
    %v2458 = vadd.f32 %v2445, %v2457
    %v2459 = vpop.f32.mrf.mxu0
    %2460 = vdwg.mxu0
    %2461 = vmatpush.bf16.msra.mxu0 %v1836
    %2462 = vmatpush.bf16.msra.mxu0 %v1835
    %2463 = vmatpush.bf16.msra.mxu0 %v1834
    %2464 = vmatpush.bf16.msra.mxu0 %v1833
    %2465 = vmatpush.bf16.msra.mxu0 %v1832
    %2466 = vmatpush.bf16.msra.mxu0 %v1831
    %2467 = vmatpush.bf16.msra.mxu0 %v1830
    %2468 = vmatpush.bf16.msra.mxu0 %v1829
    %2469 = vmatmul.bf16.gmra.mxu0 %v573
    %v2470 = vpop.f32.mrf.mxu0
    %v2471 = vadd.f32 %v2458, %v2470
    %v2472 = vpop.f32.mrf.mxu0
    %2473 = vdwg.mxu0
    %2474 = vmatpush.bf16.msra.mxu0 %v1844
    %2475 = vmatpush.bf16.msra.mxu0 %v1843
    %2476 = vmatpush.bf16.msra.mxu0 %v1842
    %2477 = vmatpush.bf16.msra.mxu0 %v1841
    %2478 = vmatpush.bf16.msra.mxu0 %v1840
    %2479 = vmatpush.bf16.msra.mxu0 %v1839
    %2480 = vmatpush.bf16.msra.mxu0 %v1838
    %2481 = vmatpush.bf16.msra.mxu0 %v1837
    %2482 = vmatmul.bf16.gmra.mxu0 %v574
    %v2483 = vpop.f32.mrf.mxu0
    %v2484 = vadd.f32 %v2471, %v2483
    %v2485 = vpop.f32.mrf.mxu0
    %2486 = vdwg.mxu0
    %2487 = vmatpush.bf16.msra.mxu0 %v1852
    %2488 = vmatpush.bf16.msra.mxu0 %v1851
    %2489 = vmatpush.bf16.msra.mxu0 %v1850
    %2490 = vmatpush.bf16.msra.mxu0 %v1849
    %2491 = vmatpush.bf16.msra.mxu0 %v1848
    %2492 = vmatpush.bf16.msra.mxu0 %v1847
    %2493 = vmatpush.bf16.msra.mxu0 %v1846
    %2494 = vmatpush.bf16.msra.mxu0 %v1845
    %2495 = vmatmul.bf16.gmra.mxu0 %v575
    %v2496 = vpop.f32.mrf.mxu0
    %v2497 = vadd.f32 %v2484, %v2496
    %v2498 = vpop.f32.mrf.mxu0
    %2499 = vdwg.mxu0
    %2500 = vmatpush.bf16.msra.mxu0 %v1860
    %2501 = vmatpush.bf16.msra.mxu0 %v1859
    %2502 = vmatpush.bf16.msra.mxu0 %v1858
    %2503 = vmatpush.bf16.msra.mxu0 %v1857
    %2504 = vmatpush.bf16.msra.mxu0 %v1856
    %2505 = vmatpush.bf16.msra.mxu0 %v1855
    %2506 = vmatpush.bf16.msra.mxu0 %v1854
    %2507 = vmatpush.bf16.msra.mxu0 %v1853
    %2508 = vmatmul.bf16.gmra.mxu0 %v576
    %v2509 = vpop.f32.mrf.mxu0
    %v2510 = vadd.f32 %v2497, %v2509
    %v2511 = vpop.f32.mrf.mxu0
    %2512 = vdwg.mxu0
    %2513 = vmatpush.bf16.msra.mxu0 %v1868
    %2514 = vmatpush.bf16.msra.mxu0 %v1867
    %2515 = vmatpush.bf16.msra.mxu0 %v1866
    %2516 = vmatpush.bf16.msra.mxu0 %v1865
    %2517 = vmatpush.bf16.msra.mxu0 %v1864
    %2518 = vmatpush.bf16.msra.mxu0 %v1863
    %2519 = vmatpush.bf16.msra.mxu0 %v1862
    %2520 = vmatpush.bf16.msra.mxu0 %v1861
    %2521 = vmatmul.bf16.gmra.mxu0 %v577
    %v2522 = vpop.f32.mrf.mxu0
    %v2523 = vadd.f32 %v2510, %v2522
    %v2524 = vpop.f32.mrf.mxu0
    %2525 = vdwg.mxu0
    %2526 = vmatpush.bf16.msra.mxu0 %v1876
    %2527 = vmatpush.bf16.msra.mxu0 %v1875
    %2528 = vmatpush.bf16.msra.mxu0 %v1874
    %2529 = vmatpush.bf16.msra.mxu0 %v1873
    %2530 = vmatpush.bf16.msra.mxu0 %v1872
    %2531 = vmatpush.bf16.msra.mxu0 %v1871
    %2532 = vmatpush.bf16.msra.mxu0 %v1870
    %2533 = vmatpush.bf16.msra.mxu0 %v1869
    %2534 = vmatmul.bf16.gmra.mxu0 %v578
    %v2535 = vpop.f32.mrf.mxu0
    %v2536 = vadd.f32 %v2523, %v2535
    %v2537 = vpop.f32.mrf.mxu0
    %2538 = vdwg.mxu0
    %2539 = vmatpush.bf16.msra.mxu0 %v1884
    %2540 = vmatpush.bf16.msra.mxu0 %v1883
    %2541 = vmatpush.bf16.msra.mxu0 %v1882
    %2542 = vmatpush.bf16.msra.mxu0 %v1881
    %2543 = vmatpush.bf16.msra.mxu0 %v1880
    %2544 = vmatpush.bf16.msra.mxu0 %v1879
    %2545 = vmatpush.bf16.msra.mxu0 %v1878
    %2546 = vmatpush.bf16.msra.mxu0 %v1877
    %2547 = vmatmul.bf16.gmra.mxu0 %v579
    %v2548 = vpop.f32.mrf.mxu0
    %v2549 = vadd.f32 %v2536, %v2548
    %v2550 = vpop.f32.mrf.mxu0
    %2551 = vdwg.mxu0
    %2552 = vmatpush.bf16.msra.mxu0 %v1892
    %2553 = vmatpush.bf16.msra.mxu0 %v1891
    %2554 = vmatpush.bf16.msra.mxu0 %v1890
    %2555 = vmatpush.bf16.msra.mxu0 %v1889
    %2556 = vmatpush.bf16.msra.mxu0 %v1888
    %2557 = vmatpush.bf16.msra.mxu0 %v1887
    %2558 = vmatpush.bf16.msra.mxu0 %v1886
    %2559 = vmatpush.bf16.msra.mxu0 %v1885
    %2560 = vmatmul.bf16.gmra.mxu0 %v580
    %v2561 = vpop.f32.mrf.mxu0
    %v2562 = vadd.f32 %v2549, %v2561
    %v2563 = vpop.f32.mrf.mxu0
    %2564 = vdwg.mxu0
    %v2565 = vmax.f32 %v2562, 0.0
    %v2566 = vpack.c.bf16 %v2565, %v2565
    %v2567 = vld [vmem:[%s3] sm:$0xf]
    %v2568 = vld [vmem:[%s3 + $0x4] sm:$0xf]
    %v2569 = vld [vmem:[%s3 + $0x8] sm:$0xf]
    %v2570 = vld [vmem:[%s3 + $0xc] sm:$0xf]
    %v2571 = vld [vmem:[%s3 + $0x10] sm:$0xf]
    %v2572 = vld [vmem:[%s3 + $0x14] sm:$0xf]
    %v2573 = vld [vmem:[%s3 + $0x18] sm:$0xf]
    %v2574 = vld [vmem:[%s3 + $0x1c] sm:$0xf]
    %v2575 = vld [vmem:[%s3 + $0x20] sm:$0xf]
    %v2576 = vld [vmem:[%s3 + $0x24] sm:$0xf]
    %v2577 = vld [vmem:[%s3 + $0x28] sm:$0xf]
    %v2578 = vld [vmem:[%s3 + $0x2c] sm:$0xf]
    %v2579 = vld [vmem:[%s3 + $0x30] sm:$0xf]
    %v2580 = vld [vmem:[%s3 + $0x34] sm:$0xf]
    %v2581 = vld [vmem:[%s3 + $0x38] sm:$0xf]
    %v2582 = vld [vmem:[%s3 + $0x3c] sm:$0xf]
    %v2583 = vld [vmem:[%s4] sm:$0x1]
    %v2585 = vperm.slane %v2583, 0
    %v2603 = vunpack.c.l.b16 %v2567
    %v2604 = vunpack.c.l.b16 %v2568
    %v2605 = vunpack.c.l.b16 %v2569
    %v2606 = vunpack.c.l.b16 %v2570
    %v2607 = vunpack.c.l.b16 %v2571
    %v2608 = vunpack.c.l.b16 %v2572
    %v2609 = vunpack.c.l.b16 %v2573
    %v2610 = vunpack.c.l.b16 %v2574
    %v2611 = vunpack.c.l.b16 %v2575
    %v2612 = vunpack.c.l.b16 %v2576
    %v2613 = vunpack.c.l.b16 %v2577
    %v2614 = vunpack.c.l.b16 %v2578
    %v2615 = vunpack.c.l.b16 %v2579
    %v2616 = vunpack.c.l.b16 %v2580
    %v2617 = vunpack.c.l.b16 %v2581
    %v2618 = vunpack.c.l.b16 %v2582
    %v2619 = vpack.c.b16 %v2604, %v2603
    %v2620 = vpack.c.b16 %v2606, %v2605
    %v2621 = vpack.c.b16 %v2608, %v2607
    %v2622 = vpack.c.b16 %v2610, %v2609
    %v2623 = vpack.c.b16 %v2612, %v2611
    %v2624 = vpack.c.b16 %v2614, %v2613
    %v2625 = vpack.c.b16 %v2616, %v2615
    %v2626 = vpack.c.b16 %v2618, %v2617
    %2635 = vmatpush.bf16.msra.mxu0 %v2626
    %2636 = vmatpush.bf16.msra.mxu0 %v2625
    %2637 = vmatpush.bf16.msra.mxu0 %v2624
    %2638 = vmatpush.bf16.msra.mxu0 %v2623
    %2639 = vmatpush.bf16.msra.mxu0 %v2622
    %2640 = vmatpush.bf16.msra.mxu0 %v2621
    %2641 = vmatpush.bf16.msra.mxu0 %v2620
    %2642 = vmatpush.bf16.msra.mxu0 %v2619
    %2643 = vmatmul.bf16.gmra.mxu0 %v2566
    %v2644 = vpop.f32.mrf.mxu0
    %v2645 = vadd.f32 %v2585, %v2644
    %v2646 = vpop.f32.mrf.mxu0
    %2647 = vdwg.mxu0
    %2648 = vst [vmem:[#allocation2] sm:$0x3] %v2645
    // Predicated region
    $region22: #{corelnet_forward.5} parent=1 // pred_check
      _
    $region23: #{corelnet_forward.5} parent=1 // pred_check_branch
      %2650 = sbr.rel (0) target = $region25
    $region24: #{corelnet_forward.5} parent=1 // pred_region
      %2652 = vsyncadd [#allocation3], 0
      %s2654 = sshll.u32 [#allocation2], 4
      %s2655 = int_to_ptr.vmem [resolvable:$true] %s2654
      %s2656 = sshll.u32 %s5, 4
      %s2657 = int_to_ptr.hbm [resolvable:$true] %s2656
      %2659 = dma.vmem_to_hbm [thread:$0]  %s2655, 32, %s2657, [#allocation3]
    $region25: #{corelnet_forward.5} parent=1 // pred_fallthru
      _
    // Predicated region
    $region26: #{corelnet_forward.5} parent=1 // pred_check
      _
    $region27: #{corelnet_forward.5} parent=1 // pred_check_branch
      %2661 = sbr.rel (0) target = $region29
    $region28: #{corelnet_forward.5} parent=1 // pred_region
      %2663 = dma.done [#allocation3], 32
    $region29: #{corelnet_forward.5} parent=1 // pred_fallthru
      _
    %2664 = vsyncpa [#allocation3], 1

</llo_original>
